<compile_context>
chip_gen: v7x
topology: tpu7x:2x2x1
jax: 0.10.0
libtpu: 0.0.40
codegen_flags: <defaults>
</compile_context>

<pallas_src>
import functools

import jax
import jax.numpy as jnp
from jax.experimental import pallas as pl
from jax.experimental.pallas import tpu as pltpu


_COMPUTE_DTYPE = jnp.bfloat16
_LANE = 128


@functools.lru_cache(maxsize=None)
def _vmem_limit():
    """~3/4 of physical VMEM: ~96 MiB on v5e/v6e (128 MiB), ~48 MiB on v7x."""
    cap = None
    try:
        cap = getattr(pltpu.get_tpu_info(), "vmem_capacity_bytes", None)
    except Exception:
        cap = None
    if not cap:
        cap = 64 * 1024 * 1024
    return int(cap) * 3 // 4


def _round_up(x, m):
    return ((x + m - 1) // m) * m


def _pick_lane_tile(spad, bytes_per_lane):
    """Largest lane tile that divides `spad`, keeps the double-buffered cols
    block within ~1/3 of the VMEM budget, and (when possible) leaves >= 2 grid
    steps so both v7x TensorCores get work."""
    budget = _vmem_limit() // 3

    def fits(t):
        return spad % t == 0 and 2 * t * bytes_per_lane <= budget

    for t in (1024, 512, 256, 128):
        if fits(t) and spad // t >= 2:
            return t
    for t in (1024, 512, 256, 128):
        if fits(t):
            return t
    return 128


# ----------------------------------------------------------------------------
# Kernel A: conv1 = Conv3d (no bias; InstanceNorm cancels it)
#           + InstanceNorm3d(eps=1e-5, affine=False) + LeakyReLU(0.2), fused.
#           One grid step per batch sample (per-sample statistics).
# ----------------------------------------------------------------------------
def _conv1_inorm_lrelu_kernel(x_ref, w_ref, o_ref):
    # x_ref: (1, K, S) bf16 cols for one sample; w_ref: (C, K) bf16;
    # o_ref: (1, C, S) bf16.
    acc = jnp.dot(w_ref[...], x_ref[0], preferred_element_type=jnp.float32)
    mean = jnp.mean(acc, axis=-1, keepdims=True)
    xc = acc - mean
    var = jnp.mean(xc * xc, axis=-1, keepdims=True)     # biased var (PyTorch)
    y = xc * jax.lax.rsqrt(var + 1e-5)
    o_ref[0] = jnp.where(y > 0, y, 0.2 * y).astype(o_ref.dtype)


def conv1_inorm_lrelu(cols, w_mat):
    batch, K, S = cols.shape
    cout = w_mat.shape[0]
    return pl.pallas_call(
        _conv1_inorm_lrelu_kernel,
        out_shape=jax.ShapeDtypeStruct((batch, cout, S), _COMPUTE_DTYPE),
        grid=(batch,),
        in_specs=[
            pl.BlockSpec((1, K, S), lambda b: (b, 0, 0)),
            pl.BlockSpec((cout, K), lambda b: (0, 0)),
        ],
        out_specs=pl.BlockSpec((1, cout, S), lambda b: (b, 0, 0)),
        compiler_params=pltpu.CompilerParams(
            dimension_semantics=("parallel",),
            vmem_limit_bytes=_vmem_limit(),
        ),
    )(cols, w_mat)


# ----------------------------------------------------------------------------
# Kernel B: generic lane-dense Conv3d-as-matmul + bias + activation.
#           Full K per step (weights stay VMEM-resident), batch folded into
#           the lane axis, grid only over lane tiles.
# ----------------------------------------------------------------------------
def _conv_bias_act_kernel(x_ref, w_ref, b_ref, o_ref, *, act):
    # x_ref: (K, ts) bf16; w_ref: (Cout, K) bf16; b_ref: (Cout, 1) f32.
    y = jnp.dot(w_ref[...], x_ref[...], preferred_element_type=jnp.float32)
    y = y + b_ref[...]
    if act == "lrelu":
        y = jnp.where(y > 0, y, 0.2 * y)
    else:  # "sigmoid"
        y = 1.0 / (1.0 + jnp.exp(-y))
    o_ref[...] = y.astype(o_ref.dtype)


def conv_bias_act(cols, w_mat, b_col, *, act, out_dtype=_COMPUTE_DTYPE):
    K, ns = cols.shape
    cout = w_mat.shape[0]
    ns_pad = _round_up(ns, _LANE)
    if ns_pad != ns:
        cols = jnp.pad(cols, ((0, 0), (0, ns_pad - ns)))
    ts = _pick_lane_tile(ns_pad, K * 2)          # bf16 cols: 2 bytes per lane-col
    kernel = functools.partial(_conv_bias_act_kernel, act=act)
    out = pl.pallas_call(
        kernel,
        out_shape=jax.ShapeDtypeStruct((cout, ns_pad), out_dtype),
        grid=(ns_pad // ts,),
        in_specs=[
            pl.BlockSpec((K, ts), lambda s: (0, s)),
            pl.BlockSpec((cout, K), lambda s: (0, 0)),   # constant index: stays resident
            pl.BlockSpec((cout, 1), lambda s: (0, 0)),
        ],
        out_specs=pl.BlockSpec((cout, ts), lambda s: (0, s)),
        compiler_params=pltpu.CompilerParams(
            dimension_semantics=("parallel",),
            vmem_limit_bytes=_vmem_limit(),
        ),
    )(cols, w_mat, b_col)
    return out[:, :ns]


# ----------------------------------------------------------------------------
# im2col glue (XLA).  K-axis order is [cin, (kd, kh, kw)], matching
# w.reshape(Cout, Cin*k^3).
# ----------------------------------------------------------------------------
def _out_dims(D, H, W, k, stride, pad):
    Do = (D + 2 * pad - k) // stride + 1
    Ho = (H + 2 * pad - k) // stride + 1
    Wo = (W + 2 * pad - k) // stride + 1
    return Do, Ho, Wo


def _tap_slices(xp, k, stride, Do, Ho, Wo):
    taps = []
    for kd in range(k):
        for kh in range(k):
            for kw in range(k):
                taps.append(xp[
                    ..., :,
                    kd: kd + stride * (Do - 1) + 1: stride,
                    kh: kh + stride * (Ho - 1) + 1: stride,
                    kw: kw + stride * (Wo - 1) + 1: stride,
                ])
    return taps


def _im2col_batch_major(x, k, stride, pad):
    """(N, C, D, H, W) -> (N, C*k^3, S) for the per-sample conv1 kernel."""
    x = x.astype(_COMPUTE_DTYPE)
    N, C, D, H, W = x.shape
    xp = jnp.pad(x, ((0, 0), (0, 0), (pad, pad), (pad, pad), (pad, pad)))
    Do, Ho, Wo = _out_dims(D, H, W, k, stride, pad)
    taps = _tap_slices(xp, k, stride, Do, Ho, Wo)    # each (N, C, Do, Ho, Wo)
    cols = jnp.stack(taps, axis=2)                   # (N, C, k^3, Do, Ho, Wo)
    return cols.reshape(N, C * k ** 3, Do * Ho * Wo), (Do, Ho, Wo)


def _im2col_channel_major(x_cm, k, stride, pad):
    """(C, N, D, H, W) -> (C*k^3, N*S): lane-dense cols, no transpose needed."""
    x_cm = x_cm.astype(_COMPUTE_DTYPE)
    C, N, D, H, W = x_cm.shape
    xp = jnp.pad(x_cm, ((0, 0), (0, 0), (pad, pad), (pad, pad), (pad, pad)))
    Do, Ho, Wo = _out_dims(D, H, W, k, stride, pad)
    taps = _tap_slices(xp, k, stride, Do, Ho, Wo)    # each (C, N, Do, Ho, Wo)
    cols = jnp.stack(taps, axis=1)                   # (C, k^3, N, Do, Ho, Wo)
    return cols.reshape(C * k ** 3, N * Do * Ho * Wo), (Do, Ho, Wo)


# ----------------------------------------------------------------------------
# adversary module
# ----------------------------------------------------------------------------
def init_conv_params(key, cin, cout, k):
    wkey, bkey = jax.random.split(key)
    fan_in = cin * k ** 3
    bound = 1.0 / (fan_in ** 0.5)
    w = jax.random.uniform(wkey, (cout, cin, k, k, k), jnp.float32, -bound, bound)
    b = jax.random.uniform(bkey, (cout,), jnp.float32, -bound, bound)
    return w, b


def init_adversary_params(key, i_nc=2, filt_num=32):
    k1, k2, k3, kf = jax.random.split(key, 4)
    w1, b1 = init_conv_params(k1, i_nc, filt_num, 4)
    w2, b2 = init_conv_params(k2, filt_num, filt_num * 2, 4)
    w3, b3 = init_conv_params(k3, filt_num * 2, filt_num * 4, 4)
    wf, bf = init_conv_params(kf, filt_num * 4, 1, 4)
    # TODO(synk): adv_4_0 (Conv3d f*4 -> f*8) exists in __init__ but is unused
    # in forward(); its parameters are not materialized here.
    return dict(
        w1m=w1.reshape(filt_num, -1).astype(_COMPUTE_DTYPE),        # (C1, K1)
        b1=b1.reshape(-1, 1),   # kept for parity with PyTorch; unused: the
                                # InstanceNorm mean-subtraction cancels it.
        w2m=w2.reshape(filt_num * 2, -1).astype(_COMPUTE_DTYPE),    # (C2, K2)
        b2=b2.reshape(-1, 1),
        w3m=w3.reshape(filt_num * 4, -1).astype(_COMPUTE_DTYPE),    # (C3, K3)
        b3=b3.reshape(-1, 1),
        wfm=wf.reshape(1, -1).astype(_COMPUTE_DTYPE),               # (1, K4) lane-dense
        bf=bf.reshape(1, 1),
    )


def adversary_forward(params, x_ncdhw):
    x = x_ncdhw.astype(jnp.float32)
    N = x.shape[0]

    # adv_1_0: Conv3d(i_nc, f, 4, s2, p1) + InstanceNorm3d + LeakyReLU(0.2)
    cols, (D1, H1, W1) = _im2col_batch_major(x, 4, 2, 1)
    c1 = params["w1m"].shape[0]
    h = conv1_inorm_lrelu(cols, params["w1m"])          # (N, C1, S1) bf16
    # Channel-major for the rest of the chain: the only transpose in the
    # forward pass, on the 1x activation (never the inflated cols).
    h = h.reshape(N, c1, D1, H1, W1).transpose(1, 0, 2, 3, 4)

    # adv_2_0: Conv3d(f, 2f, 4, s2, p1) + LeakyReLU(0.2)
    cols, (D2, H2, W2) = _im2col_channel_major(h, 4, 2, 1)
    h = conv_bias_act(cols, params["w2m"], params["b2"], act="lrelu")
    h = h.reshape(-1, N, D2, H2, W2)

    # adv_3_0: Conv3d(2f, 4f, 4, s2, p1) + LeakyReLU(0.2)
    cols, (D3, H3, W3) = _im2col_channel_major(h, 4, 2, 1)
    h = conv_bias_act(cols, params["w3m"], params["b3"], act="lrelu")
    h = h.reshape(-1, N, D3, H3, W3)

    # final: Conv3d(4f, 1, 4, s1, p1) + Sigmoid
    cols, (D4, H4, W4) = _im2col_channel_major(h, 4, 1, 1)
    out = conv_bias_act(cols, params["wfm"], params["bf"], act="sigmoid",
                        out_dtype=jnp.float32)          # (1, N*S4)
    # Cout == 1, so (1, N*S4) flattens to NCDHW order directly.
    return out.reshape(N, 1, D4, H4, W4)


if __name__ == "__main__":
    key = jax.random.PRNGKey(0)
    pkey, xkey = jax.random.split(key)

    i_nc, filt_num = 2, 32
    params = init_adversary_params(pkey, i_nc=i_nc, filt_num=filt_num)

    # NCDHW input, matching the PyTorch module: (batch=2, C=2, D=H=W=16)
    x = jax.random.normal(xkey, (2, i_nc, 16, 16, 16), dtype=jnp.float32)

    fwd = jax.jit(adversary_forward)
    y = fwd(params, x)
    jax.block_until_ready(y)

    assert y.shape == (2, 1, 1, 1, 1), y.shape
    assert bool(jnp.all(jnp.isfinite(y))), "non-finite output"
    assert bool(jnp.all((y >= 0.0) & (y <= 1.0))), "sigmoid range check failed"
    print("KERNEL_OK")
</pallas_src>

<mosaic_0001>
module attributes {stable_mosaic.version = 11 : i64} {
  func.func @_conv1_inorm_lrelu_kernel(%arg0: i32, %arg1: memref<1x128x512xbf16, #tpu.memory_space<vmem>>, %arg2: memref<32x128xbf16, #tpu.memory_space<vmem>>, %arg3: memref<1x32x512xbf16, #tpu.memory_space<vmem>>) attributes {dimension_semantics = [#tpu.dimension_semantics<parallel>], iteration_bounds = array<i64: 2>, scalar_prefetch = 0 : i64, scratch_operands = 0 : i64, tpu.core_type = #tpu.core_type<tc>, window_params = [{transform_indices = @transform_0, window_bounds = array<i64: 1, 128, 512>}, {pipeline_mode = #tpu.pipeline_mode<synchronous>, transform_indices = @transform_1, window_bounds = array<i64: 32, 128>}, {transform_indices = @transform_2, window_bounds = array<i64: 1, 32, 512>}]} {
    %c0 = arith.constant 0 : index
    %c0_0 = arith.constant 0 : index
    %0 = vector.load %arg2[%c0, %c0_0] : memref<32x128xbf16, #tpu.memory_space<vmem>>, vector<32x128xbf16>
    %c0_1 = arith.constant 0 : index
    %c0_2 = arith.constant 0 : index
    %c0_3 = arith.constant 0 : index
    %1 = vector.load %arg1[%c0_1, %c0_2, %c0_3] : memref<1x128x512xbf16, #tpu.memory_space<vmem>>, vector<1x128x512xbf16>
    %2 = vector.shape_cast %1 : vector<1x128x512xbf16> to vector<128x512xbf16>
    %cst = arith.constant dense<0.000000e+00> : vector<32x512xf32>
    %3 = tpu.matmul %0, %2, %cst {dimension_numbers = #tpu.dot_dimension_numbers<[1], [0], [0], [1], [0, 0, 1, 1], [], []>} : vector<32x128xbf16>, vector<128x512xbf16>, vector<32x512xf32> -> vector<32x512xf32>
    %cst_4 = arith.constant dense<0.000000e+00> : vector<32xf32>
    %4 = vector.multi_reduction <add>, %3, %cst_4 [1] : vector<32x512xf32> to vector<32xf32>
    %5 = vector.shape_cast %4 : vector<32xf32> to vector<32x1xf32>
    %cst_5 = arith.constant 5.120000e+02 : f32
    %6 = vector.broadcast %cst_5 : f32 to vector<32x1xf32>
    %7 = arith.divf %5, %6 : vector<32x1xf32>
    %8 = vector.broadcast %7 : vector<32x1xf32> to vector<32x512xf32>
    %9 = arith.subf %3, %8 : vector<32x512xf32>
    %10 = arith.mulf %9, %9 : vector<32x512xf32>
    %cst_6 = arith.constant dense<0.000000e+00> : vector<32xf32>
    %11 = vector.multi_reduction <add>, %10, %cst_6 [1] : vector<32x512xf32> to vector<32xf32>
    %12 = vector.shape_cast %11 : vector<32xf32> to vector<32x1xf32>
    %cst_7 = arith.constant 5.120000e+02 : f32
    %13 = vector.broadcast %cst_7 : f32 to vector<32x1xf32>
    %14 = arith.divf %12, %13 : vector<32x1xf32>
    %cst_8 = arith.constant 9.99999974E-6 : f32
    %15 = vector.broadcast %cst_8 : f32 to vector<32x1xf32>
    %16 = arith.addf %14, %15 : vector<32x1xf32>
    %17 = math.rsqrt %16 : vector<32x1xf32>
    %18 = vector.broadcast %17 : vector<32x1xf32> to vector<32x512xf32>
    %19 = arith.mulf %9, %18 : vector<32x512xf32>
    %cst_9 = arith.constant 0.000000e+00 : f32
    %20 = vector.broadcast %cst_9 : f32 to vector<32x512xf32>
    %21 = arith.cmpf ogt, %19, %20 : vector<32x512xf32>
    %cst_10 = arith.constant 2.000000e-01 : f32
    %22 = vector.broadcast %cst_10 : f32 to vector<32x512xf32>
    %23 = arith.mulf %22, %19 : vector<32x512xf32>
    %24 = arith.select %21, %19, %23 : vector<32x512xi1>, vector<32x512xf32>
    %25 = arith.truncf %24 : vector<32x512xf32> to vector<32x512xbf16>
    %c0_11 = arith.constant 0 : index
    %c0_12 = arith.constant 0 : index
    %c0_13 = arith.constant 0 : index
    %26 = vector.load %arg3[%c0_11, %c0_12, %c0_13] : memref<1x32x512xbf16, #tpu.memory_space<vmem>>, vector<1x32x512xbf16>
    %27 = vector.shape_cast %26 : vector<1x32x512xbf16> to vector<32x512xbf16>
    %28 = vector.shape_cast %25 : vector<32x512xbf16> to vector<1x32x512xbf16>
    tpu.vector_store %arg3[%c0_11, %c0_12, %c0_13], %28 {strides = array<i32>} : memref<1x32x512xbf16, #tpu.memory_space<vmem>>, vector<1x32x512xbf16>,
    return
  }
  func.func @transform_0(%arg0: i32) -> (i32, i32, i32) {
    %c0_i32 = arith.constant 0 : i32
    %c0_i32_0 = arith.constant 0 : i32
    %c0_i32_1 = arith.constant 0 : i32
    return %arg0, %c0_i32, %c0_i32_0 : i32, i32, i32
  }
  func.func @transform_1(%arg0: i32) -> (i32, i32) {
    %c0_i32 = arith.constant 0 : i32
    %c0_i32_0 = arith.constant 0 : i32
    %c0_i32_1 = arith.constant 0 : i32
    return %c0_i32, %c0_i32_0 : i32, i32
  }
  func.func @transform_2(%arg0: i32) -> (i32, i32, i32) {
    %c0_i32 = arith.constant 0 : i32
    %c0_i32_0 = arith.constant 0 : i32
    %c0_i32_1 = arith.constant 0 : i32
    return %arg0, %c0_i32, %c0_i32_0 : i32, i32, i32
  }
}

module attributes {stable_mosaic.version = 11 : i64} {
  func.func @_conv_bias_act_kernel(%arg0: i32, %arg1: memref<2048x128xbf16, #tpu.memory_space<vmem>>, %arg2: memref<64x2048xbf16, #tpu.memory_space<vmem>>, %arg3: memref<64x1xf32, #tpu.memory_space<vmem>>, %arg4: memref<64x128xbf16, #tpu.memory_space<vmem>>) attributes {dimension_semantics = [#tpu.dimension_semantics<parallel>], iteration_bounds = array<i64: 1>, scalar_prefetch = 0 : i64, scratch_operands = 0 : i64, tpu.core_type = #tpu.core_type<tc>, window_params = [{transform_indices = @transform_0, window_bounds = array<i64: 2048, 128>}, {pipeline_mode = #tpu.pipeline_mode<synchronous>, transform_indices = @transform_1, window_bounds = array<i64: 64, 2048>}, {pipeline_mode = #tpu.pipeline_mode<synchronous>, transform_indices = @transform_2, window_bounds = array<i64: 64, 1>}, {transform_indices = @transform_3, window_bounds = array<i64: 64, 128>}]} {
    %c0 = arith.constant 0 : index
    %c0_0 = arith.constant 0 : index
    %0 = vector.load %arg2[%c0, %c0_0] : memref<64x2048xbf16, #tpu.memory_space<vmem>>, vector<64x2048xbf16>
    %c0_1 = arith.constant 0 : index
    %c0_2 = arith.constant 0 : index
    %1 = vector.load %arg1[%c0_1, %c0_2] : memref<2048x128xbf16, #tpu.memory_space<vmem>>, vector<2048x128xbf16>
    %cst = arith.constant dense<0.000000e+00> : vector<64x128xf32>
    %2 = tpu.matmul %0, %1, %cst {dimension_numbers = #tpu.dot_dimension_numbers<[1], [0], [0], [1], [0, 0, 1, 1], [], []>} : vector<64x2048xbf16>, vector<2048x128xbf16>, vector<64x128xf32> -> vector<64x128xf32>
    %c0_3 = arith.constant 0 : index
    %c0_4 = arith.constant 0 : index
    %3 = vector.load %arg3[%c0_3, %c0_4] : memref<64x1xf32, #tpu.memory_space<vmem>>, vector<64x1xf32>
    %4 = vector.broadcast %3 : vector<64x1xf32> to vector<64x128xf32>
    %5 = arith.addf %2, %4 : vector<64x128xf32>
    %cst_5 = arith.constant 0.000000e+00 : f32
    %6 = vector.broadcast %cst_5 : f32 to vector<64x128xf32>
    %7 = arith.cmpf ogt, %5, %6 : vector<64x128xf32>
    %cst_6 = arith.constant 2.000000e-01 : f32
    %8 = vector.broadcast %cst_6 : f32 to vector<64x128xf32>
    %9 = arith.mulf %8, %5 : vector<64x128xf32>
    %10 = arith.select %7, %5, %9 : vector<64x128xi1>, vector<64x128xf32>
    %11 = arith.truncf %10 : vector<64x128xf32> to vector<64x128xbf16>
    %c0_7 = arith.constant 0 : index
    %c0_8 = arith.constant 0 : index
    %12 = vector.load %arg4[%c0_7, %c0_8] : memref<64x128xbf16, #tpu.memory_space<vmem>>, vector<64x128xbf16>
    tpu.vector_store %arg4[%c0_7, %c0_8], %11 {strides = array<i32>} : memref<64x128xbf16, #tpu.memory_space<vmem>>, vector<64x128xbf16>,
    return
  }
  func.func @transform_0(%arg0: i32) -> (i32, i32) {
    %c0_i32 = arith.constant 0 : i32
    %c0_i32_0 = arith.constant 0 : i32
    return %c0_i32, %arg0 : i32, i32
  }
  func.func @transform_1(%arg0: i32) -> (i32, i32) {
    %c0_i32 = arith.constant 0 : i32
    %c0_i32_0 = arith.constant 0 : i32
    %c0_i32_1 = arith.constant 0 : i32
    return %c0_i32, %c0_i32_0 : i32, i32
  }
  func.func @transform_2(%arg0: i32) -> (i32, i32) {
    %c0_i32 = arith.constant 0 : i32
    %c0_i32_0 = arith.constant 0 : i32
    %c0_i32_1 = arith.constant 0 : i32
    return %c0_i32, %c0_i32_0 : i32, i32
  }
  func.func @transform_3(%arg0: i32) -> (i32, i32) {
    %c0_i32 = arith.constant 0 : i32
    %c0_i32_0 = arith.constant 0 : i32
    return %c0_i32, %arg0 : i32, i32
  }
}

module attributes {stable_mosaic.version = 11 : i64} {
  func.func @_conv_bias_act_kernel(%arg0: i32, %arg1: memref<4096x128xbf16, #tpu.memory_space<vmem>>, %arg2: memref<128x4096xbf16, #tpu.memory_space<vmem>>, %arg3: memref<128x1xf32, #tpu.memory_space<vmem>>, %arg4: memref<128x128xbf16, #tpu.memory_space<vmem>>) attributes {dimension_semantics = [#tpu.dimension_semantics<parallel>], iteration_bounds = array<i64: 1>, scalar_prefetch = 0 : i64, scratch_operands = 0 : i64, tpu.core_type = #tpu.core_type<tc>, window_params = [{transform_indices = @transform_0, window_bounds = array<i64: 4096, 128>}, {pipeline_mode = #tpu.pipeline_mode<synchronous>, transform_indices = @transform_1, window_bounds = array<i64: 128, 4096>}, {pipeline_mode = #tpu.pipeline_mode<synchronous>, transform_indices = @transform_2, window_bounds = array<i64: 128, 1>}, {transform_indices = @transform_3, window_bounds = array<i64: 128, 128>}]} {
    %c0 = arith.constant 0 : index
    %c0_0 = arith.constant 0 : index
    %0 = vector.load %arg2[%c0, %c0_0] : memref<128x4096xbf16, #tpu.memory_space<vmem>>, vector<128x4096xbf16>
    %c0_1 = arith.constant 0 : index
    %c0_2 = arith.constant 0 : index
    %1 = vector.load %arg1[%c0_1, %c0_2] : memref<4096x128xbf16, #tpu.memory_space<vmem>>, vector<4096x128xbf16>
    %cst = arith.constant dense<0.000000e+00> : vector<128x128xf32>
    %2 = tpu.matmul %0, %1, %cst {dimension_numbers = #tpu.dot_dimension_numbers<[1], [0], [0], [1], [0, 0, 1, 1], [], []>} : vector<128x4096xbf16>, vector<4096x128xbf16>, vector<128x128xf32> -> vector<128x128xf32>
    %c0_3 = arith.constant 0 : index
    %c0_4 = arith.constant 0 : index
    %3 = vector.load %arg3[%c0_3, %c0_4] : memref<128x1xf32, #tpu.memory_space<vmem>>, vector<128x1xf32>
    %4 = vector.broadcast %3 : vector<128x1xf32> to vector<128x128xf32>
    %5 = arith.addf %2, %4 : vector<128x128xf32>
    %cst_5 = arith.constant 0.000000e+00 : f32
    %6 = vector.broadcast %cst_5 : f32 to vector<128x128xf32>
    %7 = arith.cmpf ogt, %5, %6 : vector<128x128xf32>
    %cst_6 = arith.constant 2.000000e-01 : f32
    %8 = vector.broadcast %cst_6 : f32 to vector<128x128xf32>
    %9 = arith.mulf %8, %5 : vector<128x128xf32>
    %10 = arith.select %7, %5, %9 : vector<128x128xi1>, vector<128x128xf32>
    %11 = arith.truncf %10 : vector<128x128xf32> to vector<128x128xbf16>
    %c0_7 = arith.constant 0 : index
    %c0_8 = arith.constant 0 : index
    %12 = vector.load %arg4[%c0_7, %c0_8] : memref<128x128xbf16, #tpu.memory_space<vmem>>, vector<128x128xbf16>
    tpu.vector_store %arg4[%c0_7, %c0_8], %11 {strides = array<i32>} : memref<128x128xbf16, #tpu.memory_space<vmem>>, vector<128x128xbf16>,
    return
  }
  func.func @transform_0(%arg0: i32) -> (i32, i32) {
    %c0_i32 = arith.constant 0 : i32
    %c0_i32_0 = arith.constant 0 : i32
    return %c0_i32, %arg0 : i32, i32
  }
  func.func @transform_1(%arg0: i32) -> (i32, i32) {
    %c0_i32 = arith.constant 0 : i32
    %c0_i32_0 = arith.constant 0 : i32
    %c0_i32_1 = arith.constant 0 : i32
    return %c0_i32, %c0_i32_0 : i32, i32
  }
  func.func @transform_2(%arg0: i32) -> (i32, i32) {
    %c0_i32 = arith.constant 0 : i32
    %c0_i32_0 = arith.constant 0 : i32
    %c0_i32_1 = arith.constant 0 : i32
    return %c0_i32, %c0_i32_0 : i32, i32
  }
  func.func @transform_3(%arg0: i32) -> (i32, i32) {
    %c0_i32 = arith.constant 0 : i32
    %c0_i32_0 = arith.constant 0 : i32
    return %c0_i32, %arg0 : i32, i32
  }
}

module attributes {stable_mosaic.version = 11 : i64} {
  func.func @_conv_bias_act_kernel(%arg0: i32, %arg1: memref<8192x128xbf16, #tpu.memory_space<vmem>>, %arg2: memref<1x8192xbf16, #tpu.memory_space<vmem>>, %arg3: memref<1x1xf32, #tpu.memory_space<vmem>>, %arg4: memref<1x128xf32, #tpu.memory_space<vmem>>) attributes {dimension_semantics = [#tpu.dimension_semantics<parallel>], iteration_bounds = array<i64: 1>, scalar_prefetch = 0 : i64, scratch_operands = 0 : i64, tpu.core_type = #tpu.core_type<tc>, window_params = [{transform_indices = @transform_0, window_bounds = array<i64: 8192, 128>}, {pipeline_mode = #tpu.pipeline_mode<synchronous>, transform_indices = @transform_1, window_bounds = array<i64: 1, 8192>}, {pipeline_mode = #tpu.pipeline_mode<synchronous>, transform_indices = @transform_2, window_bounds = array<i64: 1, 1>}, {transform_indices = @transform_3, window_bounds = array<i64: 1, 128>}]} {
    %c0 = arith.constant 0 : index
    %c0_0 = arith.constant 0 : index
    %0 = vector.load %arg2[%c0, %c0_0] : memref<1x8192xbf16, #tpu.memory_space<vmem>>, vector<1x8192xbf16>
    %c0_1 = arith.constant 0 : index
    %c0_2 = arith.constant 0 : index
    %1 = vector.load %arg1[%c0_1, %c0_2] : memref<8192x128xbf16, #tpu.memory_space<vmem>>, vector<8192x128xbf16>
    %cst = arith.constant dense<0.000000e+00> : vector<1x128xf32>
    %2 = tpu.matmul %0, %1, %cst {dimension_numbers = #tpu.dot_dimension_numbers<[1], [0], [0], [1], [0, 0, 1, 1], [], []>} : vector<1x8192xbf16>, vector<8192x128xbf16>, vector<1x128xf32> -> vector<1x128xf32>
    %c0_3 = arith.constant 0 : index
    %c0_4 = arith.constant 0 : index
    %3 = vector.load %arg3[%c0_3, %c0_4] : memref<1x1xf32, #tpu.memory_space<vmem>>, vector<1x1xf32>
    %4 = vector.broadcast %3 : vector<1x1xf32> to vector<1x128xf32>
    %5 = arith.addf %2, %4 : vector<1x128xf32>
    %cst_5 = arith.constant 0.000000e+00 : f32
    %6 = vector.broadcast %cst_5 : f32 to vector<1x128xf32>
    %7 = arith.subf %6, %5 : vector<1x128xf32>
    %8 = math.exp %7 : vector<1x128xf32>
    %cst_6 = arith.constant 1.000000e+00 : f32
    %9 = vector.broadcast %cst_6 : f32 to vector<1x128xf32>
    %10 = arith.addf %9, %8 : vector<1x128xf32>
    %cst_7 = arith.constant 1.000000e+00 : f32
    %11 = vector.broadcast %cst_7 : f32 to vector<1x128xf32>
    %12 = arith.divf %11, %10 : vector<1x128xf32>
    %c0_8 = arith.constant 0 : index
    %c0_9 = arith.constant 0 : index
    %13 = vector.load %arg4[%c0_8, %c0_9] : memref<1x128xf32, #tpu.memory_space<vmem>>, vector<1x128xf32>
    tpu.vector_store %arg4[%c0_8, %c0_9], %12 {strides = array<i32>} : memref<1x128xf32, #tpu.memory_space<vmem>>, vector<1x128xf32>,
    return
  }
  func.func @transform_0(%arg0: i32) -> (i32, i32) {
    %c0_i32 = arith.constant 0 : i32
    %c0_i32_0 = arith.constant 0 : i32
    return %c0_i32, %arg0 : i32, i32
  }
  func.func @transform_1(%arg0: i32) -> (i32, i32) {
    %c0_i32 = arith.constant 0 : i32
    %c0_i32_0 = arith.constant 0 : i32
    %c0_i32_1 = arith.constant 0 : i32
    return %c0_i32, %c0_i32_0 : i32, i32
  }
  func.func @transform_2(%arg0: i32) -> (i32, i32) {
    %c0_i32 = arith.constant 0 : i32
    %c0_i32_0 = arith.constant 0 : i32
    %c0_i32_1 = arith.constant 0 : i32
    return %c0_i32, %c0_i32_0 : i32, i32
  }
  func.func @transform_3(%arg0: i32) -> (i32, i32) {
    %c0_i32 = arith.constant 0 : i32
    %c0_i32_0 = arith.constant 0 : i32
    return %c0_i32, %arg0 : i32, i32
  }
}

</mosaic_0001>

<llo_original>
// kernel: adversary_forward.4
$region0: #{adversary_forward.4}
  #allocation0 [shape = 'u32[]', space=smem, size = 0x4, offset = 0x4, fixed_abs, tag = 'smem constant byte address 0x4 - core index']
  #allocation1 [shape = 'u32[144,128]{1,0:T(1,128)}', space=vmem, size = 0x12000, scoped, tag = 'internal scratch']
  %s0 = inlined_call_operand.vmem [shape: bf16[2,128,512], index: 0, kind: input, shape index: {}]
  %s1 = inlined_call_operand.vmem [shape: bf16[32,128], index: 1, kind: input, shape index: {}]
  %s2 = inlined_call_operand.vmem [shape: bf16[2,32,512], index: 2, kind: output, shape index: {}]
  %s3 = sld [smem:[#allocation0]]
  $region41: #{adversary_forward.4} parent=0
    _
  %s5 = ssub.s32 1, %s3
  %s6 = scalar_select 0, %s5, %s3
  loop: start=0, step=1, limit=4
  $region2: #{adversary_forward.4} parent=0 // loop_pre_header
    _
  $region3: #{adversary_forward.4} parent=0 // loop_header
    %s8 = sphi 0, %s12
    %p9 = scmp.ge.s32.totalorder %s8, 4
    %s18 = sphi 0, %s20
    %s21 = sphi 0, %s18
    %s22 = sphi 0, %s21
    %s38 = sphi 0, %s22
    %s42 = sphi 0, %s42
    %s44 = sphi 0, %s42
    %s45 = sphi 0, %s44
    %s59 = sphi 0, %s45
    %s65 = sphi 0, %s67
    %s68 = sphi 0, %s65
    %s69 = sphi 0, %s68
    %s85 = sphi 0, %s69
  $region4: #{adversary_forward.4} parent=0 // loop_header_branch
    %11 = sbr.rel (%p9) target = $region8
  $region5: #{adversary_forward.4} parent=0 // loop_body
    %s13 = ssub.s32 %s8, 1
    %s14 = ssub.s32 %s8, 2
    %s15 = sadd.s32 %s8, 1
    %s16 = ssub.s32 %s8, %s15
    %p17 = scmp.eq.s32.totalorder %s16, 0
    %s19 = sadd.s32 %s18, 1
    %s20 = scalar_select %p17, %s18, %s19
    %p23 = pneg %p17
    %p24 = scmp.eq.s32.totalorder %s8, 1
    %p25 = por %p23, %p24
    %p26 = scmp.ne.s32.totalorder %s18, %s21
    %p27 = scmp.eq.s32.totalorder %s8, 0
    %p28 = por %p26, %p27
    %p29 = scmp.ne.s32.totalorder %s18, %s21
    %p30 = scmp.eq.s32.totalorder %s13, 1
    %p31 = por %p29, %p30
    %p32 = scmp.ne.s32.totalorder %s21, %s22
    %p33 = scmp.eq.s32.totalorder %s13, 0
    %p34 = por %p32, %p33
    %p35 = scmp.ne.s32.totalorder %s21, %s22
    %p36 = scmp.eq.s32.totalorder %s14, 1
    %p37 = por %p35, %p36
    %p39 = scmp.ne.s32.totalorder %s22, %s38
    %p40 = scmp.eq.s32.totalorder %s14, 0
    %p41 = por %p39, %p40
    %s43 = sadd.s32 %s42, 1
    %p46 = scmp.eq.s32.totalorder %s8, 1
    %p47 = scmp.ne.s32.totalorder %s42, %s44
    %p48 = scmp.eq.s32.totalorder %s8, 0
    %p49 = por %p47, %p48
    %p50 = scmp.ne.s32.totalorder %s42, %s44
    %p51 = scmp.eq.s32.totalorder %s13, 1
    %p52 = por %p50, %p51
    %p53 = scmp.ne.s32.totalorder %s44, %s45
    %p54 = scmp.eq.s32.totalorder %s13, 0
    %p55 = por %p53, %p54
    %p56 = scmp.ne.s32.totalorder %s44, %s45
    %p57 = scmp.eq.s32.totalorder %s14, 1
    %p58 = por %p56, %p57
    %p60 = scmp.ne.s32.totalorder %s45, %s59
    %p61 = scmp.eq.s32.totalorder %s14, 0
    %p62 = por %p60, %p61
    %s63 = ssub.s32 %s8, %s15
    %p64 = scmp.eq.s32.totalorder %s63, 0
    %s66 = sadd.s32 %s65, 1
    %s67 = scalar_select %p64, %s65, %s66
    %p70 = pneg %p64
    %p71 = scmp.eq.s32.totalorder %s8, 1
    %p72 = por %p70, %p71
    %p73 = scmp.ne.s32.totalorder %s65, %s68
    %p74 = scmp.eq.s32.totalorder %s8, 0
    %p75 = por %p73, %p74
    %p76 = scmp.ne.s32.totalorder %s65, %s68
    %p77 = scmp.eq.s32.totalorder %s13, 1
    %p78 = por %p76, %p77
    %p79 = scmp.ne.s32.totalorder %s68, %s69
    %p80 = scmp.eq.s32.totalorder %s13, 0
    %p81 = por %p79, %p80
    %p82 = scmp.ne.s32.totalorder %s68, %s69
    %p83 = scmp.eq.s32.totalorder %s14, 1
    %p84 = por %p82, %p83
    %p86 = scmp.ne.s32.totalorder %s69, %s85
    %p87 = scmp.eq.s32.totalorder %s14, 0
    %p88 = por %p86, %p87
    %p89 = scmp.le.s32.totalorder 1, %s8
    %p90 = scmp.lt.s32.totalorder %s8, 3
    %p91 = pnand %p89, %p90
    %p92 = pneg %p91
    // Predicated region
    $region9: #{adversary_forward.4} parent=5 // pred_check
      _
    $region10: #{adversary_forward.4} parent=5 // pred_check_branch
      %94 = sbr.rel (%p91) target = $region12
    $region11: #{adversary_forward.4} parent=5 // pred_region
      %s95 = ssub.s32 %s8, 1
      // Predicated region
      $region13: #{adversary_forward.4} parent=11 // pred_check
        %p96 = pneg %p55
      $region14: #{adversary_forward.4} parent=11 // pred_check_branch
        %98 = sbr.rel (%p96) target = $region16
      $region15: #{adversary_forward.4} parent=11 // pred_region
        _
      $region16: #{adversary_forward.4} parent=11 // pred_fallthru
        _
    $region12: #{adversary_forward.4} parent=5 // pred_fallthru
      _
    %p99 = scmp.lt.s32.totalorder %s8, 2
    // Predicated region
    $region17: #{adversary_forward.4} parent=5 // pred_check
      %p100 = pneg %p99
    $region18: #{adversary_forward.4} parent=5 // pred_check_branch
      %102 = sbr.rel (%p100) target = $region20
    $region19: #{adversary_forward.4} parent=5 // pred_region
      // Predicated region
      $region21: #{adversary_forward.4} parent=19 // pred_check
        %p103 = pneg %p28
      $region22: #{adversary_forward.4} parent=19 // pred_check_branch
        %105 = sbr.rel (%p103) target = $region24
      $region23: #{adversary_forward.4} parent=19 // pred_region
        %p106 = scmp.lt.s32.totalorder %s8, 1
        %s107 = scalar_select %p106, %s8, 1
        %s108 = smul.addr %s107, 64
        %s109 = smul.addr %s108, 4
        %s110 = scalar_lea.vmem %s0, %s109
      $region24: #{adversary_forward.4} parent=19 // pred_fallthru
        _
    $region20: #{adversary_forward.4} parent=5 // pred_fallthru
      _
    %p111 = scmp.le.s32.totalorder 1, %s8
    %p112 = scmp.lt.s32.totalorder %s8, 3
    %p113 = pnand %p111, %p112
    %p114 = pneg %p113
    // Predicated region
    $region25: #{adversary_forward.4} parent=5 // pred_check
      _
    $region26: #{adversary_forward.4} parent=5 // pred_check_branch
      %116 = sbr.rel (%p113) target = $region28
    $region27: #{adversary_forward.4} parent=5 // pred_region
      %s117 = ssub.s32 %s8, 1
      %p118 = scmp.lt.s32.totalorder %s13, 1
      %s119 = scalar_select %p118, %s13, 1
      %s120 = smul.addr %s119, 64
      %s121 = smul.addr %s120, 4
      %s122 = scalar_lea.vmem %s0, %s121
      %p123 = pneg %p34
      %p124 = pneg %p31
      %p125 = pneg %p55
      %p126 = pneg %p52
      %p127 = pneg %p81
      %p128 = pneg %p78
      %p129 = scmp.lt.s32.totalorder %s13, 1
      %s130 = scalar_select %p129, %s13, 1
      %s131 = smul.addr %s130, 16
      %s132 = smul.addr %s131, 4
      %s133 = scalar_lea.vmem %s2, %s132
      %p134 = scmp.lt.s32.totalorder %s13, 1
      %s135 = scalar_select %p134, %s13, 1
      %s136 = smul.addr %s135, 64
      %s137 = smul.addr %s136, 4
      %s138 = scalar_lea.vmem %s0, %s137
      %p139 = scmp.lt.s32.totalorder %s13, 1
      %s140 = scalar_select %p139, %s13, 1
      %s141 = smul.addr %s140, 16
      %s142 = smul.addr %s141, 4
      %s143 = scalar_lea.vmem %s2, %s142
      %v145 = vld [vmem:[%s1] sm:$0xf]
      %v146 = vld [vmem:[%s1 + $0x4] sm:$0xf]
      %v147 = vld [vmem:[%s1 + $0x8] sm:$0xf]
      %v148 = vld [vmem:[%s1 + $0xc] sm:$0xf]
      %v149 = vld [vmem:[%s138] sm:$0xff]
      %v150 = vld [vmem:[%s138 + $0x8] sm:$0xff]
      %v151 = vld [vmem:[%s138 + $0x10] sm:$0xff]
      %v152 = vld [vmem:[%s138 + $0x18] sm:$0xff]
      %v153 = vld [vmem:[%s138 + $0x20] sm:$0xff]
      %v154 = vld [vmem:[%s138 + $0x28] sm:$0xff]
      %v155 = vld [vmem:[%s138 + $0x30] sm:$0xff]
      %v156 = vld [vmem:[%s138 + $0x38] sm:$0xff]
      %v157 = vld [vmem:[%s138 + $0x40] sm:$0xff]
      %v158 = vld [vmem:[%s138 + $0x48] sm:$0xff]
      %v159 = vld [vmem:[%s138 + $0x50] sm:$0xff]
      %v160 = vld [vmem:[%s138 + $0x58] sm:$0xff]
      %v161 = vld [vmem:[%s138 + $0x60] sm:$0xff]
      %v162 = vld [vmem:[%s138 + $0x68] sm:$0xff]
      %v163 = vld [vmem:[%s138 + $0x70] sm:$0xff]
      %v164 = vld [vmem:[%s138 + $0x78] sm:$0xff]
      %v165 = vld [vmem:[%s138 + $0x80] sm:$0xff]
      %v166 = vld [vmem:[%s138 + $0x88] sm:$0xff]
      %v167 = vld [vmem:[%s138 + $0x90] sm:$0xff]
      %v168 = vld [vmem:[%s138 + $0x98] sm:$0xff]
      %v169 = vld [vmem:[%s138 + $0xa0] sm:$0xff]
      %v170 = vld [vmem:[%s138 + $0xa8] sm:$0xff]
      %v171 = vld [vmem:[%s138 + $0xb0] sm:$0xff]
      %v172 = vld [vmem:[%s138 + $0xb8] sm:$0xff]
      %v173 = vld [vmem:[%s138 + $0xc0] sm:$0xff]
      %v174 = vld [vmem:[%s138 + $0xc8] sm:$0xff]
      %v175 = vld [vmem:[%s138 + $0xd0] sm:$0xff]
      %v176 = vld [vmem:[%s138 + $0xd8] sm:$0xff]
      %v177 = vld [vmem:[%s138 + $0xe0] sm:$0xff]
      %v178 = vld [vmem:[%s138 + $0xe8] sm:$0xff]
      %v179 = vld [vmem:[%s138 + $0xf0] sm:$0xff]
      %v180 = vld [vmem:[%s138 + $0xf8] sm:$0xff]
      %v185 = vunpack.c.l.b16 %v145
      %v186 = vunpack.c.l.b16 %v146
      %v187 = vunpack.c.l.b16 %v147
      %v188 = vunpack.c.l.b16 %v148
      %v189 = vpack.c.b16 %v186, %v185
      %v190 = vpack.c.b16 %v188, %v187
      %v225 = vunpack.c.l.b16 %v149
      %v226 = vunpack.c.h.b16 %v149
      %v227 = vunpack.c.l.b16 %v150
      %v228 = vunpack.c.h.b16 %v150
      %v229 = vunpack.c.l.b16 %v151
      %v230 = vunpack.c.h.b16 %v151
      %v231 = vunpack.c.l.b16 %v152
      %v232 = vunpack.c.h.b16 %v152
      %v233 = vunpack.c.l.b16 %v153
      %v234 = vunpack.c.h.b16 %v153
      %v235 = vunpack.c.l.b16 %v154
      %v236 = vunpack.c.h.b16 %v154
      %v237 = vunpack.c.l.b16 %v155
      %v238 = vunpack.c.h.b16 %v155
      %v239 = vunpack.c.l.b16 %v156
      %v240 = vunpack.c.h.b16 %v156
      %v241 = vunpack.c.l.b16 %v157
      %v242 = vunpack.c.h.b16 %v157
      %v243 = vunpack.c.l.b16 %v158
      %v244 = vunpack.c.h.b16 %v158
      %v245 = vunpack.c.l.b16 %v159
      %v246 = vunpack.c.h.b16 %v159
      %v247 = vunpack.c.l.b16 %v160
      %v248 = vunpack.c.h.b16 %v160
      %v249 = vunpack.c.l.b16 %v161
      %v250 = vunpack.c.h.b16 %v161
      %v251 = vunpack.c.l.b16 %v162
      %v252 = vunpack.c.h.b16 %v162
      %v253 = vunpack.c.l.b16 %v163
      %v254 = vunpack.c.h.b16 %v163
      %v255 = vunpack.c.l.b16 %v164
      %v256 = vunpack.c.h.b16 %v164
      %v257 = vunpack.c.l.b16 %v165
      %v258 = vunpack.c.h.b16 %v165
      %v259 = vunpack.c.l.b16 %v166
      %v260 = vunpack.c.h.b16 %v166
      %v261 = vunpack.c.l.b16 %v167
      %v262 = vunpack.c.h.b16 %v167
      %v263 = vunpack.c.l.b16 %v168
      %v264 = vunpack.c.h.b16 %v168
      %v265 = vunpack.c.l.b16 %v169
      %v266 = vunpack.c.h.b16 %v169
      %v267 = vunpack.c.l.b16 %v170
      %v268 = vunpack.c.h.b16 %v170
      %v269 = vunpack.c.l.b16 %v171
      %v270 = vunpack.c.h.b16 %v171
      %v271 = vunpack.c.l.b16 %v172
      %v272 = vunpack.c.h.b16 %v172
      %v273 = vunpack.c.l.b16 %v173
      %v274 = vunpack.c.h.b16 %v173
      %v275 = vunpack.c.l.b16 %v174
      %v276 = vunpack.c.h.b16 %v174
      %v277 = vunpack.c.l.b16 %v175
      %v278 = vunpack.c.h.b16 %v175
      %v279 = vunpack.c.l.b16 %v176
      %v280 = vunpack.c.h.b16 %v176
      %v281 = vunpack.c.l.b16 %v177
      %v282 = vunpack.c.h.b16 %v177
      %v283 = vunpack.c.l.b16 %v178
      %v284 = vunpack.c.h.b16 %v178
      %v285 = vunpack.c.l.b16 %v179
      %v286 = vunpack.c.h.b16 %v179
      %v287 = vunpack.c.l.b16 %v180
      %v288 = vunpack.c.h.b16 %v180
      %v289 = vpack.c.b16 %v229, %v225
      %v290 = vpack.c.b16 %v230, %v226
      %v291 = vpack.c.b16 %v231, %v227
      %v292 = vpack.c.b16 %v232, %v228
      %v293 = vpack.c.b16 %v237, %v233
      %v294 = vpack.c.b16 %v238, %v234
      %v295 = vpack.c.b16 %v239, %v235
      %v296 = vpack.c.b16 %v240, %v236
      %v297 = vpack.c.b16 %v245, %v241
      %v298 = vpack.c.b16 %v246, %v242
      %v299 = vpack.c.b16 %v247, %v243
      %v300 = vpack.c.b16 %v248, %v244
      %v301 = vpack.c.b16 %v253, %v249
      %v302 = vpack.c.b16 %v254, %v250
      %v303 = vpack.c.b16 %v255, %v251
      %v304 = vpack.c.b16 %v256, %v252
      %v305 = vpack.c.b16 %v261, %v257
      %v306 = vpack.c.b16 %v262, %v258
      %v307 = vpack.c.b16 %v263, %v259
      %v308 = vpack.c.b16 %v264, %v260
      %v309 = vpack.c.b16 %v269, %v265
      %v310 = vpack.c.b16 %v270, %v266
      %v311 = vpack.c.b16 %v271, %v267
      %v312 = vpack.c.b16 %v272, %v268
      %v313 = vpack.c.b16 %v277, %v273
      %v314 = vpack.c.b16 %v278, %v274
      %v315 = vpack.c.b16 %v279, %v275
      %v316 = vpack.c.b16 %v280, %v276
      %v317 = vpack.c.b16 %v285, %v281
      %v318 = vpack.c.b16 %v286, %v282
      %v319 = vpack.c.b16 %v287, %v283
      %v320 = vpack.c.b16 %v288, %v284
      %353 = vmatprep.subr.bf16.mxu0 %v290
      %354 = vmatpush1.bf16.msra.mxu0 %v289
      %355 = vmatprep.subr.bf16.mxu0 %v294
      %356 = vmatpush1.bf16.msra.mxu0 %v293
      %357 = vmatprep.subr.bf16.mxu0 %v298
      %358 = vmatpush1.bf16.msra.mxu0 %v297
      %359 = vmatprep.subr.bf16.mxu0 %v302
      %360 = vmatpush1.bf16.msra.mxu0 %v301
      %361 = vmatprep.subr.bf16.mxu0 %v306
      %362 = vmatpush1.bf16.msra.mxu0 %v305
      %363 = vmatprep.subr.bf16.mxu0 %v310
      %364 = vmatpush1.bf16.msra.mxu0 %v309
      %365 = vmatprep.subr.bf16.mxu0 %v314
      %366 = vmatpush1.bf16.msra.mxu0 %v313
      %367 = vmatprep.subr.bf16.mxu0 %v318
      %368 = vmatpush1.bf16.msra.mxu0 %v317
      %369 = vmatprep.subr.bf16.mxu0 0
      %370 = vmatpush1.bf16.msra.mxu0 0
      %371 = vmatprep.subr.bf16.mxu0 0
      %372 = vmatpush1.bf16.msra.mxu0 0
      %373 = vmatprep.subr.bf16.mxu0 0
      %374 = vmatpush1.bf16.msra.mxu0 0
      %375 = vmatprep.subr.bf16.mxu0 0
      %376 = vmatpush1.bf16.msra.mxu0 0
      %377 = vmatprep.subr.bf16.mxu0 0
      %378 = vmatpush1.bf16.msra.mxu0 0
      %379 = vmatprep.subr.bf16.mxu0 0
      %380 = vmatpush1.bf16.msra.mxu0 0
      %381 = vmatprep.subr.bf16.mxu0 0
      %382 = vmatpush1.bf16.msra.mxu0 0
      %383 = vmatprep.subr.bf16.mxu0 0
      %384 = vmatpush1.bf16.msra.mxu0 0
      %385 = vmatprep.mubr.bf16.mxu0 0
      %386 = vmatmul.mubr.bf16.gmra.mrb[0].mxu0 %v189
      %v387 = vpop.f32.mrb[0].mxu0
      %v388 = vadd.f32 0.0, %v387
      %v389 = vpop.f32.mrb[0].mxu0
      %v390 = vadd.f32 0.0, %v389
      %v391 = vpop.f32.mrb[0].mxu0
      %v392 = vadd.f32 0.0, %v391
      %v393 = vpop.f32.mrb[0].mxu0
      %v394 = vadd.f32 0.0, %v393
      %395 = vmatprep.mubr.bf16.mxu0 0
      %396 = vmatmul.mubr.bf16.gmra.mrb[0].mxu0 %v190
      %v397 = vpop.f32.mrb[0].mxu0
      %v398 = vadd.f32 0.0, %v397
      %v399 = vpop.f32.mrb[0].mxu0
      %v400 = vadd.f32 0.0, %v399
      %v401 = vpop.f32.mrb[0].mxu0
      %v402 = vadd.f32 0.0, %v401
      %v403 = vpop.f32.mrb[0].mxu0
      %v404 = vadd.f32 0.0, %v403
      %405 = vdwg.mxu0
      %406 = vmatprep.subr.bf16.mxu0 %v292
      %407 = vmatpush1.bf16.msra.mxu0 %v291
      %408 = vmatprep.subr.bf16.mxu0 %v296
      %409 = vmatpush1.bf16.msra.mxu0 %v295
      %410 = vmatprep.subr.bf16.mxu0 %v300
      %411 = vmatpush1.bf16.msra.mxu0 %v299
      %412 = vmatprep.subr.bf16.mxu0 %v304
      %413 = vmatpush1.bf16.msra.mxu0 %v303
      %414 = vmatprep.subr.bf16.mxu0 %v308
      %415 = vmatpush1.bf16.msra.mxu0 %v307
      %416 = vmatprep.subr.bf16.mxu0 %v312
      %417 = vmatpush1.bf16.msra.mxu0 %v311
      %418 = vmatprep.subr.bf16.mxu0 %v316
      %419 = vmatpush1.bf16.msra.mxu0 %v315
      %420 = vmatprep.subr.bf16.mxu0 %v320
      %421 = vmatpush1.bf16.msra.mxu0 %v319
      %422 = vmatprep.subr.bf16.mxu0 0
      %423 = vmatpush1.bf16.msra.mxu0 0
      %424 = vmatprep.subr.bf16.mxu0 0
      %425 = vmatpush1.bf16.msra.mxu0 0
      %426 = vmatprep.subr.bf16.mxu0 0
      %427 = vmatpush1.bf16.msra.mxu0 0
      %428 = vmatprep.subr.bf16.mxu0 0
      %429 = vmatpush1.bf16.msra.mxu0 0
      %430 = vmatprep.subr.bf16.mxu0 0
      %431 = vmatpush1.bf16.msra.mxu0 0
      %432 = vmatprep.subr.bf16.mxu0 0
      %433 = vmatpush1.bf16.msra.mxu0 0
      %434 = vmatprep.subr.bf16.mxu0 0
      %435 = vmatpush1.bf16.msra.mxu0 0
      %436 = vmatprep.subr.bf16.mxu0 0
      %437 = vmatpush1.bf16.msra.mxu0 0
      %438 = vmatprep.mubr.bf16.mxu0 0
      %439 = vmatmul.mubr.bf16.gmra.mrb[0].mxu0 %v189
      %v440 = vpop.f32.mrb[0].mxu0
      %v441 = vadd.f32 0.0, %v440
      %v442 = vpop.f32.mrb[0].mxu0
      %v443 = vadd.f32 0.0, %v442
      %v444 = vpop.f32.mrb[0].mxu0
      %v445 = vadd.f32 0.0, %v444
      %v446 = vpop.f32.mrb[0].mxu0
      %v447 = vadd.f32 0.0, %v446
      %448 = vmatprep.mubr.bf16.mxu0 0
      %449 = vmatmul.mubr.bf16.gmra.mrb[0].mxu0 %v190
      %v450 = vpop.f32.mrb[0].mxu0
      %v451 = vadd.f32 0.0, %v450
      %v452 = vpop.f32.mrb[0].mxu0
      %v453 = vadd.f32 0.0, %v452
      %v454 = vpop.f32.mrb[0].mxu0
      %v455 = vadd.f32 0.0, %v454
      %v456 = vpop.f32.mrb[0].mxu0
      %v457 = vadd.f32 0.0, %v456
      %458 = vdwg.mxu0
      %v459 = vadd.f32 %v388, %v390
      %v460 = vadd.f32 %v459, %v441
      %v461 = vadd.f32 %v460, %v443
      %462 = vadd.xlane.f32.xlu0 %v461
      %v463 = vpop.xlane.xlu0 %462
      %v464 = vadd.f32 %v392, %v394
      %v465 = vadd.f32 %v464, %v445
      %v466 = vadd.f32 %v465, %v447
      %467 = vadd.xlane.f32.xlu0 %v466
      %v468 = vpop.xlane.xlu0 %467
      %v469 = vadd.f32 %v398, %v400
      %v470 = vadd.f32 %v469, %v451
      %v471 = vadd.f32 %v470, %v453
      %472 = vadd.xlane.f32.xlu0 %v471
      %v473 = vpop.xlane.xlu0 %472
      %v474 = vadd.f32 %v402, %v404
      %v475 = vadd.f32 %v474, %v455
      %v476 = vadd.f32 %v475, %v457
      %477 = vadd.xlane.f32.xlu0 %v476
      %v478 = vpop.xlane.xlu0 %477
      %v479 = vrcp.pop 512.0
      %v480 = vmul.f32 %v463, %v479
      %v481 = vmul.f32 %v468, %v479
      %v482 = vmul.f32 %v473, %v479
      %v483 = vmul.f32 %v478, %v479
      %v484 = vsub.f32 %v388, %v480
      %v485 = vsub.f32 %v390, %v480
      %v486 = vsub.f32 %v441, %v480
      %v487 = vsub.f32 %v443, %v480
      %v488 = vsub.f32 %v392, %v481
      %v489 = vsub.f32 %v394, %v481
      %v490 = vsub.f32 %v445, %v481
      %v491 = vsub.f32 %v447, %v481
      %v492 = vsub.f32 %v398, %v482
      %v493 = vsub.f32 %v400, %v482
      %v494 = vsub.f32 %v451, %v482
      %v495 = vsub.f32 %v453, %v482
      %v496 = vsub.f32 %v402, %v483
      %v497 = vsub.f32 %v404, %v483
      %v498 = vsub.f32 %v455, %v483
      %v499 = vsub.f32 %v457, %v483
      %v500 = vmul.f32 %v484, %v484
      %v501 = vmul.f32 %v485, %v485
      %v502 = vmul.f32 %v486, %v486
      %v503 = vmul.f32 %v487, %v487
      %v504 = vmul.f32 %v488, %v488
      %v505 = vmul.f32 %v489, %v489
      %v506 = vmul.f32 %v490, %v490
      %v507 = vmul.f32 %v491, %v491
      %v508 = vmul.f32 %v492, %v492
      %v509 = vmul.f32 %v493, %v493
      %v510 = vmul.f32 %v494, %v494
      %v511 = vmul.f32 %v495, %v495
      %v512 = vmul.f32 %v496, %v496
      %v513 = vmul.f32 %v497, %v497
      %v514 = vmul.f32 %v498, %v498
      %v515 = vmul.f32 %v499, %v499
      %v516 = vadd.f32 %v500, %v501
      %v517 = vadd.f32 %v516, %v502
      %v518 = vadd.f32 %v517, %v503
      %519 = vadd.xlane.f32.xlu0 %v518
      %v520 = vpop.xlane.xlu0 %519
      %v521 = vadd.f32 %v504, %v505
      %v522 = vadd.f32 %v521, %v506
      %v523 = vadd.f32 %v522, %v507
      %524 = vadd.xlane.f32.xlu0 %v523
      %v525 = vpop.xlane.xlu0 %524
      %v526 = vadd.f32 %v508, %v509
      %v527 = vadd.f32 %v526, %v510
      %v528 = vadd.f32 %v527, %v511
      %529 = vadd.xlane.f32.xlu0 %v528
      %v530 = vpop.xlane.xlu0 %529
      %v531 = vadd.f32 %v512, %v513
      %v532 = vadd.f32 %v531, %v514
      %v533 = vadd.f32 %v532, %v515
      %534 = vadd.xlane.f32.xlu0 %v533
      %v535 = vpop.xlane.xlu0 %534
      %v536 = vmul.f32 %v520, %v479
      %v537 = vmul.f32 %v525, %v479
      %v538 = vmul.f32 %v530, %v479
      %v539 = vmul.f32 %v535, %v479
      %v540 = vadd.f32 %v536, 1e-05
      %v541 = vadd.f32 %v537, 1e-05
      %v542 = vadd.f32 %v538, 1e-05
      %v543 = vadd.f32 %v539, 1e-05
      %v544 = vrsqrt.pop %v540
      %v545 = vrsqrt.pop %v541
      %v546 = vrsqrt.pop %v542
      %v547 = vrsqrt.pop %v543
      %v548 = vmul.f32 %v484, %v544
      %v549 = vmul.f32 %v485, %v544
      %v550 = vmul.f32 %v486, %v544
      %v551 = vmul.f32 %v487, %v544
      %v552 = vmul.f32 %v488, %v545
      %v553 = vmul.f32 %v489, %v545
      %v554 = vmul.f32 %v490, %v545
      %v555 = vmul.f32 %v491, %v545
      %v556 = vmul.f32 %v492, %v546
      %v557 = vmul.f32 %v493, %v546
      %v558 = vmul.f32 %v494, %v546
      %v559 = vmul.f32 %v495, %v546
      %v560 = vmul.f32 %v496, %v547
      %v561 = vmul.f32 %v497, %v547
      %v562 = vmul.f32 %v498, %v547
      %v563 = vmul.f32 %v499, %v547
      %vm564 = vcmp.gt.f32.partialorder %v548, 0.0
      %vm565 = vcmp.gt.f32.partialorder %v549, 0.0
      %vm566 = vcmp.gt.f32.partialorder %v550, 0.0
      %vm567 = vcmp.gt.f32.partialorder %v551, 0.0
      %vm568 = vcmp.gt.f32.partialorder %v552, 0.0
      %vm569 = vcmp.gt.f32.partialorder %v553, 0.0
      %vm570 = vcmp.gt.f32.partialorder %v554, 0.0
      %vm571 = vcmp.gt.f32.partialorder %v555, 0.0
      %vm572 = vcmp.gt.f32.partialorder %v556, 0.0
      %vm573 = vcmp.gt.f32.partialorder %v557, 0.0
      %vm574 = vcmp.gt.f32.partialorder %v558, 0.0
      %vm575 = vcmp.gt.f32.partialorder %v559, 0.0
      %vm576 = vcmp.gt.f32.partialorder %v560, 0.0
      %vm577 = vcmp.gt.f32.partialorder %v561, 0.0
      %vm578 = vcmp.gt.f32.partialorder %v562, 0.0
      %vm579 = vcmp.gt.f32.partialorder %v563, 0.0
      %v580 = vmul.f32 %v548, 0.2
      %v581 = vmul.f32 %v549, 0.2
      %v582 = vmul.f32 %v550, 0.2
      %v583 = vmul.f32 %v551, 0.2
      %v584 = vmul.f32 %v552, 0.2
      %v585 = vmul.f32 %v553, 0.2
      %v586 = vmul.f32 %v554, 0.2
      %v587 = vmul.f32 %v555, 0.2
      %v588 = vmul.f32 %v556, 0.2
      %v589 = vmul.f32 %v557, 0.2
      %v590 = vmul.f32 %v558, 0.2
      %v591 = vmul.f32 %v559, 0.2
      %v592 = vmul.f32 %v560, 0.2
      %v593 = vmul.f32 %v561, 0.2
      %v594 = vmul.f32 %v562, 0.2
      %v595 = vmul.f32 %v563, 0.2
      %v596 = vsel %vm564, %v548, %v580
      %v597 = vsel %vm565, %v549, %v581
      %v598 = vsel %vm566, %v550, %v582
      %v599 = vsel %vm567, %v551, %v583
      %v600 = vsel %vm568, %v552, %v584
      %v601 = vsel %vm569, %v553, %v585
      %v602 = vsel %vm570, %v554, %v586
      %v603 = vsel %vm571, %v555, %v587
      %v604 = vsel %vm572, %v556, %v588
      %v605 = vsel %vm573, %v557, %v589
      %v606 = vsel %vm574, %v558, %v590
      %v607 = vsel %vm575, %v559, %v591
      %v608 = vsel %vm576, %v560, %v592
      %v609 = vsel %vm577, %v561, %v593
      %v610 = vsel %vm578, %v562, %v594
      %v611 = vsel %vm579, %v563, %v595
      %v612 = vpack.c.bf16 %v600, %v596
      %v613 = vpack.c.bf16 %v601, %v597
      %v614 = vpack.c.bf16 %v602, %v598
      %v615 = vpack.c.bf16 %v603, %v599
      %v616 = vpack.c.bf16 %v608, %v604
      %v617 = vpack.c.bf16 %v609, %v605
      %v618 = vpack.c.bf16 %v610, %v606
      %v619 = vpack.c.bf16 %v611, %v607
      %v628 = vunpack.c.l.b16 %v612
      %v629 = vunpack.c.l.b16 %v613
      %v630 = vunpack.c.l.b16 %v614
      %v631 = vunpack.c.l.b16 %v615
      %v632 = vunpack.c.h.b16 %v612
      %v633 = vunpack.c.h.b16 %v613
      %v634 = vunpack.c.h.b16 %v614
      %v635 = vunpack.c.h.b16 %v615
      %v636 = vunpack.c.l.b16 %v616
      %v637 = vunpack.c.l.b16 %v617
      %v638 = vunpack.c.l.b16 %v618
      %v639 = vunpack.c.l.b16 %v619
      %v640 = vunpack.c.h.b16 %v616
      %v641 = vunpack.c.h.b16 %v617
      %v642 = vunpack.c.h.b16 %v618
      %v643 = vunpack.c.h.b16 %v619
      %v644 = vpack.c.b16 %v629, %v628
      %v645 = vpack.c.b16 %v631, %v630
      %v646 = vpack.c.b16 %v633, %v632
      %v647 = vpack.c.b16 %v635, %v634
      %v648 = vpack.c.b16 %v637, %v636
      %v649 = vpack.c.b16 %v639, %v638
      %v650 = vpack.c.b16 %v641, %v640
      %v651 = vpack.c.b16 %v643, %v642
      %660 = vst [vmem:[%s143] sm:$0xff] %v644
      %661 = vst [vmem:[%s143 + $0x8] sm:$0xff] %v645
      %662 = vst [vmem:[%s143 + $0x10] sm:$0xff] %v646
      %663 = vst [vmem:[%s143 + $0x18] sm:$0xff] %v647
      %664 = vst [vmem:[%s143 + $0x20] sm:$0xff] %v648
      %665 = vst [vmem:[%s143 + $0x28] sm:$0xff] %v649
      %666 = vst [vmem:[%s143 + $0x30] sm:$0xff] %v650
      %667 = vst [vmem:[%s143 + $0x38] sm:$0xff] %v651
      %p668 = scmp.lt.s32.totalorder %s13, 1
      %s669 = scalar_select %p668, %s13, 1
      %s670 = smul.addr %s669, 16
      %s671 = smul.addr %s670, 4
      %s672 = scalar_lea.vmem %s2, %s671
      // Predicated region
      $region29: #{adversary_forward.4} parent=27 // pred_check
        %p673 = pneg %p78
      $region30: #{adversary_forward.4} parent=27 // pred_check_branch
        %675 = sbr.rel (%p673) target = $region32
      $region31: #{adversary_forward.4} parent=27 // pred_region
        _
      $region32: #{adversary_forward.4} parent=27 // pred_fallthru
        _
    $region28: #{adversary_forward.4} parent=5 // pred_fallthru
      _
    %p676 = scmp.le.s32.totalorder 2, %s8
    // Predicated region
    $region33: #{adversary_forward.4} parent=5 // pred_check
      %p677 = pneg %p676
    $region34: #{adversary_forward.4} parent=5 // pred_check_branch
      %679 = sbr.rel (%p677) target = $region36
    $region35: #{adversary_forward.4} parent=5 // pred_region
      %s680 = ssub.s32 %s8, 2
      // Predicated region
      $region37: #{adversary_forward.4} parent=35 // pred_check
        %p681 = pneg %p84
      $region38: #{adversary_forward.4} parent=35 // pred_check_branch
        %683 = sbr.rel (%p681) target = $region40
      $region39: #{adversary_forward.4} parent=35 // pred_region
        %p684 = scmp.lt.s32.totalorder %s14, 1
        %s685 = scalar_select %p684, %s14, 1
        %s686 = smul.addr %s685, 16
        %s687 = smul.addr %s686, 4
        %s688 = scalar_lea.vmem %s2, %s687
      $region40: #{adversary_forward.4} parent=35 // pred_fallthru
        _
    $region36: #{adversary_forward.4} parent=5 // pred_fallthru
      _
  $region6: #{adversary_forward.4} parent=0 // loop_footer
    %s12 = sadd.s32 1, %s8
  $region7: #{adversary_forward.4} parent=0 // loop_footer_branch
    %7 = sbr.rel target = $region3
  $region8: #{adversary_forward.4} parent=0 // loop_exit
    _

// kernel: adversary_forward.5
$region0: #{adversary_forward.5}
  #allocation0 [shape = 'u32[]', space=smem, size = 0x4, offset = 0x4, fixed_abs, tag = 'smem constant byte address 0x4 - core index']
  #allocation1 [shape = 'u32[144,128]{1,0:T(1,128)}', space=vmem, size = 0x12000, scoped, tag = 'internal scratch']
  %s0 = inlined_call_operand.vmem [shape: bf16[2048,128], index: 0, kind: input, shape index: {}]
  %s1 = inlined_call_operand.vmem [shape: bf16[64,2048], index: 1, kind: input, shape index: {}]
  %s2 = inlined_call_operand.vmem [shape: f32[64,1], index: 2, kind: input, shape index: {}]
  %s3 = inlined_call_operand.vmem [shape: bf16[64,128], index: 3, kind: output, shape index: {}]
  %s4 = sld [smem:[#allocation0]]
  $region22: #{adversary_forward.5} parent=0
    _
  %s6 = ssub.s32 1, %s4
  %s7 = scalar_select 0, %s6, %s4
  // Predicated region
  $region2: #{adversary_forward.5} parent=0 // pred_check
    _
  $region3: #{adversary_forward.5} parent=0 // pred_check_branch
    %9 = sbr.rel (0) target = $region5
  $region4: #{adversary_forward.5} parent=0 // pred_region
    _
  $region5: #{adversary_forward.5} parent=0 // pred_fallthru
    _
  // Predicated region
  $region6: #{adversary_forward.5} parent=0 // pred_check
    _
  $region7: #{adversary_forward.5} parent=0 // pred_check_branch
    %11 = sbr.rel (0) target = $region9
  $region8: #{adversary_forward.5} parent=0 // pred_region
    _
  $region9: #{adversary_forward.5} parent=0 // pred_fallthru
    _
  // Predicated region
  $region10: #{adversary_forward.5} parent=0 // pred_check
    _
  $region11: #{adversary_forward.5} parent=0 // pred_check_branch
    %13 = sbr.rel (0) target = $region13
  $region12: #{adversary_forward.5} parent=0 // pred_region
    _
  $region13: #{adversary_forward.5} parent=0 // pred_fallthru
    _
  %v15 = vld [vmem:[%s1] sm:$0xff]
  %v16 = vld [vmem:[%s1 + $0x8] sm:$0xff]
  %v17 = vld [vmem:[%s1 + $0x10] sm:$0xff]
  %v18 = vld [vmem:[%s1 + $0x18] sm:$0xff]
  %v19 = vld [vmem:[%s1 + $0x20] sm:$0xff]
  %v20 = vld [vmem:[%s1 + $0x28] sm:$0xff]
  %v21 = vld [vmem:[%s1 + $0x30] sm:$0xff]
  %v22 = vld [vmem:[%s1 + $0x38] sm:$0xff]
  %v23 = vld [vmem:[%s1 + $0x40] sm:$0xff]
  %v24 = vld [vmem:[%s1 + $0x48] sm:$0xff]
  %v25 = vld [vmem:[%s1 + $0x50] sm:$0xff]
  %v26 = vld [vmem:[%s1 + $0x58] sm:$0xff]
  %v27 = vld [vmem:[%s1 + $0x60] sm:$0xff]
  %v28 = vld [vmem:[%s1 + $0x68] sm:$0xff]
  %v29 = vld [vmem:[%s1 + $0x70] sm:$0xff]
  %v30 = vld [vmem:[%s1 + $0x78] sm:$0xff]
  %v31 = vld [vmem:[%s1 + $0x80] sm:$0xff]
  %v32 = vld [vmem:[%s1 + $0x88] sm:$0xff]
  %v33 = vld [vmem:[%s1 + $0x90] sm:$0xff]
  %v34 = vld [vmem:[%s1 + $0x98] sm:$0xff]
  %v35 = vld [vmem:[%s1 + $0xa0] sm:$0xff]
  %v36 = vld [vmem:[%s1 + $0xa8] sm:$0xff]
  %v37 = vld [vmem:[%s1 + $0xb0] sm:$0xff]
  %v38 = vld [vmem:[%s1 + $0xb8] sm:$0xff]
  %v39 = vld [vmem:[%s1 + $0xc0] sm:$0xff]
  %v40 = vld [vmem:[%s1 + $0xc8] sm:$0xff]
  %v41 = vld [vmem:[%s1 + $0xd0] sm:$0xff]
  %v42 = vld [vmem:[%s1 + $0xd8] sm:$0xff]
  %v43 = vld [vmem:[%s1 + $0xe0] sm:$0xff]
  %v44 = vld [vmem:[%s1 + $0xe8] sm:$0xff]
  %v45 = vld [vmem:[%s1 + $0xf0] sm:$0xff]
  %v46 = vld [vmem:[%s1 + $0xf8] sm:$0xff]
  %v47 = vld [vmem:[%s1 + $0x100] sm:$0xff]
  %v48 = vld [vmem:[%s1 + $0x108] sm:$0xff]
  %v49 = vld [vmem:[%s1 + $0x110] sm:$0xff]
  %v50 = vld [vmem:[%s1 + $0x118] sm:$0xff]
  %v51 = vld [vmem:[%s1 + $0x120] sm:$0xff]
  %v52 = vld [vmem:[%s1 + $0x128] sm:$0xff]
  %v53 = vld [vmem:[%s1 + $0x130] sm:$0xff]
  %v54 = vld [vmem:[%s1 + $0x138] sm:$0xff]
  %v55 = vld [vmem:[%s1 + $0x140] sm:$0xff]
  %v56 = vld [vmem:[%s1 + $0x148] sm:$0xff]
  %v57 = vld [vmem:[%s1 + $0x150] sm:$0xff]
  %v58 = vld [vmem:[%s1 + $0x158] sm:$0xff]
  %v59 = vld [vmem:[%s1 + $0x160] sm:$0xff]
  %v60 = vld [vmem:[%s1 + $0x168] sm:$0xff]
  %v61 = vld [vmem:[%s1 + $0x170] sm:$0xff]
  %v62 = vld [vmem:[%s1 + $0x178] sm:$0xff]
  %v63 = vld [vmem:[%s1 + $0x180] sm:$0xff]
  %v64 = vld [vmem:[%s1 + $0x188] sm:$0xff]
  %v65 = vld [vmem:[%s1 + $0x190] sm:$0xff]
  %v66 = vld [vmem:[%s1 + $0x198] sm:$0xff]
  %v67 = vld [vmem:[%s1 + $0x1a0] sm:$0xff]
  %v68 = vld [vmem:[%s1 + $0x1a8] sm:$0xff]
  %v69 = vld [vmem:[%s1 + $0x1b0] sm:$0xff]
  %v70 = vld [vmem:[%s1 + $0x1b8] sm:$0xff]
  %v71 = vld [vmem:[%s1 + $0x1c0] sm:$0xff]
  %v72 = vld [vmem:[%s1 + $0x1c8] sm:$0xff]
  %v73 = vld [vmem:[%s1 + $0x1d0] sm:$0xff]
  %v74 = vld [vmem:[%s1 + $0x1d8] sm:$0xff]
  %v75 = vld [vmem:[%s1 + $0x1e0] sm:$0xff]
  %v76 = vld [vmem:[%s1 + $0x1e8] sm:$0xff]
  %v77 = vld [vmem:[%s1 + $0x1f0] sm:$0xff]
  %v78 = vld [vmem:[%s1 + $0x1f8] sm:$0xff]
  %v79 = vld [vmem:[%s0] sm:$0xf]
  %v80 = vld [vmem:[%s0 + $0x4] sm:$0xf]
  %v81 = vld [vmem:[%s0 + $0x8] sm:$0xf]
  %v82 = vld [vmem:[%s0 + $0xc] sm:$0xf]
  %v83 = vld [vmem:[%s0 + $0x10] sm:$0xf]
  %v84 = vld [vmem:[%s0 + $0x14] sm:$0xf]
  %v85 = vld [vmem:[%s0 + $0x18] sm:$0xf]
  %v86 = vld [vmem:[%s0 + $0x1c] sm:$0xf]
  %v87 = vld [vmem:[%s0 + $0x20] sm:$0xf]
  %v88 = vld [vmem:[%s0 + $0x24] sm:$0xf]
  %v89 = vld [vmem:[%s0 + $0x28] sm:$0xf]
  %v90 = vld [vmem:[%s0 + $0x2c] sm:$0xf]
  %v91 = vld [vmem:[%s0 + $0x30] sm:$0xf]
  %v92 = vld [vmem:[%s0 + $0x34] sm:$0xf]
  %v93 = vld [vmem:[%s0 + $0x38] sm:$0xf]
  %v94 = vld [vmem:[%s0 + $0x3c] sm:$0xf]
  %v95 = vld [vmem:[%s0 + $0x40] sm:$0xf]
  %v96 = vld [vmem:[%s0 + $0x44] sm:$0xf]
  %v97 = vld [vmem:[%s0 + $0x48] sm:$0xf]
  %v98 = vld [vmem:[%s0 + $0x4c] sm:$0xf]
  %v99 = vld [vmem:[%s0 + $0x50] sm:$0xf]
  %v100 = vld [vmem:[%s0 + $0x54] sm:$0xf]
  %v101 = vld [vmem:[%s0 + $0x58] sm:$0xf]
  %v102 = vld [vmem:[%s0 + $0x5c] sm:$0xf]
  %v103 = vld [vmem:[%s0 + $0x60] sm:$0xf]
  %v104 = vld [vmem:[%s0 + $0x64] sm:$0xf]
  %v105 = vld [vmem:[%s0 + $0x68] sm:$0xf]
  %v106 = vld [vmem:[%s0 + $0x6c] sm:$0xf]
  %v107 = vld [vmem:[%s0 + $0x70] sm:$0xf]
  %v108 = vld [vmem:[%s0 + $0x74] sm:$0xf]
  %v109 = vld [vmem:[%s0 + $0x78] sm:$0xf]
  %v110 = vld [vmem:[%s0 + $0x7c] sm:$0xf]
  %v111 = vld [vmem:[%s0 + $0x80] sm:$0xf]
  %v112 = vld [vmem:[%s0 + $0x84] sm:$0xf]
  %v113 = vld [vmem:[%s0 + $0x88] sm:$0xf]
  %v114 = vld [vmem:[%s0 + $0x8c] sm:$0xf]
  %v115 = vld [vmem:[%s0 + $0x90] sm:$0xf]
  %v116 = vld [vmem:[%s0 + $0x94] sm:$0xf]
  %v117 = vld [vmem:[%s0 + $0x98] sm:$0xf]
  %v118 = vld [vmem:[%s0 + $0x9c] sm:$0xf]
  %v119 = vld [vmem:[%s0 + $0xa0] sm:$0xf]
  %v120 = vld [vmem:[%s0 + $0xa4] sm:$0xf]
  %v121 = vld [vmem:[%s0 + $0xa8] sm:$0xf]
  %v122 = vld [vmem:[%s0 + $0xac] sm:$0xf]
  %v123 = vld [vmem:[%s0 + $0xb0] sm:$0xf]
  %v124 = vld [vmem:[%s0 + $0xb4] sm:$0xf]
  %v125 = vld [vmem:[%s0 + $0xb8] sm:$0xf]
  %v126 = vld [vmem:[%s0 + $0xbc] sm:$0xf]
  %v127 = vld [vmem:[%s0 + $0xc0] sm:$0xf]
  %v128 = vld [vmem:[%s0 + $0xc4] sm:$0xf]
  %v129 = vld [vmem:[%s0 + $0xc8] sm:$0xf]
  %v130 = vld [vmem:[%s0 + $0xcc] sm:$0xf]
  %v131 = vld [vmem:[%s0 + $0xd0] sm:$0xf]
  %v132 = vld [vmem:[%s0 + $0xd4] sm:$0xf]
  %v133 = vld [vmem:[%s0 + $0xd8] sm:$0xf]
  %v134 = vld [vmem:[%s0 + $0xdc] sm:$0xf]
  %v135 = vld [vmem:[%s0 + $0xe0] sm:$0xf]
  %v136 = vld [vmem:[%s0 + $0xe4] sm:$0xf]
  %v137 = vld [vmem:[%s0 + $0xe8] sm:$0xf]
  %v138 = vld [vmem:[%s0 + $0xec] sm:$0xf]
  %v139 = vld [vmem:[%s0 + $0xf0] sm:$0xf]
  %v140 = vld [vmem:[%s0 + $0xf4] sm:$0xf]
  %v141 = vld [vmem:[%s0 + $0xf8] sm:$0xf]
  %v142 = vld [vmem:[%s0 + $0xfc] sm:$0xf]
  %v143 = vld [vmem:[%s0 + $0x100] sm:$0xf]
  %v144 = vld [vmem:[%s0 + $0x104] sm:$0xf]
  %v145 = vld [vmem:[%s0 + $0x108] sm:$0xf]
  %v146 = vld [vmem:[%s0 + $0x10c] sm:$0xf]
  %v147 = vld [vmem:[%s0 + $0x110] sm:$0xf]
  %v148 = vld [vmem:[%s0 + $0x114] sm:$0xf]
  %v149 = vld [vmem:[%s0 + $0x118] sm:$0xf]
  %v150 = vld [vmem:[%s0 + $0x11c] sm:$0xf]
  %v151 = vld [vmem:[%s0 + $0x120] sm:$0xf]
  %v152 = vld [vmem:[%s0 + $0x124] sm:$0xf]
  %v153 = vld [vmem:[%s0 + $0x128] sm:$0xf]
  %v154 = vld [vmem:[%s0 + $0x12c] sm:$0xf]
  %v155 = vld [vmem:[%s0 + $0x130] sm:$0xf]
  %v156 = vld [vmem:[%s0 + $0x134] sm:$0xf]
  %v157 = vld [vmem:[%s0 + $0x138] sm:$0xf]
  %v158 = vld [vmem:[%s0 + $0x13c] sm:$0xf]
  %v159 = vld [vmem:[%s0 + $0x140] sm:$0xf]
  %v160 = vld [vmem:[%s0 + $0x144] sm:$0xf]
  %v161 = vld [vmem:[%s0 + $0x148] sm:$0xf]
  %v162 = vld [vmem:[%s0 + $0x14c] sm:$0xf]
  %v163 = vld [vmem:[%s0 + $0x150] sm:$0xf]
  %v164 = vld [vmem:[%s0 + $0x154] sm:$0xf]
  %v165 = vld [vmem:[%s0 + $0x158] sm:$0xf]
  %v166 = vld [vmem:[%s0 + $0x15c] sm:$0xf]
  %v167 = vld [vmem:[%s0 + $0x160] sm:$0xf]
  %v168 = vld [vmem:[%s0 + $0x164] sm:$0xf]
  %v169 = vld [vmem:[%s0 + $0x168] sm:$0xf]
  %v170 = vld [vmem:[%s0 + $0x16c] sm:$0xf]
  %v171 = vld [vmem:[%s0 + $0x170] sm:$0xf]
  %v172 = vld [vmem:[%s0 + $0x174] sm:$0xf]
  %v173 = vld [vmem:[%s0 + $0x178] sm:$0xf]
  %v174 = vld [vmem:[%s0 + $0x17c] sm:$0xf]
  %v175 = vld [vmem:[%s0 + $0x180] sm:$0xf]
  %v176 = vld [vmem:[%s0 + $0x184] sm:$0xf]
  %v177 = vld [vmem:[%s0 + $0x188] sm:$0xf]
  %v178 = vld [vmem:[%s0 + $0x18c] sm:$0xf]
  %v179 = vld [vmem:[%s0 + $0x190] sm:$0xf]
  %v180 = vld [vmem:[%s0 + $0x194] sm:$0xf]
  %v181 = vld [vmem:[%s0 + $0x198] sm:$0xf]
  %v182 = vld [vmem:[%s0 + $0x19c] sm:$0xf]
  %v183 = vld [vmem:[%s0 + $0x1a0] sm:$0xf]
  %v184 = vld [vmem:[%s0 + $0x1a4] sm:$0xf]
  %v185 = vld [vmem:[%s0 + $0x1a8] sm:$0xf]
  %v186 = vld [vmem:[%s0 + $0x1ac] sm:$0xf]
  %v187 = vld [vmem:[%s0 + $0x1b0] sm:$0xf]
  %v188 = vld [vmem:[%s0 + $0x1b4] sm:$0xf]
  %v189 = vld [vmem:[%s0 + $0x1b8] sm:$0xf]
  %v190 = vld [vmem:[%s0 + $0x1bc] sm:$0xf]
  %v191 = vld [vmem:[%s0 + $0x1c0] sm:$0xf]
  %v192 = vld [vmem:[%s0 + $0x1c4] sm:$0xf]
  %v193 = vld [vmem:[%s0 + $0x1c8] sm:$0xf]
  %v194 = vld [vmem:[%s0 + $0x1cc] sm:$0xf]
  %v195 = vld [vmem:[%s0 + $0x1d0] sm:$0xf]
  %v196 = vld [vmem:[%s0 + $0x1d4] sm:$0xf]
  %v197 = vld [vmem:[%s0 + $0x1d8] sm:$0xf]
  %v198 = vld [vmem:[%s0 + $0x1dc] sm:$0xf]
  %v199 = vld [vmem:[%s0 + $0x1e0] sm:$0xf]
  %v200 = vld [vmem:[%s0 + $0x1e4] sm:$0xf]
  %v201 = vld [vmem:[%s0 + $0x1e8] sm:$0xf]
  %v202 = vld [vmem:[%s0 + $0x1ec] sm:$0xf]
  %v203 = vld [vmem:[%s0 + $0x1f0] sm:$0xf]
  %v204 = vld [vmem:[%s0 + $0x1f4] sm:$0xf]
  %v205 = vld [vmem:[%s0 + $0x1f8] sm:$0xf]
  %v206 = vld [vmem:[%s0 + $0x1fc] sm:$0xf]
  %v207 = vld [vmem:[%s0 + $0x200] sm:$0xf]
  %v208 = vld [vmem:[%s0 + $0x204] sm:$0xf]
  %v209 = vld [vmem:[%s0 + $0x208] sm:$0xf]
  %v210 = vld [vmem:[%s0 + $0x20c] sm:$0xf]
  %v211 = vld [vmem:[%s0 + $0x210] sm:$0xf]
  %v212 = vld [vmem:[%s0 + $0x214] sm:$0xf]
  %v213 = vld [vmem:[%s0 + $0x218] sm:$0xf]
  %v214 = vld [vmem:[%s0 + $0x21c] sm:$0xf]
  %v215 = vld [vmem:[%s0 + $0x220] sm:$0xf]
  %v216 = vld [vmem:[%s0 + $0x224] sm:$0xf]
  %v217 = vld [vmem:[%s0 + $0x228] sm:$0xf]
  %v218 = vld [vmem:[%s0 + $0x22c] sm:$0xf]
  %v219 = vld [vmem:[%s0 + $0x230] sm:$0xf]
  %v220 = vld [vmem:[%s0 + $0x234] sm:$0xf]
  %v221 = vld [vmem:[%s0 + $0x238] sm:$0xf]
  %v222 = vld [vmem:[%s0 + $0x23c] sm:$0xf]
  %v223 = vld [vmem:[%s0 + $0x240] sm:$0xf]
  %v224 = vld [vmem:[%s0 + $0x244] sm:$0xf]
  %v225 = vld [vmem:[%s0 + $0x248] sm:$0xf]
  %v226 = vld [vmem:[%s0 + $0x24c] sm:$0xf]
  %v227 = vld [vmem:[%s0 + $0x250] sm:$0xf]
  %v228 = vld [vmem:[%s0 + $0x254] sm:$0xf]
  %v229 = vld [vmem:[%s0 + $0x258] sm:$0xf]
  %v230 = vld [vmem:[%s0 + $0x25c] sm:$0xf]
  %v231 = vld [vmem:[%s0 + $0x260] sm:$0xf]
  %v232 = vld [vmem:[%s0 + $0x264] sm:$0xf]
  %v233 = vld [vmem:[%s0 + $0x268] sm:$0xf]
  %v234 = vld [vmem:[%s0 + $0x26c] sm:$0xf]
  %v235 = vld [vmem:[%s0 + $0x270] sm:$0xf]
  %v236 = vld [vmem:[%s0 + $0x274] sm:$0xf]
  %v237 = vld [vmem:[%s0 + $0x278] sm:$0xf]
  %v238 = vld [vmem:[%s0 + $0x27c] sm:$0xf]
  %v239 = vld [vmem:[%s0 + $0x280] sm:$0xf]
  %v240 = vld [vmem:[%s0 + $0x284] sm:$0xf]
  %v241 = vld [vmem:[%s0 + $0x288] sm:$0xf]
  %v242 = vld [vmem:[%s0 + $0x28c] sm:$0xf]
  %v243 = vld [vmem:[%s0 + $0x290] sm:$0xf]
  %v244 = vld [vmem:[%s0 + $0x294] sm:$0xf]
  %v245 = vld [vmem:[%s0 + $0x298] sm:$0xf]
  %v246 = vld [vmem:[%s0 + $0x29c] sm:$0xf]
  %v247 = vld [vmem:[%s0 + $0x2a0] sm:$0xf]
  %v248 = vld [vmem:[%s0 + $0x2a4] sm:$0xf]
  %v249 = vld [vmem:[%s0 + $0x2a8] sm:$0xf]
  %v250 = vld [vmem:[%s0 + $0x2ac] sm:$0xf]
  %v251 = vld [vmem:[%s0 + $0x2b0] sm:$0xf]
  %v252 = vld [vmem:[%s0 + $0x2b4] sm:$0xf]
  %v253 = vld [vmem:[%s0 + $0x2b8] sm:$0xf]
  %v254 = vld [vmem:[%s0 + $0x2bc] sm:$0xf]
  %v255 = vld [vmem:[%s0 + $0x2c0] sm:$0xf]
  %v256 = vld [vmem:[%s0 + $0x2c4] sm:$0xf]
  %v257 = vld [vmem:[%s0 + $0x2c8] sm:$0xf]
  %v258 = vld [vmem:[%s0 + $0x2cc] sm:$0xf]
  %v259 = vld [vmem:[%s0 + $0x2d0] sm:$0xf]
  %v260 = vld [vmem:[%s0 + $0x2d4] sm:$0xf]
  %v261 = vld [vmem:[%s0 + $0x2d8] sm:$0xf]
  %v262 = vld [vmem:[%s0 + $0x2dc] sm:$0xf]
  %v263 = vld [vmem:[%s0 + $0x2e0] sm:$0xf]
  %v264 = vld [vmem:[%s0 + $0x2e4] sm:$0xf]
  %v265 = vld [vmem:[%s0 + $0x2e8] sm:$0xf]
  %v266 = vld [vmem:[%s0 + $0x2ec] sm:$0xf]
  %v267 = vld [vmem:[%s0 + $0x2f0] sm:$0xf]
  %v268 = vld [vmem:[%s0 + $0x2f4] sm:$0xf]
  %v269 = vld [vmem:[%s0 + $0x2f8] sm:$0xf]
  %v270 = vld [vmem:[%s0 + $0x2fc] sm:$0xf]
  %v271 = vld [vmem:[%s0 + $0x300] sm:$0xf]
  %v272 = vld [vmem:[%s0 + $0x304] sm:$0xf]
  %v273 = vld [vmem:[%s0 + $0x308] sm:$0xf]
  %v274 = vld [vmem:[%s0 + $0x30c] sm:$0xf]
  %v275 = vld [vmem:[%s0 + $0x310] sm:$0xf]
  %v276 = vld [vmem:[%s0 + $0x314] sm:$0xf]
  %v277 = vld [vmem:[%s0 + $0x318] sm:$0xf]
  %v278 = vld [vmem:[%s0 + $0x31c] sm:$0xf]
  %v279 = vld [vmem:[%s0 + $0x320] sm:$0xf]
  %v280 = vld [vmem:[%s0 + $0x324] sm:$0xf]
  %v281 = vld [vmem:[%s0 + $0x328] sm:$0xf]
  %v282 = vld [vmem:[%s0 + $0x32c] sm:$0xf]
  %v283 = vld [vmem:[%s0 + $0x330] sm:$0xf]
  %v284 = vld [vmem:[%s0 + $0x334] sm:$0xf]
  %v285 = vld [vmem:[%s0 + $0x338] sm:$0xf]
  %v286 = vld [vmem:[%s0 + $0x33c] sm:$0xf]
  %v287 = vld [vmem:[%s0 + $0x340] sm:$0xf]
  %v288 = vld [vmem:[%s0 + $0x344] sm:$0xf]
  %v289 = vld [vmem:[%s0 + $0x348] sm:$0xf]
  %v290 = vld [vmem:[%s0 + $0x34c] sm:$0xf]
  %v291 = vld [vmem:[%s0 + $0x350] sm:$0xf]
  %v292 = vld [vmem:[%s0 + $0x354] sm:$0xf]
  %v293 = vld [vmem:[%s0 + $0x358] sm:$0xf]
  %v294 = vld [vmem:[%s0 + $0x35c] sm:$0xf]
  %v295 = vld [vmem:[%s0 + $0x360] sm:$0xf]
  %v296 = vld [vmem:[%s0 + $0x364] sm:$0xf]
  %v297 = vld [vmem:[%s0 + $0x368] sm:$0xf]
  %v298 = vld [vmem:[%s0 + $0x36c] sm:$0xf]
  %v299 = vld [vmem:[%s0 + $0x370] sm:$0xf]
  %v300 = vld [vmem:[%s0 + $0x374] sm:$0xf]
  %v301 = vld [vmem:[%s0 + $0x378] sm:$0xf]
  %v302 = vld [vmem:[%s0 + $0x37c] sm:$0xf]
  %v303 = vld [vmem:[%s0 + $0x380] sm:$0xf]
  %v304 = vld [vmem:[%s0 + $0x384] sm:$0xf]
  %v305 = vld [vmem:[%s0 + $0x388] sm:$0xf]
  %v306 = vld [vmem:[%s0 + $0x38c] sm:$0xf]
  %v307 = vld [vmem:[%s0 + $0x390] sm:$0xf]
  %v308 = vld [vmem:[%s0 + $0x394] sm:$0xf]
  %v309 = vld [vmem:[%s0 + $0x398] sm:$0xf]
  %v310 = vld [vmem:[%s0 + $0x39c] sm:$0xf]
  %v311 = vld [vmem:[%s0 + $0x3a0] sm:$0xf]
  %v312 = vld [vmem:[%s0 + $0x3a4] sm:$0xf]
  %v313 = vld [vmem:[%s0 + $0x3a8] sm:$0xf]
  %v314 = vld [vmem:[%s0 + $0x3ac] sm:$0xf]
  %v315 = vld [vmem:[%s0 + $0x3b0] sm:$0xf]
  %v316 = vld [vmem:[%s0 + $0x3b4] sm:$0xf]
  %v317 = vld [vmem:[%s0 + $0x3b8] sm:$0xf]
  %v318 = vld [vmem:[%s0 + $0x3bc] sm:$0xf]
  %v319 = vld [vmem:[%s0 + $0x3c0] sm:$0xf]
  %v320 = vld [vmem:[%s0 + $0x3c4] sm:$0xf]
  %v321 = vld [vmem:[%s0 + $0x3c8] sm:$0xf]
  %v322 = vld [vmem:[%s0 + $0x3cc] sm:$0xf]
  %v323 = vld [vmem:[%s0 + $0x3d0] sm:$0xf]
  %v324 = vld [vmem:[%s0 + $0x3d4] sm:$0xf]
  %v325 = vld [vmem:[%s0 + $0x3d8] sm:$0xf]
  %v326 = vld [vmem:[%s0 + $0x3dc] sm:$0xf]
  %v327 = vld [vmem:[%s0 + $0x3e0] sm:$0xf]
  %v328 = vld [vmem:[%s0 + $0x3e4] sm:$0xf]
  %v329 = vld [vmem:[%s0 + $0x3e8] sm:$0xf]
  %v330 = vld [vmem:[%s0 + $0x3ec] sm:$0xf]
  %v331 = vld [vmem:[%s0 + $0x3f0] sm:$0xf]
  %v332 = vld [vmem:[%s0 + $0x3f4] sm:$0xf]
  %v333 = vld [vmem:[%s0 + $0x3f8] sm:$0xf]
  %v334 = vld [vmem:[%s0 + $0x3fc] sm:$0xf]
  %v335 = vld [vmem:[%s2] sm:$0xff]
  %v336 = vld [vmem:[%s2 + $0x8] sm:$0xff]
  %v337 = vld [vmem:[%s2 + $0x10] sm:$0xff]
  %v338 = vld [vmem:[%s2 + $0x18] sm:$0xff]
  %v339 = vld [vmem:[%s2 + $0x20] sm:$0xff]
  %v340 = vld [vmem:[%s2 + $0x28] sm:$0xff]
  %v341 = vld [vmem:[%s2 + $0x30] sm:$0xff]
  %v342 = vld [vmem:[%s2 + $0x38] sm:$0xff]
  %344 = vset.pattern.permute.xlu0 0
  %345 = vperm.xlu0 %344, %v335
  %v346 = vpop.permute.xlu0 %345
  %349 = vset.pattern.permute.xlu0 0
  %350 = vperm.xlu0 %349, %v336
  %v351 = vpop.permute.xlu0 %350
  %354 = vset.pattern.permute.xlu0 0
  %355 = vperm.xlu0 %354, %v337
  %v356 = vpop.permute.xlu0 %355
  %359 = vset.pattern.permute.xlu0 0
  %360 = vperm.xlu0 %359, %v338
  %v361 = vpop.permute.xlu0 %360
  %364 = vset.pattern.permute.xlu0 0
  %365 = vperm.xlu0 %364, %v339
  %v366 = vpop.permute.xlu0 %365
  %369 = vset.pattern.permute.xlu0 0
  %370 = vperm.xlu0 %369, %v340
  %v371 = vpop.permute.xlu0 %370
  %374 = vset.pattern.permute.xlu0 0
  %375 = vperm.xlu0 %374, %v341
  %v376 = vpop.permute.xlu0 %375
  %379 = vset.pattern.permute.xlu0 0
  %380 = vperm.xlu0 %379, %v342
  %v381 = vpop.permute.xlu0 %380
  %v447 = vunpack.c.l.b16 %v15
  %v448 = vunpack.c.h.b16 %v15
  %v449 = vunpack.c.l.b16 %v16
  %v450 = vunpack.c.h.b16 %v16
  %v451 = vunpack.c.l.b16 %v17
  %v452 = vunpack.c.h.b16 %v17
  %v453 = vunpack.c.l.b16 %v18
  %v454 = vunpack.c.h.b16 %v18
  %v455 = vunpack.c.l.b16 %v19
  %v456 = vunpack.c.h.b16 %v19
  %v457 = vunpack.c.l.b16 %v20
  %v458 = vunpack.c.h.b16 %v20
  %v459 = vunpack.c.l.b16 %v21
  %v460 = vunpack.c.h.b16 %v21
  %v461 = vunpack.c.l.b16 %v22
  %v462 = vunpack.c.h.b16 %v22
  %v463 = vunpack.c.l.b16 %v23
  %v464 = vunpack.c.h.b16 %v23
  %v465 = vunpack.c.l.b16 %v24
  %v466 = vunpack.c.h.b16 %v24
  %v467 = vunpack.c.l.b16 %v25
  %v468 = vunpack.c.h.b16 %v25
  %v469 = vunpack.c.l.b16 %v26
  %v470 = vunpack.c.h.b16 %v26
  %v471 = vunpack.c.l.b16 %v27
  %v472 = vunpack.c.h.b16 %v27
  %v473 = vunpack.c.l.b16 %v28
  %v474 = vunpack.c.h.b16 %v28
  %v475 = vunpack.c.l.b16 %v29
  %v476 = vunpack.c.h.b16 %v29
  %v477 = vunpack.c.l.b16 %v30
  %v478 = vunpack.c.h.b16 %v30
  %v479 = vunpack.c.l.b16 %v31
  %v480 = vunpack.c.h.b16 %v31
  %v481 = vunpack.c.l.b16 %v32
  %v482 = vunpack.c.h.b16 %v32
  %v483 = vunpack.c.l.b16 %v33
  %v484 = vunpack.c.h.b16 %v33
  %v485 = vunpack.c.l.b16 %v34
  %v486 = vunpack.c.h.b16 %v34
  %v487 = vunpack.c.l.b16 %v35
  %v488 = vunpack.c.h.b16 %v35
  %v489 = vunpack.c.l.b16 %v36
  %v490 = vunpack.c.h.b16 %v36
  %v491 = vunpack.c.l.b16 %v37
  %v492 = vunpack.c.h.b16 %v37
  %v493 = vunpack.c.l.b16 %v38
  %v494 = vunpack.c.h.b16 %v38
  %v495 = vunpack.c.l.b16 %v39
  %v496 = vunpack.c.h.b16 %v39
  %v497 = vunpack.c.l.b16 %v40
  %v498 = vunpack.c.h.b16 %v40
  %v499 = vunpack.c.l.b16 %v41
  %v500 = vunpack.c.h.b16 %v41
  %v501 = vunpack.c.l.b16 %v42
  %v502 = vunpack.c.h.b16 %v42
  %v503 = vunpack.c.l.b16 %v43
  %v504 = vunpack.c.h.b16 %v43
  %v505 = vunpack.c.l.b16 %v44
  %v506 = vunpack.c.h.b16 %v44
  %v507 = vunpack.c.l.b16 %v45
  %v508 = vunpack.c.h.b16 %v45
  %v509 = vunpack.c.l.b16 %v46
  %v510 = vunpack.c.h.b16 %v46
  %v511 = vunpack.c.l.b16 %v47
  %v512 = vunpack.c.h.b16 %v47
  %v513 = vunpack.c.l.b16 %v48
  %v514 = vunpack.c.h.b16 %v48
  %v515 = vunpack.c.l.b16 %v49
  %v516 = vunpack.c.h.b16 %v49
  %v517 = vunpack.c.l.b16 %v50
  %v518 = vunpack.c.h.b16 %v50
  %v519 = vunpack.c.l.b16 %v51
  %v520 = vunpack.c.h.b16 %v51
  %v521 = vunpack.c.l.b16 %v52
  %v522 = vunpack.c.h.b16 %v52
  %v523 = vunpack.c.l.b16 %v53
  %v524 = vunpack.c.h.b16 %v53
  %v525 = vunpack.c.l.b16 %v54
  %v526 = vunpack.c.h.b16 %v54
  %v527 = vunpack.c.l.b16 %v55
  %v528 = vunpack.c.h.b16 %v55
  %v529 = vunpack.c.l.b16 %v56
  %v530 = vunpack.c.h.b16 %v56
  %v531 = vunpack.c.l.b16 %v57
  %v532 = vunpack.c.h.b16 %v57
  %v533 = vunpack.c.l.b16 %v58
  %v534 = vunpack.c.h.b16 %v58
  %v535 = vunpack.c.l.b16 %v59
  %v536 = vunpack.c.h.b16 %v59
  %v537 = vunpack.c.l.b16 %v60
  %v538 = vunpack.c.h.b16 %v60
  %v539 = vunpack.c.l.b16 %v61
  %v540 = vunpack.c.h.b16 %v61
  %v541 = vunpack.c.l.b16 %v62
  %v542 = vunpack.c.h.b16 %v62
  %v543 = vunpack.c.l.b16 %v63
  %v544 = vunpack.c.h.b16 %v63
  %v545 = vunpack.c.l.b16 %v64
  %v546 = vunpack.c.h.b16 %v64
  %v547 = vunpack.c.l.b16 %v65
  %v548 = vunpack.c.h.b16 %v65
  %v549 = vunpack.c.l.b16 %v66
  %v550 = vunpack.c.h.b16 %v66
  %v551 = vunpack.c.l.b16 %v67
  %v552 = vunpack.c.h.b16 %v67
  %v553 = vunpack.c.l.b16 %v68
  %v554 = vunpack.c.h.b16 %v68
  %v555 = vunpack.c.l.b16 %v69
  %v556 = vunpack.c.h.b16 %v69
  %v557 = vunpack.c.l.b16 %v70
  %v558 = vunpack.c.h.b16 %v70
  %v559 = vunpack.c.l.b16 %v71
  %v560 = vunpack.c.h.b16 %v71
  %v561 = vunpack.c.l.b16 %v72
  %v562 = vunpack.c.h.b16 %v72
  %v563 = vunpack.c.l.b16 %v73
  %v564 = vunpack.c.h.b16 %v73
  %v565 = vunpack.c.l.b16 %v74
  %v566 = vunpack.c.h.b16 %v74
  %v567 = vunpack.c.l.b16 %v75
  %v568 = vunpack.c.h.b16 %v75
  %v569 = vunpack.c.l.b16 %v76
  %v570 = vunpack.c.h.b16 %v76
  %v571 = vunpack.c.l.b16 %v77
  %v572 = vunpack.c.h.b16 %v77
  %v573 = vunpack.c.l.b16 %v78
  %v574 = vunpack.c.h.b16 %v78
  %v575 = vpack.c.b16 %v463, %v447
  %v576 = vpack.c.b16 %v464, %v448
  %v577 = vpack.c.b16 %v465, %v449
  %v578 = vpack.c.b16 %v466, %v450
  %v579 = vpack.c.b16 %v467, %v451
  %v580 = vpack.c.b16 %v468, %v452
  %v581 = vpack.c.b16 %v469, %v453
  %v582 = vpack.c.b16 %v470, %v454
  %v583 = vpack.c.b16 %v471, %v455
  %v584 = vpack.c.b16 %v472, %v456
  %v585 = vpack.c.b16 %v473, %v457
  %v586 = vpack.c.b16 %v474, %v458
  %v587 = vpack.c.b16 %v475, %v459
  %v588 = vpack.c.b16 %v476, %v460
  %v589 = vpack.c.b16 %v477, %v461
  %v590 = vpack.c.b16 %v478, %v462
  %v591 = vpack.c.b16 %v495, %v479
  %v592 = vpack.c.b16 %v496, %v480
  %v593 = vpack.c.b16 %v497, %v481
  %v594 = vpack.c.b16 %v498, %v482
  %v595 = vpack.c.b16 %v499, %v483
  %v596 = vpack.c.b16 %v500, %v484
  %v597 = vpack.c.b16 %v501, %v485
  %v598 = vpack.c.b16 %v502, %v486
  %v599 = vpack.c.b16 %v503, %v487
  %v600 = vpack.c.b16 %v504, %v488
  %v601 = vpack.c.b16 %v505, %v489
  %v602 = vpack.c.b16 %v506, %v490
  %v603 = vpack.c.b16 %v507, %v491
  %v604 = vpack.c.b16 %v508, %v492
  %v605 = vpack.c.b16 %v509, %v493
  %v606 = vpack.c.b16 %v510, %v494
  %v607 = vpack.c.b16 %v527, %v511
  %v608 = vpack.c.b16 %v528, %v512
  %v609 = vpack.c.b16 %v529, %v513
  %v610 = vpack.c.b16 %v530, %v514
  %v611 = vpack.c.b16 %v531, %v515
  %v612 = vpack.c.b16 %v532, %v516
  %v613 = vpack.c.b16 %v533, %v517
  %v614 = vpack.c.b16 %v534, %v518
  %v615 = vpack.c.b16 %v535, %v519
  %v616 = vpack.c.b16 %v536, %v520
  %v617 = vpack.c.b16 %v537, %v521
  %v618 = vpack.c.b16 %v538, %v522
  %v619 = vpack.c.b16 %v539, %v523
  %v620 = vpack.c.b16 %v540, %v524
  %v621 = vpack.c.b16 %v541, %v525
  %v622 = vpack.c.b16 %v542, %v526
  %v623 = vpack.c.b16 %v559, %v543
  %v624 = vpack.c.b16 %v560, %v544
  %v625 = vpack.c.b16 %v561, %v545
  %v626 = vpack.c.b16 %v562, %v546
  %v627 = vpack.c.b16 %v563, %v547
  %v628 = vpack.c.b16 %v564, %v548
  %v629 = vpack.c.b16 %v565, %v549
  %v630 = vpack.c.b16 %v566, %v550
  %v631 = vpack.c.b16 %v567, %v551
  %v632 = vpack.c.b16 %v568, %v552
  %v633 = vpack.c.b16 %v569, %v553
  %v634 = vpack.c.b16 %v570, %v554
  %v635 = vpack.c.b16 %v571, %v555
  %v636 = vpack.c.b16 %v572, %v556
  %v637 = vpack.c.b16 %v573, %v557
  %v638 = vpack.c.b16 %v574, %v558
  %v959 = vunpack.c.l.b16 %v79
  %v960 = vunpack.c.l.b16 %v80
  %v961 = vunpack.c.l.b16 %v81
  %v962 = vunpack.c.l.b16 %v82
  %v963 = vunpack.c.l.b16 %v83
  %v964 = vunpack.c.l.b16 %v84
  %v965 = vunpack.c.l.b16 %v85
  %v966 = vunpack.c.l.b16 %v86
  %v967 = vunpack.c.l.b16 %v87
  %v968 = vunpack.c.l.b16 %v88
  %v969 = vunpack.c.l.b16 %v89
  %v970 = vunpack.c.l.b16 %v90
  %v971 = vunpack.c.l.b16 %v91
  %v972 = vunpack.c.l.b16 %v92
  %v973 = vunpack.c.l.b16 %v93
  %v974 = vunpack.c.l.b16 %v94
  %v975 = vunpack.c.l.b16 %v95
  %v976 = vunpack.c.l.b16 %v96
  %v977 = vunpack.c.l.b16 %v97
  %v978 = vunpack.c.l.b16 %v98
  %v979 = vunpack.c.l.b16 %v99
  %v980 = vunpack.c.l.b16 %v100
  %v981 = vunpack.c.l.b16 %v101
  %v982 = vunpack.c.l.b16 %v102
  %v983 = vunpack.c.l.b16 %v103
  %v984 = vunpack.c.l.b16 %v104
  %v985 = vunpack.c.l.b16 %v105
  %v986 = vunpack.c.l.b16 %v106
  %v987 = vunpack.c.l.b16 %v107
  %v988 = vunpack.c.l.b16 %v108
  %v989 = vunpack.c.l.b16 %v109
  %v990 = vunpack.c.l.b16 %v110
  %v991 = vunpack.c.l.b16 %v111
  %v992 = vunpack.c.l.b16 %v112
  %v993 = vunpack.c.l.b16 %v113
  %v994 = vunpack.c.l.b16 %v114
  %v995 = vunpack.c.l.b16 %v115
  %v996 = vunpack.c.l.b16 %v116
  %v997 = vunpack.c.l.b16 %v117
  %v998 = vunpack.c.l.b16 %v118
  %v999 = vunpack.c.l.b16 %v119
  %v1000 = vunpack.c.l.b16 %v120
  %v1001 = vunpack.c.l.b16 %v121
  %v1002 = vunpack.c.l.b16 %v122
  %v1003 = vunpack.c.l.b16 %v123
  %v1004 = vunpack.c.l.b16 %v124
  %v1005 = vunpack.c.l.b16 %v125
  %v1006 = vunpack.c.l.b16 %v126
  %v1007 = vunpack.c.l.b16 %v127
  %v1008 = vunpack.c.l.b16 %v128
  %v1009 = vunpack.c.l.b16 %v129
  %v1010 = vunpack.c.l.b16 %v130
  %v1011 = vunpack.c.l.b16 %v131
  %v1012 = vunpack.c.l.b16 %v132
  %v1013 = vunpack.c.l.b16 %v133
  %v1014 = vunpack.c.l.b16 %v134
  %v1015 = vunpack.c.l.b16 %v135
  %v1016 = vunpack.c.l.b16 %v136
  %v1017 = vunpack.c.l.b16 %v137
  %v1018 = vunpack.c.l.b16 %v138
  %v1019 = vunpack.c.l.b16 %v139
  %v1020 = vunpack.c.l.b16 %v140
  %v1021 = vunpack.c.l.b16 %v141
  %v1022 = vunpack.c.l.b16 %v142
  %v1023 = vunpack.c.l.b16 %v143
  %v1024 = vunpack.c.l.b16 %v144
  %v1025 = vunpack.c.l.b16 %v145
  %v1026 = vunpack.c.l.b16 %v146
  %v1027 = vunpack.c.l.b16 %v147
  %v1028 = vunpack.c.l.b16 %v148
  %v1029 = vunpack.c.l.b16 %v149
  %v1030 = vunpack.c.l.b16 %v150
  %v1031 = vunpack.c.l.b16 %v151
  %v1032 = vunpack.c.l.b16 %v152
  %v1033 = vunpack.c.l.b16 %v153
  %v1034 = vunpack.c.l.b16 %v154
  %v1035 = vunpack.c.l.b16 %v155
  %v1036 = vunpack.c.l.b16 %v156
  %v1037 = vunpack.c.l.b16 %v157
  %v1038 = vunpack.c.l.b16 %v158
  %v1039 = vunpack.c.l.b16 %v159
  %v1040 = vunpack.c.l.b16 %v160
  %v1041 = vunpack.c.l.b16 %v161
  %v1042 = vunpack.c.l.b16 %v162
  %v1043 = vunpack.c.l.b16 %v163
  %v1044 = vunpack.c.l.b16 %v164
  %v1045 = vunpack.c.l.b16 %v165
  %v1046 = vunpack.c.l.b16 %v166
  %v1047 = vunpack.c.l.b16 %v167
  %v1048 = vunpack.c.l.b16 %v168
  %v1049 = vunpack.c.l.b16 %v169
  %v1050 = vunpack.c.l.b16 %v170
  %v1051 = vunpack.c.l.b16 %v171
  %v1052 = vunpack.c.l.b16 %v172
  %v1053 = vunpack.c.l.b16 %v173
  %v1054 = vunpack.c.l.b16 %v174
  %v1055 = vunpack.c.l.b16 %v175
  %v1056 = vunpack.c.l.b16 %v176
  %v1057 = vunpack.c.l.b16 %v177
  %v1058 = vunpack.c.l.b16 %v178
  %v1059 = vunpack.c.l.b16 %v179
  %v1060 = vunpack.c.l.b16 %v180
  %v1061 = vunpack.c.l.b16 %v181
  %v1062 = vunpack.c.l.b16 %v182
  %v1063 = vunpack.c.l.b16 %v183
  %v1064 = vunpack.c.l.b16 %v184
  %v1065 = vunpack.c.l.b16 %v185
  %v1066 = vunpack.c.l.b16 %v186
  %v1067 = vunpack.c.l.b16 %v187
  %v1068 = vunpack.c.l.b16 %v188
  %v1069 = vunpack.c.l.b16 %v189
  %v1070 = vunpack.c.l.b16 %v190
  %v1071 = vunpack.c.l.b16 %v191
  %v1072 = vunpack.c.l.b16 %v192
  %v1073 = vunpack.c.l.b16 %v193
  %v1074 = vunpack.c.l.b16 %v194
  %v1075 = vunpack.c.l.b16 %v195
  %v1076 = vunpack.c.l.b16 %v196
  %v1077 = vunpack.c.l.b16 %v197
  %v1078 = vunpack.c.l.b16 %v198
  %v1079 = vunpack.c.l.b16 %v199
  %v1080 = vunpack.c.l.b16 %v200
  %v1081 = vunpack.c.l.b16 %v201
  %v1082 = vunpack.c.l.b16 %v202
  %v1083 = vunpack.c.l.b16 %v203
  %v1084 = vunpack.c.l.b16 %v204
  %v1085 = vunpack.c.l.b16 %v205
  %v1086 = vunpack.c.l.b16 %v206
  %v1087 = vunpack.c.l.b16 %v207
  %v1088 = vunpack.c.l.b16 %v208
  %v1089 = vunpack.c.l.b16 %v209
  %v1090 = vunpack.c.l.b16 %v210
  %v1091 = vunpack.c.l.b16 %v211
  %v1092 = vunpack.c.l.b16 %v212
  %v1093 = vunpack.c.l.b16 %v213
  %v1094 = vunpack.c.l.b16 %v214
  %v1095 = vunpack.c.l.b16 %v215
  %v1096 = vunpack.c.l.b16 %v216
  %v1097 = vunpack.c.l.b16 %v217
  %v1098 = vunpack.c.l.b16 %v218
  %v1099 = vunpack.c.l.b16 %v219
  %v1100 = vunpack.c.l.b16 %v220
  %v1101 = vunpack.c.l.b16 %v221
  %v1102 = vunpack.c.l.b16 %v222
  %v1103 = vunpack.c.l.b16 %v223
  %v1104 = vunpack.c.l.b16 %v224
  %v1105 = vunpack.c.l.b16 %v225
  %v1106 = vunpack.c.l.b16 %v226
  %v1107 = vunpack.c.l.b16 %v227
  %v1108 = vunpack.c.l.b16 %v228
  %v1109 = vunpack.c.l.b16 %v229
  %v1110 = vunpack.c.l.b16 %v230
  %v1111 = vunpack.c.l.b16 %v231
  %v1112 = vunpack.c.l.b16 %v232
  %v1113 = vunpack.c.l.b16 %v233
  %v1114 = vunpack.c.l.b16 %v234
  %v1115 = vunpack.c.l.b16 %v235
  %v1116 = vunpack.c.l.b16 %v236
  %v1117 = vunpack.c.l.b16 %v237
  %v1118 = vunpack.c.l.b16 %v238
  %v1119 = vunpack.c.l.b16 %v239
  %v1120 = vunpack.c.l.b16 %v240
  %v1121 = vunpack.c.l.b16 %v241
  %v1122 = vunpack.c.l.b16 %v242
  %v1123 = vunpack.c.l.b16 %v243
  %v1124 = vunpack.c.l.b16 %v244
  %v1125 = vunpack.c.l.b16 %v245
  %v1126 = vunpack.c.l.b16 %v246
  %v1127 = vunpack.c.l.b16 %v247
  %v1128 = vunpack.c.l.b16 %v248
  %v1129 = vunpack.c.l.b16 %v249
  %v1130 = vunpack.c.l.b16 %v250
  %v1131 = vunpack.c.l.b16 %v251
  %v1132 = vunpack.c.l.b16 %v252
  %v1133 = vunpack.c.l.b16 %v253
  %v1134 = vunpack.c.l.b16 %v254
  %v1135 = vunpack.c.l.b16 %v255
  %v1136 = vunpack.c.l.b16 %v256
  %v1137 = vunpack.c.l.b16 %v257
  %v1138 = vunpack.c.l.b16 %v258
  %v1139 = vunpack.c.l.b16 %v259
  %v1140 = vunpack.c.l.b16 %v260
  %v1141 = vunpack.c.l.b16 %v261
  %v1142 = vunpack.c.l.b16 %v262
  %v1143 = vunpack.c.l.b16 %v263
  %v1144 = vunpack.c.l.b16 %v264
  %v1145 = vunpack.c.l.b16 %v265
  %v1146 = vunpack.c.l.b16 %v266
  %v1147 = vunpack.c.l.b16 %v267
  %v1148 = vunpack.c.l.b16 %v268
  %v1149 = vunpack.c.l.b16 %v269
  %v1150 = vunpack.c.l.b16 %v270
  %v1151 = vunpack.c.l.b16 %v271
  %v1152 = vunpack.c.l.b16 %v272
  %v1153 = vunpack.c.l.b16 %v273
  %v1154 = vunpack.c.l.b16 %v274
  %v1155 = vunpack.c.l.b16 %v275
  %v1156 = vunpack.c.l.b16 %v276
  %v1157 = vunpack.c.l.b16 %v277
  %v1158 = vunpack.c.l.b16 %v278
  %v1159 = vunpack.c.l.b16 %v279
  %v1160 = vunpack.c.l.b16 %v280
  %v1161 = vunpack.c.l.b16 %v281
  %v1162 = vunpack.c.l.b16 %v282
  %v1163 = vunpack.c.l.b16 %v283
  %v1164 = vunpack.c.l.b16 %v284
  %v1165 = vunpack.c.l.b16 %v285
  %v1166 = vunpack.c.l.b16 %v286
  %v1167 = vunpack.c.l.b16 %v287
  %v1168 = vunpack.c.l.b16 %v288
  %v1169 = vunpack.c.l.b16 %v289
  %v1170 = vunpack.c.l.b16 %v290
  %v1171 = vunpack.c.l.b16 %v291
  %v1172 = vunpack.c.l.b16 %v292
  %v1173 = vunpack.c.l.b16 %v293
  %v1174 = vunpack.c.l.b16 %v294
  %v1175 = vunpack.c.l.b16 %v295
  %v1176 = vunpack.c.l.b16 %v296
  %v1177 = vunpack.c.l.b16 %v297
  %v1178 = vunpack.c.l.b16 %v298
  %v1179 = vunpack.c.l.b16 %v299
  %v1180 = vunpack.c.l.b16 %v300
  %v1181 = vunpack.c.l.b16 %v301
  %v1182 = vunpack.c.l.b16 %v302
  %v1183 = vunpack.c.l.b16 %v303
  %v1184 = vunpack.c.l.b16 %v304
  %v1185 = vunpack.c.l.b16 %v305
  %v1186 = vunpack.c.l.b16 %v306
  %v1187 = vunpack.c.l.b16 %v307
  %v1188 = vunpack.c.l.b16 %v308
  %v1189 = vunpack.c.l.b16 %v309
  %v1190 = vunpack.c.l.b16 %v310
  %v1191 = vunpack.c.l.b16 %v311
  %v1192 = vunpack.c.l.b16 %v312
  %v1193 = vunpack.c.l.b16 %v313
  %v1194 = vunpack.c.l.b16 %v314
  %v1195 = vunpack.c.l.b16 %v315
  %v1196 = vunpack.c.l.b16 %v316
  %v1197 = vunpack.c.l.b16 %v317
  %v1198 = vunpack.c.l.b16 %v318
  %v1199 = vunpack.c.l.b16 %v319
  %v1200 = vunpack.c.l.b16 %v320
  %v1201 = vunpack.c.l.b16 %v321
  %v1202 = vunpack.c.l.b16 %v322
  %v1203 = vunpack.c.l.b16 %v323
  %v1204 = vunpack.c.l.b16 %v324
  %v1205 = vunpack.c.l.b16 %v325
  %v1206 = vunpack.c.l.b16 %v326
  %v1207 = vunpack.c.l.b16 %v327
  %v1208 = vunpack.c.l.b16 %v328
  %v1209 = vunpack.c.l.b16 %v329
  %v1210 = vunpack.c.l.b16 %v330
  %v1211 = vunpack.c.l.b16 %v331
  %v1212 = vunpack.c.l.b16 %v332
  %v1213 = vunpack.c.l.b16 %v333
  %v1214 = vunpack.c.l.b16 %v334
  %v1215 = vpack.c.b16 %v960, %v959
  %v1216 = vpack.c.b16 %v962, %v961
  %v1217 = vpack.c.b16 %v964, %v963
  %v1218 = vpack.c.b16 %v966, %v965
  %v1219 = vpack.c.b16 %v968, %v967
  %v1220 = vpack.c.b16 %v970, %v969
  %v1221 = vpack.c.b16 %v972, %v971
  %v1222 = vpack.c.b16 %v974, %v973
  %v1223 = vpack.c.b16 %v976, %v975
  %v1224 = vpack.c.b16 %v978, %v977
  %v1225 = vpack.c.b16 %v980, %v979
  %v1226 = vpack.c.b16 %v982, %v981
  %v1227 = vpack.c.b16 %v984, %v983
  %v1228 = vpack.c.b16 %v986, %v985
  %v1229 = vpack.c.b16 %v988, %v987
  %v1230 = vpack.c.b16 %v990, %v989
  %v1231 = vpack.c.b16 %v992, %v991
  %v1232 = vpack.c.b16 %v994, %v993
  %v1233 = vpack.c.b16 %v996, %v995
  %v1234 = vpack.c.b16 %v998, %v997
  %v1235 = vpack.c.b16 %v1000, %v999
  %v1236 = vpack.c.b16 %v1002, %v1001
  %v1237 = vpack.c.b16 %v1004, %v1003
  %v1238 = vpack.c.b16 %v1006, %v1005
  %v1239 = vpack.c.b16 %v1008, %v1007
  %v1240 = vpack.c.b16 %v1010, %v1009
  %v1241 = vpack.c.b16 %v1012, %v1011
  %v1242 = vpack.c.b16 %v1014, %v1013
  %v1243 = vpack.c.b16 %v1016, %v1015
  %v1244 = vpack.c.b16 %v1018, %v1017
  %v1245 = vpack.c.b16 %v1020, %v1019
  %v1246 = vpack.c.b16 %v1022, %v1021
  %v1247 = vpack.c.b16 %v1024, %v1023
  %v1248 = vpack.c.b16 %v1026, %v1025
  %v1249 = vpack.c.b16 %v1028, %v1027
  %v1250 = vpack.c.b16 %v1030, %v1029
  %v1251 = vpack.c.b16 %v1032, %v1031
  %v1252 = vpack.c.b16 %v1034, %v1033
  %v1253 = vpack.c.b16 %v1036, %v1035
  %v1254 = vpack.c.b16 %v1038, %v1037
  %v1255 = vpack.c.b16 %v1040, %v1039
  %v1256 = vpack.c.b16 %v1042, %v1041
  %v1257 = vpack.c.b16 %v1044, %v1043
  %v1258 = vpack.c.b16 %v1046, %v1045
  %v1259 = vpack.c.b16 %v1048, %v1047
  %v1260 = vpack.c.b16 %v1050, %v1049
  %v1261 = vpack.c.b16 %v1052, %v1051
  %v1262 = vpack.c.b16 %v1054, %v1053
  %v1263 = vpack.c.b16 %v1056, %v1055
  %v1264 = vpack.c.b16 %v1058, %v1057
  %v1265 = vpack.c.b16 %v1060, %v1059
  %v1266 = vpack.c.b16 %v1062, %v1061
  %v1267 = vpack.c.b16 %v1064, %v1063
  %v1268 = vpack.c.b16 %v1066, %v1065
  %v1269 = vpack.c.b16 %v1068, %v1067
  %v1270 = vpack.c.b16 %v1070, %v1069
  %v1271 = vpack.c.b16 %v1072, %v1071
  %v1272 = vpack.c.b16 %v1074, %v1073
  %v1273 = vpack.c.b16 %v1076, %v1075
  %v1274 = vpack.c.b16 %v1078, %v1077
  %v1275 = vpack.c.b16 %v1080, %v1079
  %v1276 = vpack.c.b16 %v1082, %v1081
  %v1277 = vpack.c.b16 %v1084, %v1083
  %v1278 = vpack.c.b16 %v1086, %v1085
  %v1279 = vpack.c.b16 %v1088, %v1087
  %v1280 = vpack.c.b16 %v1090, %v1089
  %v1281 = vpack.c.b16 %v1092, %v1091
  %v1282 = vpack.c.b16 %v1094, %v1093
  %v1283 = vpack.c.b16 %v1096, %v1095
  %v1284 = vpack.c.b16 %v1098, %v1097
  %v1285 = vpack.c.b16 %v1100, %v1099
  %v1286 = vpack.c.b16 %v1102, %v1101
  %v1287 = vpack.c.b16 %v1104, %v1103
  %v1288 = vpack.c.b16 %v1106, %v1105
  %v1289 = vpack.c.b16 %v1108, %v1107
  %v1290 = vpack.c.b16 %v1110, %v1109
  %v1291 = vpack.c.b16 %v1112, %v1111
  %v1292 = vpack.c.b16 %v1114, %v1113
  %v1293 = vpack.c.b16 %v1116, %v1115
  %v1294 = vpack.c.b16 %v1118, %v1117
  %v1295 = vpack.c.b16 %v1120, %v1119
  %v1296 = vpack.c.b16 %v1122, %v1121
  %v1297 = vpack.c.b16 %v1124, %v1123
  %v1298 = vpack.c.b16 %v1126, %v1125
  %v1299 = vpack.c.b16 %v1128, %v1127
  %v1300 = vpack.c.b16 %v1130, %v1129
  %v1301 = vpack.c.b16 %v1132, %v1131
  %v1302 = vpack.c.b16 %v1134, %v1133
  %v1303 = vpack.c.b16 %v1136, %v1135
  %v1304 = vpack.c.b16 %v1138, %v1137
  %v1305 = vpack.c.b16 %v1140, %v1139
  %v1306 = vpack.c.b16 %v1142, %v1141
  %v1307 = vpack.c.b16 %v1144, %v1143
  %v1308 = vpack.c.b16 %v1146, %v1145
  %v1309 = vpack.c.b16 %v1148, %v1147
  %v1310 = vpack.c.b16 %v1150, %v1149
  %v1311 = vpack.c.b16 %v1152, %v1151
  %v1312 = vpack.c.b16 %v1154, %v1153
  %v1313 = vpack.c.b16 %v1156, %v1155
  %v1314 = vpack.c.b16 %v1158, %v1157
  %v1315 = vpack.c.b16 %v1160, %v1159
  %v1316 = vpack.c.b16 %v1162, %v1161
  %v1317 = vpack.c.b16 %v1164, %v1163
  %v1318 = vpack.c.b16 %v1166, %v1165
  %v1319 = vpack.c.b16 %v1168, %v1167
  %v1320 = vpack.c.b16 %v1170, %v1169
  %v1321 = vpack.c.b16 %v1172, %v1171
  %v1322 = vpack.c.b16 %v1174, %v1173
  %v1323 = vpack.c.b16 %v1176, %v1175
  %v1324 = vpack.c.b16 %v1178, %v1177
  %v1325 = vpack.c.b16 %v1180, %v1179
  %v1326 = vpack.c.b16 %v1182, %v1181
  %v1327 = vpack.c.b16 %v1184, %v1183
  %v1328 = vpack.c.b16 %v1186, %v1185
  %v1329 = vpack.c.b16 %v1188, %v1187
  %v1330 = vpack.c.b16 %v1190, %v1189
  %v1331 = vpack.c.b16 %v1192, %v1191
  %v1332 = vpack.c.b16 %v1194, %v1193
  %v1333 = vpack.c.b16 %v1196, %v1195
  %v1334 = vpack.c.b16 %v1198, %v1197
  %v1335 = vpack.c.b16 %v1200, %v1199
  %v1336 = vpack.c.b16 %v1202, %v1201
  %v1337 = vpack.c.b16 %v1204, %v1203
  %v1338 = vpack.c.b16 %v1206, %v1205
  %v1339 = vpack.c.b16 %v1208, %v1207
  %v1340 = vpack.c.b16 %v1210, %v1209
  %v1341 = vpack.c.b16 %v1212, %v1211
  %v1342 = vpack.c.b16 %v1214, %v1213
  %1471 = vmatprep.subr.bf16.mxu0 0
  %1472 = vmatpush1.bf16.msra.mxu0 %v1215
  %1473 = vmatprep.subr.bf16.mxu0 0
  %1474 = vmatpush1.bf16.msra.mxu0 %v1216
  %1475 = vmatprep.subr.bf16.mxu0 0
  %1476 = vmatpush1.bf16.msra.mxu0 %v1217
  %1477 = vmatprep.subr.bf16.mxu0 0
  %1478 = vmatpush1.bf16.msra.mxu0 %v1218
  %1479 = vmatprep.subr.bf16.mxu0 0
  %1480 = vmatpush1.bf16.msra.mxu0 %v1219
  %1481 = vmatprep.subr.bf16.mxu0 0
  %1482 = vmatpush1.bf16.msra.mxu0 %v1220
  %1483 = vmatprep.subr.bf16.mxu0 0
  %1484 = vmatpush1.bf16.msra.mxu0 %v1221
  %1485 = vmatprep.subr.bf16.mxu0 0
  %1486 = vmatpush1.bf16.msra.mxu0 %v1222
  %1487 = vmatprep.subr.bf16.mxu0 0
  %1488 = vmatpush1.bf16.msra.mxu0 %v1223
  %1489 = vmatprep.subr.bf16.mxu0 0
  %1490 = vmatpush1.bf16.msra.mxu0 %v1224
  %1491 = vmatprep.subr.bf16.mxu0 0
  %1492 = vmatpush1.bf16.msra.mxu0 %v1225
  %1493 = vmatprep.subr.bf16.mxu0 0
  %1494 = vmatpush1.bf16.msra.mxu0 %v1226
  %1495 = vmatprep.subr.bf16.mxu0 0
  %1496 = vmatpush1.bf16.msra.mxu0 %v1227
  %1497 = vmatprep.subr.bf16.mxu0 0
  %1498 = vmatpush1.bf16.msra.mxu0 %v1228
  %1499 = vmatprep.subr.bf16.mxu0 0
  %1500 = vmatpush1.bf16.msra.mxu0 %v1229
  %1501 = vmatprep.subr.bf16.mxu0 0
  %1502 = vmatpush1.bf16.msra.mxu0 %v1230
  %1503 = vmatprep.mubr.bf16.mxu0 %v576
  %1504 = vmatmul.mubr.bf16.gmra.mrb[0].mxu0 %v575
  %v1505 = vpop.f32.mrb[0].mxu0
  %v1506 = vadd.f32 %v346, %v1505
  %v1507 = vpop.f32.mrb[0].mxu0
  %v1508 = vpop.f32.mrb[0].mxu0
  %v1509 = vadd.f32 %v351, %v1508
  %v1510 = vpop.f32.mrb[0].mxu0
  %1511 = vmatprep.mubr.bf16.mxu0 %v592
  %1512 = vmatmul.mubr.bf16.gmra.mrb[0].mxu0 %v591
  %v1513 = vpop.f32.mrb[0].mxu0
  %v1514 = vadd.f32 %v356, %v1513
  %v1515 = vpop.f32.mrb[0].mxu0
  %v1516 = vpop.f32.mrb[0].mxu0
  %v1517 = vadd.f32 %v361, %v1516
  %v1518 = vpop.f32.mrb[0].mxu0
  %1519 = vmatprep.mubr.bf16.mxu0 %v608
  %1520 = vmatmul.mubr.bf16.gmra.mrb[0].mxu0 %v607
  %v1521 = vpop.f32.mrb[0].mxu0
  %v1522 = vadd.f32 %v366, %v1521
  %v1523 = vpop.f32.mrb[0].mxu0
  %v1524 = vpop.f32.mrb[0].mxu0
  %v1525 = vadd.f32 %v371, %v1524
  %v1526 = vpop.f32.mrb[0].mxu0
  %1527 = vmatprep.mubr.bf16.mxu0 %v624
  %1528 = vmatmul.mubr.bf16.gmra.mrb[0].mxu0 %v623
  %v1529 = vpop.f32.mrb[0].mxu0
  %v1530 = vadd.f32 %v376, %v1529
  %v1531 = vpop.f32.mrb[0].mxu0
  %v1532 = vpop.f32.mrb[0].mxu0
  %v1533 = vadd.f32 %v381, %v1532
  %v1534 = vpop.f32.mrb[0].mxu0
  %1535 = vdwg.mxu0
  %1536 = vmatprep.subr.bf16.mxu0 0
  %1537 = vmatpush1.bf16.msra.mxu0 %v1231
  %1538 = vmatprep.subr.bf16.mxu0 0
  %1539 = vmatpush1.bf16.msra.mxu0 %v1232
  %1540 = vmatprep.subr.bf16.mxu0 0
  %1541 = vmatpush1.bf16.msra.mxu0 %v1233
  %1542 = vmatprep.subr.bf16.mxu0 0
  %1543 = vmatpush1.bf16.msra.mxu0 %v1234
  %1544 = vmatprep.subr.bf16.mxu0 0
  %1545 = vmatpush1.bf16.msra.mxu0 %v1235
  %1546 = vmatprep.subr.bf16.mxu0 0
  %1547 = vmatpush1.bf16.msra.mxu0 %v1236
  %1548 = vmatprep.subr.bf16.mxu0 0
  %1549 = vmatpush1.bf16.msra.mxu0 %v1237
  %1550 = vmatprep.subr.bf16.mxu0 0
  %1551 = vmatpush1.bf16.msra.mxu0 %v1238
  %1552 = vmatprep.subr.bf16.mxu0 0
  %1553 = vmatpush1.bf16.msra.mxu0 %v1239
  %1554 = vmatprep.subr.bf16.mxu0 0
  %1555 = vmatpush1.bf16.msra.mxu0 %v1240
  %1556 = vmatprep.subr.bf16.mxu0 0
  %1557 = vmatpush1.bf16.msra.mxu0 %v1241
  %1558 = vmatprep.subr.bf16.mxu0 0
  %1559 = vmatpush1.bf16.msra.mxu0 %v1242
  %1560 = vmatprep.subr.bf16.mxu0 0
  %1561 = vmatpush1.bf16.msra.mxu0 %v1243
  %1562 = vmatprep.subr.bf16.mxu0 0
  %1563 = vmatpush1.bf16.msra.mxu0 %v1244
  %1564 = vmatprep.subr.bf16.mxu0 0
  %1565 = vmatpush1.bf16.msra.mxu0 %v1245
  %1566 = vmatprep.subr.bf16.mxu0 0
  %1567 = vmatpush1.bf16.msra.mxu0 %v1246
  %1568 = vmatprep.mubr.bf16.mxu0 %v578
  %1569 = vmatmul.mubr.bf16.gmra.mrb[0].mxu0 %v577
  %v1570 = vpop.f32.mrb[0].mxu0
  %v1571 = vadd.f32 %v1506, %v1570
  %v1572 = vpop.f32.mrb[0].mxu0
  %v1573 = vpop.f32.mrb[0].mxu0
  %v1574 = vadd.f32 %v1509, %v1573
  %v1575 = vpop.f32.mrb[0].mxu0
  %1576 = vmatprep.mubr.bf16.mxu0 %v594
  %1577 = vmatmul.mubr.bf16.gmra.mrb[0].mxu0 %v593
  %v1578 = vpop.f32.mrb[0].mxu0
  %v1579 = vadd.f32 %v1514, %v1578
  %v1580 = vpop.f32.mrb[0].mxu0
  %v1581 = vpop.f32.mrb[0].mxu0
  %v1582 = vadd.f32 %v1517, %v1581
  %v1583 = vpop.f32.mrb[0].mxu0
  %1584 = vmatprep.mubr.bf16.mxu0 %v610
  %1585 = vmatmul.mubr.bf16.gmra.mrb[0].mxu0 %v609
  %v1586 = vpop.f32.mrb[0].mxu0
  %v1587 = vadd.f32 %v1522, %v1586
  %v1588 = vpop.f32.mrb[0].mxu0
  %v1589 = vpop.f32.mrb[0].mxu0
  %v1590 = vadd.f32 %v1525, %v1589
  %v1591 = vpop.f32.mrb[0].mxu0
  %1592 = vmatprep.mubr.bf16.mxu0 %v626
  %1593 = vmatmul.mubr.bf16.gmra.mrb[0].mxu0 %v625
  %v1594 = vpop.f32.mrb[0].mxu0
  %v1595 = vadd.f32 %v1530, %v1594
  %v1596 = vpop.f32.mrb[0].mxu0
  %v1597 = vpop.f32.mrb[0].mxu0
  %v1598 = vadd.f32 %v1533, %v1597
  %v1599 = vpop.f32.mrb[0].mxu0
  %1600 = vdwg.mxu0
  %1601 = vmatprep.subr.bf16.mxu0 0
  %1602 = vmatpush1.bf16.msra.mxu0 %v1247
  %1603 = vmatprep.subr.bf16.mxu0 0
  %1604 = vmatpush1.bf16.msra.mxu0 %v1248
  %1605 = vmatprep.subr.bf16.mxu0 0
  %1606 = vmatpush1.bf16.msra.mxu0 %v1249
  %1607 = vmatprep.subr.bf16.mxu0 0
  %1608 = vmatpush1.bf16.msra.mxu0 %v1250
  %1609 = vmatprep.subr.bf16.mxu0 0
  %1610 = vmatpush1.bf16.msra.mxu0 %v1251
  %1611 = vmatprep.subr.bf16.mxu0 0
  %1612 = vmatpush1.bf16.msra.mxu0 %v1252
  %1613 = vmatprep.subr.bf16.mxu0 0
  %1614 = vmatpush1.bf16.msra.mxu0 %v1253
  %1615 = vmatprep.subr.bf16.mxu0 0
  %1616 = vmatpush1.bf16.msra.mxu0 %v1254
  %1617 = vmatprep.subr.bf16.mxu0 0
  %1618 = vmatpush1.bf16.msra.mxu0 %v1255
  %1619 = vmatprep.subr.bf16.mxu0 0
  %1620 = vmatpush1.bf16.msra.mxu0 %v1256
  %1621 = vmatprep.subr.bf16.mxu0 0
  %1622 = vmatpush1.bf16.msra.mxu0 %v1257
  %1623 = vmatprep.subr.bf16.mxu0 0
  %1624 = vmatpush1.bf16.msra.mxu0 %v1258
  %1625 = vmatprep.subr.bf16.mxu0 0
  %1626 = vmatpush1.bf16.msra.mxu0 %v1259
  %1627 = vmatprep.subr.bf16.mxu0 0
  %1628 = vmatpush1.bf16.msra.mxu0 %v1260
  %1629 = vmatprep.subr.bf16.mxu0 0
  %1630 = vmatpush1.bf16.msra.mxu0 %v1261
  %1631 = vmatprep.subr.bf16.mxu0 0
  %1632 = vmatpush1.bf16.msra.mxu0 %v1262
  %1633 = vmatprep.mubr.bf16.mxu0 %v580
  %1634 = vmatmul.mubr.bf16.gmra.mrb[0].mxu0 %v579
  %v1635 = vpop.f32.mrb[0].mxu0
  %v1636 = vadd.f32 %v1571, %v1635
  %v1637 = vpop.f32.mrb[0].mxu0
  %v1638 = vpop.f32.mrb[0].mxu0
  %v1639 = vadd.f32 %v1574, %v1638
  %v1640 = vpop.f32.mrb[0].mxu0
  %1641 = vmatprep.mubr.bf16.mxu0 %v596
  %1642 = vmatmul.mubr.bf16.gmra.mrb[0].mxu0 %v595
  %v1643 = vpop.f32.mrb[0].mxu0
  %v1644 = vadd.f32 %v1579, %v1643
  %v1645 = vpop.f32.mrb[0].mxu0
  %v1646 = vpop.f32.mrb[0].mxu0
  %v1647 = vadd.f32 %v1582, %v1646
  %v1648 = vpop.f32.mrb[0].mxu0
  %1649 = vmatprep.mubr.bf16.mxu0 %v612
  %1650 = vmatmul.mubr.bf16.gmra.mrb[0].mxu0 %v611
  %v1651 = vpop.f32.mrb[0].mxu0
  %v1652 = vadd.f32 %v1587, %v1651
  %v1653 = vpop.f32.mrb[0].mxu0
  %v1654 = vpop.f32.mrb[0].mxu0
  %v1655 = vadd.f32 %v1590, %v1654
  %v1656 = vpop.f32.mrb[0].mxu0
  %1657 = vmatprep.mubr.bf16.mxu0 %v628
  %1658 = vmatmul.mubr.bf16.gmra.mrb[0].mxu0 %v627
  %v1659 = vpop.f32.mrb[0].mxu0
  %v1660 = vadd.f32 %v1595, %v1659
  %v1661 = vpop.f32.mrb[0].mxu0
  %v1662 = vpop.f32.mrb[0].mxu0
  %v1663 = vadd.f32 %v1598, %v1662
  %v1664 = vpop.f32.mrb[0].mxu0
  %1665 = vdwg.mxu0
  %1666 = vmatprep.subr.bf16.mxu0 0
  %1667 = vmatpush1.bf16.msra.mxu0 %v1263
  %1668 = vmatprep.subr.bf16.mxu0 0
  %1669 = vmatpush1.bf16.msra.mxu0 %v1264
  %1670 = vmatprep.subr.bf16.mxu0 0
  %1671 = vmatpush1.bf16.msra.mxu0 %v1265
  %1672 = vmatprep.subr.bf16.mxu0 0
  %1673 = vmatpush1.bf16.msra.mxu0 %v1266
  %1674 = vmatprep.subr.bf16.mxu0 0
  %1675 = vmatpush1.bf16.msra.mxu0 %v1267
  %1676 = vmatprep.subr.bf16.mxu0 0
  %1677 = vmatpush1.bf16.msra.mxu0 %v1268
  %1678 = vmatprep.subr.bf16.mxu0 0
  %1679 = vmatpush1.bf16.msra.mxu0 %v1269
  %1680 = vmatprep.subr.bf16.mxu0 0
  %1681 = vmatpush1.bf16.msra.mxu0 %v1270
  %1682 = vmatprep.subr.bf16.mxu0 0
  %1683 = vmatpush1.bf16.msra.mxu0 %v1271
  %1684 = vmatprep.subr.bf16.mxu0 0
  %1685 = vmatpush1.bf16.msra.mxu0 %v1272
  %1686 = vmatprep.subr.bf16.mxu0 0
  %1687 = vmatpush1.bf16.msra.mxu0 %v1273
  %1688 = vmatprep.subr.bf16.mxu0 0
  %1689 = vmatpush1.bf16.msra.mxu0 %v1274
  %1690 = vmatprep.subr.bf16.mxu0 0
  %1691 = vmatpush1.bf16.msra.mxu0 %v1275
  %1692 = vmatprep.subr.bf16.mxu0 0
  %1693 = vmatpush1.bf16.msra.mxu0 %v1276
  %1694 = vmatprep.subr.bf16.mxu0 0
  %1695 = vmatpush1.bf16.msra.mxu0 %v1277
  %1696 = vmatprep.subr.bf16.mxu0 0
  %1697 = vmatpush1.bf16.msra.mxu0 %v1278
  %1698 = vmatprep.mubr.bf16.mxu0 %v582
  %1699 = vmatmul.mubr.bf16.gmra.mrb[0].mxu0 %v581
  %v1700 = vpop.f32.mrb[0].mxu0
  %v1701 = vadd.f32 %v1636, %v1700
  %v1702 = vpop.f32.mrb[0].mxu0
  %v1703 = vpop.f32.mrb[0].mxu0
  %v1704 = vadd.f32 %v1639, %v1703
  %v1705 = vpop.f32.mrb[0].mxu0
  %1706 = vmatprep.mubr.bf16.mxu0 %v598
  %1707 = vmatmul.mubr.bf16.gmra.mrb[0].mxu0 %v597
  %v1708 = vpop.f32.mrb[0].mxu0
  %v1709 = vadd.f32 %v1644, %v1708
  %v1710 = vpop.f32.mrb[0].mxu0
  %v1711 = vpop.f32.mrb[0].mxu0
  %v1712 = vadd.f32 %v1647, %v1711
  %v1713 = vpop.f32.mrb[0].mxu0
  %1714 = vmatprep.mubr.bf16.mxu0 %v614
  %1715 = vmatmul.mubr.bf16.gmra.mrb[0].mxu0 %v613
  %v1716 = vpop.f32.mrb[0].mxu0
  %v1717 = vadd.f32 %v1652, %v1716
  %v1718 = vpop.f32.mrb[0].mxu0
  %v1719 = vpop.f32.mrb[0].mxu0
  %v1720 = vadd.f32 %v1655, %v1719
  %v1721 = vpop.f32.mrb[0].mxu0
  %1722 = vmatprep.mubr.bf16.mxu0 %v630
  %1723 = vmatmul.mubr.bf16.gmra.mrb[0].mxu0 %v629
  %v1724 = vpop.f32.mrb[0].mxu0
  %v1725 = vadd.f32 %v1660, %v1724
  %v1726 = vpop.f32.mrb[0].mxu0
  %v1727 = vpop.f32.mrb[0].mxu0
  %v1728 = vadd.f32 %v1663, %v1727
  %v1729 = vpop.f32.mrb[0].mxu0
  %1730 = vdwg.mxu0
  %1731 = vmatprep.subr.bf16.mxu0 0
  %1732 = vmatpush1.bf16.msra.mxu0 %v1279
  %1733 = vmatprep.subr.bf16.mxu0 0
  %1734 = vmatpush1.bf16.msra.mxu0 %v1280
  %1735 = vmatprep.subr.bf16.mxu0 0
  %1736 = vmatpush1.bf16.msra.mxu0 %v1281
  %1737 = vmatprep.subr.bf16.mxu0 0
  %1738 = vmatpush1.bf16.msra.mxu0 %v1282
  %1739 = vmatprep.subr.bf16.mxu0 0
  %1740 = vmatpush1.bf16.msra.mxu0 %v1283
  %1741 = vmatprep.subr.bf16.mxu0 0
  %1742 = vmatpush1.bf16.msra.mxu0 %v1284
  %1743 = vmatprep.subr.bf16.mxu0 0
  %1744 = vmatpush1.bf16.msra.mxu0 %v1285
  %1745 = vmatprep.subr.bf16.mxu0 0
  %1746 = vmatpush1.bf16.msra.mxu0 %v1286
  %1747 = vmatprep.subr.bf16.mxu0 0
  %1748 = vmatpush1.bf16.msra.mxu0 %v1287
  %1749 = vmatprep.subr.bf16.mxu0 0
  %1750 = vmatpush1.bf16.msra.mxu0 %v1288
  %1751 = vmatprep.subr.bf16.mxu0 0
  %1752 = vmatpush1.bf16.msra.mxu0 %v1289
  %1753 = vmatprep.subr.bf16.mxu0 0
  %1754 = vmatpush1.bf16.msra.mxu0 %v1290
  %1755 = vmatprep.subr.bf16.mxu0 0
  %1756 = vmatpush1.bf16.msra.mxu0 %v1291
  %1757 = vmatprep.subr.bf16.mxu0 0
  %1758 = vmatpush1.bf16.msra.mxu0 %v1292
  %1759 = vmatprep.subr.bf16.mxu0 0
  %1760 = vmatpush1.bf16.msra.mxu0 %v1293
  %1761 = vmatprep.subr.bf16.mxu0 0
  %1762 = vmatpush1.bf16.msra.mxu0 %v1294
  %1763 = vmatprep.mubr.bf16.mxu0 %v584
  %1764 = vmatmul.mubr.bf16.gmra.mrb[0].mxu0 %v583
  %v1765 = vpop.f32.mrb[0].mxu0
  %v1766 = vadd.f32 %v1701, %v1765
  %v1767 = vpop.f32.mrb[0].mxu0
  %v1768 = vpop.f32.mrb[0].mxu0
  %v1769 = vadd.f32 %v1704, %v1768
  %v1770 = vpop.f32.mrb[0].mxu0
  %1771 = vmatprep.mubr.bf16.mxu0 %v600
  %1772 = vmatmul.mubr.bf16.gmra.mrb[0].mxu0 %v599
  %v1773 = vpop.f32.mrb[0].mxu0
  %v1774 = vadd.f32 %v1709, %v1773
  %v1775 = vpop.f32.mrb[0].mxu0
  %v1776 = vpop.f32.mrb[0].mxu0
  %v1777 = vadd.f32 %v1712, %v1776
  %v1778 = vpop.f32.mrb[0].mxu0
  %1779 = vmatprep.mubr.bf16.mxu0 %v616
  %1780 = vmatmul.mubr.bf16.gmra.mrb[0].mxu0 %v615
  %v1781 = vpop.f32.mrb[0].mxu0
  %v1782 = vadd.f32 %v1717, %v1781
  %v1783 = vpop.f32.mrb[0].mxu0
  %v1784 = vpop.f32.mrb[0].mxu0
  %v1785 = vadd.f32 %v1720, %v1784
  %v1786 = vpop.f32.mrb[0].mxu0
  %1787 = vmatprep.mubr.bf16.mxu0 %v632
  %1788 = vmatmul.mubr.bf16.gmra.mrb[0].mxu0 %v631
  %v1789 = vpop.f32.mrb[0].mxu0
  %v1790 = vadd.f32 %v1725, %v1789
  %v1791 = vpop.f32.mrb[0].mxu0
  %v1792 = vpop.f32.mrb[0].mxu0
  %v1793 = vadd.f32 %v1728, %v1792
  %v1794 = vpop.f32.mrb[0].mxu0
  %1795 = vdwg.mxu0
  %1796 = vmatprep.subr.bf16.mxu0 0
  %1797 = vmatpush1.bf16.msra.mxu0 %v1295
  %1798 = vmatprep.subr.bf16.mxu0 0
  %1799 = vmatpush1.bf16.msra.mxu0 %v1296
  %1800 = vmatprep.subr.bf16.mxu0 0
  %1801 = vmatpush1.bf16.msra.mxu0 %v1297
  %1802 = vmatprep.subr.bf16.mxu0 0
  %1803 = vmatpush1.bf16.msra.mxu0 %v1298
  %1804 = vmatprep.subr.bf16.mxu0 0
  %1805 = vmatpush1.bf16.msra.mxu0 %v1299
  %1806 = vmatprep.subr.bf16.mxu0 0
  %1807 = vmatpush1.bf16.msra.mxu0 %v1300
  %1808 = vmatprep.subr.bf16.mxu0 0
  %1809 = vmatpush1.bf16.msra.mxu0 %v1301
  %1810 = vmatprep.subr.bf16.mxu0 0
  %1811 = vmatpush1.bf16.msra.mxu0 %v1302
  %1812 = vmatprep.subr.bf16.mxu0 0
  %1813 = vmatpush1.bf16.msra.mxu0 %v1303
  %1814 = vmatprep.subr.bf16.mxu0 0
  %1815 = vmatpush1.bf16.msra.mxu0 %v1304
  %1816 = vmatprep.subr.bf16.mxu0 0
  %1817 = vmatpush1.bf16.msra.mxu0 %v1305
  %1818 = vmatprep.subr.bf16.mxu0 0
  %1819 = vmatpush1.bf16.msra.mxu0 %v1306
  %1820 = vmatprep.subr.bf16.mxu0 0
  %1821 = vmatpush1.bf16.msra.mxu0 %v1307
  %1822 = vmatprep.subr.bf16.mxu0 0
  %1823 = vmatpush1.bf16.msra.mxu0 %v1308
  %1824 = vmatprep.subr.bf16.mxu0 0
  %1825 = vmatpush1.bf16.msra.mxu0 %v1309
  %1826 = vmatprep.subr.bf16.mxu0 0
  %1827 = vmatpush1.bf16.msra.mxu0 %v1310
  %1828 = vmatprep.mubr.bf16.mxu0 %v586
  %1829 = vmatmul.mubr.bf16.gmra.mrb[0].mxu0 %v585
  %v1830 = vpop.f32.mrb[0].mxu0
  %v1831 = vadd.f32 %v1766, %v1830
  %v1832 = vpop.f32.mrb[0].mxu0
  %v1833 = vpop.f32.mrb[0].mxu0
  %v1834 = vadd.f32 %v1769, %v1833
  %v1835 = vpop.f32.mrb[0].mxu0
  %1836 = vmatprep.mubr.bf16.mxu0 %v602
  %1837 = vmatmul.mubr.bf16.gmra.mrb[0].mxu0 %v601
  %v1838 = vpop.f32.mrb[0].mxu0
  %v1839 = vadd.f32 %v1774, %v1838
  %v1840 = vpop.f32.mrb[0].mxu0
  %v1841 = vpop.f32.mrb[0].mxu0
  %v1842 = vadd.f32 %v1777, %v1841
  %v1843 = vpop.f32.mrb[0].mxu0
  %1844 = vmatprep.mubr.bf16.mxu0 %v618
  %1845 = vmatmul.mubr.bf16.gmra.mrb[0].mxu0 %v617
  %v1846 = vpop.f32.mrb[0].mxu0
  %v1847 = vadd.f32 %v1782, %v1846
  %v1848 = vpop.f32.mrb[0].mxu0
  %v1849 = vpop.f32.mrb[0].mxu0
  %v1850 = vadd.f32 %v1785, %v1849
  %v1851 = vpop.f32.mrb[0].mxu0
  %1852 = vmatprep.mubr.bf16.mxu0 %v634
  %1853 = vmatmul.mubr.bf16.gmra.mrb[0].mxu0 %v633
  %v1854 = vpop.f32.mrb[0].mxu0
  %v1855 = vadd.f32 %v1790, %v1854
  %v1856 = vpop.f32.mrb[0].mxu0
  %v1857 = vpop.f32.mrb[0].mxu0
  %v1858 = vadd.f32 %v1793, %v1857
  %v1859 = vpop.f32.mrb[0].mxu0
  %1860 = vdwg.mxu0
  %1861 = vmatprep.subr.bf16.mxu0 0
  %1862 = vmatpush1.bf16.msra.mxu0 %v1311
  %1863 = vmatprep.subr.bf16.mxu0 0
  %1864 = vmatpush1.bf16.msra.mxu0 %v1312
  %1865 = vmatprep.subr.bf16.mxu0 0
  %1866 = vmatpush1.bf16.msra.mxu0 %v1313
  %1867 = vmatprep.subr.bf16.mxu0 0
  %1868 = vmatpush1.bf16.msra.mxu0 %v1314
  %1869 = vmatprep.subr.bf16.mxu0 0
  %1870 = vmatpush1.bf16.msra.mxu0 %v1315
  %1871 = vmatprep.subr.bf16.mxu0 0
  %1872 = vmatpush1.bf16.msra.mxu0 %v1316
  %1873 = vmatprep.subr.bf16.mxu0 0
  %1874 = vmatpush1.bf16.msra.mxu0 %v1317
  %1875 = vmatprep.subr.bf16.mxu0 0
  %1876 = vmatpush1.bf16.msra.mxu0 %v1318
  %1877 = vmatprep.subr.bf16.mxu0 0
  %1878 = vmatpush1.bf16.msra.mxu0 %v1319
  %1879 = vmatprep.subr.bf16.mxu0 0
  %1880 = vmatpush1.bf16.msra.mxu0 %v1320
  %1881 = vmatprep.subr.bf16.mxu0 0
  %1882 = vmatpush1.bf16.msra.mxu0 %v1321
  %1883 = vmatprep.subr.bf16.mxu0 0
  %1884 = vmatpush1.bf16.msra.mxu0 %v1322
  %1885 = vmatprep.subr.bf16.mxu0 0
  %1886 = vmatpush1.bf16.msra.mxu0 %v1323
  %1887 = vmatprep.subr.bf16.mxu0 0
  %1888 = vmatpush1.bf16.msra.mxu0 %v1324
  %1889 = vmatprep.subr.bf16.mxu0 0
  %1890 = vmatpush1.bf16.msra.mxu0 %v1325
  %1891 = vmatprep.subr.bf16.mxu0 0
  %1892 = vmatpush1.bf16.msra.mxu0 %v1326
  %1893 = vmatprep.mubr.bf16.mxu0 %v588
  %1894 = vmatmul.mubr.bf16.gmra.mrb[0].mxu0 %v587
  %v1895 = vpop.f32.mrb[0].mxu0
  %v1896 = vadd.f32 %v1831, %v1895
  %v1897 = vpop.f32.mrb[0].mxu0
  %v1898 = vpop.f32.mrb[0].mxu0
  %v1899 = vadd.f32 %v1834, %v1898
  %v1900 = vpop.f32.mrb[0].mxu0
  %1901 = vmatprep.mubr.bf16.mxu0 %v604
  %1902 = vmatmul.mubr.bf16.gmra.mrb[0].mxu0 %v603
  %v1903 = vpop.f32.mrb[0].mxu0
  %v1904 = vadd.f32 %v1839, %v1903
  %v1905 = vpop.f32.mrb[0].mxu0
  %v1906 = vpop.f32.mrb[0].mxu0
  %v1907 = vadd.f32 %v1842, %v1906
  %v1908 = vpop.f32.mrb[0].mxu0
  %1909 = vmatprep.mubr.bf16.mxu0 %v620
  %1910 = vmatmul.mubr.bf16.gmra.mrb[0].mxu0 %v619
  %v1911 = vpop.f32.mrb[0].mxu0
  %v1912 = vadd.f32 %v1847, %v1911
  %v1913 = vpop.f32.mrb[0].mxu0
  %v1914 = vpop.f32.mrb[0].mxu0
  %v1915 = vadd.f32 %v1850, %v1914
  %v1916 = vpop.f32.mrb[0].mxu0
  %1917 = vmatprep.mubr.bf16.mxu0 %v636
  %1918 = vmatmul.mubr.bf16.gmra.mrb[0].mxu0 %v635
  %v1919 = vpop.f32.mrb[0].mxu0
  %v1920 = vadd.f32 %v1855, %v1919
  %v1921 = vpop.f32.mrb[0].mxu0
  %v1922 = vpop.f32.mrb[0].mxu0
  %v1923 = vadd.f32 %v1858, %v1922
  %v1924 = vpop.f32.mrb[0].mxu0
  %1925 = vdwg.mxu0
  %1926 = vmatprep.subr.bf16.mxu0 0
  %1927 = vmatpush1.bf16.msra.mxu0 %v1327
  %1928 = vmatprep.subr.bf16.mxu0 0
  %1929 = vmatpush1.bf16.msra.mxu0 %v1328
  %1930 = vmatprep.subr.bf16.mxu0 0
  %1931 = vmatpush1.bf16.msra.mxu0 %v1329
  %1932 = vmatprep.subr.bf16.mxu0 0
  %1933 = vmatpush1.bf16.msra.mxu0 %v1330
  %1934 = vmatprep.subr.bf16.mxu0 0
  %1935 = vmatpush1.bf16.msra.mxu0 %v1331
  %1936 = vmatprep.subr.bf16.mxu0 0
  %1937 = vmatpush1.bf16.msra.mxu0 %v1332
  %1938 = vmatprep.subr.bf16.mxu0 0
  %1939 = vmatpush1.bf16.msra.mxu0 %v1333
  %1940 = vmatprep.subr.bf16.mxu0 0
  %1941 = vmatpush1.bf16.msra.mxu0 %v1334
  %1942 = vmatprep.subr.bf16.mxu0 0
  %1943 = vmatpush1.bf16.msra.mxu0 %v1335
  %1944 = vmatprep.subr.bf16.mxu0 0
  %1945 = vmatpush1.bf16.msra.mxu0 %v1336
  %1946 = vmatprep.subr.bf16.mxu0 0
  %1947 = vmatpush1.bf16.msra.mxu0 %v1337
  %1948 = vmatprep.subr.bf16.mxu0 0
  %1949 = vmatpush1.bf16.msra.mxu0 %v1338
  %1950 = vmatprep.subr.bf16.mxu0 0
  %1951 = vmatpush1.bf16.msra.mxu0 %v1339
  %1952 = vmatprep.subr.bf16.mxu0 0
  %1953 = vmatpush1.bf16.msra.mxu0 %v1340
  %1954 = vmatprep.subr.bf16.mxu0 0
  %1955 = vmatpush1.bf16.msra.mxu0 %v1341
  %1956 = vmatprep.subr.bf16.mxu0 0
  %1957 = vmatpush1.bf16.msra.mxu0 %v1342
  %1958 = vmatprep.mubr.bf16.mxu0 %v590
  %1959 = vmatmul.mubr.bf16.gmra.mrb[0].mxu0 %v589
  %v1960 = vpop.f32.mrb[0].mxu0
  %v1961 = vadd.f32 %v1896, %v1960
  %v1962 = vpop.f32.mrb[0].mxu0
  %v1963 = vpop.f32.mrb[0].mxu0
  %v1964 = vadd.f32 %v1899, %v1963
  %v1965 = vpop.f32.mrb[0].mxu0
  %1966 = vmatprep.mubr.bf16.mxu0 %v606
  %1967 = vmatmul.mubr.bf16.gmra.mrb[0].mxu0 %v605
  %v1968 = vpop.f32.mrb[0].mxu0
  %v1969 = vadd.f32 %v1904, %v1968
  %v1970 = vpop.f32.mrb[0].mxu0
  %v1971 = vpop.f32.mrb[0].mxu0
  %v1972 = vadd.f32 %v1907, %v1971
  %v1973 = vpop.f32.mrb[0].mxu0
  %1974 = vmatprep.mubr.bf16.mxu0 %v622
  %1975 = vmatmul.mubr.bf16.gmra.mrb[0].mxu0 %v621
  %v1976 = vpop.f32.mrb[0].mxu0
  %v1977 = vadd.f32 %v1912, %v1976
  %v1978 = vpop.f32.mrb[0].mxu0
  %v1979 = vpop.f32.mrb[0].mxu0
  %v1980 = vadd.f32 %v1915, %v1979
  %v1981 = vpop.f32.mrb[0].mxu0
  %1982 = vmatprep.mubr.bf16.mxu0 %v638
  %1983 = vmatmul.mubr.bf16.gmra.mrb[0].mxu0 %v637
  %v1984 = vpop.f32.mrb[0].mxu0
  %v1985 = vadd.f32 %v1920, %v1984
  %v1986 = vpop.f32.mrb[0].mxu0
  %v1987 = vpop.f32.mrb[0].mxu0
  %v1988 = vadd.f32 %v1923, %v1987
  %v1989 = vpop.f32.mrb[0].mxu0
  %1990 = vdwg.mxu0
  %vm1991 = vcmp.gt.f32.partialorder %v1961, 0.0
  %vm1992 = vcmp.gt.f32.partialorder %v1964, 0.0
  %vm1993 = vcmp.gt.f32.partialorder %v1969, 0.0
  %vm1994 = vcmp.gt.f32.partialorder %v1972, 0.0
  %vm1995 = vcmp.gt.f32.partialorder %v1977, 0.0
  %vm1996 = vcmp.gt.f32.partialorder %v1980, 0.0
  %vm1997 = vcmp.gt.f32.partialorder %v1985, 0.0
  %vm1998 = vcmp.gt.f32.partialorder %v1988, 0.0
  %v1999 = vmul.f32 %v1961, 0.2
  %v2000 = vmul.f32 %v1964, 0.2
  %v2001 = vmul.f32 %v1969, 0.2
  %v2002 = vmul.f32 %v1972, 0.2
  %v2003 = vmul.f32 %v1977, 0.2
  %v2004 = vmul.f32 %v1980, 0.2
  %v2005 = vmul.f32 %v1985, 0.2
  %v2006 = vmul.f32 %v1988, 0.2
  %v2007 = vsel %vm1991, %v1961, %v1999
  %v2008 = vsel %vm1992, %v1964, %v2000
  %v2009 = vsel %vm1993, %v1969, %v2001
  %v2010 = vsel %vm1994, %v1972, %v2002
  %v2011 = vsel %vm1995, %v1977, %v2003
  %v2012 = vsel %vm1996, %v1980, %v2004
  %v2013 = vsel %vm1997, %v1985, %v2005
  %v2014 = vsel %vm1998, %v1988, %v2006
  %v2015 = vpack.c.bf16 %v2008, %v2007
  %v2016 = vpack.c.bf16 %v2010, %v2009
  %v2017 = vpack.c.bf16 %v2012, %v2011
  %v2018 = vpack.c.bf16 %v2014, %v2013
  %v2023 = vunpack.c.l.b16 %v2015
  %v2024 = vunpack.c.h.b16 %v2015
  %v2025 = vunpack.c.l.b16 %v2016
  %v2026 = vunpack.c.h.b16 %v2016
  %v2027 = vunpack.c.l.b16 %v2017
  %v2028 = vunpack.c.h.b16 %v2017
  %v2029 = vunpack.c.l.b16 %v2018
  %v2030 = vunpack.c.h.b16 %v2018
  %v2031 = vpack.c.b16 %v2023, %v2023
  %v2032 = vpack.c.b16 %v2024, %v2024
  %v2033 = vpack.c.b16 %v2025, %v2025
  %v2034 = vpack.c.b16 %v2026, %v2026
  %v2035 = vpack.c.b16 %v2027, %v2027
  %v2036 = vpack.c.b16 %v2028, %v2028
  %v2037 = vpack.c.b16 %v2029, %v2029
  %v2038 = vpack.c.b16 %v2030, %v2030
  %2047 = vst [vmem:[%s3] sm:$0xf] %v2031
  %2048 = vst [vmem:[%s3 + $0x4] sm:$0xf] %v2032
  %2049 = vst [vmem:[%s3 + $0x8] sm:$0xf] %v2033
  %2050 = vst [vmem:[%s3 + $0xc] sm:$0xf] %v2034
  %2051 = vst [vmem:[%s3 + $0x10] sm:$0xf] %v2035
  %2052 = vst [vmem:[%s3 + $0x14] sm:$0xf] %v2036
  %2053 = vst [vmem:[%s3 + $0x18] sm:$0xf] %v2037
  %2054 = vst [vmem:[%s3 + $0x1c] sm:$0xf] %v2038
  // Predicated region
  $region14: #{adversary_forward.5} parent=0 // pred_check
    _
  $region15: #{adversary_forward.5} parent=0 // pred_check_branch
    %2056 = sbr.rel (0) target = $region17
  $region16: #{adversary_forward.5} parent=0 // pred_region
    _
  $region17: #{adversary_forward.5} parent=0 // pred_fallthru
    _
  // Predicated region
  $region18: #{adversary_forward.5} parent=0 // pred_check
    _
  $region19: #{adversary_forward.5} parent=0 // pred_check_branch
    %2058 = sbr.rel (0) target = $region21
  $region20: #{adversary_forward.5} parent=0 // pred_region
    _
  $region21: #{adversary_forward.5} parent=0 // pred_fallthru
    _

// kernel: adversary_forward.6
$region0: #{adversary_forward.6}
  #allocation0 [shape = 'u32[]', space=smem, size = 0x4, offset = 0x4, fixed_abs, tag = 'smem constant byte address 0x4 - core index']
  #allocation1 [shape = 'u32[144,128]{1,0:T(1,128)}', space=vmem, size = 0x12000, scoped, tag = 'internal scratch']
  %s0 = inlined_call_operand.vmem [shape: bf16[4096,128], index: 0, kind: input, shape index: {}]
  %s1 = inlined_call_operand.vmem [shape: bf16[128,4096], index: 1, kind: input, shape index: {}]
  %s2 = inlined_call_operand.vmem [shape: f32[128,1], index: 2, kind: input, shape index: {}]
  %s3 = inlined_call_operand.vmem [shape: bf16[128,128], index: 3, kind: output, shape index: {}]
  %s4 = sld [smem:[#allocation0]]
  $region22: #{adversary_forward.6} parent=0
    _
  %s6 = ssub.s32 1, %s4
  %s7 = scalar_select 0, %s6, %s4
  // Predicated region
  $region2: #{adversary_forward.6} parent=0 // pred_check
    _
  $region3: #{adversary_forward.6} parent=0 // pred_check_branch
    %9 = sbr.rel (0) target = $region5
  $region4: #{adversary_forward.6} parent=0 // pred_region
    _
  $region5: #{adversary_forward.6} parent=0 // pred_fallthru
    _
  // Predicated region
  $region6: #{adversary_forward.6} parent=0 // pred_check
    _
  $region7: #{adversary_forward.6} parent=0 // pred_check_branch
    %11 = sbr.rel (0) target = $region9
  $region8: #{adversary_forward.6} parent=0 // pred_region
    _
  $region9: #{adversary_forward.6} parent=0 // pred_fallthru
    _
  // Predicated region
  $region10: #{adversary_forward.6} parent=0 // pred_check
    _
  $region11: #{adversary_forward.6} parent=0 // pred_check_branch
    %13 = sbr.rel (0) target = $region13
  $region12: #{adversary_forward.6} parent=0 // pred_region
    _
  $region13: #{adversary_forward.6} parent=0 // pred_fallthru
    _
  %v15 = vld [vmem:[%s1] sm:$0xff]
  %v16 = vld [vmem:[%s1 + $0x8] sm:$0xff]
  %v17 = vld [vmem:[%s1 + $0x10] sm:$0xff]
  %v18 = vld [vmem:[%s1 + $0x18] sm:$0xff]
  %v19 = vld [vmem:[%s1 + $0x20] sm:$0xff]
  %v20 = vld [vmem:[%s1 + $0x28] sm:$0xff]
  %v21 = vld [vmem:[%s1 + $0x30] sm:$0xff]
  %v22 = vld [vmem:[%s1 + $0x38] sm:$0xff]
  %v23 = vld [vmem:[%s1 + $0x40] sm:$0xff]
  %v24 = vld [vmem:[%s1 + $0x48] sm:$0xff]
  %v25 = vld [vmem:[%s1 + $0x50] sm:$0xff]
  %v26 = vld [vmem:[%s1 + $0x58] sm:$0xff]
  %v27 = vld [vmem:[%s1 + $0x60] sm:$0xff]
  %v28 = vld [vmem:[%s1 + $0x68] sm:$0xff]
  %v29 = vld [vmem:[%s1 + $0x70] sm:$0xff]
  %v30 = vld [vmem:[%s1 + $0x78] sm:$0xff]
  %v31 = vld [vmem:[%s1 + $0x80] sm:$0xff]
  %v32 = vld [vmem:[%s1 + $0x88] sm:$0xff]
  %v33 = vld [vmem:[%s1 + $0x90] sm:$0xff]
  %v34 = vld [vmem:[%s1 + $0x98] sm:$0xff]
  %v35 = vld [vmem:[%s1 + $0xa0] sm:$0xff]
  %v36 = vld [vmem:[%s1 + $0xa8] sm:$0xff]
  %v37 = vld [vmem:[%s1 + $0xb0] sm:$0xff]
  %v38 = vld [vmem:[%s1 + $0xb8] sm:$0xff]
  %v39 = vld [vmem:[%s1 + $0xc0] sm:$0xff]
  %v40 = vld [vmem:[%s1 + $0xc8] sm:$0xff]
  %v41 = vld [vmem:[%s1 + $0xd0] sm:$0xff]
  %v42 = vld [vmem:[%s1 + $0xd8] sm:$0xff]
  %v43 = vld [vmem:[%s1 + $0xe0] sm:$0xff]
  %v44 = vld [vmem:[%s1 + $0xe8] sm:$0xff]
  %v45 = vld [vmem:[%s1 + $0xf0] sm:$0xff]
  %v46 = vld [vmem:[%s1 + $0xf8] sm:$0xff]
  %v47 = vld [vmem:[%s1 + $0x100] sm:$0xff]
  %v48 = vld [vmem:[%s1 + $0x108] sm:$0xff]
  %v49 = vld [vmem:[%s1 + $0x110] sm:$0xff]
  %v50 = vld [vmem:[%s1 + $0x118] sm:$0xff]
  %v51 = vld [vmem:[%s1 + $0x120] sm:$0xff]
  %v52 = vld [vmem:[%s1 + $0x128] sm:$0xff]
  %v53 = vld [vmem:[%s1 + $0x130] sm:$0xff]
  %v54 = vld [vmem:[%s1 + $0x138] sm:$0xff]
  %v55 = vld [vmem:[%s1 + $0x140] sm:$0xff]
  %v56 = vld [vmem:[%s1 + $0x148] sm:$0xff]
  %v57 = vld [vmem:[%s1 + $0x150] sm:$0xff]
  %v58 = vld [vmem:[%s1 + $0x158] sm:$0xff]
  %v59 = vld [vmem:[%s1 + $0x160] sm:$0xff]
  %v60 = vld [vmem:[%s1 + $0x168] sm:$0xff]
  %v61 = vld [vmem:[%s1 + $0x170] sm:$0xff]
  %v62 = vld [vmem:[%s1 + $0x178] sm:$0xff]
  %v63 = vld [vmem:[%s1 + $0x180] sm:$0xff]
  %v64 = vld [vmem:[%s1 + $0x188] sm:$0xff]
  %v65 = vld [vmem:[%s1 + $0x190] sm:$0xff]
  %v66 = vld [vmem:[%s1 + $0x198] sm:$0xff]
  %v67 = vld [vmem:[%s1 + $0x1a0] sm:$0xff]
  %v68 = vld [vmem:[%s1 + $0x1a8] sm:$0xff]
  %v69 = vld [vmem:[%s1 + $0x1b0] sm:$0xff]
  %v70 = vld [vmem:[%s1 + $0x1b8] sm:$0xff]
  %v71 = vld [vmem:[%s1 + $0x1c0] sm:$0xff]
  %v72 = vld [vmem:[%s1 + $0x1c8] sm:$0xff]
  %v73 = vld [vmem:[%s1 + $0x1d0] sm:$0xff]
  %v74 = vld [vmem:[%s1 + $0x1d8] sm:$0xff]
  %v75 = vld [vmem:[%s1 + $0x1e0] sm:$0xff]
  %v76 = vld [vmem:[%s1 + $0x1e8] sm:$0xff]
  %v77 = vld [vmem:[%s1 + $0x1f0] sm:$0xff]
  %v78 = vld [vmem:[%s1 + $0x1f8] sm:$0xff]
  %v79 = vld [vmem:[%s1 + $0x200] sm:$0xff]
  %v80 = vld [vmem:[%s1 + $0x208] sm:$0xff]
  %v81 = vld [vmem:[%s1 + $0x210] sm:$0xff]
  %v82 = vld [vmem:[%s1 + $0x218] sm:$0xff]
  %v83 = vld [vmem:[%s1 + $0x220] sm:$0xff]
  %v84 = vld [vmem:[%s1 + $0x228] sm:$0xff]
  %v85 = vld [vmem:[%s1 + $0x230] sm:$0xff]
  %v86 = vld [vmem:[%s1 + $0x238] sm:$0xff]
  %v87 = vld [vmem:[%s1 + $0x240] sm:$0xff]
  %v88 = vld [vmem:[%s1 + $0x248] sm:$0xff]
  %v89 = vld [vmem:[%s1 + $0x250] sm:$0xff]
  %v90 = vld [vmem:[%s1 + $0x258] sm:$0xff]
  %v91 = vld [vmem:[%s1 + $0x260] sm:$0xff]
  %v92 = vld [vmem:[%s1 + $0x268] sm:$0xff]
  %v93 = vld [vmem:[%s1 + $0x270] sm:$0xff]
  %v94 = vld [vmem:[%s1 + $0x278] sm:$0xff]
  %v95 = vld [vmem:[%s1 + $0x280] sm:$0xff]
  %v96 = vld [vmem:[%s1 + $0x288] sm:$0xff]
  %v97 = vld [vmem:[%s1 + $0x290] sm:$0xff]
  %v98 = vld [vmem:[%s1 + $0x298] sm:$0xff]
  %v99 = vld [vmem:[%s1 + $0x2a0] sm:$0xff]
  %v100 = vld [vmem:[%s1 + $0x2a8] sm:$0xff]
  %v101 = vld [vmem:[%s1 + $0x2b0] sm:$0xff]
  %v102 = vld [vmem:[%s1 + $0x2b8] sm:$0xff]
  %v103 = vld [vmem:[%s1 + $0x2c0] sm:$0xff]
  %v104 = vld [vmem:[%s1 + $0x2c8] sm:$0xff]
  %v105 = vld [vmem:[%s1 + $0x2d0] sm:$0xff]
  %v106 = vld [vmem:[%s1 + $0x2d8] sm:$0xff]
  %v107 = vld [vmem:[%s1 + $0x2e0] sm:$0xff]
  %v108 = vld [vmem:[%s1 + $0x2e8] sm:$0xff]
  %v109 = vld [vmem:[%s1 + $0x2f0] sm:$0xff]
  %v110 = vld [vmem:[%s1 + $0x2f8] sm:$0xff]
  %v111 = vld [vmem:[%s1 + $0x300] sm:$0xff]
  %v112 = vld [vmem:[%s1 + $0x308] sm:$0xff]
  %v113 = vld [vmem:[%s1 + $0x310] sm:$0xff]
  %v114 = vld [vmem:[%s1 + $0x318] sm:$0xff]
  %v115 = vld [vmem:[%s1 + $0x320] sm:$0xff]
  %v116 = vld [vmem:[%s1 + $0x328] sm:$0xff]
  %v117 = vld [vmem:[%s1 + $0x330] sm:$0xff]
  %v118 = vld [vmem:[%s1 + $0x338] sm:$0xff]
  %v119 = vld [vmem:[%s1 + $0x340] sm:$0xff]
  %v120 = vld [vmem:[%s1 + $0x348] sm:$0xff]
  %v121 = vld [vmem:[%s1 + $0x350] sm:$0xff]
  %v122 = vld [vmem:[%s1 + $0x358] sm:$0xff]
  %v123 = vld [vmem:[%s1 + $0x360] sm:$0xff]
  %v124 = vld [vmem:[%s1 + $0x368] sm:$0xff]
  %v125 = vld [vmem:[%s1 + $0x370] sm:$0xff]
  %v126 = vld [vmem:[%s1 + $0x378] sm:$0xff]
  %v127 = vld [vmem:[%s1 + $0x380] sm:$0xff]
  %v128 = vld [vmem:[%s1 + $0x388] sm:$0xff]
  %v129 = vld [vmem:[%s1 + $0x390] sm:$0xff]
  %v130 = vld [vmem:[%s1 + $0x398] sm:$0xff]
  %v131 = vld [vmem:[%s1 + $0x3a0] sm:$0xff]
  %v132 = vld [vmem:[%s1 + $0x3a8] sm:$0xff]
  %v133 = vld [vmem:[%s1 + $0x3b0] sm:$0xff]
  %v134 = vld [vmem:[%s1 + $0x3b8] sm:$0xff]
  %v135 = vld [vmem:[%s1 + $0x3c0] sm:$0xff]
  %v136 = vld [vmem:[%s1 + $0x3c8] sm:$0xff]
  %v137 = vld [vmem:[%s1 + $0x3d0] sm:$0xff]
  %v138 = vld [vmem:[%s1 + $0x3d8] sm:$0xff]
  %v139 = vld [vmem:[%s1 + $0x3e0] sm:$0xff]
  %v140 = vld [vmem:[%s1 + $0x3e8] sm:$0xff]
  %v141 = vld [vmem:[%s1 + $0x3f0] sm:$0xff]
  %v142 = vld [vmem:[%s1 + $0x3f8] sm:$0xff]
  %v143 = vld [vmem:[%s1 + $0x400] sm:$0xff]
  %v144 = vld [vmem:[%s1 + $0x408] sm:$0xff]
  %v145 = vld [vmem:[%s1 + $0x410] sm:$0xff]
  %v146 = vld [vmem:[%s1 + $0x418] sm:$0xff]
  %v147 = vld [vmem:[%s1 + $0x420] sm:$0xff]
  %v148 = vld [vmem:[%s1 + $0x428] sm:$0xff]
  %v149 = vld [vmem:[%s1 + $0x430] sm:$0xff]
  %v150 = vld [vmem:[%s1 + $0x438] sm:$0xff]
  %v151 = vld [vmem:[%s1 + $0x440] sm:$0xff]
  %v152 = vld [vmem:[%s1 + $0x448] sm:$0xff]
  %v153 = vld [vmem:[%s1 + $0x450] sm:$0xff]
  %v154 = vld [vmem:[%s1 + $0x458] sm:$0xff]
  %v155 = vld [vmem:[%s1 + $0x460] sm:$0xff]
  %v156 = vld [vmem:[%s1 + $0x468] sm:$0xff]
  %v157 = vld [vmem:[%s1 + $0x470] sm:$0xff]
  %v158 = vld [vmem:[%s1 + $0x478] sm:$0xff]
  %v159 = vld [vmem:[%s1 + $0x480] sm:$0xff]
  %v160 = vld [vmem:[%s1 + $0x488] sm:$0xff]
  %v161 = vld [vmem:[%s1 + $0x490] sm:$0xff]
  %v162 = vld [vmem:[%s1 + $0x498] sm:$0xff]
  %v163 = vld [vmem:[%s1 + $0x4a0] sm:$0xff]
  %v164 = vld [vmem:[%s1 + $0x4a8] sm:$0xff]
  %v165 = vld [vmem:[%s1 + $0x4b0] sm:$0xff]
  %v166 = vld [vmem:[%s1 + $0x4b8] sm:$0xff]
  %v167 = vld [vmem:[%s1 + $0x4c0] sm:$0xff]
  %v168 = vld [vmem:[%s1 + $0x4c8] sm:$0xff]
  %v169 = vld [vmem:[%s1 + $0x4d0] sm:$0xff]
  %v170 = vld [vmem:[%s1 + $0x4d8] sm:$0xff]
  %v171 = vld [vmem:[%s1 + $0x4e0] sm:$0xff]
  %v172 = vld [vmem:[%s1 + $0x4e8] sm:$0xff]
  %v173 = vld [vmem:[%s1 + $0x4f0] sm:$0xff]
  %v174 = vld [vmem:[%s1 + $0x4f8] sm:$0xff]
  %v175 = vld [vmem:[%s1 + $0x500] sm:$0xff]
  %v176 = vld [vmem:[%s1 + $0x508] sm:$0xff]
  %v177 = vld [vmem:[%s1 + $0x510] sm:$0xff]
  %v178 = vld [vmem:[%s1 + $0x518] sm:$0xff]
  %v179 = vld [vmem:[%s1 + $0x520] sm:$0xff]
  %v180 = vld [vmem:[%s1 + $0x528] sm:$0xff]
  %v181 = vld [vmem:[%s1 + $0x530] sm:$0xff]
  %v182 = vld [vmem:[%s1 + $0x538] sm:$0xff]
  %v183 = vld [vmem:[%s1 + $0x540] sm:$0xff]
  %v184 = vld [vmem:[%s1 + $0x548] sm:$0xff]
  %v185 = vld [vmem:[%s1 + $0x550] sm:$0xff]
  %v186 = vld [vmem:[%s1 + $0x558] sm:$0xff]
  %v187 = vld [vmem:[%s1 + $0x560] sm:$0xff]
  %v188 = vld [vmem:[%s1 + $0x568] sm:$0xff]
  %v189 = vld [vmem:[%s1 + $0x570] sm:$0xff]
  %v190 = vld [vmem:[%s1 + $0x578] sm:$0xff]
  %v191 = vld [vmem:[%s1 + $0x580] sm:$0xff]
  %v192 = vld [vmem:[%s1 + $0x588] sm:$0xff]
  %v193 = vld [vmem:[%s1 + $0x590] sm:$0xff]
  %v194 = vld [vmem:[%s1 + $0x598] sm:$0xff]
  %v195 = vld [vmem:[%s1 + $0x5a0] sm:$0xff]
  %v196 = vld [vmem:[%s1 + $0x5a8] sm:$0xff]
  %v197 = vld [vmem:[%s1 + $0x5b0] sm:$0xff]
  %v198 = vld [vmem:[%s1 + $0x5b8] sm:$0xff]
  %v199 = vld [vmem:[%s1 + $0x5c0] sm:$0xff]
  %v200 = vld [vmem:[%s1 + $0x5c8] sm:$0xff]
  %v201 = vld [vmem:[%s1 + $0x5d0] sm:$0xff]
  %v202 = vld [vmem:[%s1 + $0x5d8] sm:$0xff]
  %v203 = vld [vmem:[%s1 + $0x5e0] sm:$0xff]
  %v204 = vld [vmem:[%s1 + $0x5e8] sm:$0xff]
  %v205 = vld [vmem:[%s1 + $0x5f0] sm:$0xff]
  %v206 = vld [vmem:[%s1 + $0x5f8] sm:$0xff]
  %v207 = vld [vmem:[%s1 + $0x600] sm:$0xff]
  %v208 = vld [vmem:[%s1 + $0x608] sm:$0xff]
  %v209 = vld [vmem:[%s1 + $0x610] sm:$0xff]
  %v210 = vld [vmem:[%s1 + $0x618] sm:$0xff]
  %v211 = vld [vmem:[%s1 + $0x620] sm:$0xff]
  %v212 = vld [vmem:[%s1 + $0x628] sm:$0xff]
  %v213 = vld [vmem:[%s1 + $0x630] sm:$0xff]
  %v214 = vld [vmem:[%s1 + $0x638] sm:$0xff]
  %v215 = vld [vmem:[%s1 + $0x640] sm:$0xff]
  %v216 = vld [vmem:[%s1 + $0x648] sm:$0xff]
  %v217 = vld [vmem:[%s1 + $0x650] sm:$0xff]
  %v218 = vld [vmem:[%s1 + $0x658] sm:$0xff]
  %v219 = vld [vmem:[%s1 + $0x660] sm:$0xff]
  %v220 = vld [vmem:[%s1 + $0x668] sm:$0xff]
  %v221 = vld [vmem:[%s1 + $0x670] sm:$0xff]
  %v222 = vld [vmem:[%s1 + $0x678] sm:$0xff]
  %v223 = vld [vmem:[%s1 + $0x680] sm:$0xff]
  %v224 = vld [vmem:[%s1 + $0x688] sm:$0xff]
  %v225 = vld [vmem:[%s1 + $0x690] sm:$0xff]
  %v226 = vld [vmem:[%s1 + $0x698] sm:$0xff]
  %v227 = vld [vmem:[%s1 + $0x6a0] sm:$0xff]
  %v228 = vld [vmem:[%s1 + $0x6a8] sm:$0xff]
  %v229 = vld [vmem:[%s1 + $0x6b0] sm:$0xff]
  %v230 = vld [vmem:[%s1 + $0x6b8] sm:$0xff]
  %v231 = vld [vmem:[%s1 + $0x6c0] sm:$0xff]
  %v232 = vld [vmem:[%s1 + $0x6c8] sm:$0xff]
  %v233 = vld [vmem:[%s1 + $0x6d0] sm:$0xff]
  %v234 = vld [vmem:[%s1 + $0x6d8] sm:$0xff]
  %v235 = vld [vmem:[%s1 + $0x6e0] sm:$0xff]
  %v236 = vld [vmem:[%s1 + $0x6e8] sm:$0xff]
  %v237 = vld [vmem:[%s1 + $0x6f0] sm:$0xff]
  %v238 = vld [vmem:[%s1 + $0x6f8] sm:$0xff]
  %v239 = vld [vmem:[%s1 + $0x700] sm:$0xff]
  %v240 = vld [vmem:[%s1 + $0x708] sm:$0xff]
  %v241 = vld [vmem:[%s1 + $0x710] sm:$0xff]
  %v242 = vld [vmem:[%s1 + $0x718] sm:$0xff]
  %v243 = vld [vmem:[%s1 + $0x720] sm:$0xff]
  %v244 = vld [vmem:[%s1 + $0x728] sm:$0xff]
  %v245 = vld [vmem:[%s1 + $0x730] sm:$0xff]
  %v246 = vld [vmem:[%s1 + $0x738] sm:$0xff]
  %v247 = vld [vmem:[%s1 + $0x740] sm:$0xff]
  %v248 = vld [vmem:[%s1 + $0x748] sm:$0xff]
  %v249 = vld [vmem:[%s1 + $0x750] sm:$0xff]
  %v250 = vld [vmem:[%s1 + $0x758] sm:$0xff]
  %v251 = vld [vmem:[%s1 + $0x760] sm:$0xff]
  %v252 = vld [vmem:[%s1 + $0x768] sm:$0xff]
  %v253 = vld [vmem:[%s1 + $0x770] sm:$0xff]
  %v254 = vld [vmem:[%s1 + $0x778] sm:$0xff]
  %v255 = vld [vmem:[%s1 + $0x780] sm:$0xff]
  %v256 = vld [vmem:[%s1 + $0x788] sm:$0xff]
  %v257 = vld [vmem:[%s1 + $0x790] sm:$0xff]
  %v258 = vld [vmem:[%s1 + $0x798] sm:$0xff]
  %v259 = vld [vmem:[%s1 + $0x7a0] sm:$0xff]
  %v260 = vld [vmem:[%s1 + $0x7a8] sm:$0xff]
  %v261 = vld [vmem:[%s1 + $0x7b0] sm:$0xff]
  %v262 = vld [vmem:[%s1 + $0x7b8] sm:$0xff]
  %v263 = vld [vmem:[%s1 + $0x7c0] sm:$0xff]
  %v264 = vld [vmem:[%s1 + $0x7c8] sm:$0xff]
  %v265 = vld [vmem:[%s1 + $0x7d0] sm:$0xff]
  %v266 = vld [vmem:[%s1 + $0x7d8] sm:$0xff]
  %v267 = vld [vmem:[%s1 + $0x7e0] sm:$0xff]
  %v268 = vld [vmem:[%s1 + $0x7e8] sm:$0xff]
  %v269 = vld [vmem:[%s1 + $0x7f0] sm:$0xff]
  %v270 = vld [vmem:[%s1 + $0x7f8] sm:$0xff]
  %v271 = vld [vmem:[%s0] sm:$0xf]
  %v272 = vld [vmem:[%s0 + $0x4] sm:$0xf]
  %v273 = vld [vmem:[%s0 + $0x8] sm:$0xf]
  %v274 = vld [vmem:[%s0 + $0xc] sm:$0xf]
  %v275 = vld [vmem:[%s0 + $0x10] sm:$0xf]
  %v276 = vld [vmem:[%s0 + $0x14] sm:$0xf]
  %v277 = vld [vmem:[%s0 + $0x18] sm:$0xf]
  %v278 = vld [vmem:[%s0 + $0x1c] sm:$0xf]
  %v279 = vld [vmem:[%s0 + $0x20] sm:$0xf]
  %v280 = vld [vmem:[%s0 + $0x24] sm:$0xf]
  %v281 = vld [vmem:[%s0 + $0x28] sm:$0xf]
  %v282 = vld [vmem:[%s0 + $0x2c] sm:$0xf]
  %v283 = vld [vmem:[%s0 + $0x30] sm:$0xf]
  %v284 = vld [vmem:[%s0 + $0x34] sm:$0xf]
  %v285 = vld [vmem:[%s0 + $0x38] sm:$0xf]
  %v286 = vld [vmem:[%s0 + $0x3c] sm:$0xf]
  %v287 = vld [vmem:[%s0 + $0x40] sm:$0xf]
  %v288 = vld [vmem:[%s0 + $0x44] sm:$0xf]
  %v289 = vld [vmem:[%s0 + $0x48] sm:$0xf]
  %v290 = vld [vmem:[%s0 + $0x4c] sm:$0xf]
  %v291 = vld [vmem:[%s0 + $0x50] sm:$0xf]
  %v292 = vld [vmem:[%s0 + $0x54] sm:$0xf]
  %v293 = vld [vmem:[%s0 + $0x58] sm:$0xf]
  %v294 = vld [vmem:[%s0 + $0x5c] sm:$0xf]
  %v295 = vld [vmem:[%s0 + $0x60] sm:$0xf]
  %v296 = vld [vmem:[%s0 + $0x64] sm:$0xf]
  %v297 = vld [vmem:[%s0 + $0x68] sm:$0xf]
  %v298 = vld [vmem:[%s0 + $0x6c] sm:$0xf]
  %v299 = vld [vmem:[%s0 + $0x70] sm:$0xf]
  %v300 = vld [vmem:[%s0 + $0x74] sm:$0xf]
  %v301 = vld [vmem:[%s0 + $0x78] sm:$0xf]
  %v302 = vld [vmem:[%s0 + $0x7c] sm:$0xf]
  %v303 = vld [vmem:[%s0 + $0x80] sm:$0xf]
  %v304 = vld [vmem:[%s0 + $0x84] sm:$0xf]
  %v305 = vld [vmem:[%s0 + $0x88] sm:$0xf]
  %v306 = vld [vmem:[%s0 + $0x8c] sm:$0xf]
  %v307 = vld [vmem:[%s0 + $0x90] sm:$0xf]
  %v308 = vld [vmem:[%s0 + $0x94] sm:$0xf]
  %v309 = vld [vmem:[%s0 + $0x98] sm:$0xf]
  %v310 = vld [vmem:[%s0 + $0x9c] sm:$0xf]
  %v311 = vld [vmem:[%s0 + $0xa0] sm:$0xf]
  %v312 = vld [vmem:[%s0 + $0xa4] sm:$0xf]
  %v313 = vld [vmem:[%s0 + $0xa8] sm:$0xf]
  %v314 = vld [vmem:[%s0 + $0xac] sm:$0xf]
  %v315 = vld [vmem:[%s0 + $0xb0] sm:$0xf]
  %v316 = vld [vmem:[%s0 + $0xb4] sm:$0xf]
  %v317 = vld [vmem:[%s0 + $0xb8] sm:$0xf]
  %v318 = vld [vmem:[%s0 + $0xbc] sm:$0xf]
  %v319 = vld [vmem:[%s0 + $0xc0] sm:$0xf]
  %v320 = vld [vmem:[%s0 + $0xc4] sm:$0xf]
  %v321 = vld [vmem:[%s0 + $0xc8] sm:$0xf]
  %v322 = vld [vmem:[%s0 + $0xcc] sm:$0xf]
  %v323 = vld [vmem:[%s0 + $0xd0] sm:$0xf]
  %v324 = vld [vmem:[%s0 + $0xd4] sm:$0xf]
  %v325 = vld [vmem:[%s0 + $0xd8] sm:$0xf]
  %v326 = vld [vmem:[%s0 + $0xdc] sm:$0xf]
  %v327 = vld [vmem:[%s0 + $0xe0] sm:$0xf]
  %v328 = vld [vmem:[%s0 + $0xe4] sm:$0xf]
  %v329 = vld [vmem:[%s0 + $0xe8] sm:$0xf]
  %v330 = vld [vmem:[%s0 + $0xec] sm:$0xf]
  %v331 = vld [vmem:[%s0 + $0xf0] sm:$0xf]
  %v332 = vld [vmem:[%s0 + $0xf4] sm:$0xf]
  %v333 = vld [vmem:[%s0 + $0xf8] sm:$0xf]
  %v334 = vld [vmem:[%s0 + $0xfc] sm:$0xf]
  %v335 = vld [vmem:[%s0 + $0x100] sm:$0xf]
  %v336 = vld [vmem:[%s0 + $0x104] sm:$0xf]
  %v337 = vld [vmem:[%s0 + $0x108] sm:$0xf]
  %v338 = vld [vmem:[%s0 + $0x10c] sm:$0xf]
  %v339 = vld [vmem:[%s0 + $0x110] sm:$0xf]
  %v340 = vld [vmem:[%s0 + $0x114] sm:$0xf]
  %v341 = vld [vmem:[%s0 + $0x118] sm:$0xf]
  %v342 = vld [vmem:[%s0 + $0x11c] sm:$0xf]
  %v343 = vld [vmem:[%s0 + $0x120] sm:$0xf]
  %v344 = vld [vmem:[%s0 + $0x124] sm:$0xf]
  %v345 = vld [vmem:[%s0 + $0x128] sm:$0xf]
  %v346 = vld [vmem:[%s0 + $0x12c] sm:$0xf]
  %v347 = vld [vmem:[%s0 + $0x130] sm:$0xf]
  %v348 = vld [vmem:[%s0 + $0x134] sm:$0xf]
  %v349 = vld [vmem:[%s0 + $0x138] sm:$0xf]
  %v350 = vld [vmem:[%s0 + $0x13c] sm:$0xf]
  %v351 = vld [vmem:[%s0 + $0x140] sm:$0xf]
  %v352 = vld [vmem:[%s0 + $0x144] sm:$0xf]
  %v353 = vld [vmem:[%s0 + $0x148] sm:$0xf]
  %v354 = vld [vmem:[%s0 + $0x14c] sm:$0xf]
  %v355 = vld [vmem:[%s0 + $0x150] sm:$0xf]
  %v356 = vld [vmem:[%s0 + $0x154] sm:$0xf]
  %v357 = vld [vmem:[%s0 + $0x158] sm:$0xf]
  %v358 = vld [vmem:[%s0 + $0x15c] sm:$0xf]
  %v359 = vld [vmem:[%s0 + $0x160] sm:$0xf]
  %v360 = vld [vmem:[%s0 + $0x164] sm:$0xf]
  %v361 = vld [vmem:[%s0 + $0x168] sm:$0xf]
  %v362 = vld [vmem:[%s0 + $0x16c] sm:$0xf]
  %v363 = vld [vmem:[%s0 + $0x170] sm:$0xf]
  %v364 = vld [vmem:[%s0 + $0x174] sm:$0xf]
  %v365 = vld [vmem:[%s0 + $0x178] sm:$0xf]
  %v366 = vld [vmem:[%s0 + $0x17c] sm:$0xf]
  %v367 = vld [vmem:[%s0 + $0x180] sm:$0xf]
  %v368 = vld [vmem:[%s0 + $0x184] sm:$0xf]
  %v369 = vld [vmem:[%s0 + $0x188] sm:$0xf]
  %v370 = vld [vmem:[%s0 + $0x18c] sm:$0xf]
  %v371 = vld [vmem:[%s0 + $0x190] sm:$0xf]
  %v372 = vld [vmem:[%s0 + $0x194] sm:$0xf]
  %v373 = vld [vmem:[%s0 + $0x198] sm:$0xf]
  %v374 = vld [vmem:[%s0 + $0x19c] sm:$0xf]
  %v375 = vld [vmem:[%s0 + $0x1a0] sm:$0xf]
  %v376 = vld [vmem:[%s0 + $0x1a4] sm:$0xf]
  %v377 = vld [vmem:[%s0 + $0x1a8] sm:$0xf]
  %v378 = vld [vmem:[%s0 + $0x1ac] sm:$0xf]
  %v379 = vld [vmem:[%s0 + $0x1b0] sm:$0xf]
  %v380 = vld [vmem:[%s0 + $0x1b4] sm:$0xf]
  %v381 = vld [vmem:[%s0 + $0x1b8] sm:$0xf]
  %v382 = vld [vmem:[%s0 + $0x1bc] sm:$0xf]
  %v383 = vld [vmem:[%s0 + $0x1c0] sm:$0xf]
  %v384 = vld [vmem:[%s0 + $0x1c4] sm:$0xf]
  %v385 = vld [vmem:[%s0 + $0x1c8] sm:$0xf]
  %v386 = vld [vmem:[%s0 + $0x1cc] sm:$0xf]
  %v387 = vld [vmem:[%s0 + $0x1d0] sm:$0xf]
  %v388 = vld [vmem:[%s0 + $0x1d4] sm:$0xf]
  %v389 = vld [vmem:[%s0 + $0x1d8] sm:$0xf]
  %v390 = vld [vmem:[%s0 + $0x1dc] sm:$0xf]
  %v391 = vld [vmem:[%s0 + $0x1e0] sm:$0xf]
  %v392 = vld [vmem:[%s0 + $0x1e4] sm:$0xf]
  %v393 = vld [vmem:[%s0 + $0x1e8] sm:$0xf]
  %v394 = vld [vmem:[%s0 + $0x1ec] sm:$0xf]
  %v395 = vld [vmem:[%s0 + $0x1f0] sm:$0xf]
  %v396 = vld [vmem:[%s0 + $0x1f4] sm:$0xf]
  %v397 = vld [vmem:[%s0 + $0x1f8] sm:$0xf]
  %v398 = vld [vmem:[%s0 + $0x1fc] sm:$0xf]
  %v399 = vld [vmem:[%s0 + $0x200] sm:$0xf]
  %v400 = vld [vmem:[%s0 + $0x204] sm:$0xf]
  %v401 = vld [vmem:[%s0 + $0x208] sm:$0xf]
  %v402 = vld [vmem:[%s0 + $0x20c] sm:$0xf]
  %v403 = vld [vmem:[%s0 + $0x210] sm:$0xf]
  %v404 = vld [vmem:[%s0 + $0x214] sm:$0xf]
  %v405 = vld [vmem:[%s0 + $0x218] sm:$0xf]
  %v406 = vld [vmem:[%s0 + $0x21c] sm:$0xf]
  %v407 = vld [vmem:[%s0 + $0x220] sm:$0xf]
  %v408 = vld [vmem:[%s0 + $0x224] sm:$0xf]
  %v409 = vld [vmem:[%s0 + $0x228] sm:$0xf]
  %v410 = vld [vmem:[%s0 + $0x22c] sm:$0xf]
  %v411 = vld [vmem:[%s0 + $0x230] sm:$0xf]
  %v412 = vld [vmem:[%s0 + $0x234] sm:$0xf]
  %v413 = vld [vmem:[%s0 + $0x238] sm:$0xf]
  %v414 = vld [vmem:[%s0 + $0x23c] sm:$0xf]
  %v415 = vld [vmem:[%s0 + $0x240] sm:$0xf]
  %v416 = vld [vmem:[%s0 + $0x244] sm:$0xf]
  %v417 = vld [vmem:[%s0 + $0x248] sm:$0xf]
  %v418 = vld [vmem:[%s0 + $0x24c] sm:$0xf]
  %v419 = vld [vmem:[%s0 + $0x250] sm:$0xf]
  %v420 = vld [vmem:[%s0 + $0x254] sm:$0xf]
  %v421 = vld [vmem:[%s0 + $0x258] sm:$0xf]
  %v422 = vld [vmem:[%s0 + $0x25c] sm:$0xf]
  %v423 = vld [vmem:[%s0 + $0x260] sm:$0xf]
  %v424 = vld [vmem:[%s0 + $0x264] sm:$0xf]
  %v425 = vld [vmem:[%s0 + $0x268] sm:$0xf]
  %v426 = vld [vmem:[%s0 + $0x26c] sm:$0xf]
  %v427 = vld [vmem:[%s0 + $0x270] sm:$0xf]
  %v428 = vld [vmem:[%s0 + $0x274] sm:$0xf]
  %v429 = vld [vmem:[%s0 + $0x278] sm:$0xf]
  %v430 = vld [vmem:[%s0 + $0x27c] sm:$0xf]
  %v431 = vld [vmem:[%s0 + $0x280] sm:$0xf]
  %v432 = vld [vmem:[%s0 + $0x284] sm:$0xf]
  %v433 = vld [vmem:[%s0 + $0x288] sm:$0xf]
  %v434 = vld [vmem:[%s0 + $0x28c] sm:$0xf]
  %v435 = vld [vmem:[%s0 + $0x290] sm:$0xf]
  %v436 = vld [vmem:[%s0 + $0x294] sm:$0xf]
  %v437 = vld [vmem:[%s0 + $0x298] sm:$0xf]
  %v438 = vld [vmem:[%s0 + $0x29c] sm:$0xf]
  %v439 = vld [vmem:[%s0 + $0x2a0] sm:$0xf]
  %v440 = vld [vmem:[%s0 + $0x2a4] sm:$0xf]
  %v441 = vld [vmem:[%s0 + $0x2a8] sm:$0xf]
  %v442 = vld [vmem:[%s0 + $0x2ac] sm:$0xf]
  %v443 = vld [vmem:[%s0 + $0x2b0] sm:$0xf]
  %v444 = vld [vmem:[%s0 + $0x2b4] sm:$0xf]
  %v445 = vld [vmem:[%s0 + $0x2b8] sm:$0xf]
  %v446 = vld [vmem:[%s0 + $0x2bc] sm:$0xf]
  %v447 = vld [vmem:[%s0 + $0x2c0] sm:$0xf]
  %v448 = vld [vmem:[%s0 + $0x2c4] sm:$0xf]
  %v449 = vld [vmem:[%s0 + $0x2c8] sm:$0xf]
  %v450 = vld [vmem:[%s0 + $0x2cc] sm:$0xf]
  %v451 = vld [vmem:[%s0 + $0x2d0] sm:$0xf]
  %v452 = vld [vmem:[%s0 + $0x2d4] sm:$0xf]
  %v453 = vld [vmem:[%s0 + $0x2d8] sm:$0xf]
  %v454 = vld [vmem:[%s0 + $0x2dc] sm:$0xf]
  %v455 = vld [vmem:[%s0 + $0x2e0] sm:$0xf]
  %v456 = vld [vmem:[%s0 + $0x2e4] sm:$0xf]
  %v457 = vld [vmem:[%s0 + $0x2e8] sm:$0xf]
  %v458 = vld [vmem:[%s0 + $0x2ec] sm:$0xf]
  %v459 = vld [vmem:[%s0 + $0x2f0] sm:$0xf]
  %v460 = vld [vmem:[%s0 + $0x2f4] sm:$0xf]
  %v461 = vld [vmem:[%s0 + $0x2f8] sm:$0xf]
  %v462 = vld [vmem:[%s0 + $0x2fc] sm:$0xf]
  %v463 = vld [vmem:[%s0 + $0x300] sm:$0xf]
  %v464 = vld [vmem:[%s0 + $0x304] sm:$0xf]
  %v465 = vld [vmem:[%s0 + $0x308] sm:$0xf]
  %v466 = vld [vmem:[%s0 + $0x30c] sm:$0xf]
  %v467 = vld [vmem:[%s0 + $0x310] sm:$0xf]
  %v468 = vld [vmem:[%s0 + $0x314] sm:$0xf]
  %v469 = vld [vmem:[%s0 + $0x318] sm:$0xf]
  %v470 = vld [vmem:[%s0 + $0x31c] sm:$0xf]
  %v471 = vld [vmem:[%s0 + $0x320] sm:$0xf]
  %v472 = vld [vmem:[%s0 + $0x324] sm:$0xf]
  %v473 = vld [vmem:[%s0 + $0x328] sm:$0xf]
  %v474 = vld [vmem:[%s0 + $0x32c] sm:$0xf]
  %v475 = vld [vmem:[%s0 + $0x330] sm:$0xf]
  %v476 = vld [vmem:[%s0 + $0x334] sm:$0xf]
  %v477 = vld [vmem:[%s0 + $0x338] sm:$0xf]
  %v478 = vld [vmem:[%s0 + $0x33c] sm:$0xf]
  %v479 = vld [vmem:[%s0 + $0x340] sm:$0xf]
  %v480 = vld [vmem:[%s0 + $0x344] sm:$0xf]
  %v481 = vld [vmem:[%s0 + $0x348] sm:$0xf]
  %v482 = vld [vmem:[%s0 + $0x34c] sm:$0xf]
  %v483 = vld [vmem:[%s0 + $0x350] sm:$0xf]
  %v484 = vld [vmem:[%s0 + $0x354] sm:$0xf]
  %v485 = vld [vmem:[%s0 + $0x358] sm:$0xf]
  %v486 = vld [vmem:[%s0 + $0x35c] sm:$0xf]
  %v487 = vld [vmem:[%s0 + $0x360] sm:$0xf]
  %v488 = vld [vmem:[%s0 + $0x364] sm:$0xf]
  %v489 = vld [vmem:[%s0 + $0x368] sm:$0xf]
  %v490 = vld [vmem:[%s0 + $0x36c] sm:$0xf]
  %v491 = vld [vmem:[%s0 + $0x370] sm:$0xf]
  %v492 = vld [vmem:[%s0 + $0x374] sm:$0xf]
  %v493 = vld [vmem:[%s0 + $0x378] sm:$0xf]
  %v494 = vld [vmem:[%s0 + $0x37c] sm:$0xf]
  %v495 = vld [vmem:[%s0 + $0x380] sm:$0xf]
  %v496 = vld [vmem:[%s0 + $0x384] sm:$0xf]
  %v497 = vld [vmem:[%s0 + $0x388] sm:$0xf]
  %v498 = vld [vmem:[%s0 + $0x38c] sm:$0xf]
  %v499 = vld [vmem:[%s0 + $0x390] sm:$0xf]
  %v500 = vld [vmem:[%s0 + $0x394] sm:$0xf]
  %v501 = vld [vmem:[%s0 + $0x398] sm:$0xf]
  %v502 = vld [vmem:[%s0 + $0x39c] sm:$0xf]
  %v503 = vld [vmem:[%s0 + $0x3a0] sm:$0xf]
  %v504 = vld [vmem:[%s0 + $0x3a4] sm:$0xf]
  %v505 = vld [vmem:[%s0 + $0x3a8] sm:$0xf]
  %v506 = vld [vmem:[%s0 + $0x3ac] sm:$0xf]
  %v507 = vld [vmem:[%s0 + $0x3b0] sm:$0xf]
  %v508 = vld [vmem:[%s0 + $0x3b4] sm:$0xf]
  %v509 = vld [vmem:[%s0 + $0x3b8] sm:$0xf]
  %v510 = vld [vmem:[%s0 + $0x3bc] sm:$0xf]
  %v511 = vld [vmem:[%s0 + $0x3c0] sm:$0xf]
  %v512 = vld [vmem:[%s0 + $0x3c4] sm:$0xf]
  %v513 = vld [vmem:[%s0 + $0x3c8] sm:$0xf]
  %v514 = vld [vmem:[%s0 + $0x3cc] sm:$0xf]
  %v515 = vld [vmem:[%s0 + $0x3d0] sm:$0xf]
  %v516 = vld [vmem:[%s0 + $0x3d4] sm:$0xf]
  %v517 = vld [vmem:[%s0 + $0x3d8] sm:$0xf]
  %v518 = vld [vmem:[%s0 + $0x3dc] sm:$0xf]
  %v519 = vld [vmem:[%s0 + $0x3e0] sm:$0xf]
  %v520 = vld [vmem:[%s0 + $0x3e4] sm:$0xf]
  %v521 = vld [vmem:[%s0 + $0x3e8] sm:$0xf]
  %v522 = vld [vmem:[%s0 + $0x3ec] sm:$0xf]
  %v523 = vld [vmem:[%s0 + $0x3f0] sm:$0xf]
  %v524 = vld [vmem:[%s0 + $0x3f4] sm:$0xf]
  %v525 = vld [vmem:[%s0 + $0x3f8] sm:$0xf]
  %v526 = vld [vmem:[%s0 + $0x3fc] sm:$0xf]
  %v527 = vld [vmem:[%s0 + $0x400] sm:$0xf]
  %v528 = vld [vmem:[%s0 + $0x404] sm:$0xf]
  %v529 = vld [vmem:[%s0 + $0x408] sm:$0xf]
  %v530 = vld [vmem:[%s0 + $0x40c] sm:$0xf]
  %v531 = vld [vmem:[%s0 + $0x410] sm:$0xf]
  %v532 = vld [vmem:[%s0 + $0x414] sm:$0xf]
  %v533 = vld [vmem:[%s0 + $0x418] sm:$0xf]
  %v534 = vld [vmem:[%s0 + $0x41c] sm:$0xf]
  %v535 = vld [vmem:[%s0 + $0x420] sm:$0xf]
  %v536 = vld [vmem:[%s0 + $0x424] sm:$0xf]
  %v537 = vld [vmem:[%s0 + $0x428] sm:$0xf]
  %v538 = vld [vmem:[%s0 + $0x42c] sm:$0xf]
  %v539 = vld [vmem:[%s0 + $0x430] sm:$0xf]
  %v540 = vld [vmem:[%s0 + $0x434] sm:$0xf]
  %v541 = vld [vmem:[%s0 + $0x438] sm:$0xf]
  %v542 = vld [vmem:[%s0 + $0x43c] sm:$0xf]
  %v543 = vld [vmem:[%s0 + $0x440] sm:$0xf]
  %v544 = vld [vmem:[%s0 + $0x444] sm:$0xf]
  %v545 = vld [vmem:[%s0 + $0x448] sm:$0xf]
  %v546 = vld [vmem:[%s0 + $0x44c] sm:$0xf]
  %v547 = vld [vmem:[%s0 + $0x450] sm:$0xf]
  %v548 = vld [vmem:[%s0 + $0x454] sm:$0xf]
  %v549 = vld [vmem:[%s0 + $0x458] sm:$0xf]
  %v550 = vld [vmem:[%s0 + $0x45c] sm:$0xf]
  %v551 = vld [vmem:[%s0 + $0x460] sm:$0xf]
  %v552 = vld [vmem:[%s0 + $0x464] sm:$0xf]
  %v553 = vld [vmem:[%s0 + $0x468] sm:$0xf]
  %v554 = vld [vmem:[%s0 + $0x46c] sm:$0xf]
  %v555 = vld [vmem:[%s0 + $0x470] sm:$0xf]
  %v556 = vld [vmem:[%s0 + $0x474] sm:$0xf]
  %v557 = vld [vmem:[%s0 + $0x478] sm:$0xf]
  %v558 = vld [vmem:[%s0 + $0x47c] sm:$0xf]
  %v559 = vld [vmem:[%s0 + $0x480] sm:$0xf]
  %v560 = vld [vmem:[%s0 + $0x484] sm:$0xf]
  %v561 = vld [vmem:[%s0 + $0x488] sm:$0xf]
  %v562 = vld [vmem:[%s0 + $0x48c] sm:$0xf]
  %v563 = vld [vmem:[%s0 + $0x490] sm:$0xf]
  %v564 = vld [vmem:[%s0 + $0x494] sm:$0xf]
  %v565 = vld [vmem:[%s0 + $0x498] sm:$0xf]
  %v566 = vld [vmem:[%s0 + $0x49c] sm:$0xf]
  %v567 = vld [vmem:[%s0 + $0x4a0] sm:$0xf]
  %v568 = vld [vmem:[%s0 + $0x4a4] sm:$0xf]
  %v569 = vld [vmem:[%s0 + $0x4a8] sm:$0xf]
  %v570 = vld [vmem:[%s0 + $0x4ac] sm:$0xf]
  %v571 = vld [vmem:[%s0 + $0x4b0] sm:$0xf]
  %v572 = vld [vmem:[%s0 + $0x4b4] sm:$0xf]
  %v573 = vld [vmem:[%s0 + $0x4b8] sm:$0xf]
  %v574 = vld [vmem:[%s0 + $0x4bc] sm:$0xf]
  %v575 = vld [vmem:[%s0 + $0x4c0] sm:$0xf]
  %v576 = vld [vmem:[%s0 + $0x4c4] sm:$0xf]
  %v577 = vld [vmem:[%s0 + $0x4c8] sm:$0xf]
  %v578 = vld [vmem:[%s0 + $0x4cc] sm:$0xf]
  %v579 = vld [vmem:[%s0 + $0x4d0] sm:$0xf]
  %v580 = vld [vmem:[%s0 + $0x4d4] sm:$0xf]
  %v581 = vld [vmem:[%s0 + $0x4d8] sm:$0xf]
  %v582 = vld [vmem:[%s0 + $0x4dc] sm:$0xf]
  %v583 = vld [vmem:[%s0 + $0x4e0] sm:$0xf]
  %v584 = vld [vmem:[%s0 + $0x4e4] sm:$0xf]
  %v585 = vld [vmem:[%s0 + $0x4e8] sm:$0xf]
  %v586 = vld [vmem:[%s0 + $0x4ec] sm:$0xf]
  %v587 = vld [vmem:[%s0 + $0x4f0] sm:$0xf]
  %v588 = vld [vmem:[%s0 + $0x4f4] sm:$0xf]
  %v589 = vld [vmem:[%s0 + $0x4f8] sm:$0xf]
  %v590 = vld [vmem:[%s0 + $0x4fc] sm:$0xf]
  %v591 = vld [vmem:[%s0 + $0x500] sm:$0xf]
  %v592 = vld [vmem:[%s0 + $0x504] sm:$0xf]
  %v593 = vld [vmem:[%s0 + $0x508] sm:$0xf]
  %v594 = vld [vmem:[%s0 + $0x50c] sm:$0xf]
  %v595 = vld [vmem:[%s0 + $0x510] sm:$0xf]
  %v596 = vld [vmem:[%s0 + $0x514] sm:$0xf]
  %v597 = vld [vmem:[%s0 + $0x518] sm:$0xf]
  %v598 = vld [vmem:[%s0 + $0x51c] sm:$0xf]
  %v599 = vld [vmem:[%s0 + $0x520] sm:$0xf]
  %v600 = vld [vmem:[%s0 + $0x524] sm:$0xf]
  %v601 = vld [vmem:[%s0 + $0x528] sm:$0xf]
  %v602 = vld [vmem:[%s0 + $0x52c] sm:$0xf]
  %v603 = vld [vmem:[%s0 + $0x530] sm:$0xf]
  %v604 = vld [vmem:[%s0 + $0x534] sm:$0xf]
  %v605 = vld [vmem:[%s0 + $0x538] sm:$0xf]
  %v606 = vld [vmem:[%s0 + $0x53c] sm:$0xf]
  %v607 = vld [vmem:[%s0 + $0x540] sm:$0xf]
  %v608 = vld [vmem:[%s0 + $0x544] sm:$0xf]
  %v609 = vld [vmem:[%s0 + $0x548] sm:$0xf]
  %v610 = vld [vmem:[%s0 + $0x54c] sm:$0xf]
  %v611 = vld [vmem:[%s0 + $0x550] sm:$0xf]
  %v612 = vld [vmem:[%s0 + $0x554] sm:$0xf]
  %v613 = vld [vmem:[%s0 + $0x558] sm:$0xf]
  %v614 = vld [vmem:[%s0 + $0x55c] sm:$0xf]
  %v615 = vld [vmem:[%s0 + $0x560] sm:$0xf]
  %v616 = vld [vmem:[%s0 + $0x564] sm:$0xf]
  %v617 = vld [vmem:[%s0 + $0x568] sm:$0xf]
  %v618 = vld [vmem:[%s0 + $0x56c] sm:$0xf]
  %v619 = vld [vmem:[%s0 + $0x570] sm:$0xf]
  %v620 = vld [vmem:[%s0 + $0x574] sm:$0xf]
  %v621 = vld [vmem:[%s0 + $0x578] sm:$0xf]
  %v622 = vld [vmem:[%s0 + $0x57c] sm:$0xf]
  %v623 = vld [vmem:[%s0 + $0x580] sm:$0xf]
  %v624 = vld [vmem:[%s0 + $0x584] sm:$0xf]
  %v625 = vld [vmem:[%s0 + $0x588] sm:$0xf]
  %v626 = vld [vmem:[%s0 + $0x58c] sm:$0xf]
  %v627 = vld [vmem:[%s0 + $0x590] sm:$0xf]
  %v628 = vld [vmem:[%s0 + $0x594] sm:$0xf]
  %v629 = vld [vmem:[%s0 + $0x598] sm:$0xf]
  %v630 = vld [vmem:[%s0 + $0x59c] sm:$0xf]
  %v631 = vld [vmem:[%s0 + $0x5a0] sm:$0xf]
  %v632 = vld [vmem:[%s0 + $0x5a4] sm:$0xf]
  %v633 = vld [vmem:[%s0 + $0x5a8] sm:$0xf]
  %v634 = vld [vmem:[%s0 + $0x5ac] sm:$0xf]
  %v635 = vld [vmem:[%s0 + $0x5b0] sm:$0xf]
  %v636 = vld [vmem:[%s0 + $0x5b4] sm:$0xf]
  %v637 = vld [vmem:[%s0 + $0x5b8] sm:$0xf]
  %v638 = vld [vmem:[%s0 + $0x5bc] sm:$0xf]
  %v639 = vld [vmem:[%s0 + $0x5c0] sm:$0xf]
  %v640 = vld [vmem:[%s0 + $0x5c4] sm:$0xf]
  %v641 = vld [vmem:[%s0 + $0x5c8] sm:$0xf]
  %v642 = vld [vmem:[%s0 + $0x5cc] sm:$0xf]
  %v643 = vld [vmem:[%s0 + $0x5d0] sm:$0xf]
  %v644 = vld [vmem:[%s0 + $0x5d4] sm:$0xf]
  %v645 = vld [vmem:[%s0 + $0x5d8] sm:$0xf]
  %v646 = vld [vmem:[%s0 + $0x5dc] sm:$0xf]
  %v647 = vld [vmem:[%s0 + $0x5e0] sm:$0xf]
  %v648 = vld [vmem:[%s0 + $0x5e4] sm:$0xf]
  %v649 = vld [vmem:[%s0 + $0x5e8] sm:$0xf]
  %v650 = vld [vmem:[%s0 + $0x5ec] sm:$0xf]
  %v651 = vld [vmem:[%s0 + $0x5f0] sm:$0xf]
  %v652 = vld [vmem:[%s0 + $0x5f4] sm:$0xf]
  %v653 = vld [vmem:[%s0 + $0x5f8] sm:$0xf]
  %v654 = vld [vmem:[%s0 + $0x5fc] sm:$0xf]
  %v655 = vld [vmem:[%s0 + $0x600] sm:$0xf]
  %v656 = vld [vmem:[%s0 + $0x604] sm:$0xf]
  %v657 = vld [vmem:[%s0 + $0x608] sm:$0xf]
  %v658 = vld [vmem:[%s0 + $0x60c] sm:$0xf]
  %v659 = vld [vmem:[%s0 + $0x610] sm:$0xf]
  %v660 = vld [vmem:[%s0 + $0x614] sm:$0xf]
  %v661 = vld [vmem:[%s0 + $0x618] sm:$0xf]
  %v662 = vld [vmem:[%s0 + $0x61c] sm:$0xf]
  %v663 = vld [vmem:[%s0 + $0x620] sm:$0xf]
  %v664 = vld [vmem:[%s0 + $0x624] sm:$0xf]
  %v665 = vld [vmem:[%s0 + $0x628] sm:$0xf]
  %v666 = vld [vmem:[%s0 + $0x62c] sm:$0xf]
  %v667 = vld [vmem:[%s0 + $0x630] sm:$0xf]
  %v668 = vld [vmem:[%s0 + $0x634] sm:$0xf]
  %v669 = vld [vmem:[%s0 + $0x638] sm:$0xf]
  %v670 = vld [vmem:[%s0 + $0x63c] sm:$0xf]
  %v671 = vld [vmem:[%s0 + $0x640] sm:$0xf]
  %v672 = vld [vmem:[%s0 + $0x644] sm:$0xf]
  %v673 = vld [vmem:[%s0 + $0x648] sm:$0xf]
  %v674 = vld [vmem:[%s0 + $0x64c] sm:$0xf]
  %v675 = vld [vmem:[%s0 + $0x650] sm:$0xf]
  %v676 = vld [vmem:[%s0 + $0x654] sm:$0xf]
  %v677 = vld [vmem:[%s0 + $0x658] sm:$0xf]
  %v678 = vld [vmem:[%s0 + $0x65c] sm:$0xf]
  %v679 = vld [vmem:[%s0 + $0x660] sm:$0xf]
  %v680 = vld [vmem:[%s0 + $0x664] sm:$0xf]
  %v681 = vld [vmem:[%s0 + $0x668] sm:$0xf]
  %v682 = vld [vmem:[%s0 + $0x66c] sm:$0xf]
  %v683 = vld [vmem:[%s0 + $0x670] sm:$0xf]
  %v684 = vld [vmem:[%s0 + $0x674] sm:$0xf]
  %v685 = vld [vmem:[%s0 + $0x678] sm:$0xf]
  %v686 = vld [vmem:[%s0 + $0x67c] sm:$0xf]
  %v687 = vld [vmem:[%s0 + $0x680] sm:$0xf]
  %v688 = vld [vmem:[%s0 + $0x684] sm:$0xf]
  %v689 = vld [vmem:[%s0 + $0x688] sm:$0xf]
  %v690 = vld [vmem:[%s0 + $0x68c] sm:$0xf]
  %v691 = vld [vmem:[%s0 + $0x690] sm:$0xf]
  %v692 = vld [vmem:[%s0 + $0x694] sm:$0xf]
  %v693 = vld [vmem:[%s0 + $0x698] sm:$0xf]
  %v694 = vld [vmem:[%s0 + $0x69c] sm:$0xf]
  %v695 = vld [vmem:[%s0 + $0x6a0] sm:$0xf]
  %v696 = vld [vmem:[%s0 + $0x6a4] sm:$0xf]
  %v697 = vld [vmem:[%s0 + $0x6a8] sm:$0xf]
  %v698 = vld [vmem:[%s0 + $0x6ac] sm:$0xf]
  %v699 = vld [vmem:[%s0 + $0x6b0] sm:$0xf]
  %v700 = vld [vmem:[%s0 + $0x6b4] sm:$0xf]
  %v701 = vld [vmem:[%s0 + $0x6b8] sm:$0xf]
  %v702 = vld [vmem:[%s0 + $0x6bc] sm:$0xf]
  %v703 = vld [vmem:[%s0 + $0x6c0] sm:$0xf]
  %v704 = vld [vmem:[%s0 + $0x6c4] sm:$0xf]
  %v705 = vld [vmem:[%s0 + $0x6c8] sm:$0xf]
  %v706 = vld [vmem:[%s0 + $0x6cc] sm:$0xf]
  %v707 = vld [vmem:[%s0 + $0x6d0] sm:$0xf]
  %v708 = vld [vmem:[%s0 + $0x6d4] sm:$0xf]
  %v709 = vld [vmem:[%s0 + $0x6d8] sm:$0xf]
  %v710 = vld [vmem:[%s0 + $0x6dc] sm:$0xf]
  %v711 = vld [vmem:[%s0 + $0x6e0] sm:$0xf]
  %v712 = vld [vmem:[%s0 + $0x6e4] sm:$0xf]
  %v713 = vld [vmem:[%s0 + $0x6e8] sm:$0xf]
  %v714 = vld [vmem:[%s0 + $0x6ec] sm:$0xf]
  %v715 = vld [vmem:[%s0 + $0x6f0] sm:$0xf]
  %v716 = vld [vmem:[%s0 + $0x6f4] sm:$0xf]
  %v717 = vld [vmem:[%s0 + $0x6f8] sm:$0xf]
  %v718 = vld [vmem:[%s0 + $0x6fc] sm:$0xf]
  %v719 = vld [vmem:[%s0 + $0x700] sm:$0xf]
  %v720 = vld [vmem:[%s0 + $0x704] sm:$0xf]
  %v721 = vld [vmem:[%s0 + $0x708] sm:$0xf]
  %v722 = vld [vmem:[%s0 + $0x70c] sm:$0xf]
  %v723 = vld [vmem:[%s0 + $0x710] sm:$0xf]
  %v724 = vld [vmem:[%s0 + $0x714] sm:$0xf]
  %v725 = vld [vmem:[%s0 + $0x718] sm:$0xf]
  %v726 = vld [vmem:[%s0 + $0x71c] sm:$0xf]
  %v727 = vld [vmem:[%s0 + $0x720] sm:$0xf]
  %v728 = vld [vmem:[%s0 + $0x724] sm:$0xf]
  %v729 = vld [vmem:[%s0 + $0x728] sm:$0xf]
  %v730 = vld [vmem:[%s0 + $0x72c] sm:$0xf]
  %v731 = vld [vmem:[%s0 + $0x730] sm:$0xf]
  %v732 = vld [vmem:[%s0 + $0x734] sm:$0xf]
  %v733 = vld [vmem:[%s0 + $0x738] sm:$0xf]
  %v734 = vld [vmem:[%s0 + $0x73c] sm:$0xf]
  %v735 = vld [vmem:[%s0 + $0x740] sm:$0xf]
  %v736 = vld [vmem:[%s0 + $0x744] sm:$0xf]
  %v737 = vld [vmem:[%s0 + $0x748] sm:$0xf]
  %v738 = vld [vmem:[%s0 + $0x74c] sm:$0xf]
  %v739 = vld [vmem:[%s0 + $0x750] sm:$0xf]
  %v740 = vld [vmem:[%s0 + $0x754] sm:$0xf]
  %v741 = vld [vmem:[%s0 + $0x758] sm:$0xf]
  %v742 = vld [vmem:[%s0 + $0x75c] sm:$0xf]
  %v743 = vld [vmem:[%s0 + $0x760] sm:$0xf]
  %v744 = vld [vmem:[%s0 + $0x764] sm:$0xf]
  %v745 = vld [vmem:[%s0 + $0x768] sm:$0xf]
  %v746 = vld [vmem:[%s0 + $0x76c] sm:$0xf]
  %v747 = vld [vmem:[%s0 + $0x770] sm:$0xf]
  %v748 = vld [vmem:[%s0 + $0x774] sm:$0xf]
  %v749 = vld [vmem:[%s0 + $0x778] sm:$0xf]
  %v750 = vld [vmem:[%s0 + $0x77c] sm:$0xf]
  %v751 = vld [vmem:[%s0 + $0x780] sm:$0xf]
  %v752 = vld [vmem:[%s0 + $0x784] sm:$0xf]
  %v753 = vld [vmem:[%s0 + $0x788] sm:$0xf]
  %v754 = vld [vmem:[%s0 + $0x78c] sm:$0xf]
  %v755 = vld [vmem:[%s0 + $0x790] sm:$0xf]
  %v756 = vld [vmem:[%s0 + $0x794] sm:$0xf]
  %v757 = vld [vmem:[%s0 + $0x798] sm:$0xf]
  %v758 = vld [vmem:[%s0 + $0x79c] sm:$0xf]
  %v759 = vld [vmem:[%s0 + $0x7a0] sm:$0xf]
  %v760 = vld [vmem:[%s0 + $0x7a4] sm:$0xf]
  %v761 = vld [vmem:[%s0 + $0x7a8] sm:$0xf]
  %v762 = vld [vmem:[%s0 + $0x7ac] sm:$0xf]
  %v763 = vld [vmem:[%s0 + $0x7b0] sm:$0xf]
  %v764 = vld [vmem:[%s0 + $0x7b4] sm:$0xf]
  %v765 = vld [vmem:[%s0 + $0x7b8] sm:$0xf]
  %v766 = vld [vmem:[%s0 + $0x7bc] sm:$0xf]
  %v767 = vld [vmem:[%s0 + $0x7c0] sm:$0xf]
  %v768 = vld [vmem:[%s0 + $0x7c4] sm:$0xf]
  %v769 = vld [vmem:[%s0 + $0x7c8] sm:$0xf]
  %v770 = vld [vmem:[%s0 + $0x7cc] sm:$0xf]
  %v771 = vld [vmem:[%s0 + $0x7d0] sm:$0xf]
  %v772 = vld [vmem:[%s0 + $0x7d4] sm:$0xf]
  %v773 = vld [vmem:[%s0 + $0x7d8] sm:$0xf]
  %v774 = vld [vmem:[%s0 + $0x7dc] sm:$0xf]
  %v775 = vld [vmem:[%s0 + $0x7e0] sm:$0xf]
  %v776 = vld [vmem:[%s0 + $0x7e4] sm:$0xf]
  %v777 = vld [vmem:[%s0 + $0x7e8] sm:$0xf]
  %v778 = vld [vmem:[%s0 + $0x7ec] sm:$0xf]
  %v779 = vld [vmem:[%s0 + $0x7f0] sm:$0xf]
  %v780 = vld [vmem:[%s0 + $0x7f4] sm:$0xf]
  %v781 = vld [vmem:[%s0 + $0x7f8] sm:$0xf]
  %v782 = vld [vmem:[%s0 + $0x7fc] sm:$0xf]
  %v783 = vld [vmem:[%s2] sm:$0xff]
  %v784 = vld [vmem:[%s2 + $0x8] sm:$0xff]
  %v785 = vld [vmem:[%s2 + $0x10] sm:$0xff]
  %v786 = vld [vmem:[%s2 + $0x18] sm:$0xff]
  %v787 = vld [vmem:[%s2 + $0x20] sm:$0xff]
  %v788 = vld [vmem:[%s2 + $0x28] sm:$0xff]
  %v789 = vld [vmem:[%s2 + $0x30] sm:$0xff]
  %v790 = vld [vmem:[%s2 + $0x38] sm:$0xff]
  %v791 = vld [vmem:[%s2 + $0x40] sm:$0xff]
  %v792 = vld [vmem:[%s2 + $0x48] sm:$0xff]
  %v793 = vld [vmem:[%s2 + $0x50] sm:$0xff]
  %v794 = vld [vmem:[%s2 + $0x58] sm:$0xff]
  %v795 = vld [vmem:[%s2 + $0x60] sm:$0xff]
  %v796 = vld [vmem:[%s2 + $0x68] sm:$0xff]
  %v797 = vld [vmem:[%s2 + $0x70] sm:$0xff]
  %v798 = vld [vmem:[%s2 + $0x78] sm:$0xff]
  %800 = vset.pattern.permute.xlu0 0
  %801 = vperm.xlu0 %800, %v783
  %v802 = vpop.permute.xlu0 %801
  %805 = vset.pattern.permute.xlu0 0
  %806 = vperm.xlu0 %805, %v784
  %v807 = vpop.permute.xlu0 %806
  %810 = vset.pattern.permute.xlu0 0
  %811 = vperm.xlu0 %810, %v785
  %v812 = vpop.permute.xlu0 %811
  %815 = vset.pattern.permute.xlu0 0
  %816 = vperm.xlu0 %815, %v786
  %v817 = vpop.permute.xlu0 %816
  %820 = vset.pattern.permute.xlu0 0
  %821 = vperm.xlu0 %820, %v787
  %v822 = vpop.permute.xlu0 %821
  %825 = vset.pattern.permute.xlu0 0
  %826 = vperm.xlu0 %825, %v788
  %v827 = vpop.permute.xlu0 %826
  %830 = vset.pattern.permute.xlu0 0
  %831 = vperm.xlu0 %830, %v789
  %v832 = vpop.permute.xlu0 %831
  %835 = vset.pattern.permute.xlu0 0
  %836 = vperm.xlu0 %835, %v790
  %v837 = vpop.permute.xlu0 %836
  %840 = vset.pattern.permute.xlu0 0
  %841 = vperm.xlu0 %840, %v791
  %v842 = vpop.permute.xlu0 %841
  %845 = vset.pattern.permute.xlu0 0
  %846 = vperm.xlu0 %845, %v792
  %v847 = vpop.permute.xlu0 %846
  %850 = vset.pattern.permute.xlu0 0
  %851 = vperm.xlu0 %850, %v793
  %v852 = vpop.permute.xlu0 %851
  %855 = vset.pattern.permute.xlu0 0
  %856 = vperm.xlu0 %855, %v794
  %v857 = vpop.permute.xlu0 %856
  %860 = vset.pattern.permute.xlu0 0
  %861 = vperm.xlu0 %860, %v795
  %v862 = vpop.permute.xlu0 %861
  %865 = vset.pattern.permute.xlu0 0
  %866 = vperm.xlu0 %865, %v796
  %v867 = vpop.permute.xlu0 %866
  %870 = vset.pattern.permute.xlu0 0
  %871 = vperm.xlu0 %870, %v797
  %v872 = vpop.permute.xlu0 %871
  %875 = vset.pattern.permute.xlu0 0
  %876 = vperm.xlu0 %875, %v798
  %v877 = vpop.permute.xlu0 %876
  %v1135 = vunpack.c.l.b16 %v15
  %v1136 = vunpack.c.h.b16 %v15
  %v1137 = vunpack.c.l.b16 %v16
  %v1138 = vunpack.c.h.b16 %v16
  %v1139 = vunpack.c.l.b16 %v17
  %v1140 = vunpack.c.h.b16 %v17
  %v1141 = vunpack.c.l.b16 %v18
  %v1142 = vunpack.c.h.b16 %v18
  %v1143 = vunpack.c.l.b16 %v19
  %v1144 = vunpack.c.h.b16 %v19
  %v1145 = vunpack.c.l.b16 %v20
  %v1146 = vunpack.c.h.b16 %v20
  %v1147 = vunpack.c.l.b16 %v21
  %v1148 = vunpack.c.h.b16 %v21
  %v1149 = vunpack.c.l.b16 %v22
  %v1150 = vunpack.c.h.b16 %v22
  %v1151 = vunpack.c.l.b16 %v23
  %v1152 = vunpack.c.h.b16 %v23
  %v1153 = vunpack.c.l.b16 %v24
  %v1154 = vunpack.c.h.b16 %v24
  %v1155 = vunpack.c.l.b16 %v25
  %v1156 = vunpack.c.h.b16 %v25
  %v1157 = vunpack.c.l.b16 %v26
  %v1158 = vunpack.c.h.b16 %v26
  %v1159 = vunpack.c.l.b16 %v27
  %v1160 = vunpack.c.h.b16 %v27
  %v1161 = vunpack.c.l.b16 %v28
  %v1162 = vunpack.c.h.b16 %v28
  %v1163 = vunpack.c.l.b16 %v29
  %v1164 = vunpack.c.h.b16 %v29
  %v1165 = vunpack.c.l.b16 %v30
  %v1166 = vunpack.c.h.b16 %v30
  %v1167 = vunpack.c.l.b16 %v31
  %v1168 = vunpack.c.h.b16 %v31
  %v1169 = vunpack.c.l.b16 %v32
  %v1170 = vunpack.c.h.b16 %v32
  %v1171 = vunpack.c.l.b16 %v33
  %v1172 = vunpack.c.h.b16 %v33
  %v1173 = vunpack.c.l.b16 %v34
  %v1174 = vunpack.c.h.b16 %v34
  %v1175 = vunpack.c.l.b16 %v35
  %v1176 = vunpack.c.h.b16 %v35
  %v1177 = vunpack.c.l.b16 %v36
  %v1178 = vunpack.c.h.b16 %v36
  %v1179 = vunpack.c.l.b16 %v37
  %v1180 = vunpack.c.h.b16 %v37
  %v1181 = vunpack.c.l.b16 %v38
  %v1182 = vunpack.c.h.b16 %v38
  %v1183 = vunpack.c.l.b16 %v39
  %v1184 = vunpack.c.h.b16 %v39
  %v1185 = vunpack.c.l.b16 %v40
  %v1186 = vunpack.c.h.b16 %v40
  %v1187 = vunpack.c.l.b16 %v41
  %v1188 = vunpack.c.h.b16 %v41
  %v1189 = vunpack.c.l.b16 %v42
  %v1190 = vunpack.c.h.b16 %v42
  %v1191 = vunpack.c.l.b16 %v43
  %v1192 = vunpack.c.h.b16 %v43
  %v1193 = vunpack.c.l.b16 %v44
  %v1194 = vunpack.c.h.b16 %v44
  %v1195 = vunpack.c.l.b16 %v45
  %v1196 = vunpack.c.h.b16 %v45
  %v1197 = vunpack.c.l.b16 %v46
  %v1198 = vunpack.c.h.b16 %v46
  %v1199 = vunpack.c.l.b16 %v47
  %v1200 = vunpack.c.h.b16 %v47
  %v1201 = vunpack.c.l.b16 %v48
  %v1202 = vunpack.c.h.b16 %v48
  %v1203 = vunpack.c.l.b16 %v49
  %v1204 = vunpack.c.h.b16 %v49
  %v1205 = vunpack.c.l.b16 %v50
  %v1206 = vunpack.c.h.b16 %v50
  %v1207 = vunpack.c.l.b16 %v51
  %v1208 = vunpack.c.h.b16 %v51
  %v1209 = vunpack.c.l.b16 %v52
  %v1210 = vunpack.c.h.b16 %v52
  %v1211 = vunpack.c.l.b16 %v53
  %v1212 = vunpack.c.h.b16 %v53
  %v1213 = vunpack.c.l.b16 %v54
  %v1214 = vunpack.c.h.b16 %v54
  %v1215 = vunpack.c.l.b16 %v55
  %v1216 = vunpack.c.h.b16 %v55
  %v1217 = vunpack.c.l.b16 %v56
  %v1218 = vunpack.c.h.b16 %v56
  %v1219 = vunpack.c.l.b16 %v57
  %v1220 = vunpack.c.h.b16 %v57
  %v1221 = vunpack.c.l.b16 %v58
  %v1222 = vunpack.c.h.b16 %v58
  %v1223 = vunpack.c.l.b16 %v59
  %v1224 = vunpack.c.h.b16 %v59
  %v1225 = vunpack.c.l.b16 %v60
  %v1226 = vunpack.c.h.b16 %v60
  %v1227 = vunpack.c.l.b16 %v61
  %v1228 = vunpack.c.h.b16 %v61
  %v1229 = vunpack.c.l.b16 %v62
  %v1230 = vunpack.c.h.b16 %v62
  %v1231 = vunpack.c.l.b16 %v63
  %v1232 = vunpack.c.h.b16 %v63
  %v1233 = vunpack.c.l.b16 %v64
  %v1234 = vunpack.c.h.b16 %v64
  %v1235 = vunpack.c.l.b16 %v65
  %v1236 = vunpack.c.h.b16 %v65
  %v1237 = vunpack.c.l.b16 %v66
  %v1238 = vunpack.c.h.b16 %v66
  %v1239 = vunpack.c.l.b16 %v67
  %v1240 = vunpack.c.h.b16 %v67
  %v1241 = vunpack.c.l.b16 %v68
  %v1242 = vunpack.c.h.b16 %v68
  %v1243 = vunpack.c.l.b16 %v69
  %v1244 = vunpack.c.h.b16 %v69
  %v1245 = vunpack.c.l.b16 %v70
  %v1246 = vunpack.c.h.b16 %v70
  %v1247 = vunpack.c.l.b16 %v71
  %v1248 = vunpack.c.h.b16 %v71
  %v1249 = vunpack.c.l.b16 %v72
  %v1250 = vunpack.c.h.b16 %v72
  %v1251 = vunpack.c.l.b16 %v73
  %v1252 = vunpack.c.h.b16 %v73
  %v1253 = vunpack.c.l.b16 %v74
  %v1254 = vunpack.c.h.b16 %v74
  %v1255 = vunpack.c.l.b16 %v75
  %v1256 = vunpack.c.h.b16 %v75
  %v1257 = vunpack.c.l.b16 %v76
  %v1258 = vunpack.c.h.b16 %v76
  %v1259 = vunpack.c.l.b16 %v77
  %v1260 = vunpack.c.h.b16 %v77
  %v1261 = vunpack.c.l.b16 %v78
  %v1262 = vunpack.c.h.b16 %v78
  %v1263 = vunpack.c.l.b16 %v79
  %v1264 = vunpack.c.h.b16 %v79
  %v1265 = vunpack.c.l.b16 %v80
  %v1266 = vunpack.c.h.b16 %v80
  %v1267 = vunpack.c.l.b16 %v81
  %v1268 = vunpack.c.h.b16 %v81
  %v1269 = vunpack.c.l.b16 %v82
  %v1270 = vunpack.c.h.b16 %v82
  %v1271 = vunpack.c.l.b16 %v83
  %v1272 = vunpack.c.h.b16 %v83
  %v1273 = vunpack.c.l.b16 %v84
  %v1274 = vunpack.c.h.b16 %v84
  %v1275 = vunpack.c.l.b16 %v85
  %v1276 = vunpack.c.h.b16 %v85
  %v1277 = vunpack.c.l.b16 %v86
  %v1278 = vunpack.c.h.b16 %v86
  %v1279 = vunpack.c.l.b16 %v87
  %v1280 = vunpack.c.h.b16 %v87
  %v1281 = vunpack.c.l.b16 %v88
  %v1282 = vunpack.c.h.b16 %v88
  %v1283 = vunpack.c.l.b16 %v89
  %v1284 = vunpack.c.h.b16 %v89
  %v1285 = vunpack.c.l.b16 %v90
  %v1286 = vunpack.c.h.b16 %v90
  %v1287 = vunpack.c.l.b16 %v91
  %v1288 = vunpack.c.h.b16 %v91
  %v1289 = vunpack.c.l.b16 %v92
  %v1290 = vunpack.c.h.b16 %v92
  %v1291 = vunpack.c.l.b16 %v93
  %v1292 = vunpack.c.h.b16 %v93
  %v1293 = vunpack.c.l.b16 %v94
  %v1294 = vunpack.c.h.b16 %v94
  %v1295 = vunpack.c.l.b16 %v95
  %v1296 = vunpack.c.h.b16 %v95
  %v1297 = vunpack.c.l.b16 %v96
  %v1298 = vunpack.c.h.b16 %v96
  %v1299 = vunpack.c.l.b16 %v97
  %v1300 = vunpack.c.h.b16 %v97
  %v1301 = vunpack.c.l.b16 %v98
  %v1302 = vunpack.c.h.b16 %v98
  %v1303 = vunpack.c.l.b16 %v99
  %v1304 = vunpack.c.h.b16 %v99
  %v1305 = vunpack.c.l.b16 %v100
  %v1306 = vunpack.c.h.b16 %v100
  %v1307 = vunpack.c.l.b16 %v101
  %v1308 = vunpack.c.h.b16 %v101
  %v1309 = vunpack.c.l.b16 %v102
  %v1310 = vunpack.c.h.b16 %v102
  %v1311 = vunpack.c.l.b16 %v103
  %v1312 = vunpack.c.h.b16 %v103
  %v1313 = vunpack.c.l.b16 %v104
  %v1314 = vunpack.c.h.b16 %v104
  %v1315 = vunpack.c.l.b16 %v105
  %v1316 = vunpack.c.h.b16 %v105
  %v1317 = vunpack.c.l.b16 %v106
  %v1318 = vunpack.c.h.b16 %v106
  %v1319 = vunpack.c.l.b16 %v107
  %v1320 = vunpack.c.h.b16 %v107
  %v1321 = vunpack.c.l.b16 %v108
  %v1322 = vunpack.c.h.b16 %v108
  %v1323 = vunpack.c.l.b16 %v109
  %v1324 = vunpack.c.h.b16 %v109
  %v1325 = vunpack.c.l.b16 %v110
  %v1326 = vunpack.c.h.b16 %v110
  %v1327 = vunpack.c.l.b16 %v111
  %v1328 = vunpack.c.h.b16 %v111
  %v1329 = vunpack.c.l.b16 %v112
  %v1330 = vunpack.c.h.b16 %v112
  %v1331 = vunpack.c.l.b16 %v113
  %v1332 = vunpack.c.h.b16 %v113
  %v1333 = vunpack.c.l.b16 %v114
  %v1334 = vunpack.c.h.b16 %v114
  %v1335 = vunpack.c.l.b16 %v115
  %v1336 = vunpack.c.h.b16 %v115
  %v1337 = vunpack.c.l.b16 %v116
  %v1338 = vunpack.c.h.b16 %v116
  %v1339 = vunpack.c.l.b16 %v117
  %v1340 = vunpack.c.h.b16 %v117
  %v1341 = vunpack.c.l.b16 %v118
  %v1342 = vunpack.c.h.b16 %v118
  %v1343 = vunpack.c.l.b16 %v119
  %v1344 = vunpack.c.h.b16 %v119
  %v1345 = vunpack.c.l.b16 %v120
  %v1346 = vunpack.c.h.b16 %v120
  %v1347 = vunpack.c.l.b16 %v121
  %v1348 = vunpack.c.h.b16 %v121
  %v1349 = vunpack.c.l.b16 %v122
  %v1350 = vunpack.c.h.b16 %v122
  %v1351 = vunpack.c.l.b16 %v123
  %v1352 = vunpack.c.h.b16 %v123
  %v1353 = vunpack.c.l.b16 %v124
  %v1354 = vunpack.c.h.b16 %v124
  %v1355 = vunpack.c.l.b16 %v125
  %v1356 = vunpack.c.h.b16 %v125
  %v1357 = vunpack.c.l.b16 %v126
  %v1358 = vunpack.c.h.b16 %v126
  %v1359 = vunpack.c.l.b16 %v127
  %v1360 = vunpack.c.h.b16 %v127
  %v1361 = vunpack.c.l.b16 %v128
  %v1362 = vunpack.c.h.b16 %v128
  %v1363 = vunpack.c.l.b16 %v129
  %v1364 = vunpack.c.h.b16 %v129
  %v1365 = vunpack.c.l.b16 %v130
  %v1366 = vunpack.c.h.b16 %v130
  %v1367 = vunpack.c.l.b16 %v131
  %v1368 = vunpack.c.h.b16 %v131
  %v1369 = vunpack.c.l.b16 %v132
  %v1370 = vunpack.c.h.b16 %v132
  %v1371 = vunpack.c.l.b16 %v133
  %v1372 = vunpack.c.h.b16 %v133
  %v1373 = vunpack.c.l.b16 %v134
  %v1374 = vunpack.c.h.b16 %v134
  %v1375 = vunpack.c.l.b16 %v135
  %v1376 = vunpack.c.h.b16 %v135
  %v1377 = vunpack.c.l.b16 %v136
  %v1378 = vunpack.c.h.b16 %v136
  %v1379 = vunpack.c.l.b16 %v137
  %v1380 = vunpack.c.h.b16 %v137
  %v1381 = vunpack.c.l.b16 %v138
  %v1382 = vunpack.c.h.b16 %v138
  %v1383 = vunpack.c.l.b16 %v139
  %v1384 = vunpack.c.h.b16 %v139
  %v1385 = vunpack.c.l.b16 %v140
  %v1386 = vunpack.c.h.b16 %v140
  %v1387 = vunpack.c.l.b16 %v141
  %v1388 = vunpack.c.h.b16 %v141
  %v1389 = vunpack.c.l.b16 %v142
  %v1390 = vunpack.c.h.b16 %v142
  %v1391 = vunpack.c.l.b16 %v143
  %v1392 = vunpack.c.h.b16 %v143
  %v1393 = vunpack.c.l.b16 %v144
  %v1394 = vunpack.c.h.b16 %v144
  %v1395 = vunpack.c.l.b16 %v145
  %v1396 = vunpack.c.h.b16 %v145
  %v1397 = vunpack.c.l.b16 %v146
  %v1398 = vunpack.c.h.b16 %v146
  %v1399 = vunpack.c.l.b16 %v147
  %v1400 = vunpack.c.h.b16 %v147
  %v1401 = vunpack.c.l.b16 %v148
  %v1402 = vunpack.c.h.b16 %v148
  %v1403 = vunpack.c.l.b16 %v149
  %v1404 = vunpack.c.h.b16 %v149
  %v1405 = vunpack.c.l.b16 %v150
  %v1406 = vunpack.c.h.b16 %v150
  %v1407 = vunpack.c.l.b16 %v151
  %v1408 = vunpack.c.h.b16 %v151
  %v1409 = vunpack.c.l.b16 %v152
  %v1410 = vunpack.c.h.b16 %v152
  %v1411 = vunpack.c.l.b16 %v153
  %v1412 = vunpack.c.h.b16 %v153
  %v1413 = vunpack.c.l.b16 %v154
  %v1414 = vunpack.c.h.b16 %v154
  %v1415 = vunpack.c.l.b16 %v155
  %v1416 = vunpack.c.h.b16 %v155
  %v1417 = vunpack.c.l.b16 %v156
  %v1418 = vunpack.c.h.b16 %v156
  %v1419 = vunpack.c.l.b16 %v157
  %v1420 = vunpack.c.h.b16 %v157
  %v1421 = vunpack.c.l.b16 %v158
  %v1422 = vunpack.c.h.b16 %v158
  %v1423 = vunpack.c.l.b16 %v159
  %v1424 = vunpack.c.h.b16 %v159
  %v1425 = vunpack.c.l.b16 %v160
  %v1426 = vunpack.c.h.b16 %v160
  %v1427 = vunpack.c.l.b16 %v161
  %v1428 = vunpack.c.h.b16 %v161
  %v1429 = vunpack.c.l.b16 %v162
  %v1430 = vunpack.c.h.b16 %v162
  %v1431 = vunpack.c.l.b16 %v163
  %v1432 = vunpack.c.h.b16 %v163
  %v1433 = vunpack.c.l.b16 %v164
  %v1434 = vunpack.c.h.b16 %v164
  %v1435 = vunpack.c.l.b16 %v165
  %v1436 = vunpack.c.h.b16 %v165
  %v1437 = vunpack.c.l.b16 %v166
  %v1438 = vunpack.c.h.b16 %v166
  %v1439 = vunpack.c.l.b16 %v167
  %v1440 = vunpack.c.h.b16 %v167
  %v1441 = vunpack.c.l.b16 %v168
  %v1442 = vunpack.c.h.b16 %v168
  %v1443 = vunpack.c.l.b16 %v169
  %v1444 = vunpack.c.h.b16 %v169
  %v1445 = vunpack.c.l.b16 %v170
  %v1446 = vunpack.c.h.b16 %v170
  %v1447 = vunpack.c.l.b16 %v171
  %v1448 = vunpack.c.h.b16 %v171
  %v1449 = vunpack.c.l.b16 %v172
  %v1450 = vunpack.c.h.b16 %v172
  %v1451 = vunpack.c.l.b16 %v173
  %v1452 = vunpack.c.h.b16 %v173
  %v1453 = vunpack.c.l.b16 %v174
  %v1454 = vunpack.c.h.b16 %v174
  %v1455 = vunpack.c.l.b16 %v175
  %v1456 = vunpack.c.h.b16 %v175
  %v1457 = vunpack.c.l.b16 %v176
  %v1458 = vunpack.c.h.b16 %v176
  %v1459 = vunpack.c.l.b16 %v177
  %v1460 = vunpack.c.h.b16 %v177
  %v1461 = vunpack.c.l.b16 %v178
  %v1462 = vunpack.c.h.b16 %v178
  %v1463 = vunpack.c.l.b16 %v179
  %v1464 = vunpack.c.h.b16 %v179
  %v1465 = vunpack.c.l.b16 %v180
  %v1466 = vunpack.c.h.b16 %v180
  %v1467 = vunpack.c.l.b16 %v181
  %v1468 = vunpack.c.h.b16 %v181
  %v1469 = vunpack.c.l.b16 %v182
  %v1470 = vunpack.c.h.b16 %v182
  %v1471 = vunpack.c.l.b16 %v183
  %v1472 = vunpack.c.h.b16 %v183
  %v1473 = vunpack.c.l.b16 %v184
  %v1474 = vunpack.c.h.b16 %v184
  %v1475 = vunpack.c.l.b16 %v185
  %v1476 = vunpack.c.h.b16 %v185
  %v1477 = vunpack.c.l.b16 %v186
  %v1478 = vunpack.c.h.b16 %v186
  %v1479 = vunpack.c.l.b16 %v187
  %v1480 = vunpack.c.h.b16 %v187
  %v1481 = vunpack.c.l.b16 %v188
  %v1482 = vunpack.c.h.b16 %v188
  %v1483 = vunpack.c.l.b16 %v189
  %v1484 = vunpack.c.h.b16 %v189
  %v1485 = vunpack.c.l.b16 %v190
  %v1486 = vunpack.c.h.b16 %v190
  %v1487 = vunpack.c.l.b16 %v191
  %v1488 = vunpack.c.h.b16 %v191
  %v1489 = vunpack.c.l.b16 %v192
  %v1490 = vunpack.c.h.b16 %v192
  %v1491 = vunpack.c.l.b16 %v193
  %v1492 = vunpack.c.h.b16 %v193
  %v1493 = vunpack.c.l.b16 %v194
  %v1494 = vunpack.c.h.b16 %v194
  %v1495 = vunpack.c.l.b16 %v195
  %v1496 = vunpack.c.h.b16 %v195
  %v1497 = vunpack.c.l.b16 %v196
  %v1498 = vunpack.c.h.b16 %v196
  %v1499 = vunpack.c.l.b16 %v197
  %v1500 = vunpack.c.h.b16 %v197
  %v1501 = vunpack.c.l.b16 %v198
  %v1502 = vunpack.c.h.b16 %v198
  %v1503 = vunpack.c.l.b16 %v199
  %v1504 = vunpack.c.h.b16 %v199
  %v1505 = vunpack.c.l.b16 %v200
  %v1506 = vunpack.c.h.b16 %v200
  %v1507 = vunpack.c.l.b16 %v201
  %v1508 = vunpack.c.h.b16 %v201
  %v1509 = vunpack.c.l.b16 %v202
  %v1510 = vunpack.c.h.b16 %v202
  %v1511 = vunpack.c.l.b16 %v203
  %v1512 = vunpack.c.h.b16 %v203
  %v1513 = vunpack.c.l.b16 %v204
  %v1514 = vunpack.c.h.b16 %v204
  %v1515 = vunpack.c.l.b16 %v205
  %v1516 = vunpack.c.h.b16 %v205
  %v1517 = vunpack.c.l.b16 %v206
  %v1518 = vunpack.c.h.b16 %v206
  %v1519 = vunpack.c.l.b16 %v207
  %v1520 = vunpack.c.h.b16 %v207
  %v1521 = vunpack.c.l.b16 %v208
  %v1522 = vunpack.c.h.b16 %v208
  %v1523 = vunpack.c.l.b16 %v209
  %v1524 = vunpack.c.h.b16 %v209
  %v1525 = vunpack.c.l.b16 %v210
  %v1526 = vunpack.c.h.b16 %v210
  %v1527 = vunpack.c.l.b16 %v211
  %v1528 = vunpack.c.h.b16 %v211
  %v1529 = vunpack.c.l.b16 %v212
  %v1530 = vunpack.c.h.b16 %v212
  %v1531 = vunpack.c.l.b16 %v213
  %v1532 = vunpack.c.h.b16 %v213
  %v1533 = vunpack.c.l.b16 %v214
  %v1534 = vunpack.c.h.b16 %v214
  %v1535 = vunpack.c.l.b16 %v215
  %v1536 = vunpack.c.h.b16 %v215
  %v1537 = vunpack.c.l.b16 %v216
  %v1538 = vunpack.c.h.b16 %v216
  %v1539 = vunpack.c.l.b16 %v217
  %v1540 = vunpack.c.h.b16 %v217
  %v1541 = vunpack.c.l.b16 %v218
  %v1542 = vunpack.c.h.b16 %v218
  %v1543 = vunpack.c.l.b16 %v219
  %v1544 = vunpack.c.h.b16 %v219
  %v1545 = vunpack.c.l.b16 %v220
  %v1546 = vunpack.c.h.b16 %v220
  %v1547 = vunpack.c.l.b16 %v221
  %v1548 = vunpack.c.h.b16 %v221
  %v1549 = vunpack.c.l.b16 %v222
  %v1550 = vunpack.c.h.b16 %v222
  %v1551 = vunpack.c.l.b16 %v223
  %v1552 = vunpack.c.h.b16 %v223
  %v1553 = vunpack.c.l.b16 %v224
  %v1554 = vunpack.c.h.b16 %v224
  %v1555 = vunpack.c.l.b16 %v225
  %v1556 = vunpack.c.h.b16 %v225
  %v1557 = vunpack.c.l.b16 %v226
  %v1558 = vunpack.c.h.b16 %v226
  %v1559 = vunpack.c.l.b16 %v227
  %v1560 = vunpack.c.h.b16 %v227
  %v1561 = vunpack.c.l.b16 %v228
  %v1562 = vunpack.c.h.b16 %v228
  %v1563 = vunpack.c.l.b16 %v229
  %v1564 = vunpack.c.h.b16 %v229
  %v1565 = vunpack.c.l.b16 %v230
  %v1566 = vunpack.c.h.b16 %v230
  %v1567 = vunpack.c.l.b16 %v231
  %v1568 = vunpack.c.h.b16 %v231
  %v1569 = vunpack.c.l.b16 %v232
  %v1570 = vunpack.c.h.b16 %v232
  %v1571 = vunpack.c.l.b16 %v233
  %v1572 = vunpack.c.h.b16 %v233
  %v1573 = vunpack.c.l.b16 %v234
  %v1574 = vunpack.c.h.b16 %v234
  %v1575 = vunpack.c.l.b16 %v235
  %v1576 = vunpack.c.h.b16 %v235
  %v1577 = vunpack.c.l.b16 %v236
  %v1578 = vunpack.c.h.b16 %v236
  %v1579 = vunpack.c.l.b16 %v237
  %v1580 = vunpack.c.h.b16 %v237
  %v1581 = vunpack.c.l.b16 %v238
  %v1582 = vunpack.c.h.b16 %v238
  %v1583 = vunpack.c.l.b16 %v239
  %v1584 = vunpack.c.h.b16 %v239
  %v1585 = vunpack.c.l.b16 %v240
  %v1586 = vunpack.c.h.b16 %v240
  %v1587 = vunpack.c.l.b16 %v241
  %v1588 = vunpack.c.h.b16 %v241
  %v1589 = vunpack.c.l.b16 %v242
  %v1590 = vunpack.c.h.b16 %v242
  %v1591 = vunpack.c.l.b16 %v243
  %v1592 = vunpack.c.h.b16 %v243
  %v1593 = vunpack.c.l.b16 %v244
  %v1594 = vunpack.c.h.b16 %v244
  %v1595 = vunpack.c.l.b16 %v245
  %v1596 = vunpack.c.h.b16 %v245
  %v1597 = vunpack.c.l.b16 %v246
  %v1598 = vunpack.c.h.b16 %v246
  %v1599 = vunpack.c.l.b16 %v247
  %v1600 = vunpack.c.h.b16 %v247
  %v1601 = vunpack.c.l.b16 %v248
  %v1602 = vunpack.c.h.b16 %v248
  %v1603 = vunpack.c.l.b16 %v249
  %v1604 = vunpack.c.h.b16 %v249
  %v1605 = vunpack.c.l.b16 %v250
  %v1606 = vunpack.c.h.b16 %v250
  %v1607 = vunpack.c.l.b16 %v251
  %v1608 = vunpack.c.h.b16 %v251
  %v1609 = vunpack.c.l.b16 %v252
  %v1610 = vunpack.c.h.b16 %v252
  %v1611 = vunpack.c.l.b16 %v253
  %v1612 = vunpack.c.h.b16 %v253
  %v1613 = vunpack.c.l.b16 %v254
  %v1614 = vunpack.c.h.b16 %v254
  %v1615 = vunpack.c.l.b16 %v255
  %v1616 = vunpack.c.h.b16 %v255
  %v1617 = vunpack.c.l.b16 %v256
  %v1618 = vunpack.c.h.b16 %v256
  %v1619 = vunpack.c.l.b16 %v257
  %v1620 = vunpack.c.h.b16 %v257
  %v1621 = vunpack.c.l.b16 %v258
  %v1622 = vunpack.c.h.b16 %v258
  %v1623 = vunpack.c.l.b16 %v259
  %v1624 = vunpack.c.h.b16 %v259
  %v1625 = vunpack.c.l.b16 %v260
  %v1626 = vunpack.c.h.b16 %v260
  %v1627 = vunpack.c.l.b16 %v261
  %v1628 = vunpack.c.h.b16 %v261
  %v1629 = vunpack.c.l.b16 %v262
  %v1630 = vunpack.c.h.b16 %v262
  %v1631 = vunpack.c.l.b16 %v263
  %v1632 = vunpack.c.h.b16 %v263
  %v1633 = vunpack.c.l.b16 %v264
  %v1634 = vunpack.c.h.b16 %v264
  %v1635 = vunpack.c.l.b16 %v265
  %v1636 = vunpack.c.h.b16 %v265
  %v1637 = vunpack.c.l.b16 %v266
  %v1638 = vunpack.c.h.b16 %v266
  %v1639 = vunpack.c.l.b16 %v267
  %v1640 = vunpack.c.h.b16 %v267
  %v1641 = vunpack.c.l.b16 %v268
  %v1642 = vunpack.c.h.b16 %v268
  %v1643 = vunpack.c.l.b16 %v269
  %v1644 = vunpack.c.h.b16 %v269
  %v1645 = vunpack.c.l.b16 %v270
  %v1646 = vunpack.c.h.b16 %v270
  %v1647 = vpack.c.b16 %v1167, %v1135
  %v1648 = vpack.c.b16 %v1168, %v1136
  %v1649 = vpack.c.b16 %v1169, %v1137
  %v1650 = vpack.c.b16 %v1170, %v1138
  %v1651 = vpack.c.b16 %v1171, %v1139
  %v1652 = vpack.c.b16 %v1172, %v1140
  %v1653 = vpack.c.b16 %v1173, %v1141
  %v1654 = vpack.c.b16 %v1174, %v1142
  %v1655 = vpack.c.b16 %v1175, %v1143
  %v1656 = vpack.c.b16 %v1176, %v1144
  %v1657 = vpack.c.b16 %v1177, %v1145
  %v1658 = vpack.c.b16 %v1178, %v1146
  %v1659 = vpack.c.b16 %v1179, %v1147
  %v1660 = vpack.c.b16 %v1180, %v1148
  %v1661 = vpack.c.b16 %v1181, %v1149
  %v1662 = vpack.c.b16 %v1182, %v1150
  %v1663 = vpack.c.b16 %v1183, %v1151
  %v1664 = vpack.c.b16 %v1184, %v1152
  %v1665 = vpack.c.b16 %v1185, %v1153
  %v1666 = vpack.c.b16 %v1186, %v1154
  %v1667 = vpack.c.b16 %v1187, %v1155
  %v1668 = vpack.c.b16 %v1188, %v1156
  %v1669 = vpack.c.b16 %v1189, %v1157
  %v1670 = vpack.c.b16 %v1190, %v1158
  %v1671 = vpack.c.b16 %v1191, %v1159
  %v1672 = vpack.c.b16 %v1192, %v1160
  %v1673 = vpack.c.b16 %v1193, %v1161
  %v1674 = vpack.c.b16 %v1194, %v1162
  %v1675 = vpack.c.b16 %v1195, %v1163
  %v1676 = vpack.c.b16 %v1196, %v1164
  %v1677 = vpack.c.b16 %v1197, %v1165
  %v1678 = vpack.c.b16 %v1198, %v1166
  %v1679 = vpack.c.b16 %v1231, %v1199
  %v1680 = vpack.c.b16 %v1232, %v1200
  %v1681 = vpack.c.b16 %v1233, %v1201
  %v1682 = vpack.c.b16 %v1234, %v1202
  %v1683 = vpack.c.b16 %v1235, %v1203
  %v1684 = vpack.c.b16 %v1236, %v1204
  %v1685 = vpack.c.b16 %v1237, %v1205
  %v1686 = vpack.c.b16 %v1238, %v1206
  %v1687 = vpack.c.b16 %v1239, %v1207
  %v1688 = vpack.c.b16 %v1240, %v1208
  %v1689 = vpack.c.b16 %v1241, %v1209
  %v1690 = vpack.c.b16 %v1242, %v1210
  %v1691 = vpack.c.b16 %v1243, %v1211
  %v1692 = vpack.c.b16 %v1244, %v1212
  %v1693 = vpack.c.b16 %v1245, %v1213
  %v1694 = vpack.c.b16 %v1246, %v1214
  %v1695 = vpack.c.b16 %v1247, %v1215
  %v1696 = vpack.c.b16 %v1248, %v1216
  %v1697 = vpack.c.b16 %v1249, %v1217
  %v1698 = vpack.c.b16 %v1250, %v1218
  %v1699 = vpack.c.b16 %v1251, %v1219
  %v1700 = vpack.c.b16 %v1252, %v1220
  %v1701 = vpack.c.b16 %v1253, %v1221
  %v1702 = vpack.c.b16 %v1254, %v1222
  %v1703 = vpack.c.b16 %v1255, %v1223
  %v1704 = vpack.c.b16 %v1256, %v1224
  %v1705 = vpack.c.b16 %v1257, %v1225
  %v1706 = vpack.c.b16 %v1258, %v1226
  %v1707 = vpack.c.b16 %v1259, %v1227
  %v1708 = vpack.c.b16 %v1260, %v1228
  %v1709 = vpack.c.b16 %v1261, %v1229
  %v1710 = vpack.c.b16 %v1262, %v1230
  %v1711 = vpack.c.b16 %v1295, %v1263
  %v1712 = vpack.c.b16 %v1296, %v1264
  %v1713 = vpack.c.b16 %v1297, %v1265
  %v1714 = vpack.c.b16 %v1298, %v1266
  %v1715 = vpack.c.b16 %v1299, %v1267
  %v1716 = vpack.c.b16 %v1300, %v1268
  %v1717 = vpack.c.b16 %v1301, %v1269
  %v1718 = vpack.c.b16 %v1302, %v1270
  %v1719 = vpack.c.b16 %v1303, %v1271
  %v1720 = vpack.c.b16 %v1304, %v1272
  %v1721 = vpack.c.b16 %v1305, %v1273
  %v1722 = vpack.c.b16 %v1306, %v1274
  %v1723 = vpack.c.b16 %v1307, %v1275
  %v1724 = vpack.c.b16 %v1308, %v1276
  %v1725 = vpack.c.b16 %v1309, %v1277
  %v1726 = vpack.c.b16 %v1310, %v1278
  %v1727 = vpack.c.b16 %v1311, %v1279
  %v1728 = vpack.c.b16 %v1312, %v1280
  %v1729 = vpack.c.b16 %v1313, %v1281
  %v1730 = vpack.c.b16 %v1314, %v1282
  %v1731 = vpack.c.b16 %v1315, %v1283
  %v1732 = vpack.c.b16 %v1316, %v1284
  %v1733 = vpack.c.b16 %v1317, %v1285
  %v1734 = vpack.c.b16 %v1318, %v1286
  %v1735 = vpack.c.b16 %v1319, %v1287
  %v1736 = vpack.c.b16 %v1320, %v1288
  %v1737 = vpack.c.b16 %v1321, %v1289
  %v1738 = vpack.c.b16 %v1322, %v1290
  %v1739 = vpack.c.b16 %v1323, %v1291
  %v1740 = vpack.c.b16 %v1324, %v1292
  %v1741 = vpack.c.b16 %v1325, %v1293
  %v1742 = vpack.c.b16 %v1326, %v1294
  %v1743 = vpack.c.b16 %v1359, %v1327
  %v1744 = vpack.c.b16 %v1360, %v1328
  %v1745 = vpack.c.b16 %v1361, %v1329
  %v1746 = vpack.c.b16 %v1362, %v1330
  %v1747 = vpack.c.b16 %v1363, %v1331
  %v1748 = vpack.c.b16 %v1364, %v1332
  %v1749 = vpack.c.b16 %v1365, %v1333
  %v1750 = vpack.c.b16 %v1366, %v1334
  %v1751 = vpack.c.b16 %v1367, %v1335
  %v1752 = vpack.c.b16 %v1368, %v1336
  %v1753 = vpack.c.b16 %v1369, %v1337
  %v1754 = vpack.c.b16 %v1370, %v1338
  %v1755 = vpack.c.b16 %v1371, %v1339
  %v1756 = vpack.c.b16 %v1372, %v1340
  %v1757 = vpack.c.b16 %v1373, %v1341
  %v1758 = vpack.c.b16 %v1374, %v1342
  %v1759 = vpack.c.b16 %v1375, %v1343
  %v1760 = vpack.c.b16 %v1376, %v1344
  %v1761 = vpack.c.b16 %v1377, %v1345
  %v1762 = vpack.c.b16 %v1378, %v1346
  %v1763 = vpack.c.b16 %v1379, %v1347
  %v1764 = vpack.c.b16 %v1380, %v1348
  %v1765 = vpack.c.b16 %v1381, %v1349
  %v1766 = vpack.c.b16 %v1382, %v1350
  %v1767 = vpack.c.b16 %v1383, %v1351
  %v1768 = vpack.c.b16 %v1384, %v1352
  %v1769 = vpack.c.b16 %v1385, %v1353
  %v1770 = vpack.c.b16 %v1386, %v1354
  %v1771 = vpack.c.b16 %v1387, %v1355
  %v1772 = vpack.c.b16 %v1388, %v1356
  %v1773 = vpack.c.b16 %v1389, %v1357
  %v1774 = vpack.c.b16 %v1390, %v1358
  %v1775 = vpack.c.b16 %v1423, %v1391
  %v1776 = vpack.c.b16 %v1424, %v1392
  %v1777 = vpack.c.b16 %v1425, %v1393
  %v1778 = vpack.c.b16 %v1426, %v1394
  %v1779 = vpack.c.b16 %v1427, %v1395
  %v1780 = vpack.c.b16 %v1428, %v1396
  %v1781 = vpack.c.b16 %v1429, %v1397
  %v1782 = vpack.c.b16 %v1430, %v1398
  %v1783 = vpack.c.b16 %v1431, %v1399
  %v1784 = vpack.c.b16 %v1432, %v1400
  %v1785 = vpack.c.b16 %v1433, %v1401
  %v1786 = vpack.c.b16 %v1434, %v1402
  %v1787 = vpack.c.b16 %v1435, %v1403
  %v1788 = vpack.c.b16 %v1436, %v1404
  %v1789 = vpack.c.b16 %v1437, %v1405
  %v1790 = vpack.c.b16 %v1438, %v1406
  %v1791 = vpack.c.b16 %v1439, %v1407
  %v1792 = vpack.c.b16 %v1440, %v1408
  %v1793 = vpack.c.b16 %v1441, %v1409
  %v1794 = vpack.c.b16 %v1442, %v1410
  %v1795 = vpack.c.b16 %v1443, %v1411
  %v1796 = vpack.c.b16 %v1444, %v1412
  %v1797 = vpack.c.b16 %v1445, %v1413
  %v1798 = vpack.c.b16 %v1446, %v1414
  %v1799 = vpack.c.b16 %v1447, %v1415
  %v1800 = vpack.c.b16 %v1448, %v1416
  %v1801 = vpack.c.b16 %v1449, %v1417
  %v1802 = vpack.c.b16 %v1450, %v1418
  %v1803 = vpack.c.b16 %v1451, %v1419
  %v1804 = vpack.c.b16 %v1452, %v1420
  %v1805 = vpack.c.b16 %v1453, %v1421
  %v1806 = vpack.c.b16 %v1454, %v1422
  %v1807 = vpack.c.b16 %v1487, %v1455
  %v1808 = vpack.c.b16 %v1488, %v1456
  %v1809 = vpack.c.b16 %v1489, %v1457
  %v1810 = vpack.c.b16 %v1490, %v1458
  %v1811 = vpack.c.b16 %v1491, %v1459
  %v1812 = vpack.c.b16 %v1492, %v1460
  %v1813 = vpack.c.b16 %v1493, %v1461
  %v1814 = vpack.c.b16 %v1494, %v1462
  %v1815 = vpack.c.b16 %v1495, %v1463
  %v1816 = vpack.c.b16 %v1496, %v1464
  %v1817 = vpack.c.b16 %v1497, %v1465
  %v1818 = vpack.c.b16 %v1498, %v1466
  %v1819 = vpack.c.b16 %v1499, %v1467
  %v1820 = vpack.c.b16 %v1500, %v1468
  %v1821 = vpack.c.b16 %v1501, %v1469
  %v1822 = vpack.c.b16 %v1502, %v1470
  %v1823 = vpack.c.b16 %v1503, %v1471
  %v1824 = vpack.c.b16 %v1504, %v1472
  %v1825 = vpack.c.b16 %v1505, %v1473
  %v1826 = vpack.c.b16 %v1506, %v1474
  %v1827 = vpack.c.b16 %v1507, %v1475
  %v1828 = vpack.c.b16 %v1508, %v1476
  %v1829 = vpack.c.b16 %v1509, %v1477
  %v1830 = vpack.c.b16 %v1510, %v1478
  %v1831 = vpack.c.b16 %v1511, %v1479
  %v1832 = vpack.c.b16 %v1512, %v1480
  %v1833 = vpack.c.b16 %v1513, %v1481
  %v1834 = vpack.c.b16 %v1514, %v1482
  %v1835 = vpack.c.b16 %v1515, %v1483
  %v1836 = vpack.c.b16 %v1516, %v1484
  %v1837 = vpack.c.b16 %v1517, %v1485
  %v1838 = vpack.c.b16 %v1518, %v1486
  %v1839 = vpack.c.b16 %v1551, %v1519
  %v1840 = vpack.c.b16 %v1552, %v1520
  %v1841 = vpack.c.b16 %v1553, %v1521
  %v1842 = vpack.c.b16 %v1554, %v1522
  %v1843 = vpack.c.b16 %v1555, %v1523
  %v1844 = vpack.c.b16 %v1556, %v1524
  %v1845 = vpack.c.b16 %v1557, %v1525
  %v1846 = vpack.c.b16 %v1558, %v1526
  %v1847 = vpack.c.b16 %v1559, %v1527
  %v1848 = vpack.c.b16 %v1560, %v1528
  %v1849 = vpack.c.b16 %v1561, %v1529
  %v1850 = vpack.c.b16 %v1562, %v1530
  %v1851 = vpack.c.b16 %v1563, %v1531
  %v1852 = vpack.c.b16 %v1564, %v1532
  %v1853 = vpack.c.b16 %v1565, %v1533
  %v1854 = vpack.c.b16 %v1566, %v1534
  %v1855 = vpack.c.b16 %v1567, %v1535
  %v1856 = vpack.c.b16 %v1568, %v1536
  %v1857 = vpack.c.b16 %v1569, %v1537
  %v1858 = vpack.c.b16 %v1570, %v1538
  %v1859 = vpack.c.b16 %v1571, %v1539
  %v1860 = vpack.c.b16 %v1572, %v1540
  %v1861 = vpack.c.b16 %v1573, %v1541
  %v1862 = vpack.c.b16 %v1574, %v1542
  %v1863 = vpack.c.b16 %v1575, %v1543
  %v1864 = vpack.c.b16 %v1576, %v1544
  %v1865 = vpack.c.b16 %v1577, %v1545
  %v1866 = vpack.c.b16 %v1578, %v1546
  %v1867 = vpack.c.b16 %v1579, %v1547
  %v1868 = vpack.c.b16 %v1580, %v1548
  %v1869 = vpack.c.b16 %v1581, %v1549
  %v1870 = vpack.c.b16 %v1582, %v1550
  %v1871 = vpack.c.b16 %v1615, %v1583
  %v1872 = vpack.c.b16 %v1616, %v1584
  %v1873 = vpack.c.b16 %v1617, %v1585
  %v1874 = vpack.c.b16 %v1618, %v1586
  %v1875 = vpack.c.b16 %v1619, %v1587
  %v1876 = vpack.c.b16 %v1620, %v1588
  %v1877 = vpack.c.b16 %v1621, %v1589
  %v1878 = vpack.c.b16 %v1622, %v1590
  %v1879 = vpack.c.b16 %v1623, %v1591
  %v1880 = vpack.c.b16 %v1624, %v1592
  %v1881 = vpack.c.b16 %v1625, %v1593
  %v1882 = vpack.c.b16 %v1626, %v1594
  %v1883 = vpack.c.b16 %v1627, %v1595
  %v1884 = vpack.c.b16 %v1628, %v1596
  %v1885 = vpack.c.b16 %v1629, %v1597
  %v1886 = vpack.c.b16 %v1630, %v1598
  %v1887 = vpack.c.b16 %v1631, %v1599
  %v1888 = vpack.c.b16 %v1632, %v1600
  %v1889 = vpack.c.b16 %v1633, %v1601
  %v1890 = vpack.c.b16 %v1634, %v1602
  %v1891 = vpack.c.b16 %v1635, %v1603
  %v1892 = vpack.c.b16 %v1636, %v1604
  %v1893 = vpack.c.b16 %v1637, %v1605
  %v1894 = vpack.c.b16 %v1638, %v1606
  %v1895 = vpack.c.b16 %v1639, %v1607
  %v1896 = vpack.c.b16 %v1640, %v1608
  %v1897 = vpack.c.b16 %v1641, %v1609
  %v1898 = vpack.c.b16 %v1642, %v1610
  %v1899 = vpack.c.b16 %v1643, %v1611
  %v1900 = vpack.c.b16 %v1644, %v1612
  %v1901 = vpack.c.b16 %v1645, %v1613
  %v1902 = vpack.c.b16 %v1646, %v1614
  %v2671 = vunpack.c.l.b16 %v271
  %v2672 = vunpack.c.l.b16 %v272
  %v2673 = vunpack.c.l.b16 %v273
  %v2674 = vunpack.c.l.b16 %v274
  %v2675 = vunpack.c.l.b16 %v275
  %v2676 = vunpack.c.l.b16 %v276
  %v2677 = vunpack.c.l.b16 %v277
  %v2678 = vunpack.c.l.b16 %v278
  %v2679 = vunpack.c.l.b16 %v279
  %v2680 = vunpack.c.l.b16 %v280
  %v2681 = vunpack.c.l.b16 %v281
  %v2682 = vunpack.c.l.b16 %v282
  %v2683 = vunpack.c.l.b16 %v283
  %v2684 = vunpack.c.l.b16 %v284
  %v2685 = vunpack.c.l.b16 %v285
  %v2686 = vunpack.c.l.b16 %v286
  %v2687 = vunpack.c.l.b16 %v287
  %v2688 = vunpack.c.l.b16 %v288
  %v2689 = vunpack.c.l.b16 %v289
  %v2690 = vunpack.c.l.b16 %v290
  %v2691 = vunpack.c.l.b16 %v291
  %v2692 = vunpack.c.l.b16 %v292
  %v2693 = vunpack.c.l.b16 %v293
  %v2694 = vunpack.c.l.b16 %v294
  %v2695 = vunpack.c.l.b16 %v295
  %v2696 = vunpack.c.l.b16 %v296
  %v2697 = vunpack.c.l.b16 %v297
  %v2698 = vunpack.c.l.b16 %v298
  %v2699 = vunpack.c.l.b16 %v299
  %v2700 = vunpack.c.l.b16 %v300
  %v2701 = vunpack.c.l.b16 %v301
  %v2702 = vunpack.c.l.b16 %v302
  %v2703 = vunpack.c.l.b16 %v303
  %v2704 = vunpack.c.l.b16 %v304
  %v2705 = vunpack.c.l.b16 %v305
  %v2706 = vunpack.c.l.b16 %v306
  %v2707 = vunpack.c.l.b16 %v307
  %v2708 = vunpack.c.l.b16 %v308
  %v2709 = vunpack.c.l.b16 %v309
  %v2710 = vunpack.c.l.b16 %v310
  %v2711 = vunpack.c.l.b16 %v311
  %v2712 = vunpack.c.l.b16 %v312
  %v2713 = vunpack.c.l.b16 %v313
  %v2714 = vunpack.c.l.b16 %v314
  %v2715 = vunpack.c.l.b16 %v315
  %v2716 = vunpack.c.l.b16 %v316
  %v2717 = vunpack.c.l.b16 %v317
  %v2718 = vunpack.c.l.b16 %v318
  %v2719 = vunpack.c.l.b16 %v319
  %v2720 = vunpack.c.l.b16 %v320
  %v2721 = vunpack.c.l.b16 %v321
  %v2722 = vunpack.c.l.b16 %v322
  %v2723 = vunpack.c.l.b16 %v323
  %v2724 = vunpack.c.l.b16 %v324
  %v2725 = vunpack.c.l.b16 %v325
  %v2726 = vunpack.c.l.b16 %v326
  %v2727 = vunpack.c.l.b16 %v327
  %v2728 = vunpack.c.l.b16 %v328
  %v2729 = vunpack.c.l.b16 %v329
  %v2730 = vunpack.c.l.b16 %v330
  %v2731 = vunpack.c.l.b16 %v331
  %v2732 = vunpack.c.l.b16 %v332
  %v2733 = vunpack.c.l.b16 %v333
  %v2734 = vunpack.c.l.b16 %v334
  %v2735 = vunpack.c.l.b16 %v335
  %v2736 = vunpack.c.l.b16 %v336
  %v2737 = vunpack.c.l.b16 %v337
  %v2738 = vunpack.c.l.b16 %v338
  %v2739 = vunpack.c.l.b16 %v339
  %v2740 = vunpack.c.l.b16 %v340
  %v2741 = vunpack.c.l.b16 %v341
  %v2742 = vunpack.c.l.b16 %v342
  %v2743 = vunpack.c.l.b16 %v343
  %v2744 = vunpack.c.l.b16 %v344
  %v2745 = vunpack.c.l.b16 %v345
  %v2746 = vunpack.c.l.b16 %v346
  %v2747 = vunpack.c.l.b16 %v347
  %v2748 = vunpack.c.l.b16 %v348
  %v2749 = vunpack.c.l.b16 %v349
  %v2750 = vunpack.c.l.b16 %v350
  %v2751 = vunpack.c.l.b16 %v351
  %v2752 = vunpack.c.l.b16 %v352
  %v2753 = vunpack.c.l.b16 %v353
  %v2754 = vunpack.c.l.b16 %v354
  %v2755 = vunpack.c.l.b16 %v355
  %v2756 = vunpack.c.l.b16 %v356
  %v2757 = vunpack.c.l.b16 %v357
  %v2758 = vunpack.c.l.b16 %v358
  %v2759 = vunpack.c.l.b16 %v359
  %v2760 = vunpack.c.l.b16 %v360
  %v2761 = vunpack.c.l.b16 %v361
  %v2762 = vunpack.c.l.b16 %v362
  %v2763 = vunpack.c.l.b16 %v363
  %v2764 = vunpack.c.l.b16 %v364
  %v2765 = vunpack.c.l.b16 %v365
  %v2766 = vunpack.c.l.b16 %v366
  %v2767 = vunpack.c.l.b16 %v367
  %v2768 = vunpack.c.l.b16 %v368
  %v2769 = vunpack.c.l.b16 %v369
  %v2770 = vunpack.c.l.b16 %v370
  %v2771 = vunpack.c.l.b16 %v371
  %v2772 = vunpack.c.l.b16 %v372
  %v2773 = vunpack.c.l.b16 %v373
  %v2774 = vunpack.c.l.b16 %v374
  %v2775 = vunpack.c.l.b16 %v375
  %v2776 = vunpack.c.l.b16 %v376
  %v2777 = vunpack.c.l.b16 %v377
  %v2778 = vunpack.c.l.b16 %v378
  %v2779 = vunpack.c.l.b16 %v379
  %v2780 = vunpack.c.l.b16 %v380
  %v2781 = vunpack.c.l.b16 %v381
  %v2782 = vunpack.c.l.b16 %v382
  %v2783 = vunpack.c.l.b16 %v383
  %v2784 = vunpack.c.l.b16 %v384
  %v2785 = vunpack.c.l.b16 %v385
  %v2786 = vunpack.c.l.b16 %v386
  %v2787 = vunpack.c.l.b16 %v387
  %v2788 = vunpack.c.l.b16 %v388
  %v2789 = vunpack.c.l.b16 %v389
  %v2790 = vunpack.c.l.b16 %v390
  %v2791 = vunpack.c.l.b16 %v391
  %v2792 = vunpack.c.l.b16 %v392
  %v2793 = vunpack.c.l.b16 %v393
  %v2794 = vunpack.c.l.b16 %v394
  %v2795 = vunpack.c.l.b16 %v395
  %v2796 = vunpack.c.l.b16 %v396
  %v2797 = vunpack.c.l.b16 %v397
  %v2798 = vunpack.c.l.b16 %v398
  %v2799 = vunpack.c.l.b16 %v399
  %v2800 = vunpack.c.l.b16 %v400
  %v2801 = vunpack.c.l.b16 %v401
  %v2802 = vunpack.c.l.b16 %v402
  %v2803 = vunpack.c.l.b16 %v403
  %v2804 = vunpack.c.l.b16 %v404
  %v2805 = vunpack.c.l.b16 %v405
  %v2806 = vunpack.c.l.b16 %v406
  %v2807 = vunpack.c.l.b16 %v407
  %v2808 = vunpack.c.l.b16 %v408
  %v2809 = vunpack.c.l.b16 %v409
  %v2810 = vunpack.c.l.b16 %v410
  %v2811 = vunpack.c.l.b16 %v411
  %v2812 = vunpack.c.l.b16 %v412
  %v2813 = vunpack.c.l.b16 %v413
  %v2814 = vunpack.c.l.b16 %v414
  %v2815 = vunpack.c.l.b16 %v415
  %v2816 = vunpack.c.l.b16 %v416
  %v2817 = vunpack.c.l.b16 %v417
  %v2818 = vunpack.c.l.b16 %v418
  %v2819 = vunpack.c.l.b16 %v419
  %v2820 = vunpack.c.l.b16 %v420
  %v2821 = vunpack.c.l.b16 %v421
  %v2822 = vunpack.c.l.b16 %v422
  %v2823 = vunpack.c.l.b16 %v423
  %v2824 = vunpack.c.l.b16 %v424
  %v2825 = vunpack.c.l.b16 %v425
  %v2826 = vunpack.c.l.b16 %v426
  %v2827 = vunpack.c.l.b16 %v427
  %v2828 = vunpack.c.l.b16 %v428
  %v2829 = vunpack.c.l.b16 %v429
  %v2830 = vunpack.c.l.b16 %v430
  %v2831 = vunpack.c.l.b16 %v431
  %v2832 = vunpack.c.l.b16 %v432
  %v2833 = vunpack.c.l.b16 %v433
  %v2834 = vunpack.c.l.b16 %v434
  %v2835 = vunpack.c.l.b16 %v435
  %v2836 = vunpack.c.l.b16 %v436
  %v2837 = vunpack.c.l.b16 %v437
  %v2838 = vunpack.c.l.b16 %v438
  %v2839 = vunpack.c.l.b16 %v439
  %v2840 = vunpack.c.l.b16 %v440
  %v2841 = vunpack.c.l.b16 %v441
  %v2842 = vunpack.c.l.b16 %v442
  %v2843 = vunpack.c.l.b16 %v443
  %v2844 = vunpack.c.l.b16 %v444
  %v2845 = vunpack.c.l.b16 %v445
  %v2846 = vunpack.c.l.b16 %v446
  %v2847 = vunpack.c.l.b16 %v447
  %v2848 = vunpack.c.l.b16 %v448
  %v2849 = vunpack.c.l.b16 %v449
  %v2850 = vunpack.c.l.b16 %v450
  %v2851 = vunpack.c.l.b16 %v451
  %v2852 = vunpack.c.l.b16 %v452
  %v2853 = vunpack.c.l.b16 %v453
  %v2854 = vunpack.c.l.b16 %v454
  %v2855 = vunpack.c.l.b16 %v455
  %v2856 = vunpack.c.l.b16 %v456
  %v2857 = vunpack.c.l.b16 %v457
  %v2858 = vunpack.c.l.b16 %v458
  %v2859 = vunpack.c.l.b16 %v459
  %v2860 = vunpack.c.l.b16 %v460
  %v2861 = vunpack.c.l.b16 %v461
  %v2862 = vunpack.c.l.b16 %v462
  %v2863 = vunpack.c.l.b16 %v463
  %v2864 = vunpack.c.l.b16 %v464
  %v2865 = vunpack.c.l.b16 %v465
  %v2866 = vunpack.c.l.b16 %v466
  %v2867 = vunpack.c.l.b16 %v467
  %v2868 = vunpack.c.l.b16 %v468
  %v2869 = vunpack.c.l.b16 %v469
  %v2870 = vunpack.c.l.b16 %v470
  %v2871 = vunpack.c.l.b16 %v471
  %v2872 = vunpack.c.l.b16 %v472
  %v2873 = vunpack.c.l.b16 %v473
  %v2874 = vunpack.c.l.b16 %v474
  %v2875 = vunpack.c.l.b16 %v475
  %v2876 = vunpack.c.l.b16 %v476
  %v2877 = vunpack.c.l.b16 %v477
  %v2878 = vunpack.c.l.b16 %v478
  %v2879 = vunpack.c.l.b16 %v479
  %v2880 = vunpack.c.l.b16 %v480
  %v2881 = vunpack.c.l.b16 %v481
  %v2882 = vunpack.c.l.b16 %v482
  %v2883 = vunpack.c.l.b16 %v483
  %v2884 = vunpack.c.l.b16 %v484
  %v2885 = vunpack.c.l.b16 %v485
  %v2886 = vunpack.c.l.b16 %v486
  %v2887 = vunpack.c.l.b16 %v487
  %v2888 = vunpack.c.l.b16 %v488
  %v2889 = vunpack.c.l.b16 %v489
  %v2890 = vunpack.c.l.b16 %v490
  %v2891 = vunpack.c.l.b16 %v491
  %v2892 = vunpack.c.l.b16 %v492
  %v2893 = vunpack.c.l.b16 %v493
  %v2894 = vunpack.c.l.b16 %v494
  %v2895 = vunpack.c.l.b16 %v495
  %v2896 = vunpack.c.l.b16 %v496
  %v2897 = vunpack.c.l.b16 %v497
  %v2898 = vunpack.c.l.b16 %v498
  %v2899 = vunpack.c.l.b16 %v499
  %v2900 = vunpack.c.l.b16 %v500
  %v2901 = vunpack.c.l.b16 %v501
  %v2902 = vunpack.c.l.b16 %v502
  %v2903 = vunpack.c.l.b16 %v503
  %v2904 = vunpack.c.l.b16 %v504
  %v2905 = vunpack.c.l.b16 %v505
  %v2906 = vunpack.c.l.b16 %v506
  %v2907 = vunpack.c.l.b16 %v507
  %v2908 = vunpack.c.l.b16 %v508
  %v2909 = vunpack.c.l.b16 %v509
  %v2910 = vunpack.c.l.b16 %v510
  %v2911 = vunpack.c.l.b16 %v511
  %v2912 = vunpack.c.l.b16 %v512
  %v2913 = vunpack.c.l.b16 %v513
  %v2914 = vunpack.c.l.b16 %v514
  %v2915 = vunpack.c.l.b16 %v515
  %v2916 = vunpack.c.l.b16 %v516
  %v2917 = vunpack.c.l.b16 %v517
  %v2918 = vunpack.c.l.b16 %v518
  %v2919 = vunpack.c.l.b16 %v519
  %v2920 = vunpack.c.l.b16 %v520
  %v2921 = vunpack.c.l.b16 %v521
  %v2922 = vunpack.c.l.b16 %v522
  %v2923 = vunpack.c.l.b16 %v523
  %v2924 = vunpack.c.l.b16 %v524
  %v2925 = vunpack.c.l.b16 %v525
  %v2926 = vunpack.c.l.b16 %v526
  %v2927 = vunpack.c.l.b16 %v527
  %v2928 = vunpack.c.l.b16 %v528
  %v2929 = vunpack.c.l.b16 %v529
  %v2930 = vunpack.c.l.b16 %v530
  %v2931 = vunpack.c.l.b16 %v531
  %v2932 = vunpack.c.l.b16 %v532
  %v2933 = vunpack.c.l.b16 %v533
  %v2934 = vunpack.c.l.b16 %v534
  %v2935 = vunpack.c.l.b16 %v535
  %v2936 = vunpack.c.l.b16 %v536
  %v2937 = vunpack.c.l.b16 %v537
  %v2938 = vunpack.c.l.b16 %v538
  %v2939 = vunpack.c.l.b16 %v539
  %v2940 = vunpack.c.l.b16 %v540
  %v2941 = vunpack.c.l.b16 %v541
  %v2942 = vunpack.c.l.b16 %v542
  %v2943 = vunpack.c.l.b16 %v543
  %v2944 = vunpack.c.l.b16 %v544
  %v2945 = vunpack.c.l.b16 %v545
  %v2946 = vunpack.c.l.b16 %v546
  %v2947 = vunpack.c.l.b16 %v547
  %v2948 = vunpack.c.l.b16 %v548
  %v2949 = vunpack.c.l.b16 %v549
  %v2950 = vunpack.c.l.b16 %v550
  %v2951 = vunpack.c.l.b16 %v551
  %v2952 = vunpack.c.l.b16 %v552
  %v2953 = vunpack.c.l.b16 %v553
  %v2954 = vunpack.c.l.b16 %v554
  %v2955 = vunpack.c.l.b16 %v555
  %v2956 = vunpack.c.l.b16 %v556
  %v2957 = vunpack.c.l.b16 %v557
  %v2958 = vunpack.c.l.b16 %v558
  %v2959 = vunpack.c.l.b16 %v559
  %v2960 = vunpack.c.l.b16 %v560
  %v2961 = vunpack.c.l.b16 %v561
  %v2962 = vunpack.c.l.b16 %v562
  %v2963 = vunpack.c.l.b16 %v563
  %v2964 = vunpack.c.l.b16 %v564
  %v2965 = vunpack.c.l.b16 %v565
  %v2966 = vunpack.c.l.b16 %v566
  %v2967 = vunpack.c.l.b16 %v567
  %v2968 = vunpack.c.l.b16 %v568
  %v2969 = vunpack.c.l.b16 %v569
  %v2970 = vunpack.c.l.b16 %v570
  %v2971 = vunpack.c.l.b16 %v571
  %v2972 = vunpack.c.l.b16 %v572
  %v2973 = vunpack.c.l.b16 %v573
  %v2974 = vunpack.c.l.b16 %v574
  %v2975 = vunpack.c.l.b16 %v575
  %v2976 = vunpack.c.l.b16 %v576
  %v2977 = vunpack.c.l.b16 %v577
  %v2978 = vunpack.c.l.b16 %v578
  %v2979 = vunpack.c.l.b16 %v579
  %v2980 = vunpack.c.l.b16 %v580
  %v2981 = vunpack.c.l.b16 %v581
  %v2982 = vunpack.c.l.b16 %v582
  %v2983 = vunpack.c.l.b16 %v583
  %v2984 = vunpack.c.l.b16 %v584
  %v2985 = vunpack.c.l.b16 %v585
  %v2986 = vunpack.c.l.b16 %v586
  %v2987 = vunpack.c.l.b16 %v587
  %v2988 = vunpack.c.l.b16 %v588
  %v2989 = vunpack.c.l.b16 %v589
  %v2990 = vunpack.c.l.b16 %v590
  %v2991 = vunpack.c.l.b16 %v591
  %v2992 = vunpack.c.l.b16 %v592
  %v2993 = vunpack.c.l.b16 %v593
  %v2994 = vunpack.c.l.b16 %v594
  %v2995 = vunpack.c.l.b16 %v595
  %v2996 = vunpack.c.l.b16 %v596
  %v2997 = vunpack.c.l.b16 %v597
  %v2998 = vunpack.c.l.b16 %v598
  %v2999 = vunpack.c.l.b16 %v599
  %v3000 = vunpack.c.l.b16 %v600
  %v3001 = vunpack.c.l.b16 %v601
  %v3002 = vunpack.c.l.b16 %v602
  %v3003 = vunpack.c.l.b16 %v603
  %v3004 = vunpack.c.l.b16 %v604
  %v3005 = vunpack.c.l.b16 %v605
  %v3006 = vunpack.c.l.b16 %v606
  %v3007 = vunpack.c.l.b16 %v607
  %v3008 = vunpack.c.l.b16 %v608
  %v3009 = vunpack.c.l.b16 %v609
  %v3010 = vunpack.c.l.b16 %v610
  %v3011 = vunpack.c.l.b16 %v611
  %v3012 = vunpack.c.l.b16 %v612
  %v3013 = vunpack.c.l.b16 %v613
  %v3014 = vunpack.c.l.b16 %v614
  %v3015 = vunpack.c.l.b16 %v615
  %v3016 = vunpack.c.l.b16 %v616
  %v3017 = vunpack.c.l.b16 %v617
  %v3018 = vunpack.c.l.b16 %v618
  %v3019 = vunpack.c.l.b16 %v619
  %v3020 = vunpack.c.l.b16 %v620
  %v3021 = vunpack.c.l.b16 %v621
  %v3022 = vunpack.c.l.b16 %v622
  %v3023 = vunpack.c.l.b16 %v623
  %v3024 = vunpack.c.l.b16 %v624
  %v3025 = vunpack.c.l.b16 %v625
  %v3026 = vunpack.c.l.b16 %v626
  %v3027 = vunpack.c.l.b16 %v627
  %v3028 = vunpack.c.l.b16 %v628
  %v3029 = vunpack.c.l.b16 %v629
  %v3030 = vunpack.c.l.b16 %v630
  %v3031 = vunpack.c.l.b16 %v631
  %v3032 = vunpack.c.l.b16 %v632
  %v3033 = vunpack.c.l.b16 %v633
  %v3034 = vunpack.c.l.b16 %v634
  %v3035 = vunpack.c.l.b16 %v635
  %v3036 = vunpack.c.l.b16 %v636
  %v3037 = vunpack.c.l.b16 %v637
  %v3038 = vunpack.c.l.b16 %v638
  %v3039 = vunpack.c.l.b16 %v639
  %v3040 = vunpack.c.l.b16 %v640
  %v3041 = vunpack.c.l.b16 %v641
  %v3042 = vunpack.c.l.b16 %v642
  %v3043 = vunpack.c.l.b16 %v643
  %v3044 = vunpack.c.l.b16 %v644
  %v3045 = vunpack.c.l.b16 %v645
  %v3046 = vunpack.c.l.b16 %v646
  %v3047 = vunpack.c.l.b16 %v647
  %v3048 = vunpack.c.l.b16 %v648
  %v3049 = vunpack.c.l.b16 %v649
  %v3050 = vunpack.c.l.b16 %v650
  %v3051 = vunpack.c.l.b16 %v651
  %v3052 = vunpack.c.l.b16 %v652
  %v3053 = vunpack.c.l.b16 %v653
  %v3054 = vunpack.c.l.b16 %v654
  %v3055 = vunpack.c.l.b16 %v655
  %v3056 = vunpack.c.l.b16 %v656
  %v3057 = vunpack.c.l.b16 %v657
  %v3058 = vunpack.c.l.b16 %v658
  %v3059 = vunpack.c.l.b16 %v659
  %v3060 = vunpack.c.l.b16 %v660
  %v3061 = vunpack.c.l.b16 %v661
  %v3062 = vunpack.c.l.b16 %v662
  %v3063 = vunpack.c.l.b16 %v663
  %v3064 = vunpack.c.l.b16 %v664
  %v3065 = vunpack.c.l.b16 %v665
  %v3066 = vunpack.c.l.b16 %v666
  %v3067 = vunpack.c.l.b16 %v667
  %v3068 = vunpack.c.l.b16 %v668
  %v3069 = vunpack.c.l.b16 %v669
  %v3070 = vunpack.c.l.b16 %v670
  %v3071 = vunpack.c.l.b16 %v671
  %v3072 = vunpack.c.l.b16 %v672
  %v3073 = vunpack.c.l.b16 %v673
  %v3074 = vunpack.c.l.b16 %v674
  %v3075 = vunpack.c.l.b16 %v675
  %v3076 = vunpack.c.l.b16 %v676
  %v3077 = vunpack.c.l.b16 %v677
  %v3078 = vunpack.c.l.b16 %v678
  %v3079 = vunpack.c.l.b16 %v679
  %v3080 = vunpack.c.l.b16 %v680
  %v3081 = vunpack.c.l.b16 %v681
  %v3082 = vunpack.c.l.b16 %v682
  %v3083 = vunpack.c.l.b16 %v683
  %v3084 = vunpack.c.l.b16 %v684
  %v3085 = vunpack.c.l.b16 %v685
  %v3086 = vunpack.c.l.b16 %v686
  %v3087 = vunpack.c.l.b16 %v687
  %v3088 = vunpack.c.l.b16 %v688
  %v3089 = vunpack.c.l.b16 %v689
  %v3090 = vunpack.c.l.b16 %v690
  %v3091 = vunpack.c.l.b16 %v691
  %v3092 = vunpack.c.l.b16 %v692
  %v3093 = vunpack.c.l.b16 %v693
  %v3094 = vunpack.c.l.b16 %v694
  %v3095 = vunpack.c.l.b16 %v695
  %v3096 = vunpack.c.l.b16 %v696
  %v3097 = vunpack.c.l.b16 %v697
  %v3098 = vunpack.c.l.b16 %v698
  %v3099 = vunpack.c.l.b16 %v699
  %v3100 = vunpack.c.l.b16 %v700
  %v3101 = vunpack.c.l.b16 %v701
  %v3102 = vunpack.c.l.b16 %v702
  %v3103 = vunpack.c.l.b16 %v703
  %v3104 = vunpack.c.l.b16 %v704
  %v3105 = vunpack.c.l.b16 %v705
  %v3106 = vunpack.c.l.b16 %v706
  %v3107 = vunpack.c.l.b16 %v707
  %v3108 = vunpack.c.l.b16 %v708
  %v3109 = vunpack.c.l.b16 %v709
  %v3110 = vunpack.c.l.b16 %v710
  %v3111 = vunpack.c.l.b16 %v711
  %v3112 = vunpack.c.l.b16 %v712
  %v3113 = vunpack.c.l.b16 %v713
  %v3114 = vunpack.c.l.b16 %v714
  %v3115 = vunpack.c.l.b16 %v715
  %v3116 = vunpack.c.l.b16 %v716
  %v3117 = vunpack.c.l.b16 %v717
  %v3118 = vunpack.c.l.b16 %v718
  %v3119 = vunpack.c.l.b16 %v719
  %v3120 = vunpack.c.l.b16 %v720
  %v3121 = vunpack.c.l.b16 %v721
  %v3122 = vunpack.c.l.b16 %v722
  %v3123 = vunpack.c.l.b16 %v723
  %v3124 = vunpack.c.l.b16 %v724
  %v3125 = vunpack.c.l.b16 %v725
  %v3126 = vunpack.c.l.b16 %v726
  %v3127 = vunpack.c.l.b16 %v727
  %v3128 = vunpack.c.l.b16 %v728
  %v3129 = vunpack.c.l.b16 %v729
  %v3130 = vunpack.c.l.b16 %v730
  %v3131 = vunpack.c.l.b16 %v731
  %v3132 = vunpack.c.l.b16 %v732
  %v3133 = vunpack.c.l.b16 %v733
  %v3134 = vunpack.c.l.b16 %v734
  %v3135 = vunpack.c.l.b16 %v735
  %v3136 = vunpack.c.l.b16 %v736
  %v3137 = vunpack.c.l.b16 %v737
  %v3138 = vunpack.c.l.b16 %v738
  %v3139 = vunpack.c.l.b16 %v739
  %v3140 = vunpack.c.l.b16 %v740
  %v3141 = vunpack.c.l.b16 %v741
  %v3142 = vunpack.c.l.b16 %v742
  %v3143 = vunpack.c.l.b16 %v743
  %v3144 = vunpack.c.l.b16 %v744
  %v3145 = vunpack.c.l.b16 %v745
  %v3146 = vunpack.c.l.b16 %v746
  %v3147 = vunpack.c.l.b16 %v747
  %v3148 = vunpack.c.l.b16 %v748
  %v3149 = vunpack.c.l.b16 %v749
  %v3150 = vunpack.c.l.b16 %v750
  %v3151 = vunpack.c.l.b16 %v751
  %v3152 = vunpack.c.l.b16 %v752
  %v3153 = vunpack.c.l.b16 %v753
  %v3154 = vunpack.c.l.b16 %v754
  %v3155 = vunpack.c.l.b16 %v755
  %v3156 = vunpack.c.l.b16 %v756
  %v3157 = vunpack.c.l.b16 %v757
  %v3158 = vunpack.c.l.b16 %v758
  %v3159 = vunpack.c.l.b16 %v759
  %v3160 = vunpack.c.l.b16 %v760
  %v3161 = vunpack.c.l.b16 %v761
  %v3162 = vunpack.c.l.b16 %v762
  %v3163 = vunpack.c.l.b16 %v763
  %v3164 = vunpack.c.l.b16 %v764
  %v3165 = vunpack.c.l.b16 %v765
  %v3166 = vunpack.c.l.b16 %v766
  %v3167 = vunpack.c.l.b16 %v767
  %v3168 = vunpack.c.l.b16 %v768
  %v3169 = vunpack.c.l.b16 %v769
  %v3170 = vunpack.c.l.b16 %v770
  %v3171 = vunpack.c.l.b16 %v771
  %v3172 = vunpack.c.l.b16 %v772
  %v3173 = vunpack.c.l.b16 %v773
  %v3174 = vunpack.c.l.b16 %v774
  %v3175 = vunpack.c.l.b16 %v775
  %v3176 = vunpack.c.l.b16 %v776
  %v3177 = vunpack.c.l.b16 %v777
  %v3178 = vunpack.c.l.b16 %v778
  %v3179 = vunpack.c.l.b16 %v779
  %v3180 = vunpack.c.l.b16 %v780
  %v3181 = vunpack.c.l.b16 %v781
  %v3182 = vunpack.c.l.b16 %v782
  %v3183 = vpack.c.b16 %v2672, %v2671
  %v3184 = vpack.c.b16 %v2674, %v2673
  %v3185 = vpack.c.b16 %v2676, %v2675
  %v3186 = vpack.c.b16 %v2678, %v2677
  %v3187 = vpack.c.b16 %v2680, %v2679
  %v3188 = vpack.c.b16 %v2682, %v2681
  %v3189 = vpack.c.b16 %v2684, %v2683
  %v3190 = vpack.c.b16 %v2686, %v2685
  %v3191 = vpack.c.b16 %v2688, %v2687
  %v3192 = vpack.c.b16 %v2690, %v2689
  %v3193 = vpack.c.b16 %v2692, %v2691
  %v3194 = vpack.c.b16 %v2694, %v2693
  %v3195 = vpack.c.b16 %v2696, %v2695
  %v3196 = vpack.c.b16 %v2698, %v2697
  %v3197 = vpack.c.b16 %v2700, %v2699
  %v3198 = vpack.c.b16 %v2702, %v2701
  %v3199 = vpack.c.b16 %v2704, %v2703
  %v3200 = vpack.c.b16 %v2706, %v2705
  %v3201 = vpack.c.b16 %v2708, %v2707
  %v3202 = vpack.c.b16 %v2710, %v2709
  %v3203 = vpack.c.b16 %v2712, %v2711
  %v3204 = vpack.c.b16 %v2714, %v2713
  %v3205 = vpack.c.b16 %v2716, %v2715
  %v3206 = vpack.c.b16 %v2718, %v2717
  %v3207 = vpack.c.b16 %v2720, %v2719
  %v3208 = vpack.c.b16 %v2722, %v2721
  %v3209 = vpack.c.b16 %v2724, %v2723
  %v3210 = vpack.c.b16 %v2726, %v2725
  %v3211 = vpack.c.b16 %v2728, %v2727
  %v3212 = vpack.c.b16 %v2730, %v2729
  %v3213 = vpack.c.b16 %v2732, %v2731
  %v3214 = vpack.c.b16 %v2734, %v2733
  %v3215 = vpack.c.b16 %v2736, %v2735
  %v3216 = vpack.c.b16 %v2738, %v2737
  %v3217 = vpack.c.b16 %v2740, %v2739
  %v3218 = vpack.c.b16 %v2742, %v2741
  %v3219 = vpack.c.b16 %v2744, %v2743
  %v3220 = vpack.c.b16 %v2746, %v2745
  %v3221 = vpack.c.b16 %v2748, %v2747
  %v3222 = vpack.c.b16 %v2750, %v2749
  %v3223 = vpack.c.b16 %v2752, %v2751
  %v3224 = vpack.c.b16 %v2754, %v2753
  %v3225 = vpack.c.b16 %v2756, %v2755
  %v3226 = vpack.c.b16 %v2758, %v2757
  %v3227 = vpack.c.b16 %v2760, %v2759
  %v3228 = vpack.c.b16 %v2762, %v2761
  %v3229 = vpack.c.b16 %v2764, %v2763
  %v3230 = vpack.c.b16 %v2766, %v2765
  %v3231 = vpack.c.b16 %v2768, %v2767
  %v3232 = vpack.c.b16 %v2770, %v2769
  %v3233 = vpack.c.b16 %v2772, %v2771
  %v3234 = vpack.c.b16 %v2774, %v2773
  %v3235 = vpack.c.b16 %v2776, %v2775
  %v3236 = vpack.c.b16 %v2778, %v2777
  %v3237 = vpack.c.b16 %v2780, %v2779
  %v3238 = vpack.c.b16 %v2782, %v2781
  %v3239 = vpack.c.b16 %v2784, %v2783
  %v3240 = vpack.c.b16 %v2786, %v2785
  %v3241 = vpack.c.b16 %v2788, %v2787
  %v3242 = vpack.c.b16 %v2790, %v2789
  %v3243 = vpack.c.b16 %v2792, %v2791
  %v3244 = vpack.c.b16 %v2794, %v2793
  %v3245 = vpack.c.b16 %v2796, %v2795
  %v3246 = vpack.c.b16 %v2798, %v2797
  %v3247 = vpack.c.b16 %v2800, %v2799
  %v3248 = vpack.c.b16 %v2802, %v2801
  %v3249 = vpack.c.b16 %v2804, %v2803
  %v3250 = vpack.c.b16 %v2806, %v2805
  %v3251 = vpack.c.b16 %v2808, %v2807
  %v3252 = vpack.c.b16 %v2810, %v2809
  %v3253 = vpack.c.b16 %v2812, %v2811
  %v3254 = vpack.c.b16 %v2814, %v2813
  %v3255 = vpack.c.b16 %v2816, %v2815
  %v3256 = vpack.c.b16 %v2818, %v2817
  %v3257 = vpack.c.b16 %v2820, %v2819
  %v3258 = vpack.c.b16 %v2822, %v2821
  %v3259 = vpack.c.b16 %v2824, %v2823
  %v3260 = vpack.c.b16 %v2826, %v2825
  %v3261 = vpack.c.b16 %v2828, %v2827
  %v3262 = vpack.c.b16 %v2830, %v2829
  %v3263 = vpack.c.b16 %v2832, %v2831
  %v3264 = vpack.c.b16 %v2834, %v2833
  %v3265 = vpack.c.b16 %v2836, %v2835
  %v3266 = vpack.c.b16 %v2838, %v2837
  %v3267 = vpack.c.b16 %v2840, %v2839
  %v3268 = vpack.c.b16 %v2842, %v2841
  %v3269 = vpack.c.b16 %v2844, %v2843
  %v3270 = vpack.c.b16 %v2846, %v2845
  %v3271 = vpack.c.b16 %v2848, %v2847
  %v3272 = vpack.c.b16 %v2850, %v2849
  %v3273 = vpack.c.b16 %v2852, %v2851
  %v3274 = vpack.c.b16 %v2854, %v2853
  %v3275 = vpack.c.b16 %v2856, %v2855
  %v3276 = vpack.c.b16 %v2858, %v2857
  %v3277 = vpack.c.b16 %v2860, %v2859
  %v3278 = vpack.c.b16 %v2862, %v2861
  %v3279 = vpack.c.b16 %v2864, %v2863
  %v3280 = vpack.c.b16 %v2866, %v2865
  %v3281 = vpack.c.b16 %v2868, %v2867
  %v3282 = vpack.c.b16 %v2870, %v2869
  %v3283 = vpack.c.b16 %v2872, %v2871
  %v3284 = vpack.c.b16 %v2874, %v2873
  %v3285 = vpack.c.b16 %v2876, %v2875
  %v3286 = vpack.c.b16 %v2878, %v2877
  %v3287 = vpack.c.b16 %v2880, %v2879
  %v3288 = vpack.c.b16 %v2882, %v2881
  %v3289 = vpack.c.b16 %v2884, %v2883
  %v3290 = vpack.c.b16 %v2886, %v2885
  %v3291 = vpack.c.b16 %v2888, %v2887
  %v3292 = vpack.c.b16 %v2890, %v2889
  %v3293 = vpack.c.b16 %v2892, %v2891
  %v3294 = vpack.c.b16 %v2894, %v2893
  %v3295 = vpack.c.b16 %v2896, %v2895
  %v3296 = vpack.c.b16 %v2898, %v2897
  %v3297 = vpack.c.b16 %v2900, %v2899
  %v3298 = vpack.c.b16 %v2902, %v2901
  %v3299 = vpack.c.b16 %v2904, %v2903
  %v3300 = vpack.c.b16 %v2906, %v2905
  %v3301 = vpack.c.b16 %v2908, %v2907
  %v3302 = vpack.c.b16 %v2910, %v2909
  %v3303 = vpack.c.b16 %v2912, %v2911
  %v3304 = vpack.c.b16 %v2914, %v2913
  %v3305 = vpack.c.b16 %v2916, %v2915
  %v3306 = vpack.c.b16 %v2918, %v2917
  %v3307 = vpack.c.b16 %v2920, %v2919
  %v3308 = vpack.c.b16 %v2922, %v2921
  %v3309 = vpack.c.b16 %v2924, %v2923
  %v3310 = vpack.c.b16 %v2926, %v2925
  %v3311 = vpack.c.b16 %v2928, %v2927
  %v3312 = vpack.c.b16 %v2930, %v2929
  %v3313 = vpack.c.b16 %v2932, %v2931
  %v3314 = vpack.c.b16 %v2934, %v2933
  %v3315 = vpack.c.b16 %v2936, %v2935
  %v3316 = vpack.c.b16 %v2938, %v2937
  %v3317 = vpack.c.b16 %v2940, %v2939
  %v3318 = vpack.c.b16 %v2942, %v2941
  %v3319 = vpack.c.b16 %v2944, %v2943
  %v3320 = vpack.c.b16 %v2946, %v2945
  %v3321 = vpack.c.b16 %v2948, %v2947
  %v3322 = vpack.c.b16 %v2950, %v2949
  %v3323 = vpack.c.b16 %v2952, %v2951
  %v3324 = vpack.c.b16 %v2954, %v2953
  %v3325 = vpack.c.b16 %v2956, %v2955
  %v3326 = vpack.c.b16 %v2958, %v2957
  %v3327 = vpack.c.b16 %v2960, %v2959
  %v3328 = vpack.c.b16 %v2962, %v2961
  %v3329 = vpack.c.b16 %v2964, %v2963
  %v3330 = vpack.c.b16 %v2966, %v2965
  %v3331 = vpack.c.b16 %v2968, %v2967
  %v3332 = vpack.c.b16 %v2970, %v2969
  %v3333 = vpack.c.b16 %v2972, %v2971
  %v3334 = vpack.c.b16 %v2974, %v2973
  %v3335 = vpack.c.b16 %v2976, %v2975
  %v3336 = vpack.c.b16 %v2978, %v2977
  %v3337 = vpack.c.b16 %v2980, %v2979
  %v3338 = vpack.c.b16 %v2982, %v2981
  %v3339 = vpack.c.b16 %v2984, %v2983
  %v3340 = vpack.c.b16 %v2986, %v2985
  %v3341 = vpack.c.b16 %v2988, %v2987
  %v3342 = vpack.c.b16 %v2990, %v2989
  %v3343 = vpack.c.b16 %v2992, %v2991
  %v3344 = vpack.c.b16 %v2994, %v2993
  %v3345 = vpack.c.b16 %v2996, %v2995
  %v3346 = vpack.c.b16 %v2998, %v2997
  %v3347 = vpack.c.b16 %v3000, %v2999
  %v3348 = vpack.c.b16 %v3002, %v3001
  %v3349 = vpack.c.b16 %v3004, %v3003
  %v3350 = vpack.c.b16 %v3006, %v3005
  %v3351 = vpack.c.b16 %v3008, %v3007
  %v3352 = vpack.c.b16 %v3010, %v3009
  %v3353 = vpack.c.b16 %v3012, %v3011
  %v3354 = vpack.c.b16 %v3014, %v3013
  %v3355 = vpack.c.b16 %v3016, %v3015
  %v3356 = vpack.c.b16 %v3018, %v3017
  %v3357 = vpack.c.b16 %v3020, %v3019
  %v3358 = vpack.c.b16 %v3022, %v3021
  %v3359 = vpack.c.b16 %v3024, %v3023
  %v3360 = vpack.c.b16 %v3026, %v3025
  %v3361 = vpack.c.b16 %v3028, %v3027
  %v3362 = vpack.c.b16 %v3030, %v3029
  %v3363 = vpack.c.b16 %v3032, %v3031
  %v3364 = vpack.c.b16 %v3034, %v3033
  %v3365 = vpack.c.b16 %v3036, %v3035
  %v3366 = vpack.c.b16 %v3038, %v3037
  %v3367 = vpack.c.b16 %v3040, %v3039
  %v3368 = vpack.c.b16 %v3042, %v3041
  %v3369 = vpack.c.b16 %v3044, %v3043
  %v3370 = vpack.c.b16 %v3046, %v3045
  %v3371 = vpack.c.b16 %v3048, %v3047
  %v3372 = vpack.c.b16 %v3050, %v3049
  %v3373 = vpack.c.b16 %v3052, %v3051
  %v3374 = vpack.c.b16 %v3054, %v3053
  %v3375 = vpack.c.b16 %v3056, %v3055
  %v3376 = vpack.c.b16 %v3058, %v3057
  %v3377 = vpack.c.b16 %v3060, %v3059
  %v3378 = vpack.c.b16 %v3062, %v3061
  %v3379 = vpack.c.b16 %v3064, %v3063
  %v3380 = vpack.c.b16 %v3066, %v3065
  %v3381 = vpack.c.b16 %v3068, %v3067
  %v3382 = vpack.c.b16 %v3070, %v3069
  %v3383 = vpack.c.b16 %v3072, %v3071
  %v3384 = vpack.c.b16 %v3074, %v3073
  %v3385 = vpack.c.b16 %v3076, %v3075
  %v3386 = vpack.c.b16 %v3078, %v3077
  %v3387 = vpack.c.b16 %v3080, %v3079
  %v3388 = vpack.c.b16 %v3082, %v3081
  %v3389 = vpack.c.b16 %v3084, %v3083
  %v3390 = vpack.c.b16 %v3086, %v3085
  %v3391 = vpack.c.b16 %v3088, %v3087
  %v3392 = vpack.c.b16 %v3090, %v3089
  %v3393 = vpack.c.b16 %v3092, %v3091
  %v3394 = vpack.c.b16 %v3094, %v3093
  %v3395 = vpack.c.b16 %v3096, %v3095
  %v3396 = vpack.c.b16 %v3098, %v3097
  %v3397 = vpack.c.b16 %v3100, %v3099
  %v3398 = vpack.c.b16 %v3102, %v3101
  %v3399 = vpack.c.b16 %v3104, %v3103
  %v3400 = vpack.c.b16 %v3106, %v3105
  %v3401 = vpack.c.b16 %v3108, %v3107
  %v3402 = vpack.c.b16 %v3110, %v3109
  %v3403 = vpack.c.b16 %v3112, %v3111
  %v3404 = vpack.c.b16 %v3114, %v3113
  %v3405 = vpack.c.b16 %v3116, %v3115
  %v3406 = vpack.c.b16 %v3118, %v3117
  %v3407 = vpack.c.b16 %v3120, %v3119
  %v3408 = vpack.c.b16 %v3122, %v3121
  %v3409 = vpack.c.b16 %v3124, %v3123
  %v3410 = vpack.c.b16 %v3126, %v3125
  %v3411 = vpack.c.b16 %v3128, %v3127
  %v3412 = vpack.c.b16 %v3130, %v3129
  %v3413 = vpack.c.b16 %v3132, %v3131
  %v3414 = vpack.c.b16 %v3134, %v3133
  %v3415 = vpack.c.b16 %v3136, %v3135
  %v3416 = vpack.c.b16 %v3138, %v3137
  %v3417 = vpack.c.b16 %v3140, %v3139
  %v3418 = vpack.c.b16 %v3142, %v3141
  %v3419 = vpack.c.b16 %v3144, %v3143
  %v3420 = vpack.c.b16 %v3146, %v3145
  %v3421 = vpack.c.b16 %v3148, %v3147
  %v3422 = vpack.c.b16 %v3150, %v3149
  %v3423 = vpack.c.b16 %v3152, %v3151
  %v3424 = vpack.c.b16 %v3154, %v3153
  %v3425 = vpack.c.b16 %v3156, %v3155
  %v3426 = vpack.c.b16 %v3158, %v3157
  %v3427 = vpack.c.b16 %v3160, %v3159
  %v3428 = vpack.c.b16 %v3162, %v3161
  %v3429 = vpack.c.b16 %v3164, %v3163
  %v3430 = vpack.c.b16 %v3166, %v3165
  %v3431 = vpack.c.b16 %v3168, %v3167
  %v3432 = vpack.c.b16 %v3170, %v3169
  %v3433 = vpack.c.b16 %v3172, %v3171
  %v3434 = vpack.c.b16 %v3174, %v3173
  %v3435 = vpack.c.b16 %v3176, %v3175
  %v3436 = vpack.c.b16 %v3178, %v3177
  %v3437 = vpack.c.b16 %v3180, %v3179
  %v3438 = vpack.c.b16 %v3182, %v3181
  %3695 = vmatprep.subr.bf16.mxu0 0
  %3696 = vmatpush1.bf16.msra.mxu0 %v3183
  %3697 = vmatprep.subr.bf16.mxu0 0
  %3698 = vmatpush1.bf16.msra.mxu0 %v3184
  %3699 = vmatprep.subr.bf16.mxu0 0
  %3700 = vmatpush1.bf16.msra.mxu0 %v3185
  %3701 = vmatprep.subr.bf16.mxu0 0
  %3702 = vmatpush1.bf16.msra.mxu0 %v3186
  %3703 = vmatprep.subr.bf16.mxu0 0
  %3704 = vmatpush1.bf16.msra.mxu0 %v3187
  %3705 = vmatprep.subr.bf16.mxu0 0
  %3706 = vmatpush1.bf16.msra.mxu0 %v3188
  %3707 = vmatprep.subr.bf16.mxu0 0
  %3708 = vmatpush1.bf16.msra.mxu0 %v3189
  %3709 = vmatprep.subr.bf16.mxu0 0
  %3710 = vmatpush1.bf16.msra.mxu0 %v3190
  %3711 = vmatprep.subr.bf16.mxu0 0
  %3712 = vmatpush1.bf16.msra.mxu0 %v3191
  %3713 = vmatprep.subr.bf16.mxu0 0
  %3714 = vmatpush1.bf16.msra.mxu0 %v3192
  %3715 = vmatprep.subr.bf16.mxu0 0
  %3716 = vmatpush1.bf16.msra.mxu0 %v3193
  %3717 = vmatprep.subr.bf16.mxu0 0
  %3718 = vmatpush1.bf16.msra.mxu0 %v3194
  %3719 = vmatprep.subr.bf16.mxu0 0
  %3720 = vmatpush1.bf16.msra.mxu0 %v3195
  %3721 = vmatprep.subr.bf16.mxu0 0
  %3722 = vmatpush1.bf16.msra.mxu0 %v3196
  %3723 = vmatprep.subr.bf16.mxu0 0
  %3724 = vmatpush1.bf16.msra.mxu0 %v3197
  %3725 = vmatprep.subr.bf16.mxu0 0
  %3726 = vmatpush1.bf16.msra.mxu0 %v3198
  %3727 = vmatprep.mubr.bf16.mxu0 %v1648
  %3728 = vmatmul.mubr.bf16.gmra.mrb[0].mxu0 %v1647
  %v3729 = vpop.f32.mrb[0].mxu0
  %v3730 = vadd.f32 %v802, %v3729
  %v3731 = vpop.f32.mrb[0].mxu0
  %v3732 = vpop.f32.mrb[0].mxu0
  %v3733 = vadd.f32 %v807, %v3732
  %v3734 = vpop.f32.mrb[0].mxu0
  %3735 = vmatprep.mubr.bf16.mxu0 %v1680
  %3736 = vmatmul.mubr.bf16.gmra.mrb[0].mxu0 %v1679
  %v3737 = vpop.f32.mrb[0].mxu0
  %v3738 = vadd.f32 %v812, %v3737
  %v3739 = vpop.f32.mrb[0].mxu0
  %v3740 = vpop.f32.mrb[0].mxu0
  %v3741 = vadd.f32 %v817, %v3740
  %v3742 = vpop.f32.mrb[0].mxu0
  %3743 = vmatprep.mubr.bf16.mxu0 %v1712
  %3744 = vmatmul.mubr.bf16.gmra.mrb[0].mxu0 %v1711
  %v3745 = vpop.f32.mrb[0].mxu0
  %v3746 = vadd.f32 %v822, %v3745
  %v3747 = vpop.f32.mrb[0].mxu0
  %v3748 = vpop.f32.mrb[0].mxu0
  %v3749 = vadd.f32 %v827, %v3748
  %v3750 = vpop.f32.mrb[0].mxu0
  %3751 = vmatprep.mubr.bf16.mxu0 %v1744
  %3752 = vmatmul.mubr.bf16.gmra.mrb[0].mxu0 %v1743
  %v3753 = vpop.f32.mrb[0].mxu0
  %v3754 = vadd.f32 %v832, %v3753
  %v3755 = vpop.f32.mrb[0].mxu0
  %v3756 = vpop.f32.mrb[0].mxu0
  %v3757 = vadd.f32 %v837, %v3756
  %v3758 = vpop.f32.mrb[0].mxu0
  %3759 = vmatprep.mubr.bf16.mxu0 %v1776
  %3760 = vmatmul.mubr.bf16.gmra.mrb[0].mxu0 %v1775
  %v3761 = vpop.f32.mrb[0].mxu0
  %v3762 = vadd.f32 %v842, %v3761
  %v3763 = vpop.f32.mrb[0].mxu0
  %v3764 = vpop.f32.mrb[0].mxu0
  %v3765 = vadd.f32 %v847, %v3764
  %v3766 = vpop.f32.mrb[0].mxu0
  %3767 = vmatprep.mubr.bf16.mxu0 %v1808
  %3768 = vmatmul.mubr.bf16.gmra.mrb[0].mxu0 %v1807
  %v3769 = vpop.f32.mrb[0].mxu0
  %v3770 = vadd.f32 %v852, %v3769
  %v3771 = vpop.f32.mrb[0].mxu0
  %v3772 = vpop.f32.mrb[0].mxu0
  %v3773 = vadd.f32 %v857, %v3772
  %v3774 = vpop.f32.mrb[0].mxu0
  %3775 = vmatprep.mubr.bf16.mxu0 %v1840
  %3776 = vmatmul.mubr.bf16.gmra.mrb[0].mxu0 %v1839
  %v3777 = vpop.f32.mrb[0].mxu0
  %v3778 = vadd.f32 %v862, %v3777
  %v3779 = vpop.f32.mrb[0].mxu0
  %v3780 = vpop.f32.mrb[0].mxu0
  %v3781 = vadd.f32 %v867, %v3780
  %v3782 = vpop.f32.mrb[0].mxu0
  %3783 = vmatprep.mubr.bf16.mxu0 %v1872
  %3784 = vmatmul.mubr.bf16.gmra.mrb[0].mxu0 %v1871
  %v3785 = vpop.f32.mrb[0].mxu0
  %v3786 = vadd.f32 %v872, %v3785
  %v3787 = vpop.f32.mrb[0].mxu0
  %v3788 = vpop.f32.mrb[0].mxu0
  %v3789 = vadd.f32 %v877, %v3788
  %v3790 = vpop.f32.mrb[0].mxu0
  %3791 = vdwg.mxu0
  %3792 = vmatprep.subr.bf16.mxu0 0
  %3793 = vmatpush1.bf16.msra.mxu0 %v3199
  %3794 = vmatprep.subr.bf16.mxu0 0
  %3795 = vmatpush1.bf16.msra.mxu0 %v3200
  %3796 = vmatprep.subr.bf16.mxu0 0
  %3797 = vmatpush1.bf16.msra.mxu0 %v3201
  %3798 = vmatprep.subr.bf16.mxu0 0
  %3799 = vmatpush1.bf16.msra.mxu0 %v3202
  %3800 = vmatprep.subr.bf16.mxu0 0
  %3801 = vmatpush1.bf16.msra.mxu0 %v3203
  %3802 = vmatprep.subr.bf16.mxu0 0
  %3803 = vmatpush1.bf16.msra.mxu0 %v3204
  %3804 = vmatprep.subr.bf16.mxu0 0
  %3805 = vmatpush1.bf16.msra.mxu0 %v3205
  %3806 = vmatprep.subr.bf16.mxu0 0
  %3807 = vmatpush1.bf16.msra.mxu0 %v3206
  %3808 = vmatprep.subr.bf16.mxu0 0
  %3809 = vmatpush1.bf16.msra.mxu0 %v3207
  %3810 = vmatprep.subr.bf16.mxu0 0
  %3811 = vmatpush1.bf16.msra.mxu0 %v3208
  %3812 = vmatprep.subr.bf16.mxu0 0
  %3813 = vmatpush1.bf16.msra.mxu0 %v3209
  %3814 = vmatprep.subr.bf16.mxu0 0
  %3815 = vmatpush1.bf16.msra.mxu0 %v3210
  %3816 = vmatprep.subr.bf16.mxu0 0
  %3817 = vmatpush1.bf16.msra.mxu0 %v3211
  %3818 = vmatprep.subr.bf16.mxu0 0
  %3819 = vmatpush1.bf16.msra.mxu0 %v3212
  %3820 = vmatprep.subr.bf16.mxu0 0
  %3821 = vmatpush1.bf16.msra.mxu0 %v3213
  %3822 = vmatprep.subr.bf16.mxu0 0
  %3823 = vmatpush1.bf16.msra.mxu0 %v3214
  %3824 = vmatprep.mubr.bf16.mxu0 %v1650
  %3825 = vmatmul.mubr.bf16.gmra.mrb[0].mxu0 %v1649
  %v3826 = vpop.f32.mrb[0].mxu0
  %v3827 = vadd.f32 %v3730, %v3826
  %v3828 = vpop.f32.mrb[0].mxu0
  %v3829 = vpop.f32.mrb[0].mxu0
  %v3830 = vadd.f32 %v3733, %v3829
  %v3831 = vpop.f32.mrb[0].mxu0
  %3832 = vmatprep.mubr.bf16.mxu0 %v1682
  %3833 = vmatmul.mubr.bf16.gmra.mrb[0].mxu0 %v1681
  %v3834 = vpop.f32.mrb[0].mxu0
  %v3835 = vadd.f32 %v3738, %v3834
  %v3836 = vpop.f32.mrb[0].mxu0
  %v3837 = vpop.f32.mrb[0].mxu0
  %v3838 = vadd.f32 %v3741, %v3837
  %v3839 = vpop.f32.mrb[0].mxu0
  %3840 = vmatprep.mubr.bf16.mxu0 %v1714
  %3841 = vmatmul.mubr.bf16.gmra.mrb[0].mxu0 %v1713
  %v3842 = vpop.f32.mrb[0].mxu0
  %v3843 = vadd.f32 %v3746, %v3842
  %v3844 = vpop.f32.mrb[0].mxu0
  %v3845 = vpop.f32.mrb[0].mxu0
  %v3846 = vadd.f32 %v3749, %v3845
  %v3847 = vpop.f32.mrb[0].mxu0
  %3848 = vmatprep.mubr.bf16.mxu0 %v1746
  %3849 = vmatmul.mubr.bf16.gmra.mrb[0].mxu0 %v1745
  %v3850 = vpop.f32.mrb[0].mxu0
  %v3851 = vadd.f32 %v3754, %v3850
  %v3852 = vpop.f32.mrb[0].mxu0
  %v3853 = vpop.f32.mrb[0].mxu0
  %v3854 = vadd.f32 %v3757, %v3853
  %v3855 = vpop.f32.mrb[0].mxu0
  %3856 = vmatprep.mubr.bf16.mxu0 %v1778
  %3857 = vmatmul.mubr.bf16.gmra.mrb[0].mxu0 %v1777
  %v3858 = vpop.f32.mrb[0].mxu0
  %v3859 = vadd.f32 %v3762, %v3858
  %v3860 = vpop.f32.mrb[0].mxu0
  %v3861 = vpop.f32.mrb[0].mxu0
  %v3862 = vadd.f32 %v3765, %v3861
  %v3863 = vpop.f32.mrb[0].mxu0
  %3864 = vmatprep.mubr.bf16.mxu0 %v1810
  %3865 = vmatmul.mubr.bf16.gmra.mrb[0].mxu0 %v1809
  %v3866 = vpop.f32.mrb[0].mxu0
  %v3867 = vadd.f32 %v3770, %v3866
  %v3868 = vpop.f32.mrb[0].mxu0
  %v3869 = vpop.f32.mrb[0].mxu0
  %v3870 = vadd.f32 %v3773, %v3869
  %v3871 = vpop.f32.mrb[0].mxu0
  %3872 = vmatprep.mubr.bf16.mxu0 %v1842
  %3873 = vmatmul.mubr.bf16.gmra.mrb[0].mxu0 %v1841
  %v3874 = vpop.f32.mrb[0].mxu0
  %v3875 = vadd.f32 %v3778, %v3874
  %v3876 = vpop.f32.mrb[0].mxu0
  %v3877 = vpop.f32.mrb[0].mxu0
  %v3878 = vadd.f32 %v3781, %v3877
  %v3879 = vpop.f32.mrb[0].mxu0
  %3880 = vmatprep.mubr.bf16.mxu0 %v1874
  %3881 = vmatmul.mubr.bf16.gmra.mrb[0].mxu0 %v1873
  %v3882 = vpop.f32.mrb[0].mxu0
  %v3883 = vadd.f32 %v3786, %v3882
  %v3884 = vpop.f32.mrb[0].mxu0
  %v3885 = vpop.f32.mrb[0].mxu0
  %v3886 = vadd.f32 %v3789, %v3885
  %v3887 = vpop.f32.mrb[0].mxu0
  %3888 = vdwg.mxu0
  %3889 = vmatprep.subr.bf16.mxu0 0
  %3890 = vmatpush1.bf16.msra.mxu0 %v3215
  %3891 = vmatprep.subr.bf16.mxu0 0
  %3892 = vmatpush1.bf16.msra.mxu0 %v3216
  %3893 = vmatprep.subr.bf16.mxu0 0
  %3894 = vmatpush1.bf16.msra.mxu0 %v3217
  %3895 = vmatprep.subr.bf16.mxu0 0
  %3896 = vmatpush1.bf16.msra.mxu0 %v3218
  %3897 = vmatprep.subr.bf16.mxu0 0
  %3898 = vmatpush1.bf16.msra.mxu0 %v3219
  %3899 = vmatprep.subr.bf16.mxu0 0
  %3900 = vmatpush1.bf16.msra.mxu0 %v3220
  %3901 = vmatprep.subr.bf16.mxu0 0
  %3902 = vmatpush1.bf16.msra.mxu0 %v3221
  %3903 = vmatprep.subr.bf16.mxu0 0
  %3904 = vmatpush1.bf16.msra.mxu0 %v3222
  %3905 = vmatprep.subr.bf16.mxu0 0
  %3906 = vmatpush1.bf16.msra.mxu0 %v3223
  %3907 = vmatprep.subr.bf16.mxu0 0
  %3908 = vmatpush1.bf16.msra.mxu0 %v3224
  %3909 = vmatprep.subr.bf16.mxu0 0
  %3910 = vmatpush1.bf16.msra.mxu0 %v3225
  %3911 = vmatprep.subr.bf16.mxu0 0
  %3912 = vmatpush1.bf16.msra.mxu0 %v3226
  %3913 = vmatprep.subr.bf16.mxu0 0
  %3914 = vmatpush1.bf16.msra.mxu0 %v3227
  %3915 = vmatprep.subr.bf16.mxu0 0
  %3916 = vmatpush1.bf16.msra.mxu0 %v3228
  %3917 = vmatprep.subr.bf16.mxu0 0
  %3918 = vmatpush1.bf16.msra.mxu0 %v3229
  %3919 = vmatprep.subr.bf16.mxu0 0
  %3920 = vmatpush1.bf16.msra.mxu0 %v3230
  %3921 = vmatprep.mubr.bf16.mxu0 %v1652
  %3922 = vmatmul.mubr.bf16.gmra.mrb[0].mxu0 %v1651
  %v3923 = vpop.f32.mrb[0].mxu0
  %v3924 = vadd.f32 %v3827, %v3923
  %v3925 = vpop.f32.mrb[0].mxu0
  %v3926 = vpop.f32.mrb[0].mxu0
  %v3927 = vadd.f32 %v3830, %v3926
  %v3928 = vpop.f32.mrb[0].mxu0
  %3929 = vmatprep.mubr.bf16.mxu0 %v1684
  %3930 = vmatmul.mubr.bf16.gmra.mrb[0].mxu0 %v1683
  %v3931 = vpop.f32.mrb[0].mxu0
  %v3932 = vadd.f32 %v3835, %v3931
  %v3933 = vpop.f32.mrb[0].mxu0
  %v3934 = vpop.f32.mrb[0].mxu0
  %v3935 = vadd.f32 %v3838, %v3934
  %v3936 = vpop.f32.mrb[0].mxu0
  %3937 = vmatprep.mubr.bf16.mxu0 %v1716
  %3938 = vmatmul.mubr.bf16.gmra.mrb[0].mxu0 %v1715
  %v3939 = vpop.f32.mrb[0].mxu0
  %v3940 = vadd.f32 %v3843, %v3939
  %v3941 = vpop.f32.mrb[0].mxu0
  %v3942 = vpop.f32.mrb[0].mxu0
  %v3943 = vadd.f32 %v3846, %v3942
  %v3944 = vpop.f32.mrb[0].mxu0
  %3945 = vmatprep.mubr.bf16.mxu0 %v1748
  %3946 = vmatmul.mubr.bf16.gmra.mrb[0].mxu0 %v1747
  %v3947 = vpop.f32.mrb[0].mxu0
  %v3948 = vadd.f32 %v3851, %v3947
  %v3949 = vpop.f32.mrb[0].mxu0
  %v3950 = vpop.f32.mrb[0].mxu0
  %v3951 = vadd.f32 %v3854, %v3950
  %v3952 = vpop.f32.mrb[0].mxu0
  %3953 = vmatprep.mubr.bf16.mxu0 %v1780
  %3954 = vmatmul.mubr.bf16.gmra.mrb[0].mxu0 %v1779
  %v3955 = vpop.f32.mrb[0].mxu0
  %v3956 = vadd.f32 %v3859, %v3955
  %v3957 = vpop.f32.mrb[0].mxu0
  %v3958 = vpop.f32.mrb[0].mxu0
  %v3959 = vadd.f32 %v3862, %v3958
  %v3960 = vpop.f32.mrb[0].mxu0
  %3961 = vmatprep.mubr.bf16.mxu0 %v1812
  %3962 = vmatmul.mubr.bf16.gmra.mrb[0].mxu0 %v1811
  %v3963 = vpop.f32.mrb[0].mxu0
  %v3964 = vadd.f32 %v3867, %v3963
  %v3965 = vpop.f32.mrb[0].mxu0
  %v3966 = vpop.f32.mrb[0].mxu0
  %v3967 = vadd.f32 %v3870, %v3966
  %v3968 = vpop.f32.mrb[0].mxu0
  %3969 = vmatprep.mubr.bf16.mxu0 %v1844
  %3970 = vmatmul.mubr.bf16.gmra.mrb[0].mxu0 %v1843
  %v3971 = vpop.f32.mrb[0].mxu0
  %v3972 = vadd.f32 %v3875, %v3971
  %v3973 = vpop.f32.mrb[0].mxu0
  %v3974 = vpop.f32.mrb[0].mxu0
  %v3975 = vadd.f32 %v3878, %v3974
  %v3976 = vpop.f32.mrb[0].mxu0
  %3977 = vmatprep.mubr.bf16.mxu0 %v1876
  %3978 = vmatmul.mubr.bf16.gmra.mrb[0].mxu0 %v1875
  %v3979 = vpop.f32.mrb[0].mxu0
  %v3980 = vadd.f32 %v3883, %v3979
  %v3981 = vpop.f32.mrb[0].mxu0
  %v3982 = vpop.f32.mrb[0].mxu0
  %v3983 = vadd.f32 %v3886, %v3982
  %v3984 = vpop.f32.mrb[0].mxu0
  %3985 = vdwg.mxu0
  %3986 = vmatprep.subr.bf16.mxu0 0
  %3987 = vmatpush1.bf16.msra.mxu0 %v3231
  %3988 = vmatprep.subr.bf16.mxu0 0
  %3989 = vmatpush1.bf16.msra.mxu0 %v3232
  %3990 = vmatprep.subr.bf16.mxu0 0
  %3991 = vmatpush1.bf16.msra.mxu0 %v3233
  %3992 = vmatprep.subr.bf16.mxu0 0
  %3993 = vmatpush1.bf16.msra.mxu0 %v3234
  %3994 = vmatprep.subr.bf16.mxu0 0
  %3995 = vmatpush1.bf16.msra.mxu0 %v3235
  %3996 = vmatprep.subr.bf16.mxu0 0
  %3997 = vmatpush1.bf16.msra.mxu0 %v3236
  %3998 = vmatprep.subr.bf16.mxu0 0
  %3999 = vmatpush1.bf16.msra.mxu0 %v3237
  %4000 = vmatprep.subr.bf16.mxu0 0
  %4001 = vmatpush1.bf16.msra.mxu0 %v3238
  %4002 = vmatprep.subr.bf16.mxu0 0
  %4003 = vmatpush1.bf16.msra.mxu0 %v3239
  %4004 = vmatprep.subr.bf16.mxu0 0
  %4005 = vmatpush1.bf16.msra.mxu0 %v3240
  %4006 = vmatprep.subr.bf16.mxu0 0
  %4007 = vmatpush1.bf16.msra.mxu0 %v3241
  %4008 = vmatprep.subr.bf16.mxu0 0
  %4009 = vmatpush1.bf16.msra.mxu0 %v3242
  %4010 = vmatprep.subr.bf16.mxu0 0
  %4011 = vmatpush1.bf16.msra.mxu0 %v3243
  %4012 = vmatprep.subr.bf16.mxu0 0
  %4013 = vmatpush1.bf16.msra.mxu0 %v3244
  %4014 = vmatprep.subr.bf16.mxu0 0
  %4015 = vmatpush1.bf16.msra.mxu0 %v3245
  %4016 = vmatprep.subr.bf16.mxu0 0
  %4017 = vmatpush1.bf16.msra.mxu0 %v3246
  %4018 = vmatprep.mubr.bf16.mxu0 %v1654
  %4019 = vmatmul.mubr.bf16.gmra.mrb[0].mxu0 %v1653
  %v4020 = vpop.f32.mrb[0].mxu0
  %v4021 = vadd.f32 %v3924, %v4020
  %v4022 = vpop.f32.mrb[0].mxu0
  %v4023 = vpop.f32.mrb[0].mxu0
  %v4024 = vadd.f32 %v3927, %v4023
  %v4025 = vpop.f32.mrb[0].mxu0
  %4026 = vmatprep.mubr.bf16.mxu0 %v1686
  %4027 = vmatmul.mubr.bf16.gmra.mrb[0].mxu0 %v1685
  %v4028 = vpop.f32.mrb[0].mxu0
  %v4029 = vadd.f32 %v3932, %v4028
  %v4030 = vpop.f32.mrb[0].mxu0
  %v4031 = vpop.f32.mrb[0].mxu0
  %v4032 = vadd.f32 %v3935, %v4031
  %v4033 = vpop.f32.mrb[0].mxu0
  %4034 = vmatprep.mubr.bf16.mxu0 %v1718
  %4035 = vmatmul.mubr.bf16.gmra.mrb[0].mxu0 %v1717
  %v4036 = vpop.f32.mrb[0].mxu0
  %v4037 = vadd.f32 %v3940, %v4036
  %v4038 = vpop.f32.mrb[0].mxu0
  %v4039 = vpop.f32.mrb[0].mxu0
  %v4040 = vadd.f32 %v3943, %v4039
  %v4041 = vpop.f32.mrb[0].mxu0
  %4042 = vmatprep.mubr.bf16.mxu0 %v1750
  %4043 = vmatmul.mubr.bf16.gmra.mrb[0].mxu0 %v1749
  %v4044 = vpop.f32.mrb[0].mxu0
  %v4045 = vadd.f32 %v3948, %v4044
  %v4046 = vpop.f32.mrb[0].mxu0
  %v4047 = vpop.f32.mrb[0].mxu0
  %v4048 = vadd.f32 %v3951, %v4047
  %v4049 = vpop.f32.mrb[0].mxu0
  %4050 = vmatprep.mubr.bf16.mxu0 %v1782
  %4051 = vmatmul.mubr.bf16.gmra.mrb[0].mxu0 %v1781
  %v4052 = vpop.f32.mrb[0].mxu0
  %v4053 = vadd.f32 %v3956, %v4052
  %v4054 = vpop.f32.mrb[0].mxu0
  %v4055 = vpop.f32.mrb[0].mxu0
  %v4056 = vadd.f32 %v3959, %v4055
  %v4057 = vpop.f32.mrb[0].mxu0
  %4058 = vmatprep.mubr.bf16.mxu0 %v1814
  %4059 = vmatmul.mubr.bf16.gmra.mrb[0].mxu0 %v1813
  %v4060 = vpop.f32.mrb[0].mxu0
  %v4061 = vadd.f32 %v3964, %v4060
  %v4062 = vpop.f32.mrb[0].mxu0
  %v4063 = vpop.f32.mrb[0].mxu0
  %v4064 = vadd.f32 %v3967, %v4063
  %v4065 = vpop.f32.mrb[0].mxu0
  %4066 = vmatprep.mubr.bf16.mxu0 %v1846
  %4067 = vmatmul.mubr.bf16.gmra.mrb[0].mxu0 %v1845
  %v4068 = vpop.f32.mrb[0].mxu0
  %v4069 = vadd.f32 %v3972, %v4068
  %v4070 = vpop.f32.mrb[0].mxu0
  %v4071 = vpop.f32.mrb[0].mxu0
  %v4072 = vadd.f32 %v3975, %v4071
  %v4073 = vpop.f32.mrb[0].mxu0
  %4074 = vmatprep.mubr.bf16.mxu0 %v1878
  %4075 = vmatmul.mubr.bf16.gmra.mrb[0].mxu0 %v1877
  %v4076 = vpop.f32.mrb[0].mxu0
  %v4077 = vadd.f32 %v3980, %v4076
  %v4078 = vpop.f32.mrb[0].mxu0
  %v4079 = vpop.f32.mrb[0].mxu0
  %v4080 = vadd.f32 %v3983, %v4079
  %v4081 = vpop.f32.mrb[0].mxu0
  %4082 = vdwg.mxu0
  %4083 = vmatprep.subr.bf16.mxu0 0
  %4084 = vmatpush1.bf16.msra.mxu0 %v3247
  %4085 = vmatprep.subr.bf16.mxu0 0
  %4086 = vmatpush1.bf16.msra.mxu0 %v3248
  %4087 = vmatprep.subr.bf16.mxu0 0
  %4088 = vmatpush1.bf16.msra.mxu0 %v3249
  %4089 = vmatprep.subr.bf16.mxu0 0
  %4090 = vmatpush1.bf16.msra.mxu0 %v3250
  %4091 = vmatprep.subr.bf16.mxu0 0
  %4092 = vmatpush1.bf16.msra.mxu0 %v3251
  %4093 = vmatprep.subr.bf16.mxu0 0
  %4094 = vmatpush1.bf16.msra.mxu0 %v3252
  %4095 = vmatprep.subr.bf16.mxu0 0
  %4096 = vmatpush1.bf16.msra.mxu0 %v3253
  %4097 = vmatprep.subr.bf16.mxu0 0
  %4098 = vmatpush1.bf16.msra.mxu0 %v3254
  %4099 = vmatprep.subr.bf16.mxu0 0
  %4100 = vmatpush1.bf16.msra.mxu0 %v3255
  %4101 = vmatprep.subr.bf16.mxu0 0
  %4102 = vmatpush1.bf16.msra.mxu0 %v3256
  %4103 = vmatprep.subr.bf16.mxu0 0
  %4104 = vmatpush1.bf16.msra.mxu0 %v3257
  %4105 = vmatprep.subr.bf16.mxu0 0
  %4106 = vmatpush1.bf16.msra.mxu0 %v3258
  %4107 = vmatprep.subr.bf16.mxu0 0
  %4108 = vmatpush1.bf16.msra.mxu0 %v3259
  %4109 = vmatprep.subr.bf16.mxu0 0
  %4110 = vmatpush1.bf16.msra.mxu0 %v3260
  %4111 = vmatprep.subr.bf16.mxu0 0
  %4112 = vmatpush1.bf16.msra.mxu0 %v3261
  %4113 = vmatprep.subr.bf16.mxu0 0
  %4114 = vmatpush1.bf16.msra.mxu0 %v3262
  %4115 = vmatprep.mubr.bf16.mxu0 %v1656
  %4116 = vmatmul.mubr.bf16.gmra.mrb[0].mxu0 %v1655
  %v4117 = vpop.f32.mrb[0].mxu0
  %v4118 = vadd.f32 %v4021, %v4117
  %v4119 = vpop.f32.mrb[0].mxu0
  %v4120 = vpop.f32.mrb[0].mxu0
  %v4121 = vadd.f32 %v4024, %v4120
  %v4122 = vpop.f32.mrb[0].mxu0
  %4123 = vmatprep.mubr.bf16.mxu0 %v1688
  %4124 = vmatmul.mubr.bf16.gmra.mrb[0].mxu0 %v1687
  %v4125 = vpop.f32.mrb[0].mxu0
  %v4126 = vadd.f32 %v4029, %v4125
  %v4127 = vpop.f32.mrb[0].mxu0
  %v4128 = vpop.f32.mrb[0].mxu0
  %v4129 = vadd.f32 %v4032, %v4128
  %v4130 = vpop.f32.mrb[0].mxu0
  %4131 = vmatprep.mubr.bf16.mxu0 %v1720
  %4132 = vmatmul.mubr.bf16.gmra.mrb[0].mxu0 %v1719
  %v4133 = vpop.f32.mrb[0].mxu0
  %v4134 = vadd.f32 %v4037, %v4133
  %v4135 = vpop.f32.mrb[0].mxu0
  %v4136 = vpop.f32.mrb[0].mxu0
  %v4137 = vadd.f32 %v4040, %v4136
  %v4138 = vpop.f32.mrb[0].mxu0
  %4139 = vmatprep.mubr.bf16.mxu0 %v1752
  %4140 = vmatmul.mubr.bf16.gmra.mrb[0].mxu0 %v1751
  %v4141 = vpop.f32.mrb[0].mxu0
  %v4142 = vadd.f32 %v4045, %v4141
  %v4143 = vpop.f32.mrb[0].mxu0
  %v4144 = vpop.f32.mrb[0].mxu0
  %v4145 = vadd.f32 %v4048, %v4144
  %v4146 = vpop.f32.mrb[0].mxu0
  %4147 = vmatprep.mubr.bf16.mxu0 %v1784
  %4148 = vmatmul.mubr.bf16.gmra.mrb[0].mxu0 %v1783
  %v4149 = vpop.f32.mrb[0].mxu0
  %v4150 = vadd.f32 %v4053, %v4149
  %v4151 = vpop.f32.mrb[0].mxu0
  %v4152 = vpop.f32.mrb[0].mxu0
  %v4153 = vadd.f32 %v4056, %v4152
  %v4154 = vpop.f32.mrb[0].mxu0
  %4155 = vmatprep.mubr.bf16.mxu0 %v1816
  %4156 = vmatmul.mubr.bf16.gmra.mrb[0].mxu0 %v1815
  %v4157 = vpop.f32.mrb[0].mxu0
  %v4158 = vadd.f32 %v4061, %v4157
  %v4159 = vpop.f32.mrb[0].mxu0
  %v4160 = vpop.f32.mrb[0].mxu0
  %v4161 = vadd.f32 %v4064, %v4160
  %v4162 = vpop.f32.mrb[0].mxu0
  %4163 = vmatprep.mubr.bf16.mxu0 %v1848
  %4164 = vmatmul.mubr.bf16.gmra.mrb[0].mxu0 %v1847
  %v4165 = vpop.f32.mrb[0].mxu0
  %v4166 = vadd.f32 %v4069, %v4165
  %v4167 = vpop.f32.mrb[0].mxu0
  %v4168 = vpop.f32.mrb[0].mxu0
  %v4169 = vadd.f32 %v4072, %v4168
  %v4170 = vpop.f32.mrb[0].mxu0
  %4171 = vmatprep.mubr.bf16.mxu0 %v1880
  %4172 = vmatmul.mubr.bf16.gmra.mrb[0].mxu0 %v1879
  %v4173 = vpop.f32.mrb[0].mxu0
  %v4174 = vadd.f32 %v4077, %v4173
  %v4175 = vpop.f32.mrb[0].mxu0
  %v4176 = vpop.f32.mrb[0].mxu0
  %v4177 = vadd.f32 %v4080, %v4176
  %v4178 = vpop.f32.mrb[0].mxu0
  %4179 = vdwg.mxu0
  %4180 = vmatprep.subr.bf16.mxu0 0
  %4181 = vmatpush1.bf16.msra.mxu0 %v3263
  %4182 = vmatprep.subr.bf16.mxu0 0
  %4183 = vmatpush1.bf16.msra.mxu0 %v3264
  %4184 = vmatprep.subr.bf16.mxu0 0
  %4185 = vmatpush1.bf16.msra.mxu0 %v3265
  %4186 = vmatprep.subr.bf16.mxu0 0
  %4187 = vmatpush1.bf16.msra.mxu0 %v3266
  %4188 = vmatprep.subr.bf16.mxu0 0
  %4189 = vmatpush1.bf16.msra.mxu0 %v3267
  %4190 = vmatprep.subr.bf16.mxu0 0
  %4191 = vmatpush1.bf16.msra.mxu0 %v3268
  %4192 = vmatprep.subr.bf16.mxu0 0
  %4193 = vmatpush1.bf16.msra.mxu0 %v3269
  %4194 = vmatprep.subr.bf16.mxu0 0
  %4195 = vmatpush1.bf16.msra.mxu0 %v3270
  %4196 = vmatprep.subr.bf16.mxu0 0
  %4197 = vmatpush1.bf16.msra.mxu0 %v3271
  %4198 = vmatprep.subr.bf16.mxu0 0
  %4199 = vmatpush1.bf16.msra.mxu0 %v3272
  %4200 = vmatprep.subr.bf16.mxu0 0
  %4201 = vmatpush1.bf16.msra.mxu0 %v3273
  %4202 = vmatprep.subr.bf16.mxu0 0
  %4203 = vmatpush1.bf16.msra.mxu0 %v3274
  %4204 = vmatprep.subr.bf16.mxu0 0
  %4205 = vmatpush1.bf16.msra.mxu0 %v3275
  %4206 = vmatprep.subr.bf16.mxu0 0
  %4207 = vmatpush1.bf16.msra.mxu0 %v3276
  %4208 = vmatprep.subr.bf16.mxu0 0
  %4209 = vmatpush1.bf16.msra.mxu0 %v3277
  %4210 = vmatprep.subr.bf16.mxu0 0
  %4211 = vmatpush1.bf16.msra.mxu0 %v3278
  %4212 = vmatprep.mubr.bf16.mxu0 %v1658
  %4213 = vmatmul.mubr.bf16.gmra.mrb[0].mxu0 %v1657
  %v4214 = vpop.f32.mrb[0].mxu0
  %v4215 = vadd.f32 %v4118, %v4214
  %v4216 = vpop.f32.mrb[0].mxu0
  %v4217 = vpop.f32.mrb[0].mxu0
  %v4218 = vadd.f32 %v4121, %v4217
  %v4219 = vpop.f32.mrb[0].mxu0
  %4220 = vmatprep.mubr.bf16.mxu0 %v1690
  %4221 = vmatmul.mubr.bf16.gmra.mrb[0].mxu0 %v1689
  %v4222 = vpop.f32.mrb[0].mxu0
  %v4223 = vadd.f32 %v4126, %v4222
  %v4224 = vpop.f32.mrb[0].mxu0
  %v4225 = vpop.f32.mrb[0].mxu0
  %v4226 = vadd.f32 %v4129, %v4225
  %v4227 = vpop.f32.mrb[0].mxu0
  %4228 = vmatprep.mubr.bf16.mxu0 %v1722
  %4229 = vmatmul.mubr.bf16.gmra.mrb[0].mxu0 %v1721
  %v4230 = vpop.f32.mrb[0].mxu0
  %v4231 = vadd.f32 %v4134, %v4230
  %v4232 = vpop.f32.mrb[0].mxu0
  %v4233 = vpop.f32.mrb[0].mxu0
  %v4234 = vadd.f32 %v4137, %v4233
  %v4235 = vpop.f32.mrb[0].mxu0
  %4236 = vmatprep.mubr.bf16.mxu0 %v1754
  %4237 = vmatmul.mubr.bf16.gmra.mrb[0].mxu0 %v1753
  %v4238 = vpop.f32.mrb[0].mxu0
  %v4239 = vadd.f32 %v4142, %v4238
  %v4240 = vpop.f32.mrb[0].mxu0
  %v4241 = vpop.f32.mrb[0].mxu0
  %v4242 = vadd.f32 %v4145, %v4241
  %v4243 = vpop.f32.mrb[0].mxu0
  %4244 = vmatprep.mubr.bf16.mxu0 %v1786
  %4245 = vmatmul.mubr.bf16.gmra.mrb[0].mxu0 %v1785
  %v4246 = vpop.f32.mrb[0].mxu0
  %v4247 = vadd.f32 %v4150, %v4246
  %v4248 = vpop.f32.mrb[0].mxu0
  %v4249 = vpop.f32.mrb[0].mxu0
  %v4250 = vadd.f32 %v4153, %v4249
  %v4251 = vpop.f32.mrb[0].mxu0
  %4252 = vmatprep.mubr.bf16.mxu0 %v1818
  %4253 = vmatmul.mubr.bf16.gmra.mrb[0].mxu0 %v1817
  %v4254 = vpop.f32.mrb[0].mxu0
  %v4255 = vadd.f32 %v4158, %v4254
  %v4256 = vpop.f32.mrb[0].mxu0
  %v4257 = vpop.f32.mrb[0].mxu0
  %v4258 = vadd.f32 %v4161, %v4257
  %v4259 = vpop.f32.mrb[0].mxu0
  %4260 = vmatprep.mubr.bf16.mxu0 %v1850
  %4261 = vmatmul.mubr.bf16.gmra.mrb[0].mxu0 %v1849
  %v4262 = vpop.f32.mrb[0].mxu0
  %v4263 = vadd.f32 %v4166, %v4262
  %v4264 = vpop.f32.mrb[0].mxu0
  %v4265 = vpop.f32.mrb[0].mxu0
  %v4266 = vadd.f32 %v4169, %v4265
  %v4267 = vpop.f32.mrb[0].mxu0
  %4268 = vmatprep.mubr.bf16.mxu0 %v1882
  %4269 = vmatmul.mubr.bf16.gmra.mrb[0].mxu0 %v1881
  %v4270 = vpop.f32.mrb[0].mxu0
  %v4271 = vadd.f32 %v4174, %v4270
  %v4272 = vpop.f32.mrb[0].mxu0
  %v4273 = vpop.f32.mrb[0].mxu0
  %v4274 = vadd.f32 %v4177, %v4273
  %v4275 = vpop.f32.mrb[0].mxu0
  %4276 = vdwg.mxu0
  %4277 = vmatprep.subr.bf16.mxu0 0
  %4278 = vmatpush1.bf16.msra.mxu0 %v3279
  %4279 = vmatprep.subr.bf16.mxu0 0
  %4280 = vmatpush1.bf16.msra.mxu0 %v3280
  %4281 = vmatprep.subr.bf16.mxu0 0
  %4282 = vmatpush1.bf16.msra.mxu0 %v3281
  %4283 = vmatprep.subr.bf16.mxu0 0
  %4284 = vmatpush1.bf16.msra.mxu0 %v3282
  %4285 = vmatprep.subr.bf16.mxu0 0
  %4286 = vmatpush1.bf16.msra.mxu0 %v3283
  %4287 = vmatprep.subr.bf16.mxu0 0
  %4288 = vmatpush1.bf16.msra.mxu0 %v3284
  %4289 = vmatprep.subr.bf16.mxu0 0
  %4290 = vmatpush1.bf16.msra.mxu0 %v3285
  %4291 = vmatprep.subr.bf16.mxu0 0
  %4292 = vmatpush1.bf16.msra.mxu0 %v3286
  %4293 = vmatprep.subr.bf16.mxu0 0
  %4294 = vmatpush1.bf16.msra.mxu0 %v3287
  %4295 = vmatprep.subr.bf16.mxu0 0
  %4296 = vmatpush1.bf16.msra.mxu0 %v3288
  %4297 = vmatprep.subr.bf16.mxu0 0
  %4298 = vmatpush1.bf16.msra.mxu0 %v3289
  %4299 = vmatprep.subr.bf16.mxu0 0
  %4300 = vmatpush1.bf16.msra.mxu0 %v3290
  %4301 = vmatprep.subr.bf16.mxu0 0
  %4302 = vmatpush1.bf16.msra.mxu0 %v3291
  %4303 = vmatprep.subr.bf16.mxu0 0
  %4304 = vmatpush1.bf16.msra.mxu0 %v3292
  %4305 = vmatprep.subr.bf16.mxu0 0
  %4306 = vmatpush1.bf16.msra.mxu0 %v3293
  %4307 = vmatprep.subr.bf16.mxu0 0
  %4308 = vmatpush1.bf16.msra.mxu0 %v3294
  %4309 = vmatprep.mubr.bf16.mxu0 %v1660
  %4310 = vmatmul.mubr.bf16.gmra.mrb[0].mxu0 %v1659
  %v4311 = vpop.f32.mrb[0].mxu0
  %v4312 = vadd.f32 %v4215, %v4311
  %v4313 = vpop.f32.mrb[0].mxu0
  %v4314 = vpop.f32.mrb[0].mxu0
  %v4315 = vadd.f32 %v4218, %v4314
  %v4316 = vpop.f32.mrb[0].mxu0
  %4317 = vmatprep.mubr.bf16.mxu0 %v1692
  %4318 = vmatmul.mubr.bf16.gmra.mrb[0].mxu0 %v1691
  %v4319 = vpop.f32.mrb[0].mxu0
  %v4320 = vadd.f32 %v4223, %v4319
  %v4321 = vpop.f32.mrb[0].mxu0
  %v4322 = vpop.f32.mrb[0].mxu0
  %v4323 = vadd.f32 %v4226, %v4322
  %v4324 = vpop.f32.mrb[0].mxu0
  %4325 = vmatprep.mubr.bf16.mxu0 %v1724
  %4326 = vmatmul.mubr.bf16.gmra.mrb[0].mxu0 %v1723
  %v4327 = vpop.f32.mrb[0].mxu0
  %v4328 = vadd.f32 %v4231, %v4327
  %v4329 = vpop.f32.mrb[0].mxu0
  %v4330 = vpop.f32.mrb[0].mxu0
  %v4331 = vadd.f32 %v4234, %v4330
  %v4332 = vpop.f32.mrb[0].mxu0
  %4333 = vmatprep.mubr.bf16.mxu0 %v1756
  %4334 = vmatmul.mubr.bf16.gmra.mrb[0].mxu0 %v1755
  %v4335 = vpop.f32.mrb[0].mxu0
  %v4336 = vadd.f32 %v4239, %v4335
  %v4337 = vpop.f32.mrb[0].mxu0
  %v4338 = vpop.f32.mrb[0].mxu0
  %v4339 = vadd.f32 %v4242, %v4338
  %v4340 = vpop.f32.mrb[0].mxu0
  %4341 = vmatprep.mubr.bf16.mxu0 %v1788
  %4342 = vmatmul.mubr.bf16.gmra.mrb[0].mxu0 %v1787
  %v4343 = vpop.f32.mrb[0].mxu0
  %v4344 = vadd.f32 %v4247, %v4343
  %v4345 = vpop.f32.mrb[0].mxu0
  %v4346 = vpop.f32.mrb[0].mxu0
  %v4347 = vadd.f32 %v4250, %v4346
  %v4348 = vpop.f32.mrb[0].mxu0
  %4349 = vmatprep.mubr.bf16.mxu0 %v1820
  %4350 = vmatmul.mubr.bf16.gmra.mrb[0].mxu0 %v1819
  %v4351 = vpop.f32.mrb[0].mxu0
  %v4352 = vadd.f32 %v4255, %v4351
  %v4353 = vpop.f32.mrb[0].mxu0
  %v4354 = vpop.f32.mrb[0].mxu0
  %v4355 = vadd.f32 %v4258, %v4354
  %v4356 = vpop.f32.mrb[0].mxu0
  %4357 = vmatprep.mubr.bf16.mxu0 %v1852
  %4358 = vmatmul.mubr.bf16.gmra.mrb[0].mxu0 %v1851
  %v4359 = vpop.f32.mrb[0].mxu0
  %v4360 = vadd.f32 %v4263, %v4359
  %v4361 = vpop.f32.mrb[0].mxu0
  %v4362 = vpop.f32.mrb[0].mxu0
  %v4363 = vadd.f32 %v4266, %v4362
  %v4364 = vpop.f32.mrb[0].mxu0
  %4365 = vmatprep.mubr.bf16.mxu0 %v1884
  %4366 = vmatmul.mubr.bf16.gmra.mrb[0].mxu0 %v1883
  %v4367 = vpop.f32.mrb[0].mxu0
  %v4368 = vadd.f32 %v4271, %v4367
  %v4369 = vpop.f32.mrb[0].mxu0
  %v4370 = vpop.f32.mrb[0].mxu0
  %v4371 = vadd.f32 %v4274, %v4370
  %v4372 = vpop.f32.mrb[0].mxu0
  %4373 = vdwg.mxu0
  %4374 = vmatprep.subr.bf16.mxu0 0
  %4375 = vmatpush1.bf16.msra.mxu0 %v3295
  %4376 = vmatprep.subr.bf16.mxu0 0
  %4377 = vmatpush1.bf16.msra.mxu0 %v3296
  %4378 = vmatprep.subr.bf16.mxu0 0
  %4379 = vmatpush1.bf16.msra.mxu0 %v3297
  %4380 = vmatprep.subr.bf16.mxu0 0
  %4381 = vmatpush1.bf16.msra.mxu0 %v3298
  %4382 = vmatprep.subr.bf16.mxu0 0
  %4383 = vmatpush1.bf16.msra.mxu0 %v3299
  %4384 = vmatprep.subr.bf16.mxu0 0
  %4385 = vmatpush1.bf16.msra.mxu0 %v3300
  %4386 = vmatprep.subr.bf16.mxu0 0
  %4387 = vmatpush1.bf16.msra.mxu0 %v3301
  %4388 = vmatprep.subr.bf16.mxu0 0
  %4389 = vmatpush1.bf16.msra.mxu0 %v3302
  %4390 = vmatprep.subr.bf16.mxu0 0
  %4391 = vmatpush1.bf16.msra.mxu0 %v3303
  %4392 = vmatprep.subr.bf16.mxu0 0
  %4393 = vmatpush1.bf16.msra.mxu0 %v3304
  %4394 = vmatprep.subr.bf16.mxu0 0
  %4395 = vmatpush1.bf16.msra.mxu0 %v3305
  %4396 = vmatprep.subr.bf16.mxu0 0
  %4397 = vmatpush1.bf16.msra.mxu0 %v3306
  %4398 = vmatprep.subr.bf16.mxu0 0
  %4399 = vmatpush1.bf16.msra.mxu0 %v3307
  %4400 = vmatprep.subr.bf16.mxu0 0
  %4401 = vmatpush1.bf16.msra.mxu0 %v3308
  %4402 = vmatprep.subr.bf16.mxu0 0
  %4403 = vmatpush1.bf16.msra.mxu0 %v3309
  %4404 = vmatprep.subr.bf16.mxu0 0
  %4405 = vmatpush1.bf16.msra.mxu0 %v3310
  %4406 = vmatprep.mubr.bf16.mxu0 %v1662
  %4407 = vmatmul.mubr.bf16.gmra.mrb[0].mxu0 %v1661
  %v4408 = vpop.f32.mrb[0].mxu0
  %v4409 = vadd.f32 %v4312, %v4408
  %v4410 = vpop.f32.mrb[0].mxu0
  %v4411 = vpop.f32.mrb[0].mxu0
  %v4412 = vadd.f32 %v4315, %v4411
  %v4413 = vpop.f32.mrb[0].mxu0
  %4414 = vmatprep.mubr.bf16.mxu0 %v1694
  %4415 = vmatmul.mubr.bf16.gmra.mrb[0].mxu0 %v1693
  %v4416 = vpop.f32.mrb[0].mxu0
  %v4417 = vadd.f32 %v4320, %v4416
  %v4418 = vpop.f32.mrb[0].mxu0
  %v4419 = vpop.f32.mrb[0].mxu0
  %v4420 = vadd.f32 %v4323, %v4419
  %v4421 = vpop.f32.mrb[0].mxu0
  %4422 = vmatprep.mubr.bf16.mxu0 %v1726
  %4423 = vmatmul.mubr.bf16.gmra.mrb[0].mxu0 %v1725
  %v4424 = vpop.f32.mrb[0].mxu0
  %v4425 = vadd.f32 %v4328, %v4424
  %v4426 = vpop.f32.mrb[0].mxu0
  %v4427 = vpop.f32.mrb[0].mxu0
  %v4428 = vadd.f32 %v4331, %v4427
  %v4429 = vpop.f32.mrb[0].mxu0
  %4430 = vmatprep.mubr.bf16.mxu0 %v1758
  %4431 = vmatmul.mubr.bf16.gmra.mrb[0].mxu0 %v1757
  %v4432 = vpop.f32.mrb[0].mxu0
  %v4433 = vadd.f32 %v4336, %v4432
  %v4434 = vpop.f32.mrb[0].mxu0
  %v4435 = vpop.f32.mrb[0].mxu0
  %v4436 = vadd.f32 %v4339, %v4435
  %v4437 = vpop.f32.mrb[0].mxu0
  %4438 = vmatprep.mubr.bf16.mxu0 %v1790
  %4439 = vmatmul.mubr.bf16.gmra.mrb[0].mxu0 %v1789
  %v4440 = vpop.f32.mrb[0].mxu0
  %v4441 = vadd.f32 %v4344, %v4440
  %v4442 = vpop.f32.mrb[0].mxu0
  %v4443 = vpop.f32.mrb[0].mxu0
  %v4444 = vadd.f32 %v4347, %v4443
  %v4445 = vpop.f32.mrb[0].mxu0
  %4446 = vmatprep.mubr.bf16.mxu0 %v1822
  %4447 = vmatmul.mubr.bf16.gmra.mrb[0].mxu0 %v1821
  %v4448 = vpop.f32.mrb[0].mxu0
  %v4449 = vadd.f32 %v4352, %v4448
  %v4450 = vpop.f32.mrb[0].mxu0
  %v4451 = vpop.f32.mrb[0].mxu0
  %v4452 = vadd.f32 %v4355, %v4451
  %v4453 = vpop.f32.mrb[0].mxu0
  %4454 = vmatprep.mubr.bf16.mxu0 %v1854
  %4455 = vmatmul.mubr.bf16.gmra.mrb[0].mxu0 %v1853
  %v4456 = vpop.f32.mrb[0].mxu0
  %v4457 = vadd.f32 %v4360, %v4456
  %v4458 = vpop.f32.mrb[0].mxu0
  %v4459 = vpop.f32.mrb[0].mxu0
  %v4460 = vadd.f32 %v4363, %v4459
  %v4461 = vpop.f32.mrb[0].mxu0
  %4462 = vmatprep.mubr.bf16.mxu0 %v1886
  %4463 = vmatmul.mubr.bf16.gmra.mrb[0].mxu0 %v1885
  %v4464 = vpop.f32.mrb[0].mxu0
  %v4465 = vadd.f32 %v4368, %v4464
  %v4466 = vpop.f32.mrb[0].mxu0
  %v4467 = vpop.f32.mrb[0].mxu0
  %v4468 = vadd.f32 %v4371, %v4467
  %v4469 = vpop.f32.mrb[0].mxu0
  %4470 = vdwg.mxu0
  %4471 = vmatprep.subr.bf16.mxu0 0
  %4472 = vmatpush1.bf16.msra.mxu0 %v3311
  %4473 = vmatprep.subr.bf16.mxu0 0
  %4474 = vmatpush1.bf16.msra.mxu0 %v3312
  %4475 = vmatprep.subr.bf16.mxu0 0
  %4476 = vmatpush1.bf16.msra.mxu0 %v3313
  %4477 = vmatprep.subr.bf16.mxu0 0
  %4478 = vmatpush1.bf16.msra.mxu0 %v3314
  %4479 = vmatprep.subr.bf16.mxu0 0
  %4480 = vmatpush1.bf16.msra.mxu0 %v3315
  %4481 = vmatprep.subr.bf16.mxu0 0
  %4482 = vmatpush1.bf16.msra.mxu0 %v3316
  %4483 = vmatprep.subr.bf16.mxu0 0
  %4484 = vmatpush1.bf16.msra.mxu0 %v3317
  %4485 = vmatprep.subr.bf16.mxu0 0
  %4486 = vmatpush1.bf16.msra.mxu0 %v3318
  %4487 = vmatprep.subr.bf16.mxu0 0
  %4488 = vmatpush1.bf16.msra.mxu0 %v3319
  %4489 = vmatprep.subr.bf16.mxu0 0
  %4490 = vmatpush1.bf16.msra.mxu0 %v3320
  %4491 = vmatprep.subr.bf16.mxu0 0
  %4492 = vmatpush1.bf16.msra.mxu0 %v3321
  %4493 = vmatprep.subr.bf16.mxu0 0
  %4494 = vmatpush1.bf16.msra.mxu0 %v3322
  %4495 = vmatprep.subr.bf16.mxu0 0
  %4496 = vmatpush1.bf16.msra.mxu0 %v3323
  %4497 = vmatprep.subr.bf16.mxu0 0
  %4498 = vmatpush1.bf16.msra.mxu0 %v3324
  %4499 = vmatprep.subr.bf16.mxu0 0
  %4500 = vmatpush1.bf16.msra.mxu0 %v3325
  %4501 = vmatprep.subr.bf16.mxu0 0
  %4502 = vmatpush1.bf16.msra.mxu0 %v3326
  %4503 = vmatprep.mubr.bf16.mxu0 %v1664
  %4504 = vmatmul.mubr.bf16.gmra.mrb[0].mxu0 %v1663
  %v4505 = vpop.f32.mrb[0].mxu0
  %v4506 = vadd.f32 %v4409, %v4505
  %v4507 = vpop.f32.mrb[0].mxu0
  %v4508 = vpop.f32.mrb[0].mxu0
  %v4509 = vadd.f32 %v4412, %v4508
  %v4510 = vpop.f32.mrb[0].mxu0
  %4511 = vmatprep.mubr.bf16.mxu0 %v1696
  %4512 = vmatmul.mubr.bf16.gmra.mrb[0].mxu0 %v1695
  %v4513 = vpop.f32.mrb[0].mxu0
  %v4514 = vadd.f32 %v4417, %v4513
  %v4515 = vpop.f32.mrb[0].mxu0
  %v4516 = vpop.f32.mrb[0].mxu0
  %v4517 = vadd.f32 %v4420, %v4516
  %v4518 = vpop.f32.mrb[0].mxu0
  %4519 = vmatprep.mubr.bf16.mxu0 %v1728
  %4520 = vmatmul.mubr.bf16.gmra.mrb[0].mxu0 %v1727
  %v4521 = vpop.f32.mrb[0].mxu0
  %v4522 = vadd.f32 %v4425, %v4521
  %v4523 = vpop.f32.mrb[0].mxu0
  %v4524 = vpop.f32.mrb[0].mxu0
  %v4525 = vadd.f32 %v4428, %v4524
  %v4526 = vpop.f32.mrb[0].mxu0
  %4527 = vmatprep.mubr.bf16.mxu0 %v1760
  %4528 = vmatmul.mubr.bf16.gmra.mrb[0].mxu0 %v1759
  %v4529 = vpop.f32.mrb[0].mxu0
  %v4530 = vadd.f32 %v4433, %v4529
  %v4531 = vpop.f32.mrb[0].mxu0
  %v4532 = vpop.f32.mrb[0].mxu0
  %v4533 = vadd.f32 %v4436, %v4532
  %v4534 = vpop.f32.mrb[0].mxu0
  %4535 = vmatprep.mubr.bf16.mxu0 %v1792
  %4536 = vmatmul.mubr.bf16.gmra.mrb[0].mxu0 %v1791
  %v4537 = vpop.f32.mrb[0].mxu0
  %v4538 = vadd.f32 %v4441, %v4537
  %v4539 = vpop.f32.mrb[0].mxu0
  %v4540 = vpop.f32.mrb[0].mxu0
  %v4541 = vadd.f32 %v4444, %v4540
  %v4542 = vpop.f32.mrb[0].mxu0
  %4543 = vmatprep.mubr.bf16.mxu0 %v1824
  %4544 = vmatmul.mubr.bf16.gmra.mrb[0].mxu0 %v1823
  %v4545 = vpop.f32.mrb[0].mxu0
  %v4546 = vadd.f32 %v4449, %v4545
  %v4547 = vpop.f32.mrb[0].mxu0
  %v4548 = vpop.f32.mrb[0].mxu0
  %v4549 = vadd.f32 %v4452, %v4548
  %v4550 = vpop.f32.mrb[0].mxu0
  %4551 = vmatprep.mubr.bf16.mxu0 %v1856
  %4552 = vmatmul.mubr.bf16.gmra.mrb[0].mxu0 %v1855
  %v4553 = vpop.f32.mrb[0].mxu0
  %v4554 = vadd.f32 %v4457, %v4553
  %v4555 = vpop.f32.mrb[0].mxu0
  %v4556 = vpop.f32.mrb[0].mxu0
  %v4557 = vadd.f32 %v4460, %v4556
  %v4558 = vpop.f32.mrb[0].mxu0
  %4559 = vmatprep.mubr.bf16.mxu0 %v1888
  %4560 = vmatmul.mubr.bf16.gmra.mrb[0].mxu0 %v1887
  %v4561 = vpop.f32.mrb[0].mxu0
  %v4562 = vadd.f32 %v4465, %v4561
  %v4563 = vpop.f32.mrb[0].mxu0
  %v4564 = vpop.f32.mrb[0].mxu0
  %v4565 = vadd.f32 %v4468, %v4564
  %v4566 = vpop.f32.mrb[0].mxu0
  %4567 = vdwg.mxu0
  %4568 = vmatprep.subr.bf16.mxu0 0
  %4569 = vmatpush1.bf16.msra.mxu0 %v3327
  %4570 = vmatprep.subr.bf16.mxu0 0
  %4571 = vmatpush1.bf16.msra.mxu0 %v3328
  %4572 = vmatprep.subr.bf16.mxu0 0
  %4573 = vmatpush1.bf16.msra.mxu0 %v3329
  %4574 = vmatprep.subr.bf16.mxu0 0
  %4575 = vmatpush1.bf16.msra.mxu0 %v3330
  %4576 = vmatprep.subr.bf16.mxu0 0
  %4577 = vmatpush1.bf16.msra.mxu0 %v3331
  %4578 = vmatprep.subr.bf16.mxu0 0
  %4579 = vmatpush1.bf16.msra.mxu0 %v3332
  %4580 = vmatprep.subr.bf16.mxu0 0
  %4581 = vmatpush1.bf16.msra.mxu0 %v3333
  %4582 = vmatprep.subr.bf16.mxu0 0
  %4583 = vmatpush1.bf16.msra.mxu0 %v3334
  %4584 = vmatprep.subr.bf16.mxu0 0
  %4585 = vmatpush1.bf16.msra.mxu0 %v3335
  %4586 = vmatprep.subr.bf16.mxu0 0
  %4587 = vmatpush1.bf16.msra.mxu0 %v3336
  %4588 = vmatprep.subr.bf16.mxu0 0
  %4589 = vmatpush1.bf16.msra.mxu0 %v3337
  %4590 = vmatprep.subr.bf16.mxu0 0
  %4591 = vmatpush1.bf16.msra.mxu0 %v3338
  %4592 = vmatprep.subr.bf16.mxu0 0
  %4593 = vmatpush1.bf16.msra.mxu0 %v3339
  %4594 = vmatprep.subr.bf16.mxu0 0
  %4595 = vmatpush1.bf16.msra.mxu0 %v3340
  %4596 = vmatprep.subr.bf16.mxu0 0
  %4597 = vmatpush1.bf16.msra.mxu0 %v3341
  %4598 = vmatprep.subr.bf16.mxu0 0
  %4599 = vmatpush1.bf16.msra.mxu0 %v3342
  %4600 = vmatprep.mubr.bf16.mxu0 %v1666
  %4601 = vmatmul.mubr.bf16.gmra.mrb[0].mxu0 %v1665
  %v4602 = vpop.f32.mrb[0].mxu0
  %v4603 = vadd.f32 %v4506, %v4602
  %v4604 = vpop.f32.mrb[0].mxu0
  %v4605 = vpop.f32.mrb[0].mxu0
  %v4606 = vadd.f32 %v4509, %v4605
  %v4607 = vpop.f32.mrb[0].mxu0
  %4608 = vmatprep.mubr.bf16.mxu0 %v1698
  %4609 = vmatmul.mubr.bf16.gmra.mrb[0].mxu0 %v1697
  %v4610 = vpop.f32.mrb[0].mxu0
  %v4611 = vadd.f32 %v4514, %v4610
  %v4612 = vpop.f32.mrb[0].mxu0
  %v4613 = vpop.f32.mrb[0].mxu0
  %v4614 = vadd.f32 %v4517, %v4613
  %v4615 = vpop.f32.mrb[0].mxu0
  %4616 = vmatprep.mubr.bf16.mxu0 %v1730
  %4617 = vmatmul.mubr.bf16.gmra.mrb[0].mxu0 %v1729
  %v4618 = vpop.f32.mrb[0].mxu0
  %v4619 = vadd.f32 %v4522, %v4618
  %v4620 = vpop.f32.mrb[0].mxu0
  %v4621 = vpop.f32.mrb[0].mxu0
  %v4622 = vadd.f32 %v4525, %v4621
  %v4623 = vpop.f32.mrb[0].mxu0
  %4624 = vmatprep.mubr.bf16.mxu0 %v1762
  %4625 = vmatmul.mubr.bf16.gmra.mrb[0].mxu0 %v1761
  %v4626 = vpop.f32.mrb[0].mxu0
  %v4627 = vadd.f32 %v4530, %v4626
  %v4628 = vpop.f32.mrb[0].mxu0
  %v4629 = vpop.f32.mrb[0].mxu0
  %v4630 = vadd.f32 %v4533, %v4629
  %v4631 = vpop.f32.mrb[0].mxu0
  %4632 = vmatprep.mubr.bf16.mxu0 %v1794
  %4633 = vmatmul.mubr.bf16.gmra.mrb[0].mxu0 %v1793
  %v4634 = vpop.f32.mrb[0].mxu0
  %v4635 = vadd.f32 %v4538, %v4634
  %v4636 = vpop.f32.mrb[0].mxu0
  %v4637 = vpop.f32.mrb[0].mxu0
  %v4638 = vadd.f32 %v4541, %v4637
  %v4639 = vpop.f32.mrb[0].mxu0
  %4640 = vmatprep.mubr.bf16.mxu0 %v1826
  %4641 = vmatmul.mubr.bf16.gmra.mrb[0].mxu0 %v1825
  %v4642 = vpop.f32.mrb[0].mxu0
  %v4643 = vadd.f32 %v4546, %v4642
  %v4644 = vpop.f32.mrb[0].mxu0
  %v4645 = vpop.f32.mrb[0].mxu0
  %v4646 = vadd.f32 %v4549, %v4645
  %v4647 = vpop.f32.mrb[0].mxu0
  %4648 = vmatprep.mubr.bf16.mxu0 %v1858
  %4649 = vmatmul.mubr.bf16.gmra.mrb[0].mxu0 %v1857
  %v4650 = vpop.f32.mrb[0].mxu0
  %v4651 = vadd.f32 %v4554, %v4650
  %v4652 = vpop.f32.mrb[0].mxu0
  %v4653 = vpop.f32.mrb[0].mxu0
  %v4654 = vadd.f32 %v4557, %v4653
  %v4655 = vpop.f32.mrb[0].mxu0
  %4656 = vmatprep.mubr.bf16.mxu0 %v1890
  %4657 = vmatmul.mubr.bf16.gmra.mrb[0].mxu0 %v1889
  %v4658 = vpop.f32.mrb[0].mxu0
  %v4659 = vadd.f32 %v4562, %v4658
  %v4660 = vpop.f32.mrb[0].mxu0
  %v4661 = vpop.f32.mrb[0].mxu0
  %v4662 = vadd.f32 %v4565, %v4661
  %v4663 = vpop.f32.mrb[0].mxu0
  %4664 = vdwg.mxu0
  %4665 = vmatprep.subr.bf16.mxu0 0
  %4666 = vmatpush1.bf16.msra.mxu0 %v3343
  %4667 = vmatprep.subr.bf16.mxu0 0
  %4668 = vmatpush1.bf16.msra.mxu0 %v3344
  %4669 = vmatprep.subr.bf16.mxu0 0
  %4670 = vmatpush1.bf16.msra.mxu0 %v3345
  %4671 = vmatprep.subr.bf16.mxu0 0
  %4672 = vmatpush1.bf16.msra.mxu0 %v3346
  %4673 = vmatprep.subr.bf16.mxu0 0
  %4674 = vmatpush1.bf16.msra.mxu0 %v3347
  %4675 = vmatprep.subr.bf16.mxu0 0
  %4676 = vmatpush1.bf16.msra.mxu0 %v3348
  %4677 = vmatprep.subr.bf16.mxu0 0
  %4678 = vmatpush1.bf16.msra.mxu0 %v3349
  %4679 = vmatprep.subr.bf16.mxu0 0
  %4680 = vmatpush1.bf16.msra.mxu0 %v3350
  %4681 = vmatprep.subr.bf16.mxu0 0
  %4682 = vmatpush1.bf16.msra.mxu0 %v3351
  %4683 = vmatprep.subr.bf16.mxu0 0
  %4684 = vmatpush1.bf16.msra.mxu0 %v3352
  %4685 = vmatprep.subr.bf16.mxu0 0
  %4686 = vmatpush1.bf16.msra.mxu0 %v3353
  %4687 = vmatprep.subr.bf16.mxu0 0
  %4688 = vmatpush1.bf16.msra.mxu0 %v3354
  %4689 = vmatprep.subr.bf16.mxu0 0
  %4690 = vmatpush1.bf16.msra.mxu0 %v3355
  %4691 = vmatprep.subr.bf16.mxu0 0
  %4692 = vmatpush1.bf16.msra.mxu0 %v3356
  %4693 = vmatprep.subr.bf16.mxu0 0
  %4694 = vmatpush1.bf16.msra.mxu0 %v3357
  %4695 = vmatprep.subr.bf16.mxu0 0
  %4696 = vmatpush1.bf16.msra.mxu0 %v3358
  %4697 = vmatprep.mubr.bf16.mxu0 %v1668
  %4698 = vmatmul.mubr.bf16.gmra.mrb[0].mxu0 %v1667
  %v4699 = vpop.f32.mrb[0].mxu0
  %v4700 = vadd.f32 %v4603, %v4699
  %v4701 = vpop.f32.mrb[0].mxu0
  %v4702 = vpop.f32.mrb[0].mxu0
  %v4703 = vadd.f32 %v4606, %v4702
  %v4704 = vpop.f32.mrb[0].mxu0
  %4705 = vmatprep.mubr.bf16.mxu0 %v1700
  %4706 = vmatmul.mubr.bf16.gmra.mrb[0].mxu0 %v1699
  %v4707 = vpop.f32.mrb[0].mxu0
  %v4708 = vadd.f32 %v4611, %v4707
  %v4709 = vpop.f32.mrb[0].mxu0
  %v4710 = vpop.f32.mrb[0].mxu0
  %v4711 = vadd.f32 %v4614, %v4710
  %v4712 = vpop.f32.mrb[0].mxu0
  %4713 = vmatprep.mubr.bf16.mxu0 %v1732
  %4714 = vmatmul.mubr.bf16.gmra.mrb[0].mxu0 %v1731
  %v4715 = vpop.f32.mrb[0].mxu0
  %v4716 = vadd.f32 %v4619, %v4715
  %v4717 = vpop.f32.mrb[0].mxu0
  %v4718 = vpop.f32.mrb[0].mxu0
  %v4719 = vadd.f32 %v4622, %v4718
  %v4720 = vpop.f32.mrb[0].mxu0
  %4721 = vmatprep.mubr.bf16.mxu0 %v1764
  %4722 = vmatmul.mubr.bf16.gmra.mrb[0].mxu0 %v1763
  %v4723 = vpop.f32.mrb[0].mxu0
  %v4724 = vadd.f32 %v4627, %v4723
  %v4725 = vpop.f32.mrb[0].mxu0
  %v4726 = vpop.f32.mrb[0].mxu0
  %v4727 = vadd.f32 %v4630, %v4726
  %v4728 = vpop.f32.mrb[0].mxu0
  %4729 = vmatprep.mubr.bf16.mxu0 %v1796
  %4730 = vmatmul.mubr.bf16.gmra.mrb[0].mxu0 %v1795
  %v4731 = vpop.f32.mrb[0].mxu0
  %v4732 = vadd.f32 %v4635, %v4731
  %v4733 = vpop.f32.mrb[0].mxu0
  %v4734 = vpop.f32.mrb[0].mxu0
  %v4735 = vadd.f32 %v4638, %v4734
  %v4736 = vpop.f32.mrb[0].mxu0
  %4737 = vmatprep.mubr.bf16.mxu0 %v1828
  %4738 = vmatmul.mubr.bf16.gmra.mrb[0].mxu0 %v1827
  %v4739 = vpop.f32.mrb[0].mxu0
  %v4740 = vadd.f32 %v4643, %v4739
  %v4741 = vpop.f32.mrb[0].mxu0
  %v4742 = vpop.f32.mrb[0].mxu0
  %v4743 = vadd.f32 %v4646, %v4742
  %v4744 = vpop.f32.mrb[0].mxu0
  %4745 = vmatprep.mubr.bf16.mxu0 %v1860
  %4746 = vmatmul.mubr.bf16.gmra.mrb[0].mxu0 %v1859
  %v4747 = vpop.f32.mrb[0].mxu0
  %v4748 = vadd.f32 %v4651, %v4747
  %v4749 = vpop.f32.mrb[0].mxu0
  %v4750 = vpop.f32.mrb[0].mxu0
  %v4751 = vadd.f32 %v4654, %v4750
  %v4752 = vpop.f32.mrb[0].mxu0
  %4753 = vmatprep.mubr.bf16.mxu0 %v1892
  %4754 = vmatmul.mubr.bf16.gmra.mrb[0].mxu0 %v1891
  %v4755 = vpop.f32.mrb[0].mxu0
  %v4756 = vadd.f32 %v4659, %v4755
  %v4757 = vpop.f32.mrb[0].mxu0
  %v4758 = vpop.f32.mrb[0].mxu0
  %v4759 = vadd.f32 %v4662, %v4758
  %v4760 = vpop.f32.mrb[0].mxu0
  %4761 = vdwg.mxu0
  %4762 = vmatprep.subr.bf16.mxu0 0
  %4763 = vmatpush1.bf16.msra.mxu0 %v3359
  %4764 = vmatprep.subr.bf16.mxu0 0
  %4765 = vmatpush1.bf16.msra.mxu0 %v3360
  %4766 = vmatprep.subr.bf16.mxu0 0
  %4767 = vmatpush1.bf16.msra.mxu0 %v3361
  %4768 = vmatprep.subr.bf16.mxu0 0
  %4769 = vmatpush1.bf16.msra.mxu0 %v3362
  %4770 = vmatprep.subr.bf16.mxu0 0
  %4771 = vmatpush1.bf16.msra.mxu0 %v3363
  %4772 = vmatprep.subr.bf16.mxu0 0
  %4773 = vmatpush1.bf16.msra.mxu0 %v3364
  %4774 = vmatprep.subr.bf16.mxu0 0
  %4775 = vmatpush1.bf16.msra.mxu0 %v3365
  %4776 = vmatprep.subr.bf16.mxu0 0
  %4777 = vmatpush1.bf16.msra.mxu0 %v3366
  %4778 = vmatprep.subr.bf16.mxu0 0
  %4779 = vmatpush1.bf16.msra.mxu0 %v3367
  %4780 = vmatprep.subr.bf16.mxu0 0
  %4781 = vmatpush1.bf16.msra.mxu0 %v3368
  %4782 = vmatprep.subr.bf16.mxu0 0
  %4783 = vmatpush1.bf16.msra.mxu0 %v3369
  %4784 = vmatprep.subr.bf16.mxu0 0
  %4785 = vmatpush1.bf16.msra.mxu0 %v3370
  %4786 = vmatprep.subr.bf16.mxu0 0
  %4787 = vmatpush1.bf16.msra.mxu0 %v3371
  %4788 = vmatprep.subr.bf16.mxu0 0
  %4789 = vmatpush1.bf16.msra.mxu0 %v3372
  %4790 = vmatprep.subr.bf16.mxu0 0
  %4791 = vmatpush1.bf16.msra.mxu0 %v3373
  %4792 = vmatprep.subr.bf16.mxu0 0
  %4793 = vmatpush1.bf16.msra.mxu0 %v3374
  %4794 = vmatprep.mubr.bf16.mxu0 %v1670
  %4795 = vmatmul.mubr.bf16.gmra.mrb[0].mxu0 %v1669
  %v4796 = vpop.f32.mrb[0].mxu0
  %v4797 = vadd.f32 %v4700, %v4796
  %v4798 = vpop.f32.mrb[0].mxu0
  %v4799 = vpop.f32.mrb[0].mxu0
  %v4800 = vadd.f32 %v4703, %v4799
  %v4801 = vpop.f32.mrb[0].mxu0
  %4802 = vmatprep.mubr.bf16.mxu0 %v1702
  %4803 = vmatmul.mubr.bf16.gmra.mrb[0].mxu0 %v1701
  %v4804 = vpop.f32.mrb[0].mxu0
  %v4805 = vadd.f32 %v4708, %v4804
  %v4806 = vpop.f32.mrb[0].mxu0
  %v4807 = vpop.f32.mrb[0].mxu0
  %v4808 = vadd.f32 %v4711, %v4807
  %v4809 = vpop.f32.mrb[0].mxu0
  %4810 = vmatprep.mubr.bf16.mxu0 %v1734
  %4811 = vmatmul.mubr.bf16.gmra.mrb[0].mxu0 %v1733
  %v4812 = vpop.f32.mrb[0].mxu0
  %v4813 = vadd.f32 %v4716, %v4812
  %v4814 = vpop.f32.mrb[0].mxu0
  %v4815 = vpop.f32.mrb[0].mxu0
  %v4816 = vadd.f32 %v4719, %v4815
  %v4817 = vpop.f32.mrb[0].mxu0
  %4818 = vmatprep.mubr.bf16.mxu0 %v1766
  %4819 = vmatmul.mubr.bf16.gmra.mrb[0].mxu0 %v1765
  %v4820 = vpop.f32.mrb[0].mxu0
  %v4821 = vadd.f32 %v4724, %v4820
  %v4822 = vpop.f32.mrb[0].mxu0
  %v4823 = vpop.f32.mrb[0].mxu0
  %v4824 = vadd.f32 %v4727, %v4823
  %v4825 = vpop.f32.mrb[0].mxu0
  %4826 = vmatprep.mubr.bf16.mxu0 %v1798
  %4827 = vmatmul.mubr.bf16.gmra.mrb[0].mxu0 %v1797
  %v4828 = vpop.f32.mrb[0].mxu0
  %v4829 = vadd.f32 %v4732, %v4828
  %v4830 = vpop.f32.mrb[0].mxu0
  %v4831 = vpop.f32.mrb[0].mxu0
  %v4832 = vadd.f32 %v4735, %v4831
  %v4833 = vpop.f32.mrb[0].mxu0
  %4834 = vmatprep.mubr.bf16.mxu0 %v1830
  %4835 = vmatmul.mubr.bf16.gmra.mrb[0].mxu0 %v1829
  %v4836 = vpop.f32.mrb[0].mxu0
  %v4837 = vadd.f32 %v4740, %v4836
  %v4838 = vpop.f32.mrb[0].mxu0
  %v4839 = vpop.f32.mrb[0].mxu0
  %v4840 = vadd.f32 %v4743, %v4839
  %v4841 = vpop.f32.mrb[0].mxu0
  %4842 = vmatprep.mubr.bf16.mxu0 %v1862
  %4843 = vmatmul.mubr.bf16.gmra.mrb[0].mxu0 %v1861
  %v4844 = vpop.f32.mrb[0].mxu0
  %v4845 = vadd.f32 %v4748, %v4844
  %v4846 = vpop.f32.mrb[0].mxu0
  %v4847 = vpop.f32.mrb[0].mxu0
  %v4848 = vadd.f32 %v4751, %v4847
  %v4849 = vpop.f32.mrb[0].mxu0
  %4850 = vmatprep.mubr.bf16.mxu0 %v1894
  %4851 = vmatmul.mubr.bf16.gmra.mrb[0].mxu0 %v1893
  %v4852 = vpop.f32.mrb[0].mxu0
  %v4853 = vadd.f32 %v4756, %v4852
  %v4854 = vpop.f32.mrb[0].mxu0
  %v4855 = vpop.f32.mrb[0].mxu0
  %v4856 = vadd.f32 %v4759, %v4855
  %v4857 = vpop.f32.mrb[0].mxu0
  %4858 = vdwg.mxu0
  %4859 = vmatprep.subr.bf16.mxu0 0
  %4860 = vmatpush1.bf16.msra.mxu0 %v3375
  %4861 = vmatprep.subr.bf16.mxu0 0
  %4862 = vmatpush1.bf16.msra.mxu0 %v3376
  %4863 = vmatprep.subr.bf16.mxu0 0
  %4864 = vmatpush1.bf16.msra.mxu0 %v3377
  %4865 = vmatprep.subr.bf16.mxu0 0
  %4866 = vmatpush1.bf16.msra.mxu0 %v3378
  %4867 = vmatprep.subr.bf16.mxu0 0
  %4868 = vmatpush1.bf16.msra.mxu0 %v3379
  %4869 = vmatprep.subr.bf16.mxu0 0
  %4870 = vmatpush1.bf16.msra.mxu0 %v3380
  %4871 = vmatprep.subr.bf16.mxu0 0
  %4872 = vmatpush1.bf16.msra.mxu0 %v3381
  %4873 = vmatprep.subr.bf16.mxu0 0
  %4874 = vmatpush1.bf16.msra.mxu0 %v3382
  %4875 = vmatprep.subr.bf16.mxu0 0
  %4876 = vmatpush1.bf16.msra.mxu0 %v3383
  %4877 = vmatprep.subr.bf16.mxu0 0
  %4878 = vmatpush1.bf16.msra.mxu0 %v3384
  %4879 = vmatprep.subr.bf16.mxu0 0
  %4880 = vmatpush1.bf16.msra.mxu0 %v3385
  %4881 = vmatprep.subr.bf16.mxu0 0
  %4882 = vmatpush1.bf16.msra.mxu0 %v3386
  %4883 = vmatprep.subr.bf16.mxu0 0
  %4884 = vmatpush1.bf16.msra.mxu0 %v3387
  %4885 = vmatprep.subr.bf16.mxu0 0
  %4886 = vmatpush1.bf16.msra.mxu0 %v3388
  %4887 = vmatprep.subr.bf16.mxu0 0
  %4888 = vmatpush1.bf16.msra.mxu0 %v3389
  %4889 = vmatprep.subr.bf16.mxu0 0
  %4890 = vmatpush1.bf16.msra.mxu0 %v3390
  %4891 = vmatprep.mubr.bf16.mxu0 %v1672
  %4892 = vmatmul.mubr.bf16.gmra.mrb[0].mxu0 %v1671
  %v4893 = vpop.f32.mrb[0].mxu0
  %v4894 = vadd.f32 %v4797, %v4893
  %v4895 = vpop.f32.mrb[0].mxu0
  %v4896 = vpop.f32.mrb[0].mxu0
  %v4897 = vadd.f32 %v4800, %v4896
  %v4898 = vpop.f32.mrb[0].mxu0
  %4899 = vmatprep.mubr.bf16.mxu0 %v1704
  %4900 = vmatmul.mubr.bf16.gmra.mrb[0].mxu0 %v1703
  %v4901 = vpop.f32.mrb[0].mxu0
  %v4902 = vadd.f32 %v4805, %v4901
  %v4903 = vpop.f32.mrb[0].mxu0
  %v4904 = vpop.f32.mrb[0].mxu0
  %v4905 = vadd.f32 %v4808, %v4904
  %v4906 = vpop.f32.mrb[0].mxu0
  %4907 = vmatprep.mubr.bf16.mxu0 %v1736
  %4908 = vmatmul.mubr.bf16.gmra.mrb[0].mxu0 %v1735
  %v4909 = vpop.f32.mrb[0].mxu0
  %v4910 = vadd.f32 %v4813, %v4909
  %v4911 = vpop.f32.mrb[0].mxu0
  %v4912 = vpop.f32.mrb[0].mxu0
  %v4913 = vadd.f32 %v4816, %v4912
  %v4914 = vpop.f32.mrb[0].mxu0
  %4915 = vmatprep.mubr.bf16.mxu0 %v1768
  %4916 = vmatmul.mubr.bf16.gmra.mrb[0].mxu0 %v1767
  %v4917 = vpop.f32.mrb[0].mxu0
  %v4918 = vadd.f32 %v4821, %v4917
  %v4919 = vpop.f32.mrb[0].mxu0
  %v4920 = vpop.f32.mrb[0].mxu0
  %v4921 = vadd.f32 %v4824, %v4920
  %v4922 = vpop.f32.mrb[0].mxu0
  %4923 = vmatprep.mubr.bf16.mxu0 %v1800
  %4924 = vmatmul.mubr.bf16.gmra.mrb[0].mxu0 %v1799
  %v4925 = vpop.f32.mrb[0].mxu0
  %v4926 = vadd.f32 %v4829, %v4925
  %v4927 = vpop.f32.mrb[0].mxu0
  %v4928 = vpop.f32.mrb[0].mxu0
  %v4929 = vadd.f32 %v4832, %v4928
  %v4930 = vpop.f32.mrb[0].mxu0
  %4931 = vmatprep.mubr.bf16.mxu0 %v1832
  %4932 = vmatmul.mubr.bf16.gmra.mrb[0].mxu0 %v1831
  %v4933 = vpop.f32.mrb[0].mxu0
  %v4934 = vadd.f32 %v4837, %v4933
  %v4935 = vpop.f32.mrb[0].mxu0
  %v4936 = vpop.f32.mrb[0].mxu0
  %v4937 = vadd.f32 %v4840, %v4936
  %v4938 = vpop.f32.mrb[0].mxu0
  %4939 = vmatprep.mubr.bf16.mxu0 %v1864
  %4940 = vmatmul.mubr.bf16.gmra.mrb[0].mxu0 %v1863
  %v4941 = vpop.f32.mrb[0].mxu0
  %v4942 = vadd.f32 %v4845, %v4941
  %v4943 = vpop.f32.mrb[0].mxu0
  %v4944 = vpop.f32.mrb[0].mxu0
  %v4945 = vadd.f32 %v4848, %v4944
  %v4946 = vpop.f32.mrb[0].mxu0
  %4947 = vmatprep.mubr.bf16.mxu0 %v1896
  %4948 = vmatmul.mubr.bf16.gmra.mrb[0].mxu0 %v1895
  %v4949 = vpop.f32.mrb[0].mxu0
  %v4950 = vadd.f32 %v4853, %v4949
  %v4951 = vpop.f32.mrb[0].mxu0
  %v4952 = vpop.f32.mrb[0].mxu0
  %v4953 = vadd.f32 %v4856, %v4952
  %v4954 = vpop.f32.mrb[0].mxu0
  %4955 = vdwg.mxu0
  %4956 = vmatprep.subr.bf16.mxu0 0
  %4957 = vmatpush1.bf16.msra.mxu0 %v3391
  %4958 = vmatprep.subr.bf16.mxu0 0
  %4959 = vmatpush1.bf16.msra.mxu0 %v3392
  %4960 = vmatprep.subr.bf16.mxu0 0
  %4961 = vmatpush1.bf16.msra.mxu0 %v3393
  %4962 = vmatprep.subr.bf16.mxu0 0
  %4963 = vmatpush1.bf16.msra.mxu0 %v3394
  %4964 = vmatprep.subr.bf16.mxu0 0
  %4965 = vmatpush1.bf16.msra.mxu0 %v3395
  %4966 = vmatprep.subr.bf16.mxu0 0
  %4967 = vmatpush1.bf16.msra.mxu0 %v3396
  %4968 = vmatprep.subr.bf16.mxu0 0
  %4969 = vmatpush1.bf16.msra.mxu0 %v3397
  %4970 = vmatprep.subr.bf16.mxu0 0
  %4971 = vmatpush1.bf16.msra.mxu0 %v3398
  %4972 = vmatprep.subr.bf16.mxu0 0
  %4973 = vmatpush1.bf16.msra.mxu0 %v3399
  %4974 = vmatprep.subr.bf16.mxu0 0
  %4975 = vmatpush1.bf16.msra.mxu0 %v3400
  %4976 = vmatprep.subr.bf16.mxu0 0
  %4977 = vmatpush1.bf16.msra.mxu0 %v3401
  %4978 = vmatprep.subr.bf16.mxu0 0
  %4979 = vmatpush1.bf16.msra.mxu0 %v3402
  %4980 = vmatprep.subr.bf16.mxu0 0
  %4981 = vmatpush1.bf16.msra.mxu0 %v3403
  %4982 = vmatprep.subr.bf16.mxu0 0
  %4983 = vmatpush1.bf16.msra.mxu0 %v3404
  %4984 = vmatprep.subr.bf16.mxu0 0
  %4985 = vmatpush1.bf16.msra.mxu0 %v3405
  %4986 = vmatprep.subr.bf16.mxu0 0
  %4987 = vmatpush1.bf16.msra.mxu0 %v3406
  %4988 = vmatprep.mubr.bf16.mxu0 %v1674
  %4989 = vmatmul.mubr.bf16.gmra.mrb[0].mxu0 %v1673
  %v4990 = vpop.f32.mrb[0].mxu0
  %v4991 = vadd.f32 %v4894, %v4990
  %v4992 = vpop.f32.mrb[0].mxu0
  %v4993 = vpop.f32.mrb[0].mxu0
  %v4994 = vadd.f32 %v4897, %v4993
  %v4995 = vpop.f32.mrb[0].mxu0
  %4996 = vmatprep.mubr.bf16.mxu0 %v1706
  %4997 = vmatmul.mubr.bf16.gmra.mrb[0].mxu0 %v1705
  %v4998 = vpop.f32.mrb[0].mxu0
  %v4999 = vadd.f32 %v4902, %v4998
  %v5000 = vpop.f32.mrb[0].mxu0
  %v5001 = vpop.f32.mrb[0].mxu0
  %v5002 = vadd.f32 %v4905, %v5001
  %v5003 = vpop.f32.mrb[0].mxu0
  %5004 = vmatprep.mubr.bf16.mxu0 %v1738
  %5005 = vmatmul.mubr.bf16.gmra.mrb[0].mxu0 %v1737
  %v5006 = vpop.f32.mrb[0].mxu0
  %v5007 = vadd.f32 %v4910, %v5006
  %v5008 = vpop.f32.mrb[0].mxu0
  %v5009 = vpop.f32.mrb[0].mxu0
  %v5010 = vadd.f32 %v4913, %v5009
  %v5011 = vpop.f32.mrb[0].mxu0
  %5012 = vmatprep.mubr.bf16.mxu0 %v1770
  %5013 = vmatmul.mubr.bf16.gmra.mrb[0].mxu0 %v1769
  %v5014 = vpop.f32.mrb[0].mxu0
  %v5015 = vadd.f32 %v4918, %v5014
  %v5016 = vpop.f32.mrb[0].mxu0
  %v5017 = vpop.f32.mrb[0].mxu0
  %v5018 = vadd.f32 %v4921, %v5017
  %v5019 = vpop.f32.mrb[0].mxu0
  %5020 = vmatprep.mubr.bf16.mxu0 %v1802
  %5021 = vmatmul.mubr.bf16.gmra.mrb[0].mxu0 %v1801
  %v5022 = vpop.f32.mrb[0].mxu0
  %v5023 = vadd.f32 %v4926, %v5022
  %v5024 = vpop.f32.mrb[0].mxu0
  %v5025 = vpop.f32.mrb[0].mxu0
  %v5026 = vadd.f32 %v4929, %v5025
  %v5027 = vpop.f32.mrb[0].mxu0
  %5028 = vmatprep.mubr.bf16.mxu0 %v1834
  %5029 = vmatmul.mubr.bf16.gmra.mrb[0].mxu0 %v1833
  %v5030 = vpop.f32.mrb[0].mxu0
  %v5031 = vadd.f32 %v4934, %v5030
  %v5032 = vpop.f32.mrb[0].mxu0
  %v5033 = vpop.f32.mrb[0].mxu0
  %v5034 = vadd.f32 %v4937, %v5033
  %v5035 = vpop.f32.mrb[0].mxu0
  %5036 = vmatprep.mubr.bf16.mxu0 %v1866
  %5037 = vmatmul.mubr.bf16.gmra.mrb[0].mxu0 %v1865
  %v5038 = vpop.f32.mrb[0].mxu0
  %v5039 = vadd.f32 %v4942, %v5038
  %v5040 = vpop.f32.mrb[0].mxu0
  %v5041 = vpop.f32.mrb[0].mxu0
  %v5042 = vadd.f32 %v4945, %v5041
  %v5043 = vpop.f32.mrb[0].mxu0
  %5044 = vmatprep.mubr.bf16.mxu0 %v1898
  %5045 = vmatmul.mubr.bf16.gmra.mrb[0].mxu0 %v1897
  %v5046 = vpop.f32.mrb[0].mxu0
  %v5047 = vadd.f32 %v4950, %v5046
  %v5048 = vpop.f32.mrb[0].mxu0
  %v5049 = vpop.f32.mrb[0].mxu0
  %v5050 = vadd.f32 %v4953, %v5049
  %v5051 = vpop.f32.mrb[0].mxu0
  %5052 = vdwg.mxu0
  %5053 = vmatprep.subr.bf16.mxu0 0
  %5054 = vmatpush1.bf16.msra.mxu0 %v3407
  %5055 = vmatprep.subr.bf16.mxu0 0
  %5056 = vmatpush1.bf16.msra.mxu0 %v3408
  %5057 = vmatprep.subr.bf16.mxu0 0
  %5058 = vmatpush1.bf16.msra.mxu0 %v3409
  %5059 = vmatprep.subr.bf16.mxu0 0
  %5060 = vmatpush1.bf16.msra.mxu0 %v3410
  %5061 = vmatprep.subr.bf16.mxu0 0
  %5062 = vmatpush1.bf16.msra.mxu0 %v3411
  %5063 = vmatprep.subr.bf16.mxu0 0
  %5064 = vmatpush1.bf16.msra.mxu0 %v3412
  %5065 = vmatprep.subr.bf16.mxu0 0
  %5066 = vmatpush1.bf16.msra.mxu0 %v3413
  %5067 = vmatprep.subr.bf16.mxu0 0
  %5068 = vmatpush1.bf16.msra.mxu0 %v3414
  %5069 = vmatprep.subr.bf16.mxu0 0
  %5070 = vmatpush1.bf16.msra.mxu0 %v3415
  %5071 = vmatprep.subr.bf16.mxu0 0
  %5072 = vmatpush1.bf16.msra.mxu0 %v3416
  %5073 = vmatprep.subr.bf16.mxu0 0
  %5074 = vmatpush1.bf16.msra.mxu0 %v3417
  %5075 = vmatprep.subr.bf16.mxu0 0
  %5076 = vmatpush1.bf16.msra.mxu0 %v3418
  %5077 = vmatprep.subr.bf16.mxu0 0
  %5078 = vmatpush1.bf16.msra.mxu0 %v3419
  %5079 = vmatprep.subr.bf16.mxu0 0
  %5080 = vmatpush1.bf16.msra.mxu0 %v3420
  %5081 = vmatprep.subr.bf16.mxu0 0
  %5082 = vmatpush1.bf16.msra.mxu0 %v3421
  %5083 = vmatprep.subr.bf16.mxu0 0
  %5084 = vmatpush1.bf16.msra.mxu0 %v3422
  %5085 = vmatprep.mubr.bf16.mxu0 %v1676
  %5086 = vmatmul.mubr.bf16.gmra.mrb[0].mxu0 %v1675
  %v5087 = vpop.f32.mrb[0].mxu0
  %v5088 = vadd.f32 %v4991, %v5087
  %v5089 = vpop.f32.mrb[0].mxu0
  %v5090 = vpop.f32.mrb[0].mxu0
  %v5091 = vadd.f32 %v4994, %v5090
  %v5092 = vpop.f32.mrb[0].mxu0
  %5093 = vmatprep.mubr.bf16.mxu0 %v1708
  %5094 = vmatmul.mubr.bf16.gmra.mrb[0].mxu0 %v1707
  %v5095 = vpop.f32.mrb[0].mxu0
  %v5096 = vadd.f32 %v4999, %v5095
  %v5097 = vpop.f32.mrb[0].mxu0
  %v5098 = vpop.f32.mrb[0].mxu0
  %v5099 = vadd.f32 %v5002, %v5098
  %v5100 = vpop.f32.mrb[0].mxu0
  %5101 = vmatprep.mubr.bf16.mxu0 %v1740
  %5102 = vmatmul.mubr.bf16.gmra.mrb[0].mxu0 %v1739
  %v5103 = vpop.f32.mrb[0].mxu0
  %v5104 = vadd.f32 %v5007, %v5103
  %v5105 = vpop.f32.mrb[0].mxu0
  %v5106 = vpop.f32.mrb[0].mxu0
  %v5107 = vadd.f32 %v5010, %v5106
  %v5108 = vpop.f32.mrb[0].mxu0
  %5109 = vmatprep.mubr.bf16.mxu0 %v1772
  %5110 = vmatmul.mubr.bf16.gmra.mrb[0].mxu0 %v1771
  %v5111 = vpop.f32.mrb[0].mxu0
  %v5112 = vadd.f32 %v5015, %v5111
  %v5113 = vpop.f32.mrb[0].mxu0
  %v5114 = vpop.f32.mrb[0].mxu0
  %v5115 = vadd.f32 %v5018, %v5114
  %v5116 = vpop.f32.mrb[0].mxu0
  %5117 = vmatprep.mubr.bf16.mxu0 %v1804
  %5118 = vmatmul.mubr.bf16.gmra.mrb[0].mxu0 %v1803
  %v5119 = vpop.f32.mrb[0].mxu0
  %v5120 = vadd.f32 %v5023, %v5119
  %v5121 = vpop.f32.mrb[0].mxu0
  %v5122 = vpop.f32.mrb[0].mxu0
  %v5123 = vadd.f32 %v5026, %v5122
  %v5124 = vpop.f32.mrb[0].mxu0
  %5125 = vmatprep.mubr.bf16.mxu0 %v1836
  %5126 = vmatmul.mubr.bf16.gmra.mrb[0].mxu0 %v1835
  %v5127 = vpop.f32.mrb[0].mxu0
  %v5128 = vadd.f32 %v5031, %v5127
  %v5129 = vpop.f32.mrb[0].mxu0
  %v5130 = vpop.f32.mrb[0].mxu0
  %v5131 = vadd.f32 %v5034, %v5130
  %v5132 = vpop.f32.mrb[0].mxu0
  %5133 = vmatprep.mubr.bf16.mxu0 %v1868
  %5134 = vmatmul.mubr.bf16.gmra.mrb[0].mxu0 %v1867
  %v5135 = vpop.f32.mrb[0].mxu0
  %v5136 = vadd.f32 %v5039, %v5135
  %v5137 = vpop.f32.mrb[0].mxu0
  %v5138 = vpop.f32.mrb[0].mxu0
  %v5139 = vadd.f32 %v5042, %v5138
  %v5140 = vpop.f32.mrb[0].mxu0
  %5141 = vmatprep.mubr.bf16.mxu0 %v1900
  %5142 = vmatmul.mubr.bf16.gmra.mrb[0].mxu0 %v1899
  %v5143 = vpop.f32.mrb[0].mxu0
  %v5144 = vadd.f32 %v5047, %v5143
  %v5145 = vpop.f32.mrb[0].mxu0
  %v5146 = vpop.f32.mrb[0].mxu0
  %v5147 = vadd.f32 %v5050, %v5146
  %v5148 = vpop.f32.mrb[0].mxu0
  %5149 = vdwg.mxu0
  %5150 = vmatprep.subr.bf16.mxu0 0
  %5151 = vmatpush1.bf16.msra.mxu0 %v3423
  %5152 = vmatprep.subr.bf16.mxu0 0
  %5153 = vmatpush1.bf16.msra.mxu0 %v3424
  %5154 = vmatprep.subr.bf16.mxu0 0
  %5155 = vmatpush1.bf16.msra.mxu0 %v3425
  %5156 = vmatprep.subr.bf16.mxu0 0
  %5157 = vmatpush1.bf16.msra.mxu0 %v3426
  %5158 = vmatprep.subr.bf16.mxu0 0
  %5159 = vmatpush1.bf16.msra.mxu0 %v3427
  %5160 = vmatprep.subr.bf16.mxu0 0
  %5161 = vmatpush1.bf16.msra.mxu0 %v3428
  %5162 = vmatprep.subr.bf16.mxu0 0
  %5163 = vmatpush1.bf16.msra.mxu0 %v3429
  %5164 = vmatprep.subr.bf16.mxu0 0
  %5165 = vmatpush1.bf16.msra.mxu0 %v3430
  %5166 = vmatprep.subr.bf16.mxu0 0
  %5167 = vmatpush1.bf16.msra.mxu0 %v3431
  %5168 = vmatprep.subr.bf16.mxu0 0
  %5169 = vmatpush1.bf16.msra.mxu0 %v3432
  %5170 = vmatprep.subr.bf16.mxu0 0
  %5171 = vmatpush1.bf16.msra.mxu0 %v3433
  %5172 = vmatprep.subr.bf16.mxu0 0
  %5173 = vmatpush1.bf16.msra.mxu0 %v3434
  %5174 = vmatprep.subr.bf16.mxu0 0
  %5175 = vmatpush1.bf16.msra.mxu0 %v3435
  %5176 = vmatprep.subr.bf16.mxu0 0
  %5177 = vmatpush1.bf16.msra.mxu0 %v3436
  %5178 = vmatprep.subr.bf16.mxu0 0
  %5179 = vmatpush1.bf16.msra.mxu0 %v3437
  %5180 = vmatprep.subr.bf16.mxu0 0
  %5181 = vmatpush1.bf16.msra.mxu0 %v3438
  %5182 = vmatprep.mubr.bf16.mxu0 %v1678
  %5183 = vmatmul.mubr.bf16.gmra.mrb[0].mxu0 %v1677
  %v5184 = vpop.f32.mrb[0].mxu0
  %v5185 = vadd.f32 %v5088, %v5184
  %v5186 = vpop.f32.mrb[0].mxu0
  %v5187 = vpop.f32.mrb[0].mxu0
  %v5188 = vadd.f32 %v5091, %v5187
  %v5189 = vpop.f32.mrb[0].mxu0
  %5190 = vmatprep.mubr.bf16.mxu0 %v1710
  %5191 = vmatmul.mubr.bf16.gmra.mrb[0].mxu0 %v1709
  %v5192 = vpop.f32.mrb[0].mxu0
  %v5193 = vadd.f32 %v5096, %v5192
  %v5194 = vpop.f32.mrb[0].mxu0
  %v5195 = vpop.f32.mrb[0].mxu0
  %v5196 = vadd.f32 %v5099, %v5195
  %v5197 = vpop.f32.mrb[0].mxu0
  %5198 = vmatprep.mubr.bf16.mxu0 %v1742
  %5199 = vmatmul.mubr.bf16.gmra.mrb[0].mxu0 %v1741
  %v5200 = vpop.f32.mrb[0].mxu0
  %v5201 = vadd.f32 %v5104, %v5200
  %v5202 = vpop.f32.mrb[0].mxu0
  %v5203 = vpop.f32.mrb[0].mxu0
  %v5204 = vadd.f32 %v5107, %v5203
  %v5205 = vpop.f32.mrb[0].mxu0
  %5206 = vmatprep.mubr.bf16.mxu0 %v1774
  %5207 = vmatmul.mubr.bf16.gmra.mrb[0].mxu0 %v1773
  %v5208 = vpop.f32.mrb[0].mxu0
  %v5209 = vadd.f32 %v5112, %v5208
  %v5210 = vpop.f32.mrb[0].mxu0
  %v5211 = vpop.f32.mrb[0].mxu0
  %v5212 = vadd.f32 %v5115, %v5211
  %v5213 = vpop.f32.mrb[0].mxu0
  %5214 = vmatprep.mubr.bf16.mxu0 %v1806
  %5215 = vmatmul.mubr.bf16.gmra.mrb[0].mxu0 %v1805
  %v5216 = vpop.f32.mrb[0].mxu0
  %v5217 = vadd.f32 %v5120, %v5216
  %v5218 = vpop.f32.mrb[0].mxu0
  %v5219 = vpop.f32.mrb[0].mxu0
  %v5220 = vadd.f32 %v5123, %v5219
  %v5221 = vpop.f32.mrb[0].mxu0
  %5222 = vmatprep.mubr.bf16.mxu0 %v1838
  %5223 = vmatmul.mubr.bf16.gmra.mrb[0].mxu0 %v1837
  %v5224 = vpop.f32.mrb[0].mxu0
  %v5225 = vadd.f32 %v5128, %v5224
  %v5226 = vpop.f32.mrb[0].mxu0
  %v5227 = vpop.f32.mrb[0].mxu0
  %v5228 = vadd.f32 %v5131, %v5227
  %v5229 = vpop.f32.mrb[0].mxu0
  %5230 = vmatprep.mubr.bf16.mxu0 %v1870
  %5231 = vmatmul.mubr.bf16.gmra.mrb[0].mxu0 %v1869
  %v5232 = vpop.f32.mrb[0].mxu0
  %v5233 = vadd.f32 %v5136, %v5232
  %v5234 = vpop.f32.mrb[0].mxu0
  %v5235 = vpop.f32.mrb[0].mxu0
  %v5236 = vadd.f32 %v5139, %v5235
  %v5237 = vpop.f32.mrb[0].mxu0
  %5238 = vmatprep.mubr.bf16.mxu0 %v1902
  %5239 = vmatmul.mubr.bf16.gmra.mrb[0].mxu0 %v1901
  %v5240 = vpop.f32.mrb[0].mxu0
  %v5241 = vadd.f32 %v5144, %v5240
  %v5242 = vpop.f32.mrb[0].mxu0
  %v5243 = vpop.f32.mrb[0].mxu0
  %v5244 = vadd.f32 %v5147, %v5243
  %v5245 = vpop.f32.mrb[0].mxu0
  %5246 = vdwg.mxu0
  %vm5247 = vcmp.gt.f32.partialorder %v5185, 0.0
  %vm5248 = vcmp.gt.f32.partialorder %v5188, 0.0
  %vm5249 = vcmp.gt.f32.partialorder %v5193, 0.0
  %vm5250 = vcmp.gt.f32.partialorder %v5196, 0.0
  %vm5251 = vcmp.gt.f32.partialorder %v5201, 0.0
  %vm5252 = vcmp.gt.f32.partialorder %v5204, 0.0
  %vm5253 = vcmp.gt.f32.partialorder %v5209, 0.0
  %vm5254 = vcmp.gt.f32.partialorder %v5212, 0.0
  %vm5255 = vcmp.gt.f32.partialorder %v5217, 0.0
  %vm5256 = vcmp.gt.f32.partialorder %v5220, 0.0
  %vm5257 = vcmp.gt.f32.partialorder %v5225, 0.0
  %vm5258 = vcmp.gt.f32.partialorder %v5228, 0.0
  %vm5259 = vcmp.gt.f32.partialorder %v5233, 0.0
  %vm5260 = vcmp.gt.f32.partialorder %v5236, 0.0
  %vm5261 = vcmp.gt.f32.partialorder %v5241, 0.0
  %vm5262 = vcmp.gt.f32.partialorder %v5244, 0.0
  %v5263 = vmul.f32 %v5185, 0.2
  %v5264 = vmul.f32 %v5188, 0.2
  %v5265 = vmul.f32 %v5193, 0.2
  %v5266 = vmul.f32 %v5196, 0.2
  %v5267 = vmul.f32 %v5201, 0.2
  %v5268 = vmul.f32 %v5204, 0.2
  %v5269 = vmul.f32 %v5209, 0.2
  %v5270 = vmul.f32 %v5212, 0.2
  %v5271 = vmul.f32 %v5217, 0.2
  %v5272 = vmul.f32 %v5220, 0.2
  %v5273 = vmul.f32 %v5225, 0.2
  %v5274 = vmul.f32 %v5228, 0.2
  %v5275 = vmul.f32 %v5233, 0.2
  %v5276 = vmul.f32 %v5236, 0.2
  %v5277 = vmul.f32 %v5241, 0.2
  %v5278 = vmul.f32 %v5244, 0.2
  %v5279 = vsel %vm5247, %v5185, %v5263
  %v5280 = vsel %vm5248, %v5188, %v5264
  %v5281 = vsel %vm5249, %v5193, %v5265
  %v5282 = vsel %vm5250, %v5196, %v5266
  %v5283 = vsel %vm5251, %v5201, %v5267
  %v5284 = vsel %vm5252, %v5204, %v5268
  %v5285 = vsel %vm5253, %v5209, %v5269
  %v5286 = vsel %vm5254, %v5212, %v5270
  %v5287 = vsel %vm5255, %v5217, %v5271
  %v5288 = vsel %vm5256, %v5220, %v5272
  %v5289 = vsel %vm5257, %v5225, %v5273
  %v5290 = vsel %vm5258, %v5228, %v5274
  %v5291 = vsel %vm5259, %v5233, %v5275
  %v5292 = vsel %vm5260, %v5236, %v5276
  %v5293 = vsel %vm5261, %v5241, %v5277
  %v5294 = vsel %vm5262, %v5244, %v5278
  %v5295 = vpack.c.bf16 %v5280, %v5279
  %v5296 = vpack.c.bf16 %v5282, %v5281
  %v5297 = vpack.c.bf16 %v5284, %v5283
  %v5298 = vpack.c.bf16 %v5286, %v5285
  %v5299 = vpack.c.bf16 %v5288, %v5287
  %v5300 = vpack.c.bf16 %v5290, %v5289
  %v5301 = vpack.c.bf16 %v5292, %v5291
  %v5302 = vpack.c.bf16 %v5294, %v5293
  %v5311 = vunpack.c.l.b16 %v5295
  %v5312 = vunpack.c.h.b16 %v5295
  %v5313 = vunpack.c.l.b16 %v5296
  %v5314 = vunpack.c.h.b16 %v5296
  %v5315 = vunpack.c.l.b16 %v5297
  %v5316 = vunpack.c.h.b16 %v5297
  %v5317 = vunpack.c.l.b16 %v5298
  %v5318 = vunpack.c.h.b16 %v5298
  %v5319 = vunpack.c.l.b16 %v5299
  %v5320 = vunpack.c.h.b16 %v5299
  %v5321 = vunpack.c.l.b16 %v5300
  %v5322 = vunpack.c.h.b16 %v5300
  %v5323 = vunpack.c.l.b16 %v5301
  %v5324 = vunpack.c.h.b16 %v5301
  %v5325 = vunpack.c.l.b16 %v5302
  %v5326 = vunpack.c.h.b16 %v5302
  %v5327 = vpack.c.b16 %v5311, %v5311
  %v5328 = vpack.c.b16 %v5312, %v5312
  %v5329 = vpack.c.b16 %v5313, %v5313
  %v5330 = vpack.c.b16 %v5314, %v5314
  %v5331 = vpack.c.b16 %v5315, %v5315
  %v5332 = vpack.c.b16 %v5316, %v5316
  %v5333 = vpack.c.b16 %v5317, %v5317
  %v5334 = vpack.c.b16 %v5318, %v5318
  %v5335 = vpack.c.b16 %v5319, %v5319
  %v5336 = vpack.c.b16 %v5320, %v5320
  %v5337 = vpack.c.b16 %v5321, %v5321
  %v5338 = vpack.c.b16 %v5322, %v5322
  %v5339 = vpack.c.b16 %v5323, %v5323
  %v5340 = vpack.c.b16 %v5324, %v5324
  %v5341 = vpack.c.b16 %v5325, %v5325
  %v5342 = vpack.c.b16 %v5326, %v5326
  %5359 = vst [vmem:[%s3] sm:$0xf] %v5327
  %5360 = vst [vmem:[%s3 + $0x4] sm:$0xf] %v5328
  %5361 = vst [vmem:[%s3 + $0x8] sm:$0xf] %v5329
  %5362 = vst [vmem:[%s3 + $0xc] sm:$0xf] %v5330
  %5363 = vst [vmem:[%s3 + $0x10] sm:$0xf] %v5331
  %5364 = vst [vmem:[%s3 + $0x14] sm:$0xf] %v5332
  %5365 = vst [vmem:[%s3 + $0x18] sm:$0xf] %v5333
  %5366 = vst [vmem:[%s3 + $0x1c] sm:$0xf] %v5334
  %5367 = vst [vmem:[%s3 + $0x20] sm:$0xf] %v5335
  %5368 = vst [vmem:[%s3 + $0x24] sm:$0xf] %v5336
  %5369 = vst [vmem:[%s3 + $0x28] sm:$0xf] %v5337
  %5370 = vst [vmem:[%s3 + $0x2c] sm:$0xf] %v5338
  %5371 = vst [vmem:[%s3 + $0x30] sm:$0xf] %v5339
  %5372 = vst [vmem:[%s3 + $0x34] sm:$0xf] %v5340
  %5373 = vst [vmem:[%s3 + $0x38] sm:$0xf] %v5341
  %5374 = vst [vmem:[%s3 + $0x3c] sm:$0xf] %v5342
  // Predicated region
  $region14: #{adversary_forward.6} parent=0 // pred_check
    _
  $region15: #{adversary_forward.6} parent=0 // pred_check_branch
    %5376 = sbr.rel (0) target = $region17
  $region16: #{adversary_forward.6} parent=0 // pred_region
    _
  $region17: #{adversary_forward.6} parent=0 // pred_fallthru
    _
  // Predicated region
  $region18: #{adversary_forward.6} parent=0 // pred_check
    _
  $region19: #{adversary_forward.6} parent=0 // pred_check_branch
    %5378 = sbr.rel (0) target = $region21
  $region20: #{adversary_forward.6} parent=0 // pred_region
    _
  $region21: #{adversary_forward.6} parent=0 // pred_fallthru
    _

// kernel: adversary_forward.7
$region0: #{adversary_forward.7}
  #allocation0 [shape = 'u32[]', space=smem, size = 0x4, offset = 0x4, fixed_abs, tag = 'smem constant byte address 0x4 - core index']
  #allocation1 [shape = 'u32[144,128]{1,0:T(1,128)}', space=vmem, size = 0x12000, scoped, tag = 'internal scratch']
  #allocation2 [shape = 'f32[1,1]{1,0:T(1,128)S(1)}', space=vmem, size = 0x200, scoped, tag = 'scoped memory for adversary_forward.7']
  %s0 = inlined_call_operand.vmem [shape: bf16[8192,128], index: 0, kind: input, shape index: {}]
  %s1 = inlined_call_operand.vmem [shape: bf16[1,8192], index: 1, kind: input, shape index: {}]
  %s2 = inlined_call_operand.<no memory space> [shape: f32[1,1], index: 2, kind: input, shape index: {}]
  %s3 = inlined_call_operand.vmem [shape: f32[1,128], index: 3, kind: output, shape index: {}]
  %s4 = sld [smem:[#allocation0]]
  $region22: #{adversary_forward.7} parent=0
    _
  %s6 = ssub.s32 1, %s4
  %s7 = scalar_select 0, %s6, %s4
  %v8 = vstv %s2
  %9 = vst [vmem:[#allocation2] sm:$0x1] %v8
  // Predicated region
  $region2: #{adversary_forward.7} parent=0 // pred_check
    _
  $region3: #{adversary_forward.7} parent=0 // pred_check_branch
    %11 = sbr.rel (0) target = $region5
  $region4: #{adversary_forward.7} parent=0 // pred_region
    _
  $region5: #{adversary_forward.7} parent=0 // pred_fallthru
    _
  // Predicated region
  $region6: #{adversary_forward.7} parent=0 // pred_check
    _
  $region7: #{adversary_forward.7} parent=0 // pred_check_branch
    %13 = sbr.rel (0) target = $region9
  $region8: #{adversary_forward.7} parent=0 // pred_region
    _
  $region9: #{adversary_forward.7} parent=0 // pred_fallthru
    _
  // Predicated region
  $region10: #{adversary_forward.7} parent=0 // pred_check
    _
  $region11: #{adversary_forward.7} parent=0 // pred_check_branch
    %15 = sbr.rel (0) target = $region13
  $region12: #{adversary_forward.7} parent=0 // pred_region
    _
  $region13: #{adversary_forward.7} parent=0 // pred_fallthru
    _
  %v17 = vld [vmem:[%s1] sm:$0xff]
  %v18 = vld [vmem:[%s1 + $0x8] sm:$0xff]
  %v19 = vld [vmem:[%s1 + $0x10] sm:$0xff]
  %v20 = vld [vmem:[%s1 + $0x18] sm:$0xff]
  %v21 = vld [vmem:[%s1 + $0x20] sm:$0xff]
  %v22 = vld [vmem:[%s1 + $0x28] sm:$0xff]
  %v23 = vld [vmem:[%s1 + $0x30] sm:$0xff]
  %v24 = vld [vmem:[%s1 + $0x38] sm:$0xff]
  %v25 = vld [vmem:[%s0] sm:$0xf]
  %v26 = vld [vmem:[%s0 + $0x4] sm:$0xf]
  %v27 = vld [vmem:[%s0 + $0x8] sm:$0xf]
  %v28 = vld [vmem:[%s0 + $0xc] sm:$0xf]
  %v29 = vld [vmem:[%s0 + $0x10] sm:$0xf]
  %v30 = vld [vmem:[%s0 + $0x14] sm:$0xf]
  %v31 = vld [vmem:[%s0 + $0x18] sm:$0xf]
  %v32 = vld [vmem:[%s0 + $0x1c] sm:$0xf]
  %v33 = vld [vmem:[%s0 + $0x20] sm:$0xf]
  %v34 = vld [vmem:[%s0 + $0x24] sm:$0xf]
  %v35 = vld [vmem:[%s0 + $0x28] sm:$0xf]
  %v36 = vld [vmem:[%s0 + $0x2c] sm:$0xf]
  %v37 = vld [vmem:[%s0 + $0x30] sm:$0xf]
  %v38 = vld [vmem:[%s0 + $0x34] sm:$0xf]
  %v39 = vld [vmem:[%s0 + $0x38] sm:$0xf]
  %v40 = vld [vmem:[%s0 + $0x3c] sm:$0xf]
  %v41 = vld [vmem:[%s0 + $0x40] sm:$0xf]
  %v42 = vld [vmem:[%s0 + $0x44] sm:$0xf]
  %v43 = vld [vmem:[%s0 + $0x48] sm:$0xf]
  %v44 = vld [vmem:[%s0 + $0x4c] sm:$0xf]
  %v45 = vld [vmem:[%s0 + $0x50] sm:$0xf]
  %v46 = vld [vmem:[%s0 + $0x54] sm:$0xf]
  %v47 = vld [vmem:[%s0 + $0x58] sm:$0xf]
  %v48 = vld [vmem:[%s0 + $0x5c] sm:$0xf]
  %v49 = vld [vmem:[%s0 + $0x60] sm:$0xf]
  %v50 = vld [vmem:[%s0 + $0x64] sm:$0xf]
  %v51 = vld [vmem:[%s0 + $0x68] sm:$0xf]
  %v52 = vld [vmem:[%s0 + $0x6c] sm:$0xf]
  %v53 = vld [vmem:[%s0 + $0x70] sm:$0xf]
  %v54 = vld [vmem:[%s0 + $0x74] sm:$0xf]
  %v55 = vld [vmem:[%s0 + $0x78] sm:$0xf]
  %v56 = vld [vmem:[%s0 + $0x7c] sm:$0xf]
  %v57 = vld [vmem:[%s0 + $0x80] sm:$0xf]
  %v58 = vld [vmem:[%s0 + $0x84] sm:$0xf]
  %v59 = vld [vmem:[%s0 + $0x88] sm:$0xf]
  %v60 = vld [vmem:[%s0 + $0x8c] sm:$0xf]
  %v61 = vld [vmem:[%s0 + $0x90] sm:$0xf]
  %v62 = vld [vmem:[%s0 + $0x94] sm:$0xf]
  %v63 = vld [vmem:[%s0 + $0x98] sm:$0xf]
  %v64 = vld [vmem:[%s0 + $0x9c] sm:$0xf]
  %v65 = vld [vmem:[%s0 + $0xa0] sm:$0xf]
  %v66 = vld [vmem:[%s0 + $0xa4] sm:$0xf]
  %v67 = vld [vmem:[%s0 + $0xa8] sm:$0xf]
  %v68 = vld [vmem:[%s0 + $0xac] sm:$0xf]
  %v69 = vld [vmem:[%s0 + $0xb0] sm:$0xf]
  %v70 = vld [vmem:[%s0 + $0xb4] sm:$0xf]
  %v71 = vld [vmem:[%s0 + $0xb8] sm:$0xf]
  %v72 = vld [vmem:[%s0 + $0xbc] sm:$0xf]
  %v73 = vld [vmem:[%s0 + $0xc0] sm:$0xf]
  %v74 = vld [vmem:[%s0 + $0xc4] sm:$0xf]
  %v75 = vld [vmem:[%s0 + $0xc8] sm:$0xf]
  %v76 = vld [vmem:[%s0 + $0xcc] sm:$0xf]
  %v77 = vld [vmem:[%s0 + $0xd0] sm:$0xf]
  %v78 = vld [vmem:[%s0 + $0xd4] sm:$0xf]
  %v79 = vld [vmem:[%s0 + $0xd8] sm:$0xf]
  %v80 = vld [vmem:[%s0 + $0xdc] sm:$0xf]
  %v81 = vld [vmem:[%s0 + $0xe0] sm:$0xf]
  %v82 = vld [vmem:[%s0 + $0xe4] sm:$0xf]
  %v83 = vld [vmem:[%s0 + $0xe8] sm:$0xf]
  %v84 = vld [vmem:[%s0 + $0xec] sm:$0xf]
  %v85 = vld [vmem:[%s0 + $0xf0] sm:$0xf]
  %v86 = vld [vmem:[%s0 + $0xf4] sm:$0xf]
  %v87 = vld [vmem:[%s0 + $0xf8] sm:$0xf]
  %v88 = vld [vmem:[%s0 + $0xfc] sm:$0xf]
  %v89 = vld [vmem:[%s0 + $0x100] sm:$0xf]
  %v90 = vld [vmem:[%s0 + $0x104] sm:$0xf]
  %v91 = vld [vmem:[%s0 + $0x108] sm:$0xf]
  %v92 = vld [vmem:[%s0 + $0x10c] sm:$0xf]
  %v93 = vld [vmem:[%s0 + $0x110] sm:$0xf]
  %v94 = vld [vmem:[%s0 + $0x114] sm:$0xf]
  %v95 = vld [vmem:[%s0 + $0x118] sm:$0xf]
  %v96 = vld [vmem:[%s0 + $0x11c] sm:$0xf]
  %v97 = vld [vmem:[%s0 + $0x120] sm:$0xf]
  %v98 = vld [vmem:[%s0 + $0x124] sm:$0xf]
  %v99 = vld [vmem:[%s0 + $0x128] sm:$0xf]
  %v100 = vld [vmem:[%s0 + $0x12c] sm:$0xf]
  %v101 = vld [vmem:[%s0 + $0x130] sm:$0xf]
  %v102 = vld [vmem:[%s0 + $0x134] sm:$0xf]
  %v103 = vld [vmem:[%s0 + $0x138] sm:$0xf]
  %v104 = vld [vmem:[%s0 + $0x13c] sm:$0xf]
  %v105 = vld [vmem:[%s0 + $0x140] sm:$0xf]
  %v106 = vld [vmem:[%s0 + $0x144] sm:$0xf]
  %v107 = vld [vmem:[%s0 + $0x148] sm:$0xf]
  %v108 = vld [vmem:[%s0 + $0x14c] sm:$0xf]
  %v109 = vld [vmem:[%s0 + $0x150] sm:$0xf]
  %v110 = vld [vmem:[%s0 + $0x154] sm:$0xf]
  %v111 = vld [vmem:[%s0 + $0x158] sm:$0xf]
  %v112 = vld [vmem:[%s0 + $0x15c] sm:$0xf]
  %v113 = vld [vmem:[%s0 + $0x160] sm:$0xf]
  %v114 = vld [vmem:[%s0 + $0x164] sm:$0xf]
  %v115 = vld [vmem:[%s0 + $0x168] sm:$0xf]
  %v116 = vld [vmem:[%s0 + $0x16c] sm:$0xf]
  %v117 = vld [vmem:[%s0 + $0x170] sm:$0xf]
  %v118 = vld [vmem:[%s0 + $0x174] sm:$0xf]
  %v119 = vld [vmem:[%s0 + $0x178] sm:$0xf]
  %v120 = vld [vmem:[%s0 + $0x17c] sm:$0xf]
  %v121 = vld [vmem:[%s0 + $0x180] sm:$0xf]
  %v122 = vld [vmem:[%s0 + $0x184] sm:$0xf]
  %v123 = vld [vmem:[%s0 + $0x188] sm:$0xf]
  %v124 = vld [vmem:[%s0 + $0x18c] sm:$0xf]
  %v125 = vld [vmem:[%s0 + $0x190] sm:$0xf]
  %v126 = vld [vmem:[%s0 + $0x194] sm:$0xf]
  %v127 = vld [vmem:[%s0 + $0x198] sm:$0xf]
  %v128 = vld [vmem:[%s0 + $0x19c] sm:$0xf]
  %v129 = vld [vmem:[%s0 + $0x1a0] sm:$0xf]
  %v130 = vld [vmem:[%s0 + $0x1a4] sm:$0xf]
  %v131 = vld [vmem:[%s0 + $0x1a8] sm:$0xf]
  %v132 = vld [vmem:[%s0 + $0x1ac] sm:$0xf]
  %v133 = vld [vmem:[%s0 + $0x1b0] sm:$0xf]
  %v134 = vld [vmem:[%s0 + $0x1b4] sm:$0xf]
  %v135 = vld [vmem:[%s0 + $0x1b8] sm:$0xf]
  %v136 = vld [vmem:[%s0 + $0x1bc] sm:$0xf]
  %v137 = vld [vmem:[%s0 + $0x1c0] sm:$0xf]
  %v138 = vld [vmem:[%s0 + $0x1c4] sm:$0xf]
  %v139 = vld [vmem:[%s0 + $0x1c8] sm:$0xf]
  %v140 = vld [vmem:[%s0 + $0x1cc] sm:$0xf]
  %v141 = vld [vmem:[%s0 + $0x1d0] sm:$0xf]
  %v142 = vld [vmem:[%s0 + $0x1d4] sm:$0xf]
  %v143 = vld [vmem:[%s0 + $0x1d8] sm:$0xf]
  %v144 = vld [vmem:[%s0 + $0x1dc] sm:$0xf]
  %v145 = vld [vmem:[%s0 + $0x1e0] sm:$0xf]
  %v146 = vld [vmem:[%s0 + $0x1e4] sm:$0xf]
  %v147 = vld [vmem:[%s0 + $0x1e8] sm:$0xf]
  %v148 = vld [vmem:[%s0 + $0x1ec] sm:$0xf]
  %v149 = vld [vmem:[%s0 + $0x1f0] sm:$0xf]
  %v150 = vld [vmem:[%s0 + $0x1f4] sm:$0xf]
  %v151 = vld [vmem:[%s0 + $0x1f8] sm:$0xf]
  %v152 = vld [vmem:[%s0 + $0x1fc] sm:$0xf]
  %v153 = vld [vmem:[%s0 + $0x200] sm:$0xf]
  %v154 = vld [vmem:[%s0 + $0x204] sm:$0xf]
  %v155 = vld [vmem:[%s0 + $0x208] sm:$0xf]
  %v156 = vld [vmem:[%s0 + $0x20c] sm:$0xf]
  %v157 = vld [vmem:[%s0 + $0x210] sm:$0xf]
  %v158 = vld [vmem:[%s0 + $0x214] sm:$0xf]
  %v159 = vld [vmem:[%s0 + $0x218] sm:$0xf]
  %v160 = vld [vmem:[%s0 + $0x21c] sm:$0xf]
  %v161 = vld [vmem:[%s0 + $0x220] sm:$0xf]
  %v162 = vld [vmem:[%s0 + $0x224] sm:$0xf]
  %v163 = vld [vmem:[%s0 + $0x228] sm:$0xf]
  %v164 = vld [vmem:[%s0 + $0x22c] sm:$0xf]
  %v165 = vld [vmem:[%s0 + $0x230] sm:$0xf]
  %v166 = vld [vmem:[%s0 + $0x234] sm:$0xf]
  %v167 = vld [vmem:[%s0 + $0x238] sm:$0xf]
  %v168 = vld [vmem:[%s0 + $0x23c] sm:$0xf]
  %v169 = vld [vmem:[%s0 + $0x240] sm:$0xf]
  %v170 = vld [vmem:[%s0 + $0x244] sm:$0xf]
  %v171 = vld [vmem:[%s0 + $0x248] sm:$0xf]
  %v172 = vld [vmem:[%s0 + $0x24c] sm:$0xf]
  %v173 = vld [vmem:[%s0 + $0x250] sm:$0xf]
  %v174 = vld [vmem:[%s0 + $0x254] sm:$0xf]
  %v175 = vld [vmem:[%s0 + $0x258] sm:$0xf]
  %v176 = vld [vmem:[%s0 + $0x25c] sm:$0xf]
  %v177 = vld [vmem:[%s0 + $0x260] sm:$0xf]
  %v178 = vld [vmem:[%s0 + $0x264] sm:$0xf]
  %v179 = vld [vmem:[%s0 + $0x268] sm:$0xf]
  %v180 = vld [vmem:[%s0 + $0x26c] sm:$0xf]
  %v181 = vld [vmem:[%s0 + $0x270] sm:$0xf]
  %v182 = vld [vmem:[%s0 + $0x274] sm:$0xf]
  %v183 = vld [vmem:[%s0 + $0x278] sm:$0xf]
  %v184 = vld [vmem:[%s0 + $0x27c] sm:$0xf]
  %v185 = vld [vmem:[%s0 + $0x280] sm:$0xf]
  %v186 = vld [vmem:[%s0 + $0x284] sm:$0xf]
  %v187 = vld [vmem:[%s0 + $0x288] sm:$0xf]
  %v188 = vld [vmem:[%s0 + $0x28c] sm:$0xf]
  %v189 = vld [vmem:[%s0 + $0x290] sm:$0xf]
  %v190 = vld [vmem:[%s0 + $0x294] sm:$0xf]
  %v191 = vld [vmem:[%s0 + $0x298] sm:$0xf]
  %v192 = vld [vmem:[%s0 + $0x29c] sm:$0xf]
  %v193 = vld [vmem:[%s0 + $0x2a0] sm:$0xf]
  %v194 = vld [vmem:[%s0 + $0x2a4] sm:$0xf]
  %v195 = vld [vmem:[%s0 + $0x2a8] sm:$0xf]
  %v196 = vld [vmem:[%s0 + $0x2ac] sm:$0xf]
  %v197 = vld [vmem:[%s0 + $0x2b0] sm:$0xf]
  %v198 = vld [vmem:[%s0 + $0x2b4] sm:$0xf]
  %v199 = vld [vmem:[%s0 + $0x2b8] sm:$0xf]
  %v200 = vld [vmem:[%s0 + $0x2bc] sm:$0xf]
  %v201 = vld [vmem:[%s0 + $0x2c0] sm:$0xf]
  %v202 = vld [vmem:[%s0 + $0x2c4] sm:$0xf]
  %v203 = vld [vmem:[%s0 + $0x2c8] sm:$0xf]
  %v204 = vld [vmem:[%s0 + $0x2cc] sm:$0xf]
  %v205 = vld [vmem:[%s0 + $0x2d0] sm:$0xf]
  %v206 = vld [vmem:[%s0 + $0x2d4] sm:$0xf]
  %v207 = vld [vmem:[%s0 + $0x2d8] sm:$0xf]
  %v208 = vld [vmem:[%s0 + $0x2dc] sm:$0xf]
  %v209 = vld [vmem:[%s0 + $0x2e0] sm:$0xf]
  %v210 = vld [vmem:[%s0 + $0x2e4] sm:$0xf]
  %v211 = vld [vmem:[%s0 + $0x2e8] sm:$0xf]
  %v212 = vld [vmem:[%s0 + $0x2ec] sm:$0xf]
  %v213 = vld [vmem:[%s0 + $0x2f0] sm:$0xf]
  %v214 = vld [vmem:[%s0 + $0x2f4] sm:$0xf]
  %v215 = vld [vmem:[%s0 + $0x2f8] sm:$0xf]
  %v216 = vld [vmem:[%s0 + $0x2fc] sm:$0xf]
  %v217 = vld [vmem:[%s0 + $0x300] sm:$0xf]
  %v218 = vld [vmem:[%s0 + $0x304] sm:$0xf]
  %v219 = vld [vmem:[%s0 + $0x308] sm:$0xf]
  %v220 = vld [vmem:[%s0 + $0x30c] sm:$0xf]
  %v221 = vld [vmem:[%s0 + $0x310] sm:$0xf]
  %v222 = vld [vmem:[%s0 + $0x314] sm:$0xf]
  %v223 = vld [vmem:[%s0 + $0x318] sm:$0xf]
  %v224 = vld [vmem:[%s0 + $0x31c] sm:$0xf]
  %v225 = vld [vmem:[%s0 + $0x320] sm:$0xf]
  %v226 = vld [vmem:[%s0 + $0x324] sm:$0xf]
  %v227 = vld [vmem:[%s0 + $0x328] sm:$0xf]
  %v228 = vld [vmem:[%s0 + $0x32c] sm:$0xf]
  %v229 = vld [vmem:[%s0 + $0x330] sm:$0xf]
  %v230 = vld [vmem:[%s0 + $0x334] sm:$0xf]
  %v231 = vld [vmem:[%s0 + $0x338] sm:$0xf]
  %v232 = vld [vmem:[%s0 + $0x33c] sm:$0xf]
  %v233 = vld [vmem:[%s0 + $0x340] sm:$0xf]
  %v234 = vld [vmem:[%s0 + $0x344] sm:$0xf]
  %v235 = vld [vmem:[%s0 + $0x348] sm:$0xf]
  %v236 = vld [vmem:[%s0 + $0x34c] sm:$0xf]
  %v237 = vld [vmem:[%s0 + $0x350] sm:$0xf]
  %v238 = vld [vmem:[%s0 + $0x354] sm:$0xf]
  %v239 = vld [vmem:[%s0 + $0x358] sm:$0xf]
  %v240 = vld [vmem:[%s0 + $0x35c] sm:$0xf]
  %v241 = vld [vmem:[%s0 + $0x360] sm:$0xf]
  %v242 = vld [vmem:[%s0 + $0x364] sm:$0xf]
  %v243 = vld [vmem:[%s0 + $0x368] sm:$0xf]
  %v244 = vld [vmem:[%s0 + $0x36c] sm:$0xf]
  %v245 = vld [vmem:[%s0 + $0x370] sm:$0xf]
  %v246 = vld [vmem:[%s0 + $0x374] sm:$0xf]
  %v247 = vld [vmem:[%s0 + $0x378] sm:$0xf]
  %v248 = vld [vmem:[%s0 + $0x37c] sm:$0xf]
  %v249 = vld [vmem:[%s0 + $0x380] sm:$0xf]
  %v250 = vld [vmem:[%s0 + $0x384] sm:$0xf]
  %v251 = vld [vmem:[%s0 + $0x388] sm:$0xf]
  %v252 = vld [vmem:[%s0 + $0x38c] sm:$0xf]
  %v253 = vld [vmem:[%s0 + $0x390] sm:$0xf]
  %v254 = vld [vmem:[%s0 + $0x394] sm:$0xf]
  %v255 = vld [vmem:[%s0 + $0x398] sm:$0xf]
  %v256 = vld [vmem:[%s0 + $0x39c] sm:$0xf]
  %v257 = vld [vmem:[%s0 + $0x3a0] sm:$0xf]
  %v258 = vld [vmem:[%s0 + $0x3a4] sm:$0xf]
  %v259 = vld [vmem:[%s0 + $0x3a8] sm:$0xf]
  %v260 = vld [vmem:[%s0 + $0x3ac] sm:$0xf]
  %v261 = vld [vmem:[%s0 + $0x3b0] sm:$0xf]
  %v262 = vld [vmem:[%s0 + $0x3b4] sm:$0xf]
  %v263 = vld [vmem:[%s0 + $0x3b8] sm:$0xf]
  %v264 = vld [vmem:[%s0 + $0x3bc] sm:$0xf]
  %v265 = vld [vmem:[%s0 + $0x3c0] sm:$0xf]
  %v266 = vld [vmem:[%s0 + $0x3c4] sm:$0xf]
  %v267 = vld [vmem:[%s0 + $0x3c8] sm:$0xf]
  %v268 = vld [vmem:[%s0 + $0x3cc] sm:$0xf]
  %v269 = vld [vmem:[%s0 + $0x3d0] sm:$0xf]
  %v270 = vld [vmem:[%s0 + $0x3d4] sm:$0xf]
  %v271 = vld [vmem:[%s0 + $0x3d8] sm:$0xf]
  %v272 = vld [vmem:[%s0 + $0x3dc] sm:$0xf]
  %v273 = vld [vmem:[%s0 + $0x3e0] sm:$0xf]
  %v274 = vld [vmem:[%s0 + $0x3e4] sm:$0xf]
  %v275 = vld [vmem:[%s0 + $0x3e8] sm:$0xf]
  %v276 = vld [vmem:[%s0 + $0x3ec] sm:$0xf]
  %v277 = vld [vmem:[%s0 + $0x3f0] sm:$0xf]
  %v278 = vld [vmem:[%s0 + $0x3f4] sm:$0xf]
  %v279 = vld [vmem:[%s0 + $0x3f8] sm:$0xf]
  %v280 = vld [vmem:[%s0 + $0x3fc] sm:$0xf]
  %v281 = vld [vmem:[%s0 + $0x400] sm:$0xf]
  %v282 = vld [vmem:[%s0 + $0x404] sm:$0xf]
  %v283 = vld [vmem:[%s0 + $0x408] sm:$0xf]
  %v284 = vld [vmem:[%s0 + $0x40c] sm:$0xf]
  %v285 = vld [vmem:[%s0 + $0x410] sm:$0xf]
  %v286 = vld [vmem:[%s0 + $0x414] sm:$0xf]
  %v287 = vld [vmem:[%s0 + $0x418] sm:$0xf]
  %v288 = vld [vmem:[%s0 + $0x41c] sm:$0xf]
  %v289 = vld [vmem:[%s0 + $0x420] sm:$0xf]
  %v290 = vld [vmem:[%s0 + $0x424] sm:$0xf]
  %v291 = vld [vmem:[%s0 + $0x428] sm:$0xf]
  %v292 = vld [vmem:[%s0 + $0x42c] sm:$0xf]
  %v293 = vld [vmem:[%s0 + $0x430] sm:$0xf]
  %v294 = vld [vmem:[%s0 + $0x434] sm:$0xf]
  %v295 = vld [vmem:[%s0 + $0x438] sm:$0xf]
  %v296 = vld [vmem:[%s0 + $0x43c] sm:$0xf]
  %v297 = vld [vmem:[%s0 + $0x440] sm:$0xf]
  %v298 = vld [vmem:[%s0 + $0x444] sm:$0xf]
  %v299 = vld [vmem:[%s0 + $0x448] sm:$0xf]
  %v300 = vld [vmem:[%s0 + $0x44c] sm:$0xf]
  %v301 = vld [vmem:[%s0 + $0x450] sm:$0xf]
  %v302 = vld [vmem:[%s0 + $0x454] sm:$0xf]
  %v303 = vld [vmem:[%s0 + $0x458] sm:$0xf]
  %v304 = vld [vmem:[%s0 + $0x45c] sm:$0xf]
  %v305 = vld [vmem:[%s0 + $0x460] sm:$0xf]
  %v306 = vld [vmem:[%s0 + $0x464] sm:$0xf]
  %v307 = vld [vmem:[%s0 + $0x468] sm:$0xf]
  %v308 = vld [vmem:[%s0 + $0x46c] sm:$0xf]
  %v309 = vld [vmem:[%s0 + $0x470] sm:$0xf]
  %v310 = vld [vmem:[%s0 + $0x474] sm:$0xf]
  %v311 = vld [vmem:[%s0 + $0x478] sm:$0xf]
  %v312 = vld [vmem:[%s0 + $0x47c] sm:$0xf]
  %v313 = vld [vmem:[%s0 + $0x480] sm:$0xf]
  %v314 = vld [vmem:[%s0 + $0x484] sm:$0xf]
  %v315 = vld [vmem:[%s0 + $0x488] sm:$0xf]
  %v316 = vld [vmem:[%s0 + $0x48c] sm:$0xf]
  %v317 = vld [vmem:[%s0 + $0x490] sm:$0xf]
  %v318 = vld [vmem:[%s0 + $0x494] sm:$0xf]
  %v319 = vld [vmem:[%s0 + $0x498] sm:$0xf]
  %v320 = vld [vmem:[%s0 + $0x49c] sm:$0xf]
  %v321 = vld [vmem:[%s0 + $0x4a0] sm:$0xf]
  %v322 = vld [vmem:[%s0 + $0x4a4] sm:$0xf]
  %v323 = vld [vmem:[%s0 + $0x4a8] sm:$0xf]
  %v324 = vld [vmem:[%s0 + $0x4ac] sm:$0xf]
  %v325 = vld [vmem:[%s0 + $0x4b0] sm:$0xf]
  %v326 = vld [vmem:[%s0 + $0x4b4] sm:$0xf]
  %v327 = vld [vmem:[%s0 + $0x4b8] sm:$0xf]
  %v328 = vld [vmem:[%s0 + $0x4bc] sm:$0xf]
  %v329 = vld [vmem:[%s0 + $0x4c0] sm:$0xf]
  %v330 = vld [vmem:[%s0 + $0x4c4] sm:$0xf]
  %v331 = vld [vmem:[%s0 + $0x4c8] sm:$0xf]
  %v332 = vld [vmem:[%s0 + $0x4cc] sm:$0xf]
  %v333 = vld [vmem:[%s0 + $0x4d0] sm:$0xf]
  %v334 = vld [vmem:[%s0 + $0x4d4] sm:$0xf]
  %v335 = vld [vmem:[%s0 + $0x4d8] sm:$0xf]
  %v336 = vld [vmem:[%s0 + $0x4dc] sm:$0xf]
  %v337 = vld [vmem:[%s0 + $0x4e0] sm:$0xf]
  %v338 = vld [vmem:[%s0 + $0x4e4] sm:$0xf]
  %v339 = vld [vmem:[%s0 + $0x4e8] sm:$0xf]
  %v340 = vld [vmem:[%s0 + $0x4ec] sm:$0xf]
  %v341 = vld [vmem:[%s0 + $0x4f0] sm:$0xf]
  %v342 = vld [vmem:[%s0 + $0x4f4] sm:$0xf]
  %v343 = vld [vmem:[%s0 + $0x4f8] sm:$0xf]
  %v344 = vld [vmem:[%s0 + $0x4fc] sm:$0xf]
  %v345 = vld [vmem:[%s0 + $0x500] sm:$0xf]
  %v346 = vld [vmem:[%s0 + $0x504] sm:$0xf]
  %v347 = vld [vmem:[%s0 + $0x508] sm:$0xf]
  %v348 = vld [vmem:[%s0 + $0x50c] sm:$0xf]
  %v349 = vld [vmem:[%s0 + $0x510] sm:$0xf]
  %v350 = vld [vmem:[%s0 + $0x514] sm:$0xf]
  %v351 = vld [vmem:[%s0 + $0x518] sm:$0xf]
  %v352 = vld [vmem:[%s0 + $0x51c] sm:$0xf]
  %v353 = vld [vmem:[%s0 + $0x520] sm:$0xf]
  %v354 = vld [vmem:[%s0 + $0x524] sm:$0xf]
  %v355 = vld [vmem:[%s0 + $0x528] sm:$0xf]
  %v356 = vld [vmem:[%s0 + $0x52c] sm:$0xf]
  %v357 = vld [vmem:[%s0 + $0x530] sm:$0xf]
  %v358 = vld [vmem:[%s0 + $0x534] sm:$0xf]
  %v359 = vld [vmem:[%s0 + $0x538] sm:$0xf]
  %v360 = vld [vmem:[%s0 + $0x53c] sm:$0xf]
  %v361 = vld [vmem:[%s0 + $0x540] sm:$0xf]
  %v362 = vld [vmem:[%s0 + $0x544] sm:$0xf]
  %v363 = vld [vmem:[%s0 + $0x548] sm:$0xf]
  %v364 = vld [vmem:[%s0 + $0x54c] sm:$0xf]
  %v365 = vld [vmem:[%s0 + $0x550] sm:$0xf]
  %v366 = vld [vmem:[%s0 + $0x554] sm:$0xf]
  %v367 = vld [vmem:[%s0 + $0x558] sm:$0xf]
  %v368 = vld [vmem:[%s0 + $0x55c] sm:$0xf]
  %v369 = vld [vmem:[%s0 + $0x560] sm:$0xf]
  %v370 = vld [vmem:[%s0 + $0x564] sm:$0xf]
  %v371 = vld [vmem:[%s0 + $0x568] sm:$0xf]
  %v372 = vld [vmem:[%s0 + $0x56c] sm:$0xf]
  %v373 = vld [vmem:[%s0 + $0x570] sm:$0xf]
  %v374 = vld [vmem:[%s0 + $0x574] sm:$0xf]
  %v375 = vld [vmem:[%s0 + $0x578] sm:$0xf]
  %v376 = vld [vmem:[%s0 + $0x57c] sm:$0xf]
  %v377 = vld [vmem:[%s0 + $0x580] sm:$0xf]
  %v378 = vld [vmem:[%s0 + $0x584] sm:$0xf]
  %v379 = vld [vmem:[%s0 + $0x588] sm:$0xf]
  %v380 = vld [vmem:[%s0 + $0x58c] sm:$0xf]
  %v381 = vld [vmem:[%s0 + $0x590] sm:$0xf]
  %v382 = vld [vmem:[%s0 + $0x594] sm:$0xf]
  %v383 = vld [vmem:[%s0 + $0x598] sm:$0xf]
  %v384 = vld [vmem:[%s0 + $0x59c] sm:$0xf]
  %v385 = vld [vmem:[%s0 + $0x5a0] sm:$0xf]
  %v386 = vld [vmem:[%s0 + $0x5a4] sm:$0xf]
  %v387 = vld [vmem:[%s0 + $0x5a8] sm:$0xf]
  %v388 = vld [vmem:[%s0 + $0x5ac] sm:$0xf]
  %v389 = vld [vmem:[%s0 + $0x5b0] sm:$0xf]
  %v390 = vld [vmem:[%s0 + $0x5b4] sm:$0xf]
  %v391 = vld [vmem:[%s0 + $0x5b8] sm:$0xf]
  %v392 = vld [vmem:[%s0 + $0x5bc] sm:$0xf]
  %v393 = vld [vmem:[%s0 + $0x5c0] sm:$0xf]
  %v394 = vld [vmem:[%s0 + $0x5c4] sm:$0xf]
  %v395 = vld [vmem:[%s0 + $0x5c8] sm:$0xf]
  %v396 = vld [vmem:[%s0 + $0x5cc] sm:$0xf]
  %v397 = vld [vmem:[%s0 + $0x5d0] sm:$0xf]
  %v398 = vld [vmem:[%s0 + $0x5d4] sm:$0xf]
  %v399 = vld [vmem:[%s0 + $0x5d8] sm:$0xf]
  %v400 = vld [vmem:[%s0 + $0x5dc] sm:$0xf]
  %v401 = vld [vmem:[%s0 + $0x5e0] sm:$0xf]
  %v402 = vld [vmem:[%s0 + $0x5e4] sm:$0xf]
  %v403 = vld [vmem:[%s0 + $0x5e8] sm:$0xf]
  %v404 = vld [vmem:[%s0 + $0x5ec] sm:$0xf]
  %v405 = vld [vmem:[%s0 + $0x5f0] sm:$0xf]
  %v406 = vld [vmem:[%s0 + $0x5f4] sm:$0xf]
  %v407 = vld [vmem:[%s0 + $0x5f8] sm:$0xf]
  %v408 = vld [vmem:[%s0 + $0x5fc] sm:$0xf]
  %v409 = vld [vmem:[%s0 + $0x600] sm:$0xf]
  %v410 = vld [vmem:[%s0 + $0x604] sm:$0xf]
  %v411 = vld [vmem:[%s0 + $0x608] sm:$0xf]
  %v412 = vld [vmem:[%s0 + $0x60c] sm:$0xf]
  %v413 = vld [vmem:[%s0 + $0x610] sm:$0xf]
  %v414 = vld [vmem:[%s0 + $0x614] sm:$0xf]
  %v415 = vld [vmem:[%s0 + $0x618] sm:$0xf]
  %v416 = vld [vmem:[%s0 + $0x61c] sm:$0xf]
  %v417 = vld [vmem:[%s0 + $0x620] sm:$0xf]
  %v418 = vld [vmem:[%s0 + $0x624] sm:$0xf]
  %v419 = vld [vmem:[%s0 + $0x628] sm:$0xf]
  %v420 = vld [vmem:[%s0 + $0x62c] sm:$0xf]
  %v421 = vld [vmem:[%s0 + $0x630] sm:$0xf]
  %v422 = vld [vmem:[%s0 + $0x634] sm:$0xf]
  %v423 = vld [vmem:[%s0 + $0x638] sm:$0xf]
  %v424 = vld [vmem:[%s0 + $0x63c] sm:$0xf]
  %v425 = vld [vmem:[%s0 + $0x640] sm:$0xf]
  %v426 = vld [vmem:[%s0 + $0x644] sm:$0xf]
  %v427 = vld [vmem:[%s0 + $0x648] sm:$0xf]
  %v428 = vld [vmem:[%s0 + $0x64c] sm:$0xf]
  %v429 = vld [vmem:[%s0 + $0x650] sm:$0xf]
  %v430 = vld [vmem:[%s0 + $0x654] sm:$0xf]
  %v431 = vld [vmem:[%s0 + $0x658] sm:$0xf]
  %v432 = vld [vmem:[%s0 + $0x65c] sm:$0xf]
  %v433 = vld [vmem:[%s0 + $0x660] sm:$0xf]
  %v434 = vld [vmem:[%s0 + $0x664] sm:$0xf]
  %v435 = vld [vmem:[%s0 + $0x668] sm:$0xf]
  %v436 = vld [vmem:[%s0 + $0x66c] sm:$0xf]
  %v437 = vld [vmem:[%s0 + $0x670] sm:$0xf]
  %v438 = vld [vmem:[%s0 + $0x674] sm:$0xf]
  %v439 = vld [vmem:[%s0 + $0x678] sm:$0xf]
  %v440 = vld [vmem:[%s0 + $0x67c] sm:$0xf]
  %v441 = vld [vmem:[%s0 + $0x680] sm:$0xf]
  %v442 = vld [vmem:[%s0 + $0x684] sm:$0xf]
  %v443 = vld [vmem:[%s0 + $0x688] sm:$0xf]
  %v444 = vld [vmem:[%s0 + $0x68c] sm:$0xf]
  %v445 = vld [vmem:[%s0 + $0x690] sm:$0xf]
  %v446 = vld [vmem:[%s0 + $0x694] sm:$0xf]
  %v447 = vld [vmem:[%s0 + $0x698] sm:$0xf]
  %v448 = vld [vmem:[%s0 + $0x69c] sm:$0xf]
  %v449 = vld [vmem:[%s0 + $0x6a0] sm:$0xf]
  %v450 = vld [vmem:[%s0 + $0x6a4] sm:$0xf]
  %v451 = vld [vmem:[%s0 + $0x6a8] sm:$0xf]
  %v452 = vld [vmem:[%s0 + $0x6ac] sm:$0xf]
  %v453 = vld [vmem:[%s0 + $0x6b0] sm:$0xf]
  %v454 = vld [vmem:[%s0 + $0x6b4] sm:$0xf]
  %v455 = vld [vmem:[%s0 + $0x6b8] sm:$0xf]
  %v456 = vld [vmem:[%s0 + $0x6bc] sm:$0xf]
  %v457 = vld [vmem:[%s0 + $0x6c0] sm:$0xf]
  %v458 = vld [vmem:[%s0 + $0x6c4] sm:$0xf]
  %v459 = vld [vmem:[%s0 + $0x6c8] sm:$0xf]
  %v460 = vld [vmem:[%s0 + $0x6cc] sm:$0xf]
  %v461 = vld [vmem:[%s0 + $0x6d0] sm:$0xf]
  %v462 = vld [vmem:[%s0 + $0x6d4] sm:$0xf]
  %v463 = vld [vmem:[%s0 + $0x6d8] sm:$0xf]
  %v464 = vld [vmem:[%s0 + $0x6dc] sm:$0xf]
  %v465 = vld [vmem:[%s0 + $0x6e0] sm:$0xf]
  %v466 = vld [vmem:[%s0 + $0x6e4] sm:$0xf]
  %v467 = vld [vmem:[%s0 + $0x6e8] sm:$0xf]
  %v468 = vld [vmem:[%s0 + $0x6ec] sm:$0xf]
  %v469 = vld [vmem:[%s0 + $0x6f0] sm:$0xf]
  %v470 = vld [vmem:[%s0 + $0x6f4] sm:$0xf]
  %v471 = vld [vmem:[%s0 + $0x6f8] sm:$0xf]
  %v472 = vld [vmem:[%s0 + $0x6fc] sm:$0xf]
  %v473 = vld [vmem:[%s0 + $0x700] sm:$0xf]
  %v474 = vld [vmem:[%s0 + $0x704] sm:$0xf]
  %v475 = vld [vmem:[%s0 + $0x708] sm:$0xf]
  %v476 = vld [vmem:[%s0 + $0x70c] sm:$0xf]
  %v477 = vld [vmem:[%s0 + $0x710] sm:$0xf]
  %v478 = vld [vmem:[%s0 + $0x714] sm:$0xf]
  %v479 = vld [vmem:[%s0 + $0x718] sm:$0xf]
  %v480 = vld [vmem:[%s0 + $0x71c] sm:$0xf]
  %v481 = vld [vmem:[%s0 + $0x720] sm:$0xf]
  %v482 = vld [vmem:[%s0 + $0x724] sm:$0xf]
  %v483 = vld [vmem:[%s0 + $0x728] sm:$0xf]
  %v484 = vld [vmem:[%s0 + $0x72c] sm:$0xf]
  %v485 = vld [vmem:[%s0 + $0x730] sm:$0xf]
  %v486 = vld [vmem:[%s0 + $0x734] sm:$0xf]
  %v487 = vld [vmem:[%s0 + $0x738] sm:$0xf]
  %v488 = vld [vmem:[%s0 + $0x73c] sm:$0xf]
  %v489 = vld [vmem:[%s0 + $0x740] sm:$0xf]
  %v490 = vld [vmem:[%s0 + $0x744] sm:$0xf]
  %v491 = vld [vmem:[%s0 + $0x748] sm:$0xf]
  %v492 = vld [vmem:[%s0 + $0x74c] sm:$0xf]
  %v493 = vld [vmem:[%s0 + $0x750] sm:$0xf]
  %v494 = vld [vmem:[%s0 + $0x754] sm:$0xf]
  %v495 = vld [vmem:[%s0 + $0x758] sm:$0xf]
  %v496 = vld [vmem:[%s0 + $0x75c] sm:$0xf]
  %v497 = vld [vmem:[%s0 + $0x760] sm:$0xf]
  %v498 = vld [vmem:[%s0 + $0x764] sm:$0xf]
  %v499 = vld [vmem:[%s0 + $0x768] sm:$0xf]
  %v500 = vld [vmem:[%s0 + $0x76c] sm:$0xf]
  %v501 = vld [vmem:[%s0 + $0x770] sm:$0xf]
  %v502 = vld [vmem:[%s0 + $0x774] sm:$0xf]
  %v503 = vld [vmem:[%s0 + $0x778] sm:$0xf]
  %v504 = vld [vmem:[%s0 + $0x77c] sm:$0xf]
  %v505 = vld [vmem:[%s0 + $0x780] sm:$0xf]
  %v506 = vld [vmem:[%s0 + $0x784] sm:$0xf]
  %v507 = vld [vmem:[%s0 + $0x788] sm:$0xf]
  %v508 = vld [vmem:[%s0 + $0x78c] sm:$0xf]
  %v509 = vld [vmem:[%s0 + $0x790] sm:$0xf]
  %v510 = vld [vmem:[%s0 + $0x794] sm:$0xf]
  %v511 = vld [vmem:[%s0 + $0x798] sm:$0xf]
  %v512 = vld [vmem:[%s0 + $0x79c] sm:$0xf]
  %v513 = vld [vmem:[%s0 + $0x7a0] sm:$0xf]
  %v514 = vld [vmem:[%s0 + $0x7a4] sm:$0xf]
  %v515 = vld [vmem:[%s0 + $0x7a8] sm:$0xf]
  %v516 = vld [vmem:[%s0 + $0x7ac] sm:$0xf]
  %v517 = vld [vmem:[%s0 + $0x7b0] sm:$0xf]
  %v518 = vld [vmem:[%s0 + $0x7b4] sm:$0xf]
  %v519 = vld [vmem:[%s0 + $0x7b8] sm:$0xf]
  %v520 = vld [vmem:[%s0 + $0x7bc] sm:$0xf]
  %v521 = vld [vmem:[%s0 + $0x7c0] sm:$0xf]
  %v522 = vld [vmem:[%s0 + $0x7c4] sm:$0xf]
  %v523 = vld [vmem:[%s0 + $0x7c8] sm:$0xf]
  %v524 = vld [vmem:[%s0 + $0x7cc] sm:$0xf]
  %v525 = vld [vmem:[%s0 + $0x7d0] sm:$0xf]
  %v526 = vld [vmem:[%s0 + $0x7d4] sm:$0xf]
  %v527 = vld [vmem:[%s0 + $0x7d8] sm:$0xf]
  %v528 = vld [vmem:[%s0 + $0x7dc] sm:$0xf]
  %v529 = vld [vmem:[%s0 + $0x7e0] sm:$0xf]
  %v530 = vld [vmem:[%s0 + $0x7e4] sm:$0xf]
  %v531 = vld [vmem:[%s0 + $0x7e8] sm:$0xf]
  %v532 = vld [vmem:[%s0 + $0x7ec] sm:$0xf]
  %v533 = vld [vmem:[%s0 + $0x7f0] sm:$0xf]
  %v534 = vld [vmem:[%s0 + $0x7f4] sm:$0xf]
  %v535 = vld [vmem:[%s0 + $0x7f8] sm:$0xf]
  %v536 = vld [vmem:[%s0 + $0x7fc] sm:$0xf]
  %v537 = vld [vmem:[%s0 + $0x800] sm:$0xf]
  %v538 = vld [vmem:[%s0 + $0x804] sm:$0xf]
  %v539 = vld [vmem:[%s0 + $0x808] sm:$0xf]
  %v540 = vld [vmem:[%s0 + $0x80c] sm:$0xf]
  %v541 = vld [vmem:[%s0 + $0x810] sm:$0xf]
  %v542 = vld [vmem:[%s0 + $0x814] sm:$0xf]
  %v543 = vld [vmem:[%s0 + $0x818] sm:$0xf]
  %v544 = vld [vmem:[%s0 + $0x81c] sm:$0xf]
  %v545 = vld [vmem:[%s0 + $0x820] sm:$0xf]
  %v546 = vld [vmem:[%s0 + $0x824] sm:$0xf]
  %v547 = vld [vmem:[%s0 + $0x828] sm:$0xf]
  %v548 = vld [vmem:[%s0 + $0x82c] sm:$0xf]
  %v549 = vld [vmem:[%s0 + $0x830] sm:$0xf]
  %v550 = vld [vmem:[%s0 + $0x834] sm:$0xf]
  %v551 = vld [vmem:[%s0 + $0x838] sm:$0xf]
  %v552 = vld [vmem:[%s0 + $0x83c] sm:$0xf]
  %v553 = vld [vmem:[%s0 + $0x840] sm:$0xf]
  %v554 = vld [vmem:[%s0 + $0x844] sm:$0xf]
  %v555 = vld [vmem:[%s0 + $0x848] sm:$0xf]
  %v556 = vld [vmem:[%s0 + $0x84c] sm:$0xf]
  %v557 = vld [vmem:[%s0 + $0x850] sm:$0xf]
  %v558 = vld [vmem:[%s0 + $0x854] sm:$0xf]
  %v559 = vld [vmem:[%s0 + $0x858] sm:$0xf]
  %v560 = vld [vmem:[%s0 + $0x85c] sm:$0xf]
  %v561 = vld [vmem:[%s0 + $0x860] sm:$0xf]
  %v562 = vld [vmem:[%s0 + $0x864] sm:$0xf]
  %v563 = vld [vmem:[%s0 + $0x868] sm:$0xf]
  %v564 = vld [vmem:[%s0 + $0x86c] sm:$0xf]
  %v565 = vld [vmem:[%s0 + $0x870] sm:$0xf]
  %v566 = vld [vmem:[%s0 + $0x874] sm:$0xf]
  %v567 = vld [vmem:[%s0 + $0x878] sm:$0xf]
  %v568 = vld [vmem:[%s0 + $0x87c] sm:$0xf]
  %v569 = vld [vmem:[%s0 + $0x880] sm:$0xf]
  %v570 = vld [vmem:[%s0 + $0x884] sm:$0xf]
  %v571 = vld [vmem:[%s0 + $0x888] sm:$0xf]
  %v572 = vld [vmem:[%s0 + $0x88c] sm:$0xf]
  %v573 = vld [vmem:[%s0 + $0x890] sm:$0xf]
  %v574 = vld [vmem:[%s0 + $0x894] sm:$0xf]
  %v575 = vld [vmem:[%s0 + $0x898] sm:$0xf]
  %v576 = vld [vmem:[%s0 + $0x89c] sm:$0xf]
  %v577 = vld [vmem:[%s0 + $0x8a0] sm:$0xf]
  %v578 = vld [vmem:[%s0 + $0x8a4] sm:$0xf]
  %v579 = vld [vmem:[%s0 + $0x8a8] sm:$0xf]
  %v580 = vld [vmem:[%s0 + $0x8ac] sm:$0xf]
  %v581 = vld [vmem:[%s0 + $0x8b0] sm:$0xf]
  %v582 = vld [vmem:[%s0 + $0x8b4] sm:$0xf]
  %v583 = vld [vmem:[%s0 + $0x8b8] sm:$0xf]
  %v584 = vld [vmem:[%s0 + $0x8bc] sm:$0xf]
  %v585 = vld [vmem:[%s0 + $0x8c0] sm:$0xf]
  %v586 = vld [vmem:[%s0 + $0x8c4] sm:$0xf]
  %v587 = vld [vmem:[%s0 + $0x8c8] sm:$0xf]
  %v588 = vld [vmem:[%s0 + $0x8cc] sm:$0xf]
  %v589 = vld [vmem:[%s0 + $0x8d0] sm:$0xf]
  %v590 = vld [vmem:[%s0 + $0x8d4] sm:$0xf]
  %v591 = vld [vmem:[%s0 + $0x8d8] sm:$0xf]
  %v592 = vld [vmem:[%s0 + $0x8dc] sm:$0xf]
  %v593 = vld [vmem:[%s0 + $0x8e0] sm:$0xf]
  %v594 = vld [vmem:[%s0 + $0x8e4] sm:$0xf]
  %v595 = vld [vmem:[%s0 + $0x8e8] sm:$0xf]
  %v596 = vld [vmem:[%s0 + $0x8ec] sm:$0xf]
  %v597 = vld [vmem:[%s0 + $0x8f0] sm:$0xf]
  %v598 = vld [vmem:[%s0 + $0x8f4] sm:$0xf]
  %v599 = vld [vmem:[%s0 + $0x8f8] sm:$0xf]
  %v600 = vld [vmem:[%s0 + $0x8fc] sm:$0xf]
  %v601 = vld [vmem:[%s0 + $0x900] sm:$0xf]
  %v602 = vld [vmem:[%s0 + $0x904] sm:$0xf]
  %v603 = vld [vmem:[%s0 + $0x908] sm:$0xf]
  %v604 = vld [vmem:[%s0 + $0x90c] sm:$0xf]
  %v605 = vld [vmem:[%s0 + $0x910] sm:$0xf]
  %v606 = vld [vmem:[%s0 + $0x914] sm:$0xf]
  %v607 = vld [vmem:[%s0 + $0x918] sm:$0xf]
  %v608 = vld [vmem:[%s0 + $0x91c] sm:$0xf]
  %v609 = vld [vmem:[%s0 + $0x920] sm:$0xf]
  %v610 = vld [vmem:[%s0 + $0x924] sm:$0xf]
  %v611 = vld [vmem:[%s0 + $0x928] sm:$0xf]
  %v612 = vld [vmem:[%s0 + $0x92c] sm:$0xf]
  %v613 = vld [vmem:[%s0 + $0x930] sm:$0xf]
  %v614 = vld [vmem:[%s0 + $0x934] sm:$0xf]
  %v615 = vld [vmem:[%s0 + $0x938] sm:$0xf]
  %v616 = vld [vmem:[%s0 + $0x93c] sm:$0xf]
  %v617 = vld [vmem:[%s0 + $0x940] sm:$0xf]
  %v618 = vld [vmem:[%s0 + $0x944] sm:$0xf]
  %v619 = vld [vmem:[%s0 + $0x948] sm:$0xf]
  %v620 = vld [vmem:[%s0 + $0x94c] sm:$0xf]
  %v621 = vld [vmem:[%s0 + $0x950] sm:$0xf]
  %v622 = vld [vmem:[%s0 + $0x954] sm:$0xf]
  %v623 = vld [vmem:[%s0 + $0x958] sm:$0xf]
  %v624 = vld [vmem:[%s0 + $0x95c] sm:$0xf]
  %v625 = vld [vmem:[%s0 + $0x960] sm:$0xf]
  %v626 = vld [vmem:[%s0 + $0x964] sm:$0xf]
  %v627 = vld [vmem:[%s0 + $0x968] sm:$0xf]
  %v628 = vld [vmem:[%s0 + $0x96c] sm:$0xf]
  %v629 = vld [vmem:[%s0 + $0x970] sm:$0xf]
  %v630 = vld [vmem:[%s0 + $0x974] sm:$0xf]
  %v631 = vld [vmem:[%s0 + $0x978] sm:$0xf]
  %v632 = vld [vmem:[%s0 + $0x97c] sm:$0xf]
  %v633 = vld [vmem:[%s0 + $0x980] sm:$0xf]
  %v634 = vld [vmem:[%s0 + $0x984] sm:$0xf]
  %v635 = vld [vmem:[%s0 + $0x988] sm:$0xf]
  %v636 = vld [vmem:[%s0 + $0x98c] sm:$0xf]
  %v637 = vld [vmem:[%s0 + $0x990] sm:$0xf]
  %v638 = vld [vmem:[%s0 + $0x994] sm:$0xf]
  %v639 = vld [vmem:[%s0 + $0x998] sm:$0xf]
  %v640 = vld [vmem:[%s0 + $0x99c] sm:$0xf]
  %v641 = vld [vmem:[%s0 + $0x9a0] sm:$0xf]
  %v642 = vld [vmem:[%s0 + $0x9a4] sm:$0xf]
  %v643 = vld [vmem:[%s0 + $0x9a8] sm:$0xf]
  %v644 = vld [vmem:[%s0 + $0x9ac] sm:$0xf]
  %v645 = vld [vmem:[%s0 + $0x9b0] sm:$0xf]
  %v646 = vld [vmem:[%s0 + $0x9b4] sm:$0xf]
  %v647 = vld [vmem:[%s0 + $0x9b8] sm:$0xf]
  %v648 = vld [vmem:[%s0 + $0x9bc] sm:$0xf]
  %v649 = vld [vmem:[%s0 + $0x9c0] sm:$0xf]
  %v650 = vld [vmem:[%s0 + $0x9c4] sm:$0xf]
  %v651 = vld [vmem:[%s0 + $0x9c8] sm:$0xf]
  %v652 = vld [vmem:[%s0 + $0x9cc] sm:$0xf]
  %v653 = vld [vmem:[%s0 + $0x9d0] sm:$0xf]
  %v654 = vld [vmem:[%s0 + $0x9d4] sm:$0xf]
  %v655 = vld [vmem:[%s0 + $0x9d8] sm:$0xf]
  %v656 = vld [vmem:[%s0 + $0x9dc] sm:$0xf]
  %v657 = vld [vmem:[%s0 + $0x9e0] sm:$0xf]
  %v658 = vld [vmem:[%s0 + $0x9e4] sm:$0xf]
  %v659 = vld [vmem:[%s0 + $0x9e8] sm:$0xf]
  %v660 = vld [vmem:[%s0 + $0x9ec] sm:$0xf]
  %v661 = vld [vmem:[%s0 + $0x9f0] sm:$0xf]
  %v662 = vld [vmem:[%s0 + $0x9f4] sm:$0xf]
  %v663 = vld [vmem:[%s0 + $0x9f8] sm:$0xf]
  %v664 = vld [vmem:[%s0 + $0x9fc] sm:$0xf]
  %v665 = vld [vmem:[%s0 + $0xa00] sm:$0xf]
  %v666 = vld [vmem:[%s0 + $0xa04] sm:$0xf]
  %v667 = vld [vmem:[%s0 + $0xa08] sm:$0xf]
  %v668 = vld [vmem:[%s0 + $0xa0c] sm:$0xf]
  %v669 = vld [vmem:[%s0 + $0xa10] sm:$0xf]
  %v670 = vld [vmem:[%s0 + $0xa14] sm:$0xf]
  %v671 = vld [vmem:[%s0 + $0xa18] sm:$0xf]
  %v672 = vld [vmem:[%s0 + $0xa1c] sm:$0xf]
  %v673 = vld [vmem:[%s0 + $0xa20] sm:$0xf]
  %v674 = vld [vmem:[%s0 + $0xa24] sm:$0xf]
  %v675 = vld [vmem:[%s0 + $0xa28] sm:$0xf]
  %v676 = vld [vmem:[%s0 + $0xa2c] sm:$0xf]
  %v677 = vld [vmem:[%s0 + $0xa30] sm:$0xf]
  %v678 = vld [vmem:[%s0 + $0xa34] sm:$0xf]
  %v679 = vld [vmem:[%s0 + $0xa38] sm:$0xf]
  %v680 = vld [vmem:[%s0 + $0xa3c] sm:$0xf]
  %v681 = vld [vmem:[%s0 + $0xa40] sm:$0xf]
  %v682 = vld [vmem:[%s0 + $0xa44] sm:$0xf]
  %v683 = vld [vmem:[%s0 + $0xa48] sm:$0xf]
  %v684 = vld [vmem:[%s0 + $0xa4c] sm:$0xf]
  %v685 = vld [vmem:[%s0 + $0xa50] sm:$0xf]
  %v686 = vld [vmem:[%s0 + $0xa54] sm:$0xf]
  %v687 = vld [vmem:[%s0 + $0xa58] sm:$0xf]
  %v688 = vld [vmem:[%s0 + $0xa5c] sm:$0xf]
  %v689 = vld [vmem:[%s0 + $0xa60] sm:$0xf]
  %v690 = vld [vmem:[%s0 + $0xa64] sm:$0xf]
  %v691 = vld [vmem:[%s0 + $0xa68] sm:$0xf]
  %v692 = vld [vmem:[%s0 + $0xa6c] sm:$0xf]
  %v693 = vld [vmem:[%s0 + $0xa70] sm:$0xf]
  %v694 = vld [vmem:[%s0 + $0xa74] sm:$0xf]
  %v695 = vld [vmem:[%s0 + $0xa78] sm:$0xf]
  %v696 = vld [vmem:[%s0 + $0xa7c] sm:$0xf]
  %v697 = vld [vmem:[%s0 + $0xa80] sm:$0xf]
  %v698 = vld [vmem:[%s0 + $0xa84] sm:$0xf]
  %v699 = vld [vmem:[%s0 + $0xa88] sm:$0xf]
  %v700 = vld [vmem:[%s0 + $0xa8c] sm:$0xf]
  %v701 = vld [vmem:[%s0 + $0xa90] sm:$0xf]
  %v702 = vld [vmem:[%s0 + $0xa94] sm:$0xf]
  %v703 = vld [vmem:[%s0 + $0xa98] sm:$0xf]
  %v704 = vld [vmem:[%s0 + $0xa9c] sm:$0xf]
  %v705 = vld [vmem:[%s0 + $0xaa0] sm:$0xf]
  %v706 = vld [vmem:[%s0 + $0xaa4] sm:$0xf]
  %v707 = vld [vmem:[%s0 + $0xaa8] sm:$0xf]
  %v708 = vld [vmem:[%s0 + $0xaac] sm:$0xf]
  %v709 = vld [vmem:[%s0 + $0xab0] sm:$0xf]
  %v710 = vld [vmem:[%s0 + $0xab4] sm:$0xf]
  %v711 = vld [vmem:[%s0 + $0xab8] sm:$0xf]
  %v712 = vld [vmem:[%s0 + $0xabc] sm:$0xf]
  %v713 = vld [vmem:[%s0 + $0xac0] sm:$0xf]
  %v714 = vld [vmem:[%s0 + $0xac4] sm:$0xf]
  %v715 = vld [vmem:[%s0 + $0xac8] sm:$0xf]
  %v716 = vld [vmem:[%s0 + $0xacc] sm:$0xf]
  %v717 = vld [vmem:[%s0 + $0xad0] sm:$0xf]
  %v718 = vld [vmem:[%s0 + $0xad4] sm:$0xf]
  %v719 = vld [vmem:[%s0 + $0xad8] sm:$0xf]
  %v720 = vld [vmem:[%s0 + $0xadc] sm:$0xf]
  %v721 = vld [vmem:[%s0 + $0xae0] sm:$0xf]
  %v722 = vld [vmem:[%s0 + $0xae4] sm:$0xf]
  %v723 = vld [vmem:[%s0 + $0xae8] sm:$0xf]
  %v724 = vld [vmem:[%s0 + $0xaec] sm:$0xf]
  %v725 = vld [vmem:[%s0 + $0xaf0] sm:$0xf]
  %v726 = vld [vmem:[%s0 + $0xaf4] sm:$0xf]
  %v727 = vld [vmem:[%s0 + $0xaf8] sm:$0xf]
  %v728 = vld [vmem:[%s0 + $0xafc] sm:$0xf]
  %v729 = vld [vmem:[%s0 + $0xb00] sm:$0xf]
  %v730 = vld [vmem:[%s0 + $0xb04] sm:$0xf]
  %v731 = vld [vmem:[%s0 + $0xb08] sm:$0xf]
  %v732 = vld [vmem:[%s0 + $0xb0c] sm:$0xf]
  %v733 = vld [vmem:[%s0 + $0xb10] sm:$0xf]
  %v734 = vld [vmem:[%s0 + $0xb14] sm:$0xf]
  %v735 = vld [vmem:[%s0 + $0xb18] sm:$0xf]
  %v736 = vld [vmem:[%s0 + $0xb1c] sm:$0xf]
  %v737 = vld [vmem:[%s0 + $0xb20] sm:$0xf]
  %v738 = vld [vmem:[%s0 + $0xb24] sm:$0xf]
  %v739 = vld [vmem:[%s0 + $0xb28] sm:$0xf]
  %v740 = vld [vmem:[%s0 + $0xb2c] sm:$0xf]
  %v741 = vld [vmem:[%s0 + $0xb30] sm:$0xf]
  %v742 = vld [vmem:[%s0 + $0xb34] sm:$0xf]
  %v743 = vld [vmem:[%s0 + $0xb38] sm:$0xf]
  %v744 = vld [vmem:[%s0 + $0xb3c] sm:$0xf]
  %v745 = vld [vmem:[%s0 + $0xb40] sm:$0xf]
  %v746 = vld [vmem:[%s0 + $0xb44] sm:$0xf]
  %v747 = vld [vmem:[%s0 + $0xb48] sm:$0xf]
  %v748 = vld [vmem:[%s0 + $0xb4c] sm:$0xf]
  %v749 = vld [vmem:[%s0 + $0xb50] sm:$0xf]
  %v750 = vld [vmem:[%s0 + $0xb54] sm:$0xf]
  %v751 = vld [vmem:[%s0 + $0xb58] sm:$0xf]
  %v752 = vld [vmem:[%s0 + $0xb5c] sm:$0xf]
  %v753 = vld [vmem:[%s0 + $0xb60] sm:$0xf]
  %v754 = vld [vmem:[%s0 + $0xb64] sm:$0xf]
  %v755 = vld [vmem:[%s0 + $0xb68] sm:$0xf]
  %v756 = vld [vmem:[%s0 + $0xb6c] sm:$0xf]
  %v757 = vld [vmem:[%s0 + $0xb70] sm:$0xf]
  %v758 = vld [vmem:[%s0 + $0xb74] sm:$0xf]
  %v759 = vld [vmem:[%s0 + $0xb78] sm:$0xf]
  %v760 = vld [vmem:[%s0 + $0xb7c] sm:$0xf]
  %v761 = vld [vmem:[%s0 + $0xb80] sm:$0xf]
  %v762 = vld [vmem:[%s0 + $0xb84] sm:$0xf]
  %v763 = vld [vmem:[%s0 + $0xb88] sm:$0xf]
  %v764 = vld [vmem:[%s0 + $0xb8c] sm:$0xf]
  %v765 = vld [vmem:[%s0 + $0xb90] sm:$0xf]
  %v766 = vld [vmem:[%s0 + $0xb94] sm:$0xf]
  %v767 = vld [vmem:[%s0 + $0xb98] sm:$0xf]
  %v768 = vld [vmem:[%s0 + $0xb9c] sm:$0xf]
  %v769 = vld [vmem:[%s0 + $0xba0] sm:$0xf]
  %v770 = vld [vmem:[%s0 + $0xba4] sm:$0xf]
  %v771 = vld [vmem:[%s0 + $0xba8] sm:$0xf]
  %v772 = vld [vmem:[%s0 + $0xbac] sm:$0xf]
  %v773 = vld [vmem:[%s0 + $0xbb0] sm:$0xf]
  %v774 = vld [vmem:[%s0 + $0xbb4] sm:$0xf]
  %v775 = vld [vmem:[%s0 + $0xbb8] sm:$0xf]
  %v776 = vld [vmem:[%s0 + $0xbbc] sm:$0xf]
  %v777 = vld [vmem:[%s0 + $0xbc0] sm:$0xf]
  %v778 = vld [vmem:[%s0 + $0xbc4] sm:$0xf]
  %v779 = vld [vmem:[%s0 + $0xbc8] sm:$0xf]
  %v780 = vld [vmem:[%s0 + $0xbcc] sm:$0xf]
  %v781 = vld [vmem:[%s0 + $0xbd0] sm:$0xf]
  %v782 = vld [vmem:[%s0 + $0xbd4] sm:$0xf]
  %v783 = vld [vmem:[%s0 + $0xbd8] sm:$0xf]
  %v784 = vld [vmem:[%s0 + $0xbdc] sm:$0xf]
  %v785 = vld [vmem:[%s0 + $0xbe0] sm:$0xf]
  %v786 = vld [vmem:[%s0 + $0xbe4] sm:$0xf]
  %v787 = vld [vmem:[%s0 + $0xbe8] sm:$0xf]
  %v788 = vld [vmem:[%s0 + $0xbec] sm:$0xf]
  %v789 = vld [vmem:[%s0 + $0xbf0] sm:$0xf]
  %v790 = vld [vmem:[%s0 + $0xbf4] sm:$0xf]
  %v791 = vld [vmem:[%s0 + $0xbf8] sm:$0xf]
  %v792 = vld [vmem:[%s0 + $0xbfc] sm:$0xf]
  %v793 = vld [vmem:[%s0 + $0xc00] sm:$0xf]
  %v794 = vld [vmem:[%s0 + $0xc04] sm:$0xf]
  %v795 = vld [vmem:[%s0 + $0xc08] sm:$0xf]
  %v796 = vld [vmem:[%s0 + $0xc0c] sm:$0xf]
  %v797 = vld [vmem:[%s0 + $0xc10] sm:$0xf]
  %v798 = vld [vmem:[%s0 + $0xc14] sm:$0xf]
  %v799 = vld [vmem:[%s0 + $0xc18] sm:$0xf]
  %v800 = vld [vmem:[%s0 + $0xc1c] sm:$0xf]
  %v801 = vld [vmem:[%s0 + $0xc20] sm:$0xf]
  %v802 = vld [vmem:[%s0 + $0xc24] sm:$0xf]
  %v803 = vld [vmem:[%s0 + $0xc28] sm:$0xf]
  %v804 = vld [vmem:[%s0 + $0xc2c] sm:$0xf]
  %v805 = vld [vmem:[%s0 + $0xc30] sm:$0xf]
  %v806 = vld [vmem:[%s0 + $0xc34] sm:$0xf]
  %v807 = vld [vmem:[%s0 + $0xc38] sm:$0xf]
  %v808 = vld [vmem:[%s0 + $0xc3c] sm:$0xf]
  %v809 = vld [vmem:[%s0 + $0xc40] sm:$0xf]
  %v810 = vld [vmem:[%s0 + $0xc44] sm:$0xf]
  %v811 = vld [vmem:[%s0 + $0xc48] sm:$0xf]
  %v812 = vld [vmem:[%s0 + $0xc4c] sm:$0xf]
  %v813 = vld [vmem:[%s0 + $0xc50] sm:$0xf]
  %v814 = vld [vmem:[%s0 + $0xc54] sm:$0xf]
  %v815 = vld [vmem:[%s0 + $0xc58] sm:$0xf]
  %v816 = vld [vmem:[%s0 + $0xc5c] sm:$0xf]
  %v817 = vld [vmem:[%s0 + $0xc60] sm:$0xf]
  %v818 = vld [vmem:[%s0 + $0xc64] sm:$0xf]
  %v819 = vld [vmem:[%s0 + $0xc68] sm:$0xf]
  %v820 = vld [vmem:[%s0 + $0xc6c] sm:$0xf]
  %v821 = vld [vmem:[%s0 + $0xc70] sm:$0xf]
  %v822 = vld [vmem:[%s0 + $0xc74] sm:$0xf]
  %v823 = vld [vmem:[%s0 + $0xc78] sm:$0xf]
  %v824 = vld [vmem:[%s0 + $0xc7c] sm:$0xf]
  %v825 = vld [vmem:[%s0 + $0xc80] sm:$0xf]
  %v826 = vld [vmem:[%s0 + $0xc84] sm:$0xf]
  %v827 = vld [vmem:[%s0 + $0xc88] sm:$0xf]
  %v828 = vld [vmem:[%s0 + $0xc8c] sm:$0xf]
  %v829 = vld [vmem:[%s0 + $0xc90] sm:$0xf]
  %v830 = vld [vmem:[%s0 + $0xc94] sm:$0xf]
  %v831 = vld [vmem:[%s0 + $0xc98] sm:$0xf]
  %v832 = vld [vmem:[%s0 + $0xc9c] sm:$0xf]
  %v833 = vld [vmem:[%s0 + $0xca0] sm:$0xf]
  %v834 = vld [vmem:[%s0 + $0xca4] sm:$0xf]
  %v835 = vld [vmem:[%s0 + $0xca8] sm:$0xf]
  %v836 = vld [vmem:[%s0 + $0xcac] sm:$0xf]
  %v837 = vld [vmem:[%s0 + $0xcb0] sm:$0xf]
  %v838 = vld [vmem:[%s0 + $0xcb4] sm:$0xf]
  %v839 = vld [vmem:[%s0 + $0xcb8] sm:$0xf]
  %v840 = vld [vmem:[%s0 + $0xcbc] sm:$0xf]
  %v841 = vld [vmem:[%s0 + $0xcc0] sm:$0xf]
  %v842 = vld [vmem:[%s0 + $0xcc4] sm:$0xf]
  %v843 = vld [vmem:[%s0 + $0xcc8] sm:$0xf]
  %v844 = vld [vmem:[%s0 + $0xccc] sm:$0xf]
  %v845 = vld [vmem:[%s0 + $0xcd0] sm:$0xf]
  %v846 = vld [vmem:[%s0 + $0xcd4] sm:$0xf]
  %v847 = vld [vmem:[%s0 + $0xcd8] sm:$0xf]
  %v848 = vld [vmem:[%s0 + $0xcdc] sm:$0xf]
  %v849 = vld [vmem:[%s0 + $0xce0] sm:$0xf]
  %v850 = vld [vmem:[%s0 + $0xce4] sm:$0xf]
  %v851 = vld [vmem:[%s0 + $0xce8] sm:$0xf]
  %v852 = vld [vmem:[%s0 + $0xcec] sm:$0xf]
  %v853 = vld [vmem:[%s0 + $0xcf0] sm:$0xf]
  %v854 = vld [vmem:[%s0 + $0xcf4] sm:$0xf]
  %v855 = vld [vmem:[%s0 + $0xcf8] sm:$0xf]
  %v856 = vld [vmem:[%s0 + $0xcfc] sm:$0xf]
  %v857 = vld [vmem:[%s0 + $0xd00] sm:$0xf]
  %v858 = vld [vmem:[%s0 + $0xd04] sm:$0xf]
  %v859 = vld [vmem:[%s0 + $0xd08] sm:$0xf]
  %v860 = vld [vmem:[%s0 + $0xd0c] sm:$0xf]
  %v861 = vld [vmem:[%s0 + $0xd10] sm:$0xf]
  %v862 = vld [vmem:[%s0 + $0xd14] sm:$0xf]
  %v863 = vld [vmem:[%s0 + $0xd18] sm:$0xf]
  %v864 = vld [vmem:[%s0 + $0xd1c] sm:$0xf]
  %v865 = vld [vmem:[%s0 + $0xd20] sm:$0xf]
  %v866 = vld [vmem:[%s0 + $0xd24] sm:$0xf]
  %v867 = vld [vmem:[%s0 + $0xd28] sm:$0xf]
  %v868 = vld [vmem:[%s0 + $0xd2c] sm:$0xf]
  %v869 = vld [vmem:[%s0 + $0xd30] sm:$0xf]
  %v870 = vld [vmem:[%s0 + $0xd34] sm:$0xf]
  %v871 = vld [vmem:[%s0 + $0xd38] sm:$0xf]
  %v872 = vld [vmem:[%s0 + $0xd3c] sm:$0xf]
  %v873 = vld [vmem:[%s0 + $0xd40] sm:$0xf]
  %v874 = vld [vmem:[%s0 + $0xd44] sm:$0xf]
  %v875 = vld [vmem:[%s0 + $0xd48] sm:$0xf]
  %v876 = vld [vmem:[%s0 + $0xd4c] sm:$0xf]
  %v877 = vld [vmem:[%s0 + $0xd50] sm:$0xf]
  %v878 = vld [vmem:[%s0 + $0xd54] sm:$0xf]
  %v879 = vld [vmem:[%s0 + $0xd58] sm:$0xf]
  %v880 = vld [vmem:[%s0 + $0xd5c] sm:$0xf]
  %v881 = vld [vmem:[%s0 + $0xd60] sm:$0xf]
  %v882 = vld [vmem:[%s0 + $0xd64] sm:$0xf]
  %v883 = vld [vmem:[%s0 + $0xd68] sm:$0xf]
  %v884 = vld [vmem:[%s0 + $0xd6c] sm:$0xf]
  %v885 = vld [vmem:[%s0 + $0xd70] sm:$0xf]
  %v886 = vld [vmem:[%s0 + $0xd74] sm:$0xf]
  %v887 = vld [vmem:[%s0 + $0xd78] sm:$0xf]
  %v888 = vld [vmem:[%s0 + $0xd7c] sm:$0xf]
  %v889 = vld [vmem:[%s0 + $0xd80] sm:$0xf]
  %v890 = vld [vmem:[%s0 + $0xd84] sm:$0xf]
  %v891 = vld [vmem:[%s0 + $0xd88] sm:$0xf]
  %v892 = vld [vmem:[%s0 + $0xd8c] sm:$0xf]
  %v893 = vld [vmem:[%s0 + $0xd90] sm:$0xf]
  %v894 = vld [vmem:[%s0 + $0xd94] sm:$0xf]
  %v895 = vld [vmem:[%s0 + $0xd98] sm:$0xf]
  %v896 = vld [vmem:[%s0 + $0xd9c] sm:$0xf]
  %v897 = vld [vmem:[%s0 + $0xda0] sm:$0xf]
  %v898 = vld [vmem:[%s0 + $0xda4] sm:$0xf]
  %v899 = vld [vmem:[%s0 + $0xda8] sm:$0xf]
  %v900 = vld [vmem:[%s0 + $0xdac] sm:$0xf]
  %v901 = vld [vmem:[%s0 + $0xdb0] sm:$0xf]
  %v902 = vld [vmem:[%s0 + $0xdb4] sm:$0xf]
  %v903 = vld [vmem:[%s0 + $0xdb8] sm:$0xf]
  %v904 = vld [vmem:[%s0 + $0xdbc] sm:$0xf]
  %v905 = vld [vmem:[%s0 + $0xdc0] sm:$0xf]
  %v906 = vld [vmem:[%s0 + $0xdc4] sm:$0xf]
  %v907 = vld [vmem:[%s0 + $0xdc8] sm:$0xf]
  %v908 = vld [vmem:[%s0 + $0xdcc] sm:$0xf]
  %v909 = vld [vmem:[%s0 + $0xdd0] sm:$0xf]
  %v910 = vld [vmem:[%s0 + $0xdd4] sm:$0xf]
  %v911 = vld [vmem:[%s0 + $0xdd8] sm:$0xf]
  %v912 = vld [vmem:[%s0 + $0xddc] sm:$0xf]
  %v913 = vld [vmem:[%s0 + $0xde0] sm:$0xf]
  %v914 = vld [vmem:[%s0 + $0xde4] sm:$0xf]
  %v915 = vld [vmem:[%s0 + $0xde8] sm:$0xf]
  %v916 = vld [vmem:[%s0 + $0xdec] sm:$0xf]
  %v917 = vld [vmem:[%s0 + $0xdf0] sm:$0xf]
  %v918 = vld [vmem:[%s0 + $0xdf4] sm:$0xf]
  %v919 = vld [vmem:[%s0 + $0xdf8] sm:$0xf]
  %v920 = vld [vmem:[%s0 + $0xdfc] sm:$0xf]
  %v921 = vld [vmem:[%s0 + $0xe00] sm:$0xf]
  %v922 = vld [vmem:[%s0 + $0xe04] sm:$0xf]
  %v923 = vld [vmem:[%s0 + $0xe08] sm:$0xf]
  %v924 = vld [vmem:[%s0 + $0xe0c] sm:$0xf]
  %v925 = vld [vmem:[%s0 + $0xe10] sm:$0xf]
  %v926 = vld [vmem:[%s0 + $0xe14] sm:$0xf]
  %v927 = vld [vmem:[%s0 + $0xe18] sm:$0xf]
  %v928 = vld [vmem:[%s0 + $0xe1c] sm:$0xf]
  %v929 = vld [vmem:[%s0 + $0xe20] sm:$0xf]
  %v930 = vld [vmem:[%s0 + $0xe24] sm:$0xf]
  %v931 = vld [vmem:[%s0 + $0xe28] sm:$0xf]
  %v932 = vld [vmem:[%s0 + $0xe2c] sm:$0xf]
  %v933 = vld [vmem:[%s0 + $0xe30] sm:$0xf]
  %v934 = vld [vmem:[%s0 + $0xe34] sm:$0xf]
  %v935 = vld [vmem:[%s0 + $0xe38] sm:$0xf]
  %v936 = vld [vmem:[%s0 + $0xe3c] sm:$0xf]
  %v937 = vld [vmem:[%s0 + $0xe40] sm:$0xf]
  %v938 = vld [vmem:[%s0 + $0xe44] sm:$0xf]
  %v939 = vld [vmem:[%s0 + $0xe48] sm:$0xf]
  %v940 = vld [vmem:[%s0 + $0xe4c] sm:$0xf]
  %v941 = vld [vmem:[%s0 + $0xe50] sm:$0xf]
  %v942 = vld [vmem:[%s0 + $0xe54] sm:$0xf]
  %v943 = vld [vmem:[%s0 + $0xe58] sm:$0xf]
  %v944 = vld [vmem:[%s0 + $0xe5c] sm:$0xf]
  %v945 = vld [vmem:[%s0 + $0xe60] sm:$0xf]
  %v946 = vld [vmem:[%s0 + $0xe64] sm:$0xf]
  %v947 = vld [vmem:[%s0 + $0xe68] sm:$0xf]
  %v948 = vld [vmem:[%s0 + $0xe6c] sm:$0xf]
  %v949 = vld [vmem:[%s0 + $0xe70] sm:$0xf]
  %v950 = vld [vmem:[%s0 + $0xe74] sm:$0xf]
  %v951 = vld [vmem:[%s0 + $0xe78] sm:$0xf]
  %v952 = vld [vmem:[%s0 + $0xe7c] sm:$0xf]
  %v953 = vld [vmem:[%s0 + $0xe80] sm:$0xf]
  %v954 = vld [vmem:[%s0 + $0xe84] sm:$0xf]
  %v955 = vld [vmem:[%s0 + $0xe88] sm:$0xf]
  %v956 = vld [vmem:[%s0 + $0xe8c] sm:$0xf]
  %v957 = vld [vmem:[%s0 + $0xe90] sm:$0xf]
  %v958 = vld [vmem:[%s0 + $0xe94] sm:$0xf]
  %v959 = vld [vmem:[%s0 + $0xe98] sm:$0xf]
  %v960 = vld [vmem:[%s0 + $0xe9c] sm:$0xf]
  %v961 = vld [vmem:[%s0 + $0xea0] sm:$0xf]
  %v962 = vld [vmem:[%s0 + $0xea4] sm:$0xf]
  %v963 = vld [vmem:[%s0 + $0xea8] sm:$0xf]
  %v964 = vld [vmem:[%s0 + $0xeac] sm:$0xf]
  %v965 = vld [vmem:[%s0 + $0xeb0] sm:$0xf]
  %v966 = vld [vmem:[%s0 + $0xeb4] sm:$0xf]
  %v967 = vld [vmem:[%s0 + $0xeb8] sm:$0xf]
  %v968 = vld [vmem:[%s0 + $0xebc] sm:$0xf]
  %v969 = vld [vmem:[%s0 + $0xec0] sm:$0xf]
  %v970 = vld [vmem:[%s0 + $0xec4] sm:$0xf]
  %v971 = vld [vmem:[%s0 + $0xec8] sm:$0xf]
  %v972 = vld [vmem:[%s0 + $0xecc] sm:$0xf]
  %v973 = vld [vmem:[%s0 + $0xed0] sm:$0xf]
  %v974 = vld [vmem:[%s0 + $0xed4] sm:$0xf]
  %v975 = vld [vmem:[%s0 + $0xed8] sm:$0xf]
  %v976 = vld [vmem:[%s0 + $0xedc] sm:$0xf]
  %v977 = vld [vmem:[%s0 + $0xee0] sm:$0xf]
  %v978 = vld [vmem:[%s0 + $0xee4] sm:$0xf]
  %v979 = vld [vmem:[%s0 + $0xee8] sm:$0xf]
  %v980 = vld [vmem:[%s0 + $0xeec] sm:$0xf]
  %v981 = vld [vmem:[%s0 + $0xef0] sm:$0xf]
  %v982 = vld [vmem:[%s0 + $0xef4] sm:$0xf]
  %v983 = vld [vmem:[%s0 + $0xef8] sm:$0xf]
  %v984 = vld [vmem:[%s0 + $0xefc] sm:$0xf]
  %v985 = vld [vmem:[%s0 + $0xf00] sm:$0xf]
  %v986 = vld [vmem:[%s0 + $0xf04] sm:$0xf]
  %v987 = vld [vmem:[%s0 + $0xf08] sm:$0xf]
  %v988 = vld [vmem:[%s0 + $0xf0c] sm:$0xf]
  %v989 = vld [vmem:[%s0 + $0xf10] sm:$0xf]
  %v990 = vld [vmem:[%s0 + $0xf14] sm:$0xf]
  %v991 = vld [vmem:[%s0 + $0xf18] sm:$0xf]
  %v992 = vld [vmem:[%s0 + $0xf1c] sm:$0xf]
  %v993 = vld [vmem:[%s0 + $0xf20] sm:$0xf]
  %v994 = vld [vmem:[%s0 + $0xf24] sm:$0xf]
  %v995 = vld [vmem:[%s0 + $0xf28] sm:$0xf]
  %v996 = vld [vmem:[%s0 + $0xf2c] sm:$0xf]
  %v997 = vld [vmem:[%s0 + $0xf30] sm:$0xf]
  %v998 = vld [vmem:[%s0 + $0xf34] sm:$0xf]
  %v999 = vld [vmem:[%s0 + $0xf38] sm:$0xf]
  %v1000 = vld [vmem:[%s0 + $0xf3c] sm:$0xf]
  %v1001 = vld [vmem:[%s0 + $0xf40] sm:$0xf]
  %v1002 = vld [vmem:[%s0 + $0xf44] sm:$0xf]
  %v1003 = vld [vmem:[%s0 + $0xf48] sm:$0xf]
  %v1004 = vld [vmem:[%s0 + $0xf4c] sm:$0xf]
  %v1005 = vld [vmem:[%s0 + $0xf50] sm:$0xf]
  %v1006 = vld [vmem:[%s0 + $0xf54] sm:$0xf]
  %v1007 = vld [vmem:[%s0 + $0xf58] sm:$0xf]
  %v1008 = vld [vmem:[%s0 + $0xf5c] sm:$0xf]
  %v1009 = vld [vmem:[%s0 + $0xf60] sm:$0xf]
  %v1010 = vld [vmem:[%s0 + $0xf64] sm:$0xf]
  %v1011 = vld [vmem:[%s0 + $0xf68] sm:$0xf]
  %v1012 = vld [vmem:[%s0 + $0xf6c] sm:$0xf]
  %v1013 = vld [vmem:[%s0 + $0xf70] sm:$0xf]
  %v1014 = vld [vmem:[%s0 + $0xf74] sm:$0xf]
  %v1015 = vld [vmem:[%s0 + $0xf78] sm:$0xf]
  %v1016 = vld [vmem:[%s0 + $0xf7c] sm:$0xf]
  %v1017 = vld [vmem:[%s0 + $0xf80] sm:$0xf]
  %v1018 = vld [vmem:[%s0 + $0xf84] sm:$0xf]
  %v1019 = vld [vmem:[%s0 + $0xf88] sm:$0xf]
  %v1020 = vld [vmem:[%s0 + $0xf8c] sm:$0xf]
  %v1021 = vld [vmem:[%s0 + $0xf90] sm:$0xf]
  %v1022 = vld [vmem:[%s0 + $0xf94] sm:$0xf]
  %v1023 = vld [vmem:[%s0 + $0xf98] sm:$0xf]
  %v1024 = vld [vmem:[%s0 + $0xf9c] sm:$0xf]
  %v1025 = vld [vmem:[%s0 + $0xfa0] sm:$0xf]
  %v1026 = vld [vmem:[%s0 + $0xfa4] sm:$0xf]
  %v1027 = vld [vmem:[%s0 + $0xfa8] sm:$0xf]
  %v1028 = vld [vmem:[%s0 + $0xfac] sm:$0xf]
  %v1029 = vld [vmem:[%s0 + $0xfb0] sm:$0xf]
  %v1030 = vld [vmem:[%s0 + $0xfb4] sm:$0xf]
  %v1031 = vld [vmem:[%s0 + $0xfb8] sm:$0xf]
  %v1032 = vld [vmem:[%s0 + $0xfbc] sm:$0xf]
  %v1033 = vld [vmem:[%s0 + $0xfc0] sm:$0xf]
  %v1034 = vld [vmem:[%s0 + $0xfc4] sm:$0xf]
  %v1035 = vld [vmem:[%s0 + $0xfc8] sm:$0xf]
  %v1036 = vld [vmem:[%s0 + $0xfcc] sm:$0xf]
  %v1037 = vld [vmem:[%s0 + $0xfd0] sm:$0xf]
  %v1038 = vld [vmem:[%s0 + $0xfd4] sm:$0xf]
  %v1039 = vld [vmem:[%s0 + $0xfd8] sm:$0xf]
  %v1040 = vld [vmem:[%s0 + $0xfdc] sm:$0xf]
  %v1041 = vld [vmem:[%s0 + $0xfe0] sm:$0xf]
  %v1042 = vld [vmem:[%s0 + $0xfe4] sm:$0xf]
  %v1043 = vld [vmem:[%s0 + $0xfe8] sm:$0xf]
  %v1044 = vld [vmem:[%s0 + $0xfec] sm:$0xf]
  %v1045 = vld [vmem:[%s0 + $0xff0] sm:$0xf]
  %v1046 = vld [vmem:[%s0 + $0xff4] sm:$0xf]
  %v1047 = vld [vmem:[%s0 + $0xff8] sm:$0xf]
  %v1048 = vld [vmem:[%s0 + $0xffc] sm:$0xf]
  %v1049 = vld [vmem:[#allocation2] sm:$0x1]
  %1051 = vset.pattern.permute.xlu0 0
  %1052 = vperm.xlu0 %1051, %v1049
  %v1053 = vpop.permute.xlu0 %1052
  %v1055 = vlaneseq
  %v1056 = vshrl.u32 %v1055, 7
  %v1057 = vsub.s32 0, %v1056
  %v1058 = vrot.slane %v1053, %v1057
  %v1067 = vcombine.high %v17, %v17
  %v1069 = vunpack.c.l.s4 1966171168
  %v1070 = vunpack.c.0.s8 %v1069
  %v1071 = vlaneseq
  %v1072 = vshrl.u32 %v1071, 7
  %v1073 = vsub.s32 %v1070, %v1072
  %v1074 = vrot.slane %v17, %v1073
  %v1076 = vunpack.c.l.s4 1966171168
  %v1077 = vunpack.c.0.s8 %v1076
  %v1078 = vlaneseq
  %v1079 = vshrl.u32 %v1078, 7
  %v1080 = vsub.s32 %v1077, %v1079
  %v1081 = vrot.slane %v1067, %v1080
  %v1082 = vcombine.high %v1074, %v1074
  %v1083 = vcombine.high %v1081, %v1081
  %v1085 = vunpack.c.l.s4 1966171168
  %v1086 = vunpack.c.0.s8 %v1085
  %v1087 = vlaneseq
  %v1088 = vshrl.u32 %v1087, 7
  %v1089 = vsub.s32 %v1086, %v1088
  %v1090 = vrot.slane %v1074, %v1089
  %v1092 = vunpack.c.l.s4 1966171168
  %v1093 = vunpack.c.0.s8 %v1092
  %v1094 = vlaneseq
  %v1095 = vshrl.u32 %v1094, 7
  %v1096 = vsub.s32 %v1093, %v1095
  %v1097 = vrot.slane %v1081, %v1096
  %v1099 = vunpack.c.l.s4 1966171168
  %v1100 = vunpack.c.0.s8 %v1099
  %v1101 = vlaneseq
  %v1102 = vshrl.u32 %v1101, 7
  %v1103 = vsub.s32 %v1100, %v1102
  %v1104 = vrot.slane %v1082, %v1103
  %v1106 = vunpack.c.l.s4 1966171168
  %v1107 = vunpack.c.0.s8 %v1106
  %v1108 = vlaneseq
  %v1109 = vshrl.u32 %v1108, 7
  %v1110 = vsub.s32 %v1107, %v1109
  %v1111 = vrot.slane %v1083, %v1110
  %v1112 = vcombine.high %v1090, %v1090
  %v1113 = vcombine.high %v1097, %v1097
  %v1114 = vcombine.high %v1104, %v1104
  %v1115 = vcombine.high %v1111, %v1111
  %v1116 = vcombine.high %v18, %v18
  %v1118 = vunpack.c.l.s4 1966171168
  %v1119 = vunpack.c.0.s8 %v1118
  %v1120 = vlaneseq
  %v1121 = vshrl.u32 %v1120, 7
  %v1122 = vsub.s32 %v1119, %v1121
  %v1123 = vrot.slane %v18, %v1122
  %v1125 = vunpack.c.l.s4 1966171168
  %v1126 = vunpack.c.0.s8 %v1125
  %v1127 = vlaneseq
  %v1128 = vshrl.u32 %v1127, 7
  %v1129 = vsub.s32 %v1126, %v1128
  %v1130 = vrot.slane %v1116, %v1129
  %v1131 = vcombine.high %v1123, %v1123
  %v1132 = vcombine.high %v1130, %v1130
  %v1134 = vunpack.c.l.s4 1966171168
  %v1135 = vunpack.c.0.s8 %v1134
  %v1136 = vlaneseq
  %v1137 = vshrl.u32 %v1136, 7
  %v1138 = vsub.s32 %v1135, %v1137
  %v1139 = vrot.slane %v1123, %v1138
  %v1141 = vunpack.c.l.s4 1966171168
  %v1142 = vunpack.c.0.s8 %v1141
  %v1143 = vlaneseq
  %v1144 = vshrl.u32 %v1143, 7
  %v1145 = vsub.s32 %v1142, %v1144
  %v1146 = vrot.slane %v1130, %v1145
  %v1148 = vunpack.c.l.s4 1966171168
  %v1149 = vunpack.c.0.s8 %v1148
  %v1150 = vlaneseq
  %v1151 = vshrl.u32 %v1150, 7
  %v1152 = vsub.s32 %v1149, %v1151
  %v1153 = vrot.slane %v1131, %v1152
  %v1155 = vunpack.c.l.s4 1966171168
  %v1156 = vunpack.c.0.s8 %v1155
  %v1157 = vlaneseq
  %v1158 = vshrl.u32 %v1157, 7
  %v1159 = vsub.s32 %v1156, %v1158
  %v1160 = vrot.slane %v1132, %v1159
  %v1161 = vcombine.high %v1139, %v1139
  %v1162 = vcombine.high %v1146, %v1146
  %v1163 = vcombine.high %v1153, %v1153
  %v1164 = vcombine.high %v1160, %v1160
  %v1165 = vcombine.high %v19, %v19
  %v1167 = vunpack.c.l.s4 1966171168
  %v1168 = vunpack.c.0.s8 %v1167
  %v1169 = vlaneseq
  %v1170 = vshrl.u32 %v1169, 7
  %v1171 = vsub.s32 %v1168, %v1170
  %v1172 = vrot.slane %v19, %v1171
  %v1174 = vunpack.c.l.s4 1966171168
  %v1175 = vunpack.c.0.s8 %v1174
  %v1176 = vlaneseq
  %v1177 = vshrl.u32 %v1176, 7
  %v1178 = vsub.s32 %v1175, %v1177
  %v1179 = vrot.slane %v1165, %v1178
  %v1180 = vcombine.high %v1172, %v1172
  %v1181 = vcombine.high %v1179, %v1179
  %v1183 = vunpack.c.l.s4 1966171168
  %v1184 = vunpack.c.0.s8 %v1183
  %v1185 = vlaneseq
  %v1186 = vshrl.u32 %v1185, 7
  %v1187 = vsub.s32 %v1184, %v1186
  %v1188 = vrot.slane %v1172, %v1187
  %v1190 = vunpack.c.l.s4 1966171168
  %v1191 = vunpack.c.0.s8 %v1190
  %v1192 = vlaneseq
  %v1193 = vshrl.u32 %v1192, 7
  %v1194 = vsub.s32 %v1191, %v1193
  %v1195 = vrot.slane %v1179, %v1194
  %v1197 = vunpack.c.l.s4 1966171168
  %v1198 = vunpack.c.0.s8 %v1197
  %v1199 = vlaneseq
  %v1200 = vshrl.u32 %v1199, 7
  %v1201 = vsub.s32 %v1198, %v1200
  %v1202 = vrot.slane %v1180, %v1201
  %v1204 = vunpack.c.l.s4 1966171168
  %v1205 = vunpack.c.0.s8 %v1204
  %v1206 = vlaneseq
  %v1207 = vshrl.u32 %v1206, 7
  %v1208 = vsub.s32 %v1205, %v1207
  %v1209 = vrot.slane %v1181, %v1208
  %v1210 = vcombine.high %v1188, %v1188
  %v1211 = vcombine.high %v1195, %v1195
  %v1212 = vcombine.high %v1202, %v1202
  %v1213 = vcombine.high %v1209, %v1209
  %v1214 = vcombine.high %v20, %v20
  %v1216 = vunpack.c.l.s4 1966171168
  %v1217 = vunpack.c.0.s8 %v1216
  %v1218 = vlaneseq
  %v1219 = vshrl.u32 %v1218, 7
  %v1220 = vsub.s32 %v1217, %v1219
  %v1221 = vrot.slane %v20, %v1220
  %v1223 = vunpack.c.l.s4 1966171168
  %v1224 = vunpack.c.0.s8 %v1223
  %v1225 = vlaneseq
  %v1226 = vshrl.u32 %v1225, 7
  %v1227 = vsub.s32 %v1224, %v1226
  %v1228 = vrot.slane %v1214, %v1227
  %v1229 = vcombine.high %v1221, %v1221
  %v1230 = vcombine.high %v1228, %v1228
  %v1232 = vunpack.c.l.s4 1966171168
  %v1233 = vunpack.c.0.s8 %v1232
  %v1234 = vlaneseq
  %v1235 = vshrl.u32 %v1234, 7
  %v1236 = vsub.s32 %v1233, %v1235
  %v1237 = vrot.slane %v1221, %v1236
  %v1239 = vunpack.c.l.s4 1966171168
  %v1240 = vunpack.c.0.s8 %v1239
  %v1241 = vlaneseq
  %v1242 = vshrl.u32 %v1241, 7
  %v1243 = vsub.s32 %v1240, %v1242
  %v1244 = vrot.slane %v1228, %v1243
  %v1246 = vunpack.c.l.s4 1966171168
  %v1247 = vunpack.c.0.s8 %v1246
  %v1248 = vlaneseq
  %v1249 = vshrl.u32 %v1248, 7
  %v1250 = vsub.s32 %v1247, %v1249
  %v1251 = vrot.slane %v1229, %v1250
  %v1253 = vunpack.c.l.s4 1966171168
  %v1254 = vunpack.c.0.s8 %v1253
  %v1255 = vlaneseq
  %v1256 = vshrl.u32 %v1255, 7
  %v1257 = vsub.s32 %v1254, %v1256
  %v1258 = vrot.slane %v1230, %v1257
  %v1259 = vcombine.high %v1237, %v1237
  %v1260 = vcombine.high %v1244, %v1244
  %v1261 = vcombine.high %v1251, %v1251
  %v1262 = vcombine.high %v1258, %v1258
  %v1263 = vcombine.high %v21, %v21
  %v1265 = vunpack.c.l.s4 1966171168
  %v1266 = vunpack.c.0.s8 %v1265
  %v1267 = vlaneseq
  %v1268 = vshrl.u32 %v1267, 7
  %v1269 = vsub.s32 %v1266, %v1268
  %v1270 = vrot.slane %v21, %v1269
  %v1272 = vunpack.c.l.s4 1966171168
  %v1273 = vunpack.c.0.s8 %v1272
  %v1274 = vlaneseq
  %v1275 = vshrl.u32 %v1274, 7
  %v1276 = vsub.s32 %v1273, %v1275
  %v1277 = vrot.slane %v1263, %v1276
  %v1278 = vcombine.high %v1270, %v1270
  %v1279 = vcombine.high %v1277, %v1277
  %v1281 = vunpack.c.l.s4 1966171168
  %v1282 = vunpack.c.0.s8 %v1281
  %v1283 = vlaneseq
  %v1284 = vshrl.u32 %v1283, 7
  %v1285 = vsub.s32 %v1282, %v1284
  %v1286 = vrot.slane %v1270, %v1285
  %v1288 = vunpack.c.l.s4 1966171168
  %v1289 = vunpack.c.0.s8 %v1288
  %v1290 = vlaneseq
  %v1291 = vshrl.u32 %v1290, 7
  %v1292 = vsub.s32 %v1289, %v1291
  %v1293 = vrot.slane %v1277, %v1292
  %v1295 = vunpack.c.l.s4 1966171168
  %v1296 = vunpack.c.0.s8 %v1295
  %v1297 = vlaneseq
  %v1298 = vshrl.u32 %v1297, 7
  %v1299 = vsub.s32 %v1296, %v1298
  %v1300 = vrot.slane %v1278, %v1299
  %v1302 = vunpack.c.l.s4 1966171168
  %v1303 = vunpack.c.0.s8 %v1302
  %v1304 = vlaneseq
  %v1305 = vshrl.u32 %v1304, 7
  %v1306 = vsub.s32 %v1303, %v1305
  %v1307 = vrot.slane %v1279, %v1306
  %v1308 = vcombine.high %v1286, %v1286
  %v1309 = vcombine.high %v1293, %v1293
  %v1310 = vcombine.high %v1300, %v1300
  %v1311 = vcombine.high %v1307, %v1307
  %v1312 = vcombine.high %v22, %v22
  %v1314 = vunpack.c.l.s4 1966171168
  %v1315 = vunpack.c.0.s8 %v1314
  %v1316 = vlaneseq
  %v1317 = vshrl.u32 %v1316, 7
  %v1318 = vsub.s32 %v1315, %v1317
  %v1319 = vrot.slane %v22, %v1318
  %v1321 = vunpack.c.l.s4 1966171168
  %v1322 = vunpack.c.0.s8 %v1321
  %v1323 = vlaneseq
  %v1324 = vshrl.u32 %v1323, 7
  %v1325 = vsub.s32 %v1322, %v1324
  %v1326 = vrot.slane %v1312, %v1325
  %v1327 = vcombine.high %v1319, %v1319
  %v1328 = vcombine.high %v1326, %v1326
  %v1330 = vunpack.c.l.s4 1966171168
  %v1331 = vunpack.c.0.s8 %v1330
  %v1332 = vlaneseq
  %v1333 = vshrl.u32 %v1332, 7
  %v1334 = vsub.s32 %v1331, %v1333
  %v1335 = vrot.slane %v1319, %v1334
  %v1337 = vunpack.c.l.s4 1966171168
  %v1338 = vunpack.c.0.s8 %v1337
  %v1339 = vlaneseq
  %v1340 = vshrl.u32 %v1339, 7
  %v1341 = vsub.s32 %v1338, %v1340
  %v1342 = vrot.slane %v1326, %v1341
  %v1344 = vunpack.c.l.s4 1966171168
  %v1345 = vunpack.c.0.s8 %v1344
  %v1346 = vlaneseq
  %v1347 = vshrl.u32 %v1346, 7
  %v1348 = vsub.s32 %v1345, %v1347
  %v1349 = vrot.slane %v1327, %v1348
  %v1351 = vunpack.c.l.s4 1966171168
  %v1352 = vunpack.c.0.s8 %v1351
  %v1353 = vlaneseq
  %v1354 = vshrl.u32 %v1353, 7
  %v1355 = vsub.s32 %v1352, %v1354
  %v1356 = vrot.slane %v1328, %v1355
  %v1357 = vcombine.high %v1335, %v1335
  %v1358 = vcombine.high %v1342, %v1342
  %v1359 = vcombine.high %v1349, %v1349
  %v1360 = vcombine.high %v1356, %v1356
  %v1361 = vcombine.high %v23, %v23
  %v1363 = vunpack.c.l.s4 1966171168
  %v1364 = vunpack.c.0.s8 %v1363
  %v1365 = vlaneseq
  %v1366 = vshrl.u32 %v1365, 7
  %v1367 = vsub.s32 %v1364, %v1366
  %v1368 = vrot.slane %v23, %v1367
  %v1370 = vunpack.c.l.s4 1966171168
  %v1371 = vunpack.c.0.s8 %v1370
  %v1372 = vlaneseq
  %v1373 = vshrl.u32 %v1372, 7
  %v1374 = vsub.s32 %v1371, %v1373
  %v1375 = vrot.slane %v1361, %v1374
  %v1376 = vcombine.high %v1368, %v1368
  %v1377 = vcombine.high %v1375, %v1375
  %v1379 = vunpack.c.l.s4 1966171168
  %v1380 = vunpack.c.0.s8 %v1379
  %v1381 = vlaneseq
  %v1382 = vshrl.u32 %v1381, 7
  %v1383 = vsub.s32 %v1380, %v1382
  %v1384 = vrot.slane %v1368, %v1383
  %v1386 = vunpack.c.l.s4 1966171168
  %v1387 = vunpack.c.0.s8 %v1386
  %v1388 = vlaneseq
  %v1389 = vshrl.u32 %v1388, 7
  %v1390 = vsub.s32 %v1387, %v1389
  %v1391 = vrot.slane %v1375, %v1390
  %v1393 = vunpack.c.l.s4 1966171168
  %v1394 = vunpack.c.0.s8 %v1393
  %v1395 = vlaneseq
  %v1396 = vshrl.u32 %v1395, 7
  %v1397 = vsub.s32 %v1394, %v1396
  %v1398 = vrot.slane %v1376, %v1397
  %v1400 = vunpack.c.l.s4 1966171168
  %v1401 = vunpack.c.0.s8 %v1400
  %v1402 = vlaneseq
  %v1403 = vshrl.u32 %v1402, 7
  %v1404 = vsub.s32 %v1401, %v1403
  %v1405 = vrot.slane %v1377, %v1404
  %v1406 = vcombine.high %v1384, %v1384
  %v1407 = vcombine.high %v1391, %v1391
  %v1408 = vcombine.high %v1398, %v1398
  %v1409 = vcombine.high %v1405, %v1405
  %v1410 = vcombine.high %v24, %v24
  %v1412 = vunpack.c.l.s4 1966171168
  %v1413 = vunpack.c.0.s8 %v1412
  %v1414 = vlaneseq
  %v1415 = vshrl.u32 %v1414, 7
  %v1416 = vsub.s32 %v1413, %v1415
  %v1417 = vrot.slane %v24, %v1416
  %v1419 = vunpack.c.l.s4 1966171168
  %v1420 = vunpack.c.0.s8 %v1419
  %v1421 = vlaneseq
  %v1422 = vshrl.u32 %v1421, 7
  %v1423 = vsub.s32 %v1420, %v1422
  %v1424 = vrot.slane %v1410, %v1423
  %v1425 = vcombine.high %v1417, %v1417
  %v1426 = vcombine.high %v1424, %v1424
  %v1428 = vunpack.c.l.s4 1966171168
  %v1429 = vunpack.c.0.s8 %v1428
  %v1430 = vlaneseq
  %v1431 = vshrl.u32 %v1430, 7
  %v1432 = vsub.s32 %v1429, %v1431
  %v1433 = vrot.slane %v1417, %v1432
  %v1435 = vunpack.c.l.s4 1966171168
  %v1436 = vunpack.c.0.s8 %v1435
  %v1437 = vlaneseq
  %v1438 = vshrl.u32 %v1437, 7
  %v1439 = vsub.s32 %v1436, %v1438
  %v1440 = vrot.slane %v1424, %v1439
  %v1442 = vunpack.c.l.s4 1966171168
  %v1443 = vunpack.c.0.s8 %v1442
  %v1444 = vlaneseq
  %v1445 = vshrl.u32 %v1444, 7
  %v1446 = vsub.s32 %v1443, %v1445
  %v1447 = vrot.slane %v1425, %v1446
  %v1449 = vunpack.c.l.s4 1966171168
  %v1450 = vunpack.c.0.s8 %v1449
  %v1451 = vlaneseq
  %v1452 = vshrl.u32 %v1451, 7
  %v1453 = vsub.s32 %v1450, %v1452
  %v1454 = vrot.slane %v1426, %v1453
  %v1455 = vcombine.high %v1433, %v1433
  %v1456 = vcombine.high %v1440, %v1440
  %v1457 = vcombine.high %v1447, %v1447
  %v1458 = vcombine.high %v1454, %v1454
  %v2547 = vunpack.c.l.b16 %v25
  %v2548 = vunpack.c.l.b16 %v26
  %v2549 = vunpack.c.l.b16 %v27
  %v2550 = vunpack.c.l.b16 %v28
  %v2551 = vunpack.c.l.b16 %v29
  %v2552 = vunpack.c.l.b16 %v30
  %v2553 = vunpack.c.l.b16 %v31
  %v2554 = vunpack.c.l.b16 %v32
  %v2555 = vunpack.c.l.b16 %v33
  %v2556 = vunpack.c.l.b16 %v34
  %v2557 = vunpack.c.l.b16 %v35
  %v2558 = vunpack.c.l.b16 %v36
  %v2559 = vunpack.c.l.b16 %v37
  %v2560 = vunpack.c.l.b16 %v38
  %v2561 = vunpack.c.l.b16 %v39
  %v2562 = vunpack.c.l.b16 %v40
  %v2563 = vunpack.c.l.b16 %v41
  %v2564 = vunpack.c.l.b16 %v42
  %v2565 = vunpack.c.l.b16 %v43
  %v2566 = vunpack.c.l.b16 %v44
  %v2567 = vunpack.c.l.b16 %v45
  %v2568 = vunpack.c.l.b16 %v46
  %v2569 = vunpack.c.l.b16 %v47
  %v2570 = vunpack.c.l.b16 %v48
  %v2571 = vunpack.c.l.b16 %v49
  %v2572 = vunpack.c.l.b16 %v50
  %v2573 = vunpack.c.l.b16 %v51
  %v2574 = vunpack.c.l.b16 %v52
  %v2575 = vunpack.c.l.b16 %v53
  %v2576 = vunpack.c.l.b16 %v54
  %v2577 = vunpack.c.l.b16 %v55
  %v2578 = vunpack.c.l.b16 %v56
  %v2579 = vunpack.c.l.b16 %v57
  %v2580 = vunpack.c.l.b16 %v58
  %v2581 = vunpack.c.l.b16 %v59
  %v2582 = vunpack.c.l.b16 %v60
  %v2583 = vunpack.c.l.b16 %v61
  %v2584 = vunpack.c.l.b16 %v62
  %v2585 = vunpack.c.l.b16 %v63
  %v2586 = vunpack.c.l.b16 %v64
  %v2587 = vunpack.c.l.b16 %v65
  %v2588 = vunpack.c.l.b16 %v66
  %v2589 = vunpack.c.l.b16 %v67
  %v2590 = vunpack.c.l.b16 %v68
  %v2591 = vunpack.c.l.b16 %v69
  %v2592 = vunpack.c.l.b16 %v70
  %v2593 = vunpack.c.l.b16 %v71
  %v2594 = vunpack.c.l.b16 %v72
  %v2595 = vunpack.c.l.b16 %v73
  %v2596 = vunpack.c.l.b16 %v74
  %v2597 = vunpack.c.l.b16 %v75
  %v2598 = vunpack.c.l.b16 %v76
  %v2599 = vunpack.c.l.b16 %v77
  %v2600 = vunpack.c.l.b16 %v78
  %v2601 = vunpack.c.l.b16 %v79
  %v2602 = vunpack.c.l.b16 %v80
  %v2603 = vunpack.c.l.b16 %v81
  %v2604 = vunpack.c.l.b16 %v82
  %v2605 = vunpack.c.l.b16 %v83
  %v2606 = vunpack.c.l.b16 %v84
  %v2607 = vunpack.c.l.b16 %v85
  %v2608 = vunpack.c.l.b16 %v86
  %v2609 = vunpack.c.l.b16 %v87
  %v2610 = vunpack.c.l.b16 %v88
  %v2611 = vunpack.c.l.b16 %v89
  %v2612 = vunpack.c.l.b16 %v90
  %v2613 = vunpack.c.l.b16 %v91
  %v2614 = vunpack.c.l.b16 %v92
  %v2615 = vunpack.c.l.b16 %v93
  %v2616 = vunpack.c.l.b16 %v94
  %v2617 = vunpack.c.l.b16 %v95
  %v2618 = vunpack.c.l.b16 %v96
  %v2619 = vunpack.c.l.b16 %v97
  %v2620 = vunpack.c.l.b16 %v98
  %v2621 = vunpack.c.l.b16 %v99
  %v2622 = vunpack.c.l.b16 %v100
  %v2623 = vunpack.c.l.b16 %v101
  %v2624 = vunpack.c.l.b16 %v102
  %v2625 = vunpack.c.l.b16 %v103
  %v2626 = vunpack.c.l.b16 %v104
  %v2627 = vunpack.c.l.b16 %v105
  %v2628 = vunpack.c.l.b16 %v106
  %v2629 = vunpack.c.l.b16 %v107
  %v2630 = vunpack.c.l.b16 %v108
  %v2631 = vunpack.c.l.b16 %v109
  %v2632 = vunpack.c.l.b16 %v110
  %v2633 = vunpack.c.l.b16 %v111
  %v2634 = vunpack.c.l.b16 %v112
  %v2635 = vunpack.c.l.b16 %v113
  %v2636 = vunpack.c.l.b16 %v114
  %v2637 = vunpack.c.l.b16 %v115
  %v2638 = vunpack.c.l.b16 %v116
  %v2639 = vunpack.c.l.b16 %v117
  %v2640 = vunpack.c.l.b16 %v118
  %v2641 = vunpack.c.l.b16 %v119
  %v2642 = vunpack.c.l.b16 %v120
  %v2643 = vunpack.c.l.b16 %v121
  %v2644 = vunpack.c.l.b16 %v122
  %v2645 = vunpack.c.l.b16 %v123
  %v2646 = vunpack.c.l.b16 %v124
  %v2647 = vunpack.c.l.b16 %v125
  %v2648 = vunpack.c.l.b16 %v126
  %v2649 = vunpack.c.l.b16 %v127
  %v2650 = vunpack.c.l.b16 %v128
  %v2651 = vunpack.c.l.b16 %v129
  %v2652 = vunpack.c.l.b16 %v130
  %v2653 = vunpack.c.l.b16 %v131
  %v2654 = vunpack.c.l.b16 %v132
  %v2655 = vunpack.c.l.b16 %v133
  %v2656 = vunpack.c.l.b16 %v134
  %v2657 = vunpack.c.l.b16 %v135
  %v2658 = vunpack.c.l.b16 %v136
  %v2659 = vunpack.c.l.b16 %v137
  %v2660 = vunpack.c.l.b16 %v138
  %v2661 = vunpack.c.l.b16 %v139
  %v2662 = vunpack.c.l.b16 %v140
  %v2663 = vunpack.c.l.b16 %v141
  %v2664 = vunpack.c.l.b16 %v142
  %v2665 = vunpack.c.l.b16 %v143
  %v2666 = vunpack.c.l.b16 %v144
  %v2667 = vunpack.c.l.b16 %v145
  %v2668 = vunpack.c.l.b16 %v146
  %v2669 = vunpack.c.l.b16 %v147
  %v2670 = vunpack.c.l.b16 %v148
  %v2671 = vunpack.c.l.b16 %v149
  %v2672 = vunpack.c.l.b16 %v150
  %v2673 = vunpack.c.l.b16 %v151
  %v2674 = vunpack.c.l.b16 %v152
  %v2675 = vunpack.c.l.b16 %v153
  %v2676 = vunpack.c.l.b16 %v154
  %v2677 = vunpack.c.l.b16 %v155
  %v2678 = vunpack.c.l.b16 %v156
  %v2679 = vunpack.c.l.b16 %v157
  %v2680 = vunpack.c.l.b16 %v158
  %v2681 = vunpack.c.l.b16 %v159
  %v2682 = vunpack.c.l.b16 %v160
  %v2683 = vunpack.c.l.b16 %v161
  %v2684 = vunpack.c.l.b16 %v162
  %v2685 = vunpack.c.l.b16 %v163
  %v2686 = vunpack.c.l.b16 %v164
  %v2687 = vunpack.c.l.b16 %v165
  %v2688 = vunpack.c.l.b16 %v166
  %v2689 = vunpack.c.l.b16 %v167
  %v2690 = vunpack.c.l.b16 %v168
  %v2691 = vunpack.c.l.b16 %v169
  %v2692 = vunpack.c.l.b16 %v170
  %v2693 = vunpack.c.l.b16 %v171
  %v2694 = vunpack.c.l.b16 %v172
  %v2695 = vunpack.c.l.b16 %v173
  %v2696 = vunpack.c.l.b16 %v174
  %v2697 = vunpack.c.l.b16 %v175
  %v2698 = vunpack.c.l.b16 %v176
  %v2699 = vunpack.c.l.b16 %v177
  %v2700 = vunpack.c.l.b16 %v178
  %v2701 = vunpack.c.l.b16 %v179
  %v2702 = vunpack.c.l.b16 %v180
  %v2703 = vunpack.c.l.b16 %v181
  %v2704 = vunpack.c.l.b16 %v182
  %v2705 = vunpack.c.l.b16 %v183
  %v2706 = vunpack.c.l.b16 %v184
  %v2707 = vunpack.c.l.b16 %v185
  %v2708 = vunpack.c.l.b16 %v186
  %v2709 = vunpack.c.l.b16 %v187
  %v2710 = vunpack.c.l.b16 %v188
  %v2711 = vunpack.c.l.b16 %v189
  %v2712 = vunpack.c.l.b16 %v190
  %v2713 = vunpack.c.l.b16 %v191
  %v2714 = vunpack.c.l.b16 %v192
  %v2715 = vunpack.c.l.b16 %v193
  %v2716 = vunpack.c.l.b16 %v194
  %v2717 = vunpack.c.l.b16 %v195
  %v2718 = vunpack.c.l.b16 %v196
  %v2719 = vunpack.c.l.b16 %v197
  %v2720 = vunpack.c.l.b16 %v198
  %v2721 = vunpack.c.l.b16 %v199
  %v2722 = vunpack.c.l.b16 %v200
  %v2723 = vunpack.c.l.b16 %v201
  %v2724 = vunpack.c.l.b16 %v202
  %v2725 = vunpack.c.l.b16 %v203
  %v2726 = vunpack.c.l.b16 %v204
  %v2727 = vunpack.c.l.b16 %v205
  %v2728 = vunpack.c.l.b16 %v206
  %v2729 = vunpack.c.l.b16 %v207
  %v2730 = vunpack.c.l.b16 %v208
  %v2731 = vunpack.c.l.b16 %v209
  %v2732 = vunpack.c.l.b16 %v210
  %v2733 = vunpack.c.l.b16 %v211
  %v2734 = vunpack.c.l.b16 %v212
  %v2735 = vunpack.c.l.b16 %v213
  %v2736 = vunpack.c.l.b16 %v214
  %v2737 = vunpack.c.l.b16 %v215
  %v2738 = vunpack.c.l.b16 %v216
  %v2739 = vunpack.c.l.b16 %v217
  %v2740 = vunpack.c.l.b16 %v218
  %v2741 = vunpack.c.l.b16 %v219
  %v2742 = vunpack.c.l.b16 %v220
  %v2743 = vunpack.c.l.b16 %v221
  %v2744 = vunpack.c.l.b16 %v222
  %v2745 = vunpack.c.l.b16 %v223
  %v2746 = vunpack.c.l.b16 %v224
  %v2747 = vunpack.c.l.b16 %v225
  %v2748 = vunpack.c.l.b16 %v226
  %v2749 = vunpack.c.l.b16 %v227
  %v2750 = vunpack.c.l.b16 %v228
  %v2751 = vunpack.c.l.b16 %v229
  %v2752 = vunpack.c.l.b16 %v230
  %v2753 = vunpack.c.l.b16 %v231
  %v2754 = vunpack.c.l.b16 %v232
  %v2755 = vunpack.c.l.b16 %v233
  %v2756 = vunpack.c.l.b16 %v234
  %v2757 = vunpack.c.l.b16 %v235
  %v2758 = vunpack.c.l.b16 %v236
  %v2759 = vunpack.c.l.b16 %v237
  %v2760 = vunpack.c.l.b16 %v238
  %v2761 = vunpack.c.l.b16 %v239
  %v2762 = vunpack.c.l.b16 %v240
  %v2763 = vunpack.c.l.b16 %v241
  %v2764 = vunpack.c.l.b16 %v242
  %v2765 = vunpack.c.l.b16 %v243
  %v2766 = vunpack.c.l.b16 %v244
  %v2767 = vunpack.c.l.b16 %v245
  %v2768 = vunpack.c.l.b16 %v246
  %v2769 = vunpack.c.l.b16 %v247
  %v2770 = vunpack.c.l.b16 %v248
  %v2771 = vunpack.c.l.b16 %v249
  %v2772 = vunpack.c.l.b16 %v250
  %v2773 = vunpack.c.l.b16 %v251
  %v2774 = vunpack.c.l.b16 %v252
  %v2775 = vunpack.c.l.b16 %v253
  %v2776 = vunpack.c.l.b16 %v254
  %v2777 = vunpack.c.l.b16 %v255
  %v2778 = vunpack.c.l.b16 %v256
  %v2779 = vunpack.c.l.b16 %v257
  %v2780 = vunpack.c.l.b16 %v258
  %v2781 = vunpack.c.l.b16 %v259
  %v2782 = vunpack.c.l.b16 %v260
  %v2783 = vunpack.c.l.b16 %v261
  %v2784 = vunpack.c.l.b16 %v262
  %v2785 = vunpack.c.l.b16 %v263
  %v2786 = vunpack.c.l.b16 %v264
  %v2787 = vunpack.c.l.b16 %v265
  %v2788 = vunpack.c.l.b16 %v266
  %v2789 = vunpack.c.l.b16 %v267
  %v2790 = vunpack.c.l.b16 %v268
  %v2791 = vunpack.c.l.b16 %v269
  %v2792 = vunpack.c.l.b16 %v270
  %v2793 = vunpack.c.l.b16 %v271
  %v2794 = vunpack.c.l.b16 %v272
  %v2795 = vunpack.c.l.b16 %v273
  %v2796 = vunpack.c.l.b16 %v274
  %v2797 = vunpack.c.l.b16 %v275
  %v2798 = vunpack.c.l.b16 %v276
  %v2799 = vunpack.c.l.b16 %v277
  %v2800 = vunpack.c.l.b16 %v278
  %v2801 = vunpack.c.l.b16 %v279
  %v2802 = vunpack.c.l.b16 %v280
  %v2803 = vunpack.c.l.b16 %v281
  %v2804 = vunpack.c.l.b16 %v282
  %v2805 = vunpack.c.l.b16 %v283
  %v2806 = vunpack.c.l.b16 %v284
  %v2807 = vunpack.c.l.b16 %v285
  %v2808 = vunpack.c.l.b16 %v286
  %v2809 = vunpack.c.l.b16 %v287
  %v2810 = vunpack.c.l.b16 %v288
  %v2811 = vunpack.c.l.b16 %v289
  %v2812 = vunpack.c.l.b16 %v290
  %v2813 = vunpack.c.l.b16 %v291
  %v2814 = vunpack.c.l.b16 %v292
  %v2815 = vunpack.c.l.b16 %v293
  %v2816 = vunpack.c.l.b16 %v294
  %v2817 = vunpack.c.l.b16 %v295
  %v2818 = vunpack.c.l.b16 %v296
  %v2819 = vunpack.c.l.b16 %v297
  %v2820 = vunpack.c.l.b16 %v298
  %v2821 = vunpack.c.l.b16 %v299
  %v2822 = vunpack.c.l.b16 %v300
  %v2823 = vunpack.c.l.b16 %v301
  %v2824 = vunpack.c.l.b16 %v302
  %v2825 = vunpack.c.l.b16 %v303
  %v2826 = vunpack.c.l.b16 %v304
  %v2827 = vunpack.c.l.b16 %v305
  %v2828 = vunpack.c.l.b16 %v306
  %v2829 = vunpack.c.l.b16 %v307
  %v2830 = vunpack.c.l.b16 %v308
  %v2831 = vunpack.c.l.b16 %v309
  %v2832 = vunpack.c.l.b16 %v310
  %v2833 = vunpack.c.l.b16 %v311
  %v2834 = vunpack.c.l.b16 %v312
  %v2835 = vunpack.c.l.b16 %v313
  %v2836 = vunpack.c.l.b16 %v314
  %v2837 = vunpack.c.l.b16 %v315
  %v2838 = vunpack.c.l.b16 %v316
  %v2839 = vunpack.c.l.b16 %v317
  %v2840 = vunpack.c.l.b16 %v318
  %v2841 = vunpack.c.l.b16 %v319
  %v2842 = vunpack.c.l.b16 %v320
  %v2843 = vunpack.c.l.b16 %v321
  %v2844 = vunpack.c.l.b16 %v322
  %v2845 = vunpack.c.l.b16 %v323
  %v2846 = vunpack.c.l.b16 %v324
  %v2847 = vunpack.c.l.b16 %v325
  %v2848 = vunpack.c.l.b16 %v326
  %v2849 = vunpack.c.l.b16 %v327
  %v2850 = vunpack.c.l.b16 %v328
  %v2851 = vunpack.c.l.b16 %v329
  %v2852 = vunpack.c.l.b16 %v330
  %v2853 = vunpack.c.l.b16 %v331
  %v2854 = vunpack.c.l.b16 %v332
  %v2855 = vunpack.c.l.b16 %v333
  %v2856 = vunpack.c.l.b16 %v334
  %v2857 = vunpack.c.l.b16 %v335
  %v2858 = vunpack.c.l.b16 %v336
  %v2859 = vunpack.c.l.b16 %v337
  %v2860 = vunpack.c.l.b16 %v338
  %v2861 = vunpack.c.l.b16 %v339
  %v2862 = vunpack.c.l.b16 %v340
  %v2863 = vunpack.c.l.b16 %v341
  %v2864 = vunpack.c.l.b16 %v342
  %v2865 = vunpack.c.l.b16 %v343
  %v2866 = vunpack.c.l.b16 %v344
  %v2867 = vunpack.c.l.b16 %v345
  %v2868 = vunpack.c.l.b16 %v346
  %v2869 = vunpack.c.l.b16 %v347
  %v2870 = vunpack.c.l.b16 %v348
  %v2871 = vunpack.c.l.b16 %v349
  %v2872 = vunpack.c.l.b16 %v350
  %v2873 = vunpack.c.l.b16 %v351
  %v2874 = vunpack.c.l.b16 %v352
  %v2875 = vunpack.c.l.b16 %v353
  %v2876 = vunpack.c.l.b16 %v354
  %v2877 = vunpack.c.l.b16 %v355
  %v2878 = vunpack.c.l.b16 %v356
  %v2879 = vunpack.c.l.b16 %v357
  %v2880 = vunpack.c.l.b16 %v358
  %v2881 = vunpack.c.l.b16 %v359
  %v2882 = vunpack.c.l.b16 %v360
  %v2883 = vunpack.c.l.b16 %v361
  %v2884 = vunpack.c.l.b16 %v362
  %v2885 = vunpack.c.l.b16 %v363
  %v2886 = vunpack.c.l.b16 %v364
  %v2887 = vunpack.c.l.b16 %v365
  %v2888 = vunpack.c.l.b16 %v366
  %v2889 = vunpack.c.l.b16 %v367
  %v2890 = vunpack.c.l.b16 %v368
  %v2891 = vunpack.c.l.b16 %v369
  %v2892 = vunpack.c.l.b16 %v370
  %v2893 = vunpack.c.l.b16 %v371
  %v2894 = vunpack.c.l.b16 %v372
  %v2895 = vunpack.c.l.b16 %v373
  %v2896 = vunpack.c.l.b16 %v374
  %v2897 = vunpack.c.l.b16 %v375
  %v2898 = vunpack.c.l.b16 %v376
  %v2899 = vunpack.c.l.b16 %v377
  %v2900 = vunpack.c.l.b16 %v378
  %v2901 = vunpack.c.l.b16 %v379
  %v2902 = vunpack.c.l.b16 %v380
  %v2903 = vunpack.c.l.b16 %v381
  %v2904 = vunpack.c.l.b16 %v382
  %v2905 = vunpack.c.l.b16 %v383
  %v2906 = vunpack.c.l.b16 %v384
  %v2907 = vunpack.c.l.b16 %v385
  %v2908 = vunpack.c.l.b16 %v386
  %v2909 = vunpack.c.l.b16 %v387
  %v2910 = vunpack.c.l.b16 %v388
  %v2911 = vunpack.c.l.b16 %v389
  %v2912 = vunpack.c.l.b16 %v390
  %v2913 = vunpack.c.l.b16 %v391
  %v2914 = vunpack.c.l.b16 %v392
  %v2915 = vunpack.c.l.b16 %v393
  %v2916 = vunpack.c.l.b16 %v394
  %v2917 = vunpack.c.l.b16 %v395
  %v2918 = vunpack.c.l.b16 %v396
  %v2919 = vunpack.c.l.b16 %v397
  %v2920 = vunpack.c.l.b16 %v398
  %v2921 = vunpack.c.l.b16 %v399
  %v2922 = vunpack.c.l.b16 %v400
  %v2923 = vunpack.c.l.b16 %v401
  %v2924 = vunpack.c.l.b16 %v402
  %v2925 = vunpack.c.l.b16 %v403
  %v2926 = vunpack.c.l.b16 %v404
  %v2927 = vunpack.c.l.b16 %v405
  %v2928 = vunpack.c.l.b16 %v406
  %v2929 = vunpack.c.l.b16 %v407
  %v2930 = vunpack.c.l.b16 %v408
  %v2931 = vunpack.c.l.b16 %v409
  %v2932 = vunpack.c.l.b16 %v410
  %v2933 = vunpack.c.l.b16 %v411
  %v2934 = vunpack.c.l.b16 %v412
  %v2935 = vunpack.c.l.b16 %v413
  %v2936 = vunpack.c.l.b16 %v414
  %v2937 = vunpack.c.l.b16 %v415
  %v2938 = vunpack.c.l.b16 %v416
  %v2939 = vunpack.c.l.b16 %v417
  %v2940 = vunpack.c.l.b16 %v418
  %v2941 = vunpack.c.l.b16 %v419
  %v2942 = vunpack.c.l.b16 %v420
  %v2943 = vunpack.c.l.b16 %v421
  %v2944 = vunpack.c.l.b16 %v422
  %v2945 = vunpack.c.l.b16 %v423
  %v2946 = vunpack.c.l.b16 %v424
  %v2947 = vunpack.c.l.b16 %v425
  %v2948 = vunpack.c.l.b16 %v426
  %v2949 = vunpack.c.l.b16 %v427
  %v2950 = vunpack.c.l.b16 %v428
  %v2951 = vunpack.c.l.b16 %v429
  %v2952 = vunpack.c.l.b16 %v430
  %v2953 = vunpack.c.l.b16 %v431
  %v2954 = vunpack.c.l.b16 %v432
  %v2955 = vunpack.c.l.b16 %v433
  %v2956 = vunpack.c.l.b16 %v434
  %v2957 = vunpack.c.l.b16 %v435
  %v2958 = vunpack.c.l.b16 %v436
  %v2959 = vunpack.c.l.b16 %v437
  %v2960 = vunpack.c.l.b16 %v438
  %v2961 = vunpack.c.l.b16 %v439
  %v2962 = vunpack.c.l.b16 %v440
  %v2963 = vunpack.c.l.b16 %v441
  %v2964 = vunpack.c.l.b16 %v442
  %v2965 = vunpack.c.l.b16 %v443
  %v2966 = vunpack.c.l.b16 %v444
  %v2967 = vunpack.c.l.b16 %v445
  %v2968 = vunpack.c.l.b16 %v446
  %v2969 = vunpack.c.l.b16 %v447
  %v2970 = vunpack.c.l.b16 %v448
  %v2971 = vunpack.c.l.b16 %v449
  %v2972 = vunpack.c.l.b16 %v450
  %v2973 = vunpack.c.l.b16 %v451
  %v2974 = vunpack.c.l.b16 %v452
  %v2975 = vunpack.c.l.b16 %v453
  %v2976 = vunpack.c.l.b16 %v454
  %v2977 = vunpack.c.l.b16 %v455
  %v2978 = vunpack.c.l.b16 %v456
  %v2979 = vunpack.c.l.b16 %v457
  %v2980 = vunpack.c.l.b16 %v458
  %v2981 = vunpack.c.l.b16 %v459
  %v2982 = vunpack.c.l.b16 %v460
  %v2983 = vunpack.c.l.b16 %v461
  %v2984 = vunpack.c.l.b16 %v462
  %v2985 = vunpack.c.l.b16 %v463
  %v2986 = vunpack.c.l.b16 %v464
  %v2987 = vunpack.c.l.b16 %v465
  %v2988 = vunpack.c.l.b16 %v466
  %v2989 = vunpack.c.l.b16 %v467
  %v2990 = vunpack.c.l.b16 %v468
  %v2991 = vunpack.c.l.b16 %v469
  %v2992 = vunpack.c.l.b16 %v470
  %v2993 = vunpack.c.l.b16 %v471
  %v2994 = vunpack.c.l.b16 %v472
  %v2995 = vunpack.c.l.b16 %v473
  %v2996 = vunpack.c.l.b16 %v474
  %v2997 = vunpack.c.l.b16 %v475
  %v2998 = vunpack.c.l.b16 %v476
  %v2999 = vunpack.c.l.b16 %v477
  %v3000 = vunpack.c.l.b16 %v478
  %v3001 = vunpack.c.l.b16 %v479
  %v3002 = vunpack.c.l.b16 %v480
  %v3003 = vunpack.c.l.b16 %v481
  %v3004 = vunpack.c.l.b16 %v482
  %v3005 = vunpack.c.l.b16 %v483
  %v3006 = vunpack.c.l.b16 %v484
  %v3007 = vunpack.c.l.b16 %v485
  %v3008 = vunpack.c.l.b16 %v486
  %v3009 = vunpack.c.l.b16 %v487
  %v3010 = vunpack.c.l.b16 %v488
  %v3011 = vunpack.c.l.b16 %v489
  %v3012 = vunpack.c.l.b16 %v490
  %v3013 = vunpack.c.l.b16 %v491
  %v3014 = vunpack.c.l.b16 %v492
  %v3015 = vunpack.c.l.b16 %v493
  %v3016 = vunpack.c.l.b16 %v494
  %v3017 = vunpack.c.l.b16 %v495
  %v3018 = vunpack.c.l.b16 %v496
  %v3019 = vunpack.c.l.b16 %v497
  %v3020 = vunpack.c.l.b16 %v498
  %v3021 = vunpack.c.l.b16 %v499
  %v3022 = vunpack.c.l.b16 %v500
  %v3023 = vunpack.c.l.b16 %v501
  %v3024 = vunpack.c.l.b16 %v502
  %v3025 = vunpack.c.l.b16 %v503
  %v3026 = vunpack.c.l.b16 %v504
  %v3027 = vunpack.c.l.b16 %v505
  %v3028 = vunpack.c.l.b16 %v506
  %v3029 = vunpack.c.l.b16 %v507
  %v3030 = vunpack.c.l.b16 %v508
  %v3031 = vunpack.c.l.b16 %v509
  %v3032 = vunpack.c.l.b16 %v510
  %v3033 = vunpack.c.l.b16 %v511
  %v3034 = vunpack.c.l.b16 %v512
  %v3035 = vunpack.c.l.b16 %v513
  %v3036 = vunpack.c.l.b16 %v514
  %v3037 = vunpack.c.l.b16 %v515
  %v3038 = vunpack.c.l.b16 %v516
  %v3039 = vunpack.c.l.b16 %v517
  %v3040 = vunpack.c.l.b16 %v518
  %v3041 = vunpack.c.l.b16 %v519
  %v3042 = vunpack.c.l.b16 %v520
  %v3043 = vunpack.c.l.b16 %v521
  %v3044 = vunpack.c.l.b16 %v522
  %v3045 = vunpack.c.l.b16 %v523
  %v3046 = vunpack.c.l.b16 %v524
  %v3047 = vunpack.c.l.b16 %v525
  %v3048 = vunpack.c.l.b16 %v526
  %v3049 = vunpack.c.l.b16 %v527
  %v3050 = vunpack.c.l.b16 %v528
  %v3051 = vunpack.c.l.b16 %v529
  %v3052 = vunpack.c.l.b16 %v530
  %v3053 = vunpack.c.l.b16 %v531
  %v3054 = vunpack.c.l.b16 %v532
  %v3055 = vunpack.c.l.b16 %v533
  %v3056 = vunpack.c.l.b16 %v534
  %v3057 = vunpack.c.l.b16 %v535
  %v3058 = vunpack.c.l.b16 %v536
  %v3059 = vunpack.c.l.b16 %v537
  %v3060 = vunpack.c.l.b16 %v538
  %v3061 = vunpack.c.l.b16 %v539
  %v3062 = vunpack.c.l.b16 %v540
  %v3063 = vunpack.c.l.b16 %v541
  %v3064 = vunpack.c.l.b16 %v542
  %v3065 = vunpack.c.l.b16 %v543
  %v3066 = vunpack.c.l.b16 %v544
  %v3067 = vunpack.c.l.b16 %v545
  %v3068 = vunpack.c.l.b16 %v546
  %v3069 = vunpack.c.l.b16 %v547
  %v3070 = vunpack.c.l.b16 %v548
  %v3071 = vunpack.c.l.b16 %v549
  %v3072 = vunpack.c.l.b16 %v550
  %v3073 = vunpack.c.l.b16 %v551
  %v3074 = vunpack.c.l.b16 %v552
  %v3075 = vunpack.c.l.b16 %v553
  %v3076 = vunpack.c.l.b16 %v554
  %v3077 = vunpack.c.l.b16 %v555
  %v3078 = vunpack.c.l.b16 %v556
  %v3079 = vunpack.c.l.b16 %v557
  %v3080 = vunpack.c.l.b16 %v558
  %v3081 = vunpack.c.l.b16 %v559
  %v3082 = vunpack.c.l.b16 %v560
  %v3083 = vunpack.c.l.b16 %v561
  %v3084 = vunpack.c.l.b16 %v562
  %v3085 = vunpack.c.l.b16 %v563
  %v3086 = vunpack.c.l.b16 %v564
  %v3087 = vunpack.c.l.b16 %v565
  %v3088 = vunpack.c.l.b16 %v566
  %v3089 = vunpack.c.l.b16 %v567
  %v3090 = vunpack.c.l.b16 %v568
  %v3091 = vunpack.c.l.b16 %v569
  %v3092 = vunpack.c.l.b16 %v570
  %v3093 = vunpack.c.l.b16 %v571
  %v3094 = vunpack.c.l.b16 %v572
  %v3095 = vunpack.c.l.b16 %v573
  %v3096 = vunpack.c.l.b16 %v574
  %v3097 = vunpack.c.l.b16 %v575
  %v3098 = vunpack.c.l.b16 %v576
  %v3099 = vunpack.c.l.b16 %v577
  %v3100 = vunpack.c.l.b16 %v578
  %v3101 = vunpack.c.l.b16 %v579
  %v3102 = vunpack.c.l.b16 %v580
  %v3103 = vunpack.c.l.b16 %v581
  %v3104 = vunpack.c.l.b16 %v582
  %v3105 = vunpack.c.l.b16 %v583
  %v3106 = vunpack.c.l.b16 %v584
  %v3107 = vunpack.c.l.b16 %v585
  %v3108 = vunpack.c.l.b16 %v586
  %v3109 = vunpack.c.l.b16 %v587
  %v3110 = vunpack.c.l.b16 %v588
  %v3111 = vunpack.c.l.b16 %v589
  %v3112 = vunpack.c.l.b16 %v590
  %v3113 = vunpack.c.l.b16 %v591
  %v3114 = vunpack.c.l.b16 %v592
  %v3115 = vunpack.c.l.b16 %v593
  %v3116 = vunpack.c.l.b16 %v594
  %v3117 = vunpack.c.l.b16 %v595
  %v3118 = vunpack.c.l.b16 %v596
  %v3119 = vunpack.c.l.b16 %v597
  %v3120 = vunpack.c.l.b16 %v598
  %v3121 = vunpack.c.l.b16 %v599
  %v3122 = vunpack.c.l.b16 %v600
  %v3123 = vunpack.c.l.b16 %v601
  %v3124 = vunpack.c.l.b16 %v602
  %v3125 = vunpack.c.l.b16 %v603
  %v3126 = vunpack.c.l.b16 %v604
  %v3127 = vunpack.c.l.b16 %v605
  %v3128 = vunpack.c.l.b16 %v606
  %v3129 = vunpack.c.l.b16 %v607
  %v3130 = vunpack.c.l.b16 %v608
  %v3131 = vunpack.c.l.b16 %v609
  %v3132 = vunpack.c.l.b16 %v610
  %v3133 = vunpack.c.l.b16 %v611
  %v3134 = vunpack.c.l.b16 %v612
  %v3135 = vunpack.c.l.b16 %v613
  %v3136 = vunpack.c.l.b16 %v614
  %v3137 = vunpack.c.l.b16 %v615
  %v3138 = vunpack.c.l.b16 %v616
  %v3139 = vunpack.c.l.b16 %v617
  %v3140 = vunpack.c.l.b16 %v618
  %v3141 = vunpack.c.l.b16 %v619
  %v3142 = vunpack.c.l.b16 %v620
  %v3143 = vunpack.c.l.b16 %v621
  %v3144 = vunpack.c.l.b16 %v622
  %v3145 = vunpack.c.l.b16 %v623
  %v3146 = vunpack.c.l.b16 %v624
  %v3147 = vunpack.c.l.b16 %v625
  %v3148 = vunpack.c.l.b16 %v626
  %v3149 = vunpack.c.l.b16 %v627
  %v3150 = vunpack.c.l.b16 %v628
  %v3151 = vunpack.c.l.b16 %v629
  %v3152 = vunpack.c.l.b16 %v630
  %v3153 = vunpack.c.l.b16 %v631
  %v3154 = vunpack.c.l.b16 %v632
  %v3155 = vunpack.c.l.b16 %v633
  %v3156 = vunpack.c.l.b16 %v634
  %v3157 = vunpack.c.l.b16 %v635
  %v3158 = vunpack.c.l.b16 %v636
  %v3159 = vunpack.c.l.b16 %v637
  %v3160 = vunpack.c.l.b16 %v638
  %v3161 = vunpack.c.l.b16 %v639
  %v3162 = vunpack.c.l.b16 %v640
  %v3163 = vunpack.c.l.b16 %v641
  %v3164 = vunpack.c.l.b16 %v642
  %v3165 = vunpack.c.l.b16 %v643
  %v3166 = vunpack.c.l.b16 %v644
  %v3167 = vunpack.c.l.b16 %v645
  %v3168 = vunpack.c.l.b16 %v646
  %v3169 = vunpack.c.l.b16 %v647
  %v3170 = vunpack.c.l.b16 %v648
  %v3171 = vunpack.c.l.b16 %v649
  %v3172 = vunpack.c.l.b16 %v650
  %v3173 = vunpack.c.l.b16 %v651
  %v3174 = vunpack.c.l.b16 %v652
  %v3175 = vunpack.c.l.b16 %v653
  %v3176 = vunpack.c.l.b16 %v654
  %v3177 = vunpack.c.l.b16 %v655
  %v3178 = vunpack.c.l.b16 %v656
  %v3179 = vunpack.c.l.b16 %v657
  %v3180 = vunpack.c.l.b16 %v658
  %v3181 = vunpack.c.l.b16 %v659
  %v3182 = vunpack.c.l.b16 %v660
  %v3183 = vunpack.c.l.b16 %v661
  %v3184 = vunpack.c.l.b16 %v662
  %v3185 = vunpack.c.l.b16 %v663
  %v3186 = vunpack.c.l.b16 %v664
  %v3187 = vunpack.c.l.b16 %v665
  %v3188 = vunpack.c.l.b16 %v666
  %v3189 = vunpack.c.l.b16 %v667
  %v3190 = vunpack.c.l.b16 %v668
  %v3191 = vunpack.c.l.b16 %v669
  %v3192 = vunpack.c.l.b16 %v670
  %v3193 = vunpack.c.l.b16 %v671
  %v3194 = vunpack.c.l.b16 %v672
  %v3195 = vunpack.c.l.b16 %v673
  %v3196 = vunpack.c.l.b16 %v674
  %v3197 = vunpack.c.l.b16 %v675
  %v3198 = vunpack.c.l.b16 %v676
  %v3199 = vunpack.c.l.b16 %v677
  %v3200 = vunpack.c.l.b16 %v678
  %v3201 = vunpack.c.l.b16 %v679
  %v3202 = vunpack.c.l.b16 %v680
  %v3203 = vunpack.c.l.b16 %v681
  %v3204 = vunpack.c.l.b16 %v682
  %v3205 = vunpack.c.l.b16 %v683
  %v3206 = vunpack.c.l.b16 %v684
  %v3207 = vunpack.c.l.b16 %v685
  %v3208 = vunpack.c.l.b16 %v686
  %v3209 = vunpack.c.l.b16 %v687
  %v3210 = vunpack.c.l.b16 %v688
  %v3211 = vunpack.c.l.b16 %v689
  %v3212 = vunpack.c.l.b16 %v690
  %v3213 = vunpack.c.l.b16 %v691
  %v3214 = vunpack.c.l.b16 %v692
  %v3215 = vunpack.c.l.b16 %v693
  %v3216 = vunpack.c.l.b16 %v694
  %v3217 = vunpack.c.l.b16 %v695
  %v3218 = vunpack.c.l.b16 %v696
  %v3219 = vunpack.c.l.b16 %v697
  %v3220 = vunpack.c.l.b16 %v698
  %v3221 = vunpack.c.l.b16 %v699
  %v3222 = vunpack.c.l.b16 %v700
  %v3223 = vunpack.c.l.b16 %v701
  %v3224 = vunpack.c.l.b16 %v702
  %v3225 = vunpack.c.l.b16 %v703
  %v3226 = vunpack.c.l.b16 %v704
  %v3227 = vunpack.c.l.b16 %v705
  %v3228 = vunpack.c.l.b16 %v706
  %v3229 = vunpack.c.l.b16 %v707
  %v3230 = vunpack.c.l.b16 %v708
  %v3231 = vunpack.c.l.b16 %v709
  %v3232 = vunpack.c.l.b16 %v710
  %v3233 = vunpack.c.l.b16 %v711
  %v3234 = vunpack.c.l.b16 %v712
  %v3235 = vunpack.c.l.b16 %v713
  %v3236 = vunpack.c.l.b16 %v714
  %v3237 = vunpack.c.l.b16 %v715
  %v3238 = vunpack.c.l.b16 %v716
  %v3239 = vunpack.c.l.b16 %v717
  %v3240 = vunpack.c.l.b16 %v718
  %v3241 = vunpack.c.l.b16 %v719
  %v3242 = vunpack.c.l.b16 %v720
  %v3243 = vunpack.c.l.b16 %v721
  %v3244 = vunpack.c.l.b16 %v722
  %v3245 = vunpack.c.l.b16 %v723
  %v3246 = vunpack.c.l.b16 %v724
  %v3247 = vunpack.c.l.b16 %v725
  %v3248 = vunpack.c.l.b16 %v726
  %v3249 = vunpack.c.l.b16 %v727
  %v3250 = vunpack.c.l.b16 %v728
  %v3251 = vunpack.c.l.b16 %v729
  %v3252 = vunpack.c.l.b16 %v730
  %v3253 = vunpack.c.l.b16 %v731
  %v3254 = vunpack.c.l.b16 %v732
  %v3255 = vunpack.c.l.b16 %v733
  %v3256 = vunpack.c.l.b16 %v734
  %v3257 = vunpack.c.l.b16 %v735
  %v3258 = vunpack.c.l.b16 %v736
  %v3259 = vunpack.c.l.b16 %v737
  %v3260 = vunpack.c.l.b16 %v738
  %v3261 = vunpack.c.l.b16 %v739
  %v3262 = vunpack.c.l.b16 %v740
  %v3263 = vunpack.c.l.b16 %v741
  %v3264 = vunpack.c.l.b16 %v742
  %v3265 = vunpack.c.l.b16 %v743
  %v3266 = vunpack.c.l.b16 %v744
  %v3267 = vunpack.c.l.b16 %v745
  %v3268 = vunpack.c.l.b16 %v746
  %v3269 = vunpack.c.l.b16 %v747
  %v3270 = vunpack.c.l.b16 %v748
  %v3271 = vunpack.c.l.b16 %v749
  %v3272 = vunpack.c.l.b16 %v750
  %v3273 = vunpack.c.l.b16 %v751
  %v3274 = vunpack.c.l.b16 %v752
  %v3275 = vunpack.c.l.b16 %v753
  %v3276 = vunpack.c.l.b16 %v754
  %v3277 = vunpack.c.l.b16 %v755
  %v3278 = vunpack.c.l.b16 %v756
  %v3279 = vunpack.c.l.b16 %v757
  %v3280 = vunpack.c.l.b16 %v758
  %v3281 = vunpack.c.l.b16 %v759
  %v3282 = vunpack.c.l.b16 %v760
  %v3283 = vunpack.c.l.b16 %v761
  %v3284 = vunpack.c.l.b16 %v762
  %v3285 = vunpack.c.l.b16 %v763
  %v3286 = vunpack.c.l.b16 %v764
  %v3287 = vunpack.c.l.b16 %v765
  %v3288 = vunpack.c.l.b16 %v766
  %v3289 = vunpack.c.l.b16 %v767
  %v3290 = vunpack.c.l.b16 %v768
  %v3291 = vunpack.c.l.b16 %v769
  %v3292 = vunpack.c.l.b16 %v770
  %v3293 = vunpack.c.l.b16 %v771
  %v3294 = vunpack.c.l.b16 %v772
  %v3295 = vunpack.c.l.b16 %v773
  %v3296 = vunpack.c.l.b16 %v774
  %v3297 = vunpack.c.l.b16 %v775
  %v3298 = vunpack.c.l.b16 %v776
  %v3299 = vunpack.c.l.b16 %v777
  %v3300 = vunpack.c.l.b16 %v778
  %v3301 = vunpack.c.l.b16 %v779
  %v3302 = vunpack.c.l.b16 %v780
  %v3303 = vunpack.c.l.b16 %v781
  %v3304 = vunpack.c.l.b16 %v782
  %v3305 = vunpack.c.l.b16 %v783
  %v3306 = vunpack.c.l.b16 %v784
  %v3307 = vunpack.c.l.b16 %v785
  %v3308 = vunpack.c.l.b16 %v786
  %v3309 = vunpack.c.l.b16 %v787
  %v3310 = vunpack.c.l.b16 %v788
  %v3311 = vunpack.c.l.b16 %v789
  %v3312 = vunpack.c.l.b16 %v790
  %v3313 = vunpack.c.l.b16 %v791
  %v3314 = vunpack.c.l.b16 %v792
  %v3315 = vunpack.c.l.b16 %v793
  %v3316 = vunpack.c.l.b16 %v794
  %v3317 = vunpack.c.l.b16 %v795
  %v3318 = vunpack.c.l.b16 %v796
  %v3319 = vunpack.c.l.b16 %v797
  %v3320 = vunpack.c.l.b16 %v798
  %v3321 = vunpack.c.l.b16 %v799
  %v3322 = vunpack.c.l.b16 %v800
  %v3323 = vunpack.c.l.b16 %v801
  %v3324 = vunpack.c.l.b16 %v802
  %v3325 = vunpack.c.l.b16 %v803
  %v3326 = vunpack.c.l.b16 %v804
  %v3327 = vunpack.c.l.b16 %v805
  %v3328 = vunpack.c.l.b16 %v806
  %v3329 = vunpack.c.l.b16 %v807
  %v3330 = vunpack.c.l.b16 %v808
  %v3331 = vunpack.c.l.b16 %v809
  %v3332 = vunpack.c.l.b16 %v810
  %v3333 = vunpack.c.l.b16 %v811
  %v3334 = vunpack.c.l.b16 %v812
  %v3335 = vunpack.c.l.b16 %v813
  %v3336 = vunpack.c.l.b16 %v814
  %v3337 = vunpack.c.l.b16 %v815
  %v3338 = vunpack.c.l.b16 %v816
  %v3339 = vunpack.c.l.b16 %v817
  %v3340 = vunpack.c.l.b16 %v818
  %v3341 = vunpack.c.l.b16 %v819
  %v3342 = vunpack.c.l.b16 %v820
  %v3343 = vunpack.c.l.b16 %v821
  %v3344 = vunpack.c.l.b16 %v822
  %v3345 = vunpack.c.l.b16 %v823
  %v3346 = vunpack.c.l.b16 %v824
  %v3347 = vunpack.c.l.b16 %v825
  %v3348 = vunpack.c.l.b16 %v826
  %v3349 = vunpack.c.l.b16 %v827
  %v3350 = vunpack.c.l.b16 %v828
  %v3351 = vunpack.c.l.b16 %v829
  %v3352 = vunpack.c.l.b16 %v830
  %v3353 = vunpack.c.l.b16 %v831
  %v3354 = vunpack.c.l.b16 %v832
  %v3355 = vunpack.c.l.b16 %v833
  %v3356 = vunpack.c.l.b16 %v834
  %v3357 = vunpack.c.l.b16 %v835
  %v3358 = vunpack.c.l.b16 %v836
  %v3359 = vunpack.c.l.b16 %v837
  %v3360 = vunpack.c.l.b16 %v838
  %v3361 = vunpack.c.l.b16 %v839
  %v3362 = vunpack.c.l.b16 %v840
  %v3363 = vunpack.c.l.b16 %v841
  %v3364 = vunpack.c.l.b16 %v842
  %v3365 = vunpack.c.l.b16 %v843
  %v3366 = vunpack.c.l.b16 %v844
  %v3367 = vunpack.c.l.b16 %v845
  %v3368 = vunpack.c.l.b16 %v846
  %v3369 = vunpack.c.l.b16 %v847
  %v3370 = vunpack.c.l.b16 %v848
  %v3371 = vunpack.c.l.b16 %v849
  %v3372 = vunpack.c.l.b16 %v850
  %v3373 = vunpack.c.l.b16 %v851
  %v3374 = vunpack.c.l.b16 %v852
  %v3375 = vunpack.c.l.b16 %v853
  %v3376 = vunpack.c.l.b16 %v854
  %v3377 = vunpack.c.l.b16 %v855
  %v3378 = vunpack.c.l.b16 %v856
  %v3379 = vunpack.c.l.b16 %v857
  %v3380 = vunpack.c.l.b16 %v858
  %v3381 = vunpack.c.l.b16 %v859
  %v3382 = vunpack.c.l.b16 %v860
  %v3383 = vunpack.c.l.b16 %v861
  %v3384 = vunpack.c.l.b16 %v862
  %v3385 = vunpack.c.l.b16 %v863
  %v3386 = vunpack.c.l.b16 %v864
  %v3387 = vunpack.c.l.b16 %v865
  %v3388 = vunpack.c.l.b16 %v866
  %v3389 = vunpack.c.l.b16 %v867
  %v3390 = vunpack.c.l.b16 %v868
  %v3391 = vunpack.c.l.b16 %v869
  %v3392 = vunpack.c.l.b16 %v870
  %v3393 = vunpack.c.l.b16 %v871
  %v3394 = vunpack.c.l.b16 %v872
  %v3395 = vunpack.c.l.b16 %v873
  %v3396 = vunpack.c.l.b16 %v874
  %v3397 = vunpack.c.l.b16 %v875
  %v3398 = vunpack.c.l.b16 %v876
  %v3399 = vunpack.c.l.b16 %v877
  %v3400 = vunpack.c.l.b16 %v878
  %v3401 = vunpack.c.l.b16 %v879
  %v3402 = vunpack.c.l.b16 %v880
  %v3403 = vunpack.c.l.b16 %v881
  %v3404 = vunpack.c.l.b16 %v882
  %v3405 = vunpack.c.l.b16 %v883
  %v3406 = vunpack.c.l.b16 %v884
  %v3407 = vunpack.c.l.b16 %v885
  %v3408 = vunpack.c.l.b16 %v886
  %v3409 = vunpack.c.l.b16 %v887
  %v3410 = vunpack.c.l.b16 %v888
  %v3411 = vunpack.c.l.b16 %v889
  %v3412 = vunpack.c.l.b16 %v890
  %v3413 = vunpack.c.l.b16 %v891
  %v3414 = vunpack.c.l.b16 %v892
  %v3415 = vunpack.c.l.b16 %v893
  %v3416 = vunpack.c.l.b16 %v894
  %v3417 = vunpack.c.l.b16 %v895
  %v3418 = vunpack.c.l.b16 %v896
  %v3419 = vunpack.c.l.b16 %v897
  %v3420 = vunpack.c.l.b16 %v898
  %v3421 = vunpack.c.l.b16 %v899
  %v3422 = vunpack.c.l.b16 %v900
  %v3423 = vunpack.c.l.b16 %v901
  %v3424 = vunpack.c.l.b16 %v902
  %v3425 = vunpack.c.l.b16 %v903
  %v3426 = vunpack.c.l.b16 %v904
  %v3427 = vunpack.c.l.b16 %v905
  %v3428 = vunpack.c.l.b16 %v906
  %v3429 = vunpack.c.l.b16 %v907
  %v3430 = vunpack.c.l.b16 %v908
  %v3431 = vunpack.c.l.b16 %v909
  %v3432 = vunpack.c.l.b16 %v910
  %v3433 = vunpack.c.l.b16 %v911
  %v3434 = vunpack.c.l.b16 %v912
  %v3435 = vunpack.c.l.b16 %v913
  %v3436 = vunpack.c.l.b16 %v914
  %v3437 = vunpack.c.l.b16 %v915
  %v3438 = vunpack.c.l.b16 %v916
  %v3439 = vunpack.c.l.b16 %v917
  %v3440 = vunpack.c.l.b16 %v918
  %v3441 = vunpack.c.l.b16 %v919
  %v3442 = vunpack.c.l.b16 %v920
  %v3443 = vunpack.c.l.b16 %v921
  %v3444 = vunpack.c.l.b16 %v922
  %v3445 = vunpack.c.l.b16 %v923
  %v3446 = vunpack.c.l.b16 %v924
  %v3447 = vunpack.c.l.b16 %v925
  %v3448 = vunpack.c.l.b16 %v926
  %v3449 = vunpack.c.l.b16 %v927
  %v3450 = vunpack.c.l.b16 %v928
  %v3451 = vunpack.c.l.b16 %v929
  %v3452 = vunpack.c.l.b16 %v930
  %v3453 = vunpack.c.l.b16 %v931
  %v3454 = vunpack.c.l.b16 %v932
  %v3455 = vunpack.c.l.b16 %v933
  %v3456 = vunpack.c.l.b16 %v934
  %v3457 = vunpack.c.l.b16 %v935
  %v3458 = vunpack.c.l.b16 %v936
  %v3459 = vunpack.c.l.b16 %v937
  %v3460 = vunpack.c.l.b16 %v938
  %v3461 = vunpack.c.l.b16 %v939
  %v3462 = vunpack.c.l.b16 %v940
  %v3463 = vunpack.c.l.b16 %v941
  %v3464 = vunpack.c.l.b16 %v942
  %v3465 = vunpack.c.l.b16 %v943
  %v3466 = vunpack.c.l.b16 %v944
  %v3467 = vunpack.c.l.b16 %v945
  %v3468 = vunpack.c.l.b16 %v946
  %v3469 = vunpack.c.l.b16 %v947
  %v3470 = vunpack.c.l.b16 %v948
  %v3471 = vunpack.c.l.b16 %v949
  %v3472 = vunpack.c.l.b16 %v950
  %v3473 = vunpack.c.l.b16 %v951
  %v3474 = vunpack.c.l.b16 %v952
  %v3475 = vunpack.c.l.b16 %v953
  %v3476 = vunpack.c.l.b16 %v954
  %v3477 = vunpack.c.l.b16 %v955
  %v3478 = vunpack.c.l.b16 %v956
  %v3479 = vunpack.c.l.b16 %v957
  %v3480 = vunpack.c.l.b16 %v958
  %v3481 = vunpack.c.l.b16 %v959
  %v3482 = vunpack.c.l.b16 %v960
  %v3483 = vunpack.c.l.b16 %v961
  %v3484 = vunpack.c.l.b16 %v962
  %v3485 = vunpack.c.l.b16 %v963
  %v3486 = vunpack.c.l.b16 %v964
  %v3487 = vunpack.c.l.b16 %v965
  %v3488 = vunpack.c.l.b16 %v966
  %v3489 = vunpack.c.l.b16 %v967
  %v3490 = vunpack.c.l.b16 %v968
  %v3491 = vunpack.c.l.b16 %v969
  %v3492 = vunpack.c.l.b16 %v970
  %v3493 = vunpack.c.l.b16 %v971
  %v3494 = vunpack.c.l.b16 %v972
  %v3495 = vunpack.c.l.b16 %v973
  %v3496 = vunpack.c.l.b16 %v974
  %v3497 = vunpack.c.l.b16 %v975
  %v3498 = vunpack.c.l.b16 %v976
  %v3499 = vunpack.c.l.b16 %v977
  %v3500 = vunpack.c.l.b16 %v978
  %v3501 = vunpack.c.l.b16 %v979
  %v3502 = vunpack.c.l.b16 %v980
  %v3503 = vunpack.c.l.b16 %v981
  %v3504 = vunpack.c.l.b16 %v982
  %v3505 = vunpack.c.l.b16 %v983
  %v3506 = vunpack.c.l.b16 %v984
  %v3507 = vunpack.c.l.b16 %v985
  %v3508 = vunpack.c.l.b16 %v986
  %v3509 = vunpack.c.l.b16 %v987
  %v3510 = vunpack.c.l.b16 %v988
  %v3511 = vunpack.c.l.b16 %v989
  %v3512 = vunpack.c.l.b16 %v990
  %v3513 = vunpack.c.l.b16 %v991
  %v3514 = vunpack.c.l.b16 %v992
  %v3515 = vunpack.c.l.b16 %v993
  %v3516 = vunpack.c.l.b16 %v994
  %v3517 = vunpack.c.l.b16 %v995
  %v3518 = vunpack.c.l.b16 %v996
  %v3519 = vunpack.c.l.b16 %v997
  %v3520 = vunpack.c.l.b16 %v998
  %v3521 = vunpack.c.l.b16 %v999
  %v3522 = vunpack.c.l.b16 %v1000
  %v3523 = vunpack.c.l.b16 %v1001
  %v3524 = vunpack.c.l.b16 %v1002
  %v3525 = vunpack.c.l.b16 %v1003
  %v3526 = vunpack.c.l.b16 %v1004
  %v3527 = vunpack.c.l.b16 %v1005
  %v3528 = vunpack.c.l.b16 %v1006
  %v3529 = vunpack.c.l.b16 %v1007
  %v3530 = vunpack.c.l.b16 %v1008
  %v3531 = vunpack.c.l.b16 %v1009
  %v3532 = vunpack.c.l.b16 %v1010
  %v3533 = vunpack.c.l.b16 %v1011
  %v3534 = vunpack.c.l.b16 %v1012
  %v3535 = vunpack.c.l.b16 %v1013
  %v3536 = vunpack.c.l.b16 %v1014
  %v3537 = vunpack.c.l.b16 %v1015
  %v3538 = vunpack.c.l.b16 %v1016
  %v3539 = vunpack.c.l.b16 %v1017
  %v3540 = vunpack.c.l.b16 %v1018
  %v3541 = vunpack.c.l.b16 %v1019
  %v3542 = vunpack.c.l.b16 %v1020
  %v3543 = vunpack.c.l.b16 %v1021
  %v3544 = vunpack.c.l.b16 %v1022
  %v3545 = vunpack.c.l.b16 %v1023
  %v3546 = vunpack.c.l.b16 %v1024
  %v3547 = vunpack.c.l.b16 %v1025
  %v3548 = vunpack.c.l.b16 %v1026
  %v3549 = vunpack.c.l.b16 %v1027
  %v3550 = vunpack.c.l.b16 %v1028
  %v3551 = vunpack.c.l.b16 %v1029
  %v3552 = vunpack.c.l.b16 %v1030
  %v3553 = vunpack.c.l.b16 %v1031
  %v3554 = vunpack.c.l.b16 %v1032
  %v3555 = vunpack.c.l.b16 %v1033
  %v3556 = vunpack.c.l.b16 %v1034
  %v3557 = vunpack.c.l.b16 %v1035
  %v3558 = vunpack.c.l.b16 %v1036
  %v3559 = vunpack.c.l.b16 %v1037
  %v3560 = vunpack.c.l.b16 %v1038
  %v3561 = vunpack.c.l.b16 %v1039
  %v3562 = vunpack.c.l.b16 %v1040
  %v3563 = vunpack.c.l.b16 %v1041
  %v3564 = vunpack.c.l.b16 %v1042
  %v3565 = vunpack.c.l.b16 %v1043
  %v3566 = vunpack.c.l.b16 %v1044
  %v3567 = vunpack.c.l.b16 %v1045
  %v3568 = vunpack.c.l.b16 %v1046
  %v3569 = vunpack.c.l.b16 %v1047
  %v3570 = vunpack.c.l.b16 %v1048
  %v3571 = vpack.c.b16 %v2548, %v2547
  %v3572 = vpack.c.b16 %v2550, %v2549
  %v3573 = vpack.c.b16 %v2552, %v2551
  %v3574 = vpack.c.b16 %v2554, %v2553
  %v3575 = vpack.c.b16 %v2556, %v2555
  %v3576 = vpack.c.b16 %v2558, %v2557
  %v3577 = vpack.c.b16 %v2560, %v2559
  %v3578 = vpack.c.b16 %v2562, %v2561
  %v3579 = vpack.c.b16 %v2564, %v2563
  %v3580 = vpack.c.b16 %v2566, %v2565
  %v3581 = vpack.c.b16 %v2568, %v2567
  %v3582 = vpack.c.b16 %v2570, %v2569
  %v3583 = vpack.c.b16 %v2572, %v2571
  %v3584 = vpack.c.b16 %v2574, %v2573
  %v3585 = vpack.c.b16 %v2576, %v2575
  %v3586 = vpack.c.b16 %v2578, %v2577
  %v3587 = vpack.c.b16 %v2580, %v2579
  %v3588 = vpack.c.b16 %v2582, %v2581
  %v3589 = vpack.c.b16 %v2584, %v2583
  %v3590 = vpack.c.b16 %v2586, %v2585
  %v3591 = vpack.c.b16 %v2588, %v2587
  %v3592 = vpack.c.b16 %v2590, %v2589
  %v3593 = vpack.c.b16 %v2592, %v2591
  %v3594 = vpack.c.b16 %v2594, %v2593
  %v3595 = vpack.c.b16 %v2596, %v2595
  %v3596 = vpack.c.b16 %v2598, %v2597
  %v3597 = vpack.c.b16 %v2600, %v2599
  %v3598 = vpack.c.b16 %v2602, %v2601
  %v3599 = vpack.c.b16 %v2604, %v2603
  %v3600 = vpack.c.b16 %v2606, %v2605
  %v3601 = vpack.c.b16 %v2608, %v2607
  %v3602 = vpack.c.b16 %v2610, %v2609
  %v3603 = vpack.c.b16 %v2612, %v2611
  %v3604 = vpack.c.b16 %v2614, %v2613
  %v3605 = vpack.c.b16 %v2616, %v2615
  %v3606 = vpack.c.b16 %v2618, %v2617
  %v3607 = vpack.c.b16 %v2620, %v2619
  %v3608 = vpack.c.b16 %v2622, %v2621
  %v3609 = vpack.c.b16 %v2624, %v2623
  %v3610 = vpack.c.b16 %v2626, %v2625
  %v3611 = vpack.c.b16 %v2628, %v2627
  %v3612 = vpack.c.b16 %v2630, %v2629
  %v3613 = vpack.c.b16 %v2632, %v2631
  %v3614 = vpack.c.b16 %v2634, %v2633
  %v3615 = vpack.c.b16 %v2636, %v2635
  %v3616 = vpack.c.b16 %v2638, %v2637
  %v3617 = vpack.c.b16 %v2640, %v2639
  %v3618 = vpack.c.b16 %v2642, %v2641
  %v3619 = vpack.c.b16 %v2644, %v2643
  %v3620 = vpack.c.b16 %v2646, %v2645
  %v3621 = vpack.c.b16 %v2648, %v2647
  %v3622 = vpack.c.b16 %v2650, %v2649
  %v3623 = vpack.c.b16 %v2652, %v2651
  %v3624 = vpack.c.b16 %v2654, %v2653
  %v3625 = vpack.c.b16 %v2656, %v2655
  %v3626 = vpack.c.b16 %v2658, %v2657
  %v3627 = vpack.c.b16 %v2660, %v2659
  %v3628 = vpack.c.b16 %v2662, %v2661
  %v3629 = vpack.c.b16 %v2664, %v2663
  %v3630 = vpack.c.b16 %v2666, %v2665
  %v3631 = vpack.c.b16 %v2668, %v2667
  %v3632 = vpack.c.b16 %v2670, %v2669
  %v3633 = vpack.c.b16 %v2672, %v2671
  %v3634 = vpack.c.b16 %v2674, %v2673
  %v3635 = vpack.c.b16 %v2676, %v2675
  %v3636 = vpack.c.b16 %v2678, %v2677
  %v3637 = vpack.c.b16 %v2680, %v2679
  %v3638 = vpack.c.b16 %v2682, %v2681
  %v3639 = vpack.c.b16 %v2684, %v2683
  %v3640 = vpack.c.b16 %v2686, %v2685
  %v3641 = vpack.c.b16 %v2688, %v2687
  %v3642 = vpack.c.b16 %v2690, %v2689
  %v3643 = vpack.c.b16 %v2692, %v2691
  %v3644 = vpack.c.b16 %v2694, %v2693
  %v3645 = vpack.c.b16 %v2696, %v2695
  %v3646 = vpack.c.b16 %v2698, %v2697
  %v3647 = vpack.c.b16 %v2700, %v2699
  %v3648 = vpack.c.b16 %v2702, %v2701
  %v3649 = vpack.c.b16 %v2704, %v2703
  %v3650 = vpack.c.b16 %v2706, %v2705
  %v3651 = vpack.c.b16 %v2708, %v2707
  %v3652 = vpack.c.b16 %v2710, %v2709
  %v3653 = vpack.c.b16 %v2712, %v2711
  %v3654 = vpack.c.b16 %v2714, %v2713
  %v3655 = vpack.c.b16 %v2716, %v2715
  %v3656 = vpack.c.b16 %v2718, %v2717
  %v3657 = vpack.c.b16 %v2720, %v2719
  %v3658 = vpack.c.b16 %v2722, %v2721
  %v3659 = vpack.c.b16 %v2724, %v2723
  %v3660 = vpack.c.b16 %v2726, %v2725
  %v3661 = vpack.c.b16 %v2728, %v2727
  %v3662 = vpack.c.b16 %v2730, %v2729
  %v3663 = vpack.c.b16 %v2732, %v2731
  %v3664 = vpack.c.b16 %v2734, %v2733
  %v3665 = vpack.c.b16 %v2736, %v2735
  %v3666 = vpack.c.b16 %v2738, %v2737
  %v3667 = vpack.c.b16 %v2740, %v2739
  %v3668 = vpack.c.b16 %v2742, %v2741
  %v3669 = vpack.c.b16 %v2744, %v2743
  %v3670 = vpack.c.b16 %v2746, %v2745
  %v3671 = vpack.c.b16 %v2748, %v2747
  %v3672 = vpack.c.b16 %v2750, %v2749
  %v3673 = vpack.c.b16 %v2752, %v2751
  %v3674 = vpack.c.b16 %v2754, %v2753
  %v3675 = vpack.c.b16 %v2756, %v2755
  %v3676 = vpack.c.b16 %v2758, %v2757
  %v3677 = vpack.c.b16 %v2760, %v2759
  %v3678 = vpack.c.b16 %v2762, %v2761
  %v3679 = vpack.c.b16 %v2764, %v2763
  %v3680 = vpack.c.b16 %v2766, %v2765
  %v3681 = vpack.c.b16 %v2768, %v2767
  %v3682 = vpack.c.b16 %v2770, %v2769
  %v3683 = vpack.c.b16 %v2772, %v2771
  %v3684 = vpack.c.b16 %v2774, %v2773
  %v3685 = vpack.c.b16 %v2776, %v2775
  %v3686 = vpack.c.b16 %v2778, %v2777
  %v3687 = vpack.c.b16 %v2780, %v2779
  %v3688 = vpack.c.b16 %v2782, %v2781
  %v3689 = vpack.c.b16 %v2784, %v2783
  %v3690 = vpack.c.b16 %v2786, %v2785
  %v3691 = vpack.c.b16 %v2788, %v2787
  %v3692 = vpack.c.b16 %v2790, %v2789
  %v3693 = vpack.c.b16 %v2792, %v2791
  %v3694 = vpack.c.b16 %v2794, %v2793
  %v3695 = vpack.c.b16 %v2796, %v2795
  %v3696 = vpack.c.b16 %v2798, %v2797
  %v3697 = vpack.c.b16 %v2800, %v2799
  %v3698 = vpack.c.b16 %v2802, %v2801
  %v3699 = vpack.c.b16 %v2804, %v2803
  %v3700 = vpack.c.b16 %v2806, %v2805
  %v3701 = vpack.c.b16 %v2808, %v2807
  %v3702 = vpack.c.b16 %v2810, %v2809
  %v3703 = vpack.c.b16 %v2812, %v2811
  %v3704 = vpack.c.b16 %v2814, %v2813
  %v3705 = vpack.c.b16 %v2816, %v2815
  %v3706 = vpack.c.b16 %v2818, %v2817
  %v3707 = vpack.c.b16 %v2820, %v2819
  %v3708 = vpack.c.b16 %v2822, %v2821
  %v3709 = vpack.c.b16 %v2824, %v2823
  %v3710 = vpack.c.b16 %v2826, %v2825
  %v3711 = vpack.c.b16 %v2828, %v2827
  %v3712 = vpack.c.b16 %v2830, %v2829
  %v3713 = vpack.c.b16 %v2832, %v2831
  %v3714 = vpack.c.b16 %v2834, %v2833
  %v3715 = vpack.c.b16 %v2836, %v2835
  %v3716 = vpack.c.b16 %v2838, %v2837
  %v3717 = vpack.c.b16 %v2840, %v2839
  %v3718 = vpack.c.b16 %v2842, %v2841
  %v3719 = vpack.c.b16 %v2844, %v2843
  %v3720 = vpack.c.b16 %v2846, %v2845
  %v3721 = vpack.c.b16 %v2848, %v2847
  %v3722 = vpack.c.b16 %v2850, %v2849
  %v3723 = vpack.c.b16 %v2852, %v2851
  %v3724 = vpack.c.b16 %v2854, %v2853
  %v3725 = vpack.c.b16 %v2856, %v2855
  %v3726 = vpack.c.b16 %v2858, %v2857
  %v3727 = vpack.c.b16 %v2860, %v2859
  %v3728 = vpack.c.b16 %v2862, %v2861
  %v3729 = vpack.c.b16 %v2864, %v2863
  %v3730 = vpack.c.b16 %v2866, %v2865
  %v3731 = vpack.c.b16 %v2868, %v2867
  %v3732 = vpack.c.b16 %v2870, %v2869
  %v3733 = vpack.c.b16 %v2872, %v2871
  %v3734 = vpack.c.b16 %v2874, %v2873
  %v3735 = vpack.c.b16 %v2876, %v2875
  %v3736 = vpack.c.b16 %v2878, %v2877
  %v3737 = vpack.c.b16 %v2880, %v2879
  %v3738 = vpack.c.b16 %v2882, %v2881
  %v3739 = vpack.c.b16 %v2884, %v2883
  %v3740 = vpack.c.b16 %v2886, %v2885
  %v3741 = vpack.c.b16 %v2888, %v2887
  %v3742 = vpack.c.b16 %v2890, %v2889
  %v3743 = vpack.c.b16 %v2892, %v2891
  %v3744 = vpack.c.b16 %v2894, %v2893
  %v3745 = vpack.c.b16 %v2896, %v2895
  %v3746 = vpack.c.b16 %v2898, %v2897
  %v3747 = vpack.c.b16 %v2900, %v2899
  %v3748 = vpack.c.b16 %v2902, %v2901
  %v3749 = vpack.c.b16 %v2904, %v2903
  %v3750 = vpack.c.b16 %v2906, %v2905
  %v3751 = vpack.c.b16 %v2908, %v2907
  %v3752 = vpack.c.b16 %v2910, %v2909
  %v3753 = vpack.c.b16 %v2912, %v2911
  %v3754 = vpack.c.b16 %v2914, %v2913
  %v3755 = vpack.c.b16 %v2916, %v2915
  %v3756 = vpack.c.b16 %v2918, %v2917
  %v3757 = vpack.c.b16 %v2920, %v2919
  %v3758 = vpack.c.b16 %v2922, %v2921
  %v3759 = vpack.c.b16 %v2924, %v2923
  %v3760 = vpack.c.b16 %v2926, %v2925
  %v3761 = vpack.c.b16 %v2928, %v2927
  %v3762 = vpack.c.b16 %v2930, %v2929
  %v3763 = vpack.c.b16 %v2932, %v2931
  %v3764 = vpack.c.b16 %v2934, %v2933
  %v3765 = vpack.c.b16 %v2936, %v2935
  %v3766 = vpack.c.b16 %v2938, %v2937
  %v3767 = vpack.c.b16 %v2940, %v2939
  %v3768 = vpack.c.b16 %v2942, %v2941
  %v3769 = vpack.c.b16 %v2944, %v2943
  %v3770 = vpack.c.b16 %v2946, %v2945
  %v3771 = vpack.c.b16 %v2948, %v2947
  %v3772 = vpack.c.b16 %v2950, %v2949
  %v3773 = vpack.c.b16 %v2952, %v2951
  %v3774 = vpack.c.b16 %v2954, %v2953
  %v3775 = vpack.c.b16 %v2956, %v2955
  %v3776 = vpack.c.b16 %v2958, %v2957
  %v3777 = vpack.c.b16 %v2960, %v2959
  %v3778 = vpack.c.b16 %v2962, %v2961
  %v3779 = vpack.c.b16 %v2964, %v2963
  %v3780 = vpack.c.b16 %v2966, %v2965
  %v3781 = vpack.c.b16 %v2968, %v2967
  %v3782 = vpack.c.b16 %v2970, %v2969
  %v3783 = vpack.c.b16 %v2972, %v2971
  %v3784 = vpack.c.b16 %v2974, %v2973
  %v3785 = vpack.c.b16 %v2976, %v2975
  %v3786 = vpack.c.b16 %v2978, %v2977
  %v3787 = vpack.c.b16 %v2980, %v2979
  %v3788 = vpack.c.b16 %v2982, %v2981
  %v3789 = vpack.c.b16 %v2984, %v2983
  %v3790 = vpack.c.b16 %v2986, %v2985
  %v3791 = vpack.c.b16 %v2988, %v2987
  %v3792 = vpack.c.b16 %v2990, %v2989
  %v3793 = vpack.c.b16 %v2992, %v2991
  %v3794 = vpack.c.b16 %v2994, %v2993
  %v3795 = vpack.c.b16 %v2996, %v2995
  %v3796 = vpack.c.b16 %v2998, %v2997
  %v3797 = vpack.c.b16 %v3000, %v2999
  %v3798 = vpack.c.b16 %v3002, %v3001
  %v3799 = vpack.c.b16 %v3004, %v3003
  %v3800 = vpack.c.b16 %v3006, %v3005
  %v3801 = vpack.c.b16 %v3008, %v3007
  %v3802 = vpack.c.b16 %v3010, %v3009
  %v3803 = vpack.c.b16 %v3012, %v3011
  %v3804 = vpack.c.b16 %v3014, %v3013
  %v3805 = vpack.c.b16 %v3016, %v3015
  %v3806 = vpack.c.b16 %v3018, %v3017
  %v3807 = vpack.c.b16 %v3020, %v3019
  %v3808 = vpack.c.b16 %v3022, %v3021
  %v3809 = vpack.c.b16 %v3024, %v3023
  %v3810 = vpack.c.b16 %v3026, %v3025
  %v3811 = vpack.c.b16 %v3028, %v3027
  %v3812 = vpack.c.b16 %v3030, %v3029
  %v3813 = vpack.c.b16 %v3032, %v3031
  %v3814 = vpack.c.b16 %v3034, %v3033
  %v3815 = vpack.c.b16 %v3036, %v3035
  %v3816 = vpack.c.b16 %v3038, %v3037
  %v3817 = vpack.c.b16 %v3040, %v3039
  %v3818 = vpack.c.b16 %v3042, %v3041
  %v3819 = vpack.c.b16 %v3044, %v3043
  %v3820 = vpack.c.b16 %v3046, %v3045
  %v3821 = vpack.c.b16 %v3048, %v3047
  %v3822 = vpack.c.b16 %v3050, %v3049
  %v3823 = vpack.c.b16 %v3052, %v3051
  %v3824 = vpack.c.b16 %v3054, %v3053
  %v3825 = vpack.c.b16 %v3056, %v3055
  %v3826 = vpack.c.b16 %v3058, %v3057
  %v3827 = vpack.c.b16 %v3060, %v3059
  %v3828 = vpack.c.b16 %v3062, %v3061
  %v3829 = vpack.c.b16 %v3064, %v3063
  %v3830 = vpack.c.b16 %v3066, %v3065
  %v3831 = vpack.c.b16 %v3068, %v3067
  %v3832 = vpack.c.b16 %v3070, %v3069
  %v3833 = vpack.c.b16 %v3072, %v3071
  %v3834 = vpack.c.b16 %v3074, %v3073
  %v3835 = vpack.c.b16 %v3076, %v3075
  %v3836 = vpack.c.b16 %v3078, %v3077
  %v3837 = vpack.c.b16 %v3080, %v3079
  %v3838 = vpack.c.b16 %v3082, %v3081
  %v3839 = vpack.c.b16 %v3084, %v3083
  %v3840 = vpack.c.b16 %v3086, %v3085
  %v3841 = vpack.c.b16 %v3088, %v3087
  %v3842 = vpack.c.b16 %v3090, %v3089
  %v3843 = vpack.c.b16 %v3092, %v3091
  %v3844 = vpack.c.b16 %v3094, %v3093
  %v3845 = vpack.c.b16 %v3096, %v3095
  %v3846 = vpack.c.b16 %v3098, %v3097
  %v3847 = vpack.c.b16 %v3100, %v3099
  %v3848 = vpack.c.b16 %v3102, %v3101
  %v3849 = vpack.c.b16 %v3104, %v3103
  %v3850 = vpack.c.b16 %v3106, %v3105
  %v3851 = vpack.c.b16 %v3108, %v3107
  %v3852 = vpack.c.b16 %v3110, %v3109
  %v3853 = vpack.c.b16 %v3112, %v3111
  %v3854 = vpack.c.b16 %v3114, %v3113
  %v3855 = vpack.c.b16 %v3116, %v3115
  %v3856 = vpack.c.b16 %v3118, %v3117
  %v3857 = vpack.c.b16 %v3120, %v3119
  %v3858 = vpack.c.b16 %v3122, %v3121
  %v3859 = vpack.c.b16 %v3124, %v3123
  %v3860 = vpack.c.b16 %v3126, %v3125
  %v3861 = vpack.c.b16 %v3128, %v3127
  %v3862 = vpack.c.b16 %v3130, %v3129
  %v3863 = vpack.c.b16 %v3132, %v3131
  %v3864 = vpack.c.b16 %v3134, %v3133
  %v3865 = vpack.c.b16 %v3136, %v3135
  %v3866 = vpack.c.b16 %v3138, %v3137
  %v3867 = vpack.c.b16 %v3140, %v3139
  %v3868 = vpack.c.b16 %v3142, %v3141
  %v3869 = vpack.c.b16 %v3144, %v3143
  %v3870 = vpack.c.b16 %v3146, %v3145
  %v3871 = vpack.c.b16 %v3148, %v3147
  %v3872 = vpack.c.b16 %v3150, %v3149
  %v3873 = vpack.c.b16 %v3152, %v3151
  %v3874 = vpack.c.b16 %v3154, %v3153
  %v3875 = vpack.c.b16 %v3156, %v3155
  %v3876 = vpack.c.b16 %v3158, %v3157
  %v3877 = vpack.c.b16 %v3160, %v3159
  %v3878 = vpack.c.b16 %v3162, %v3161
  %v3879 = vpack.c.b16 %v3164, %v3163
  %v3880 = vpack.c.b16 %v3166, %v3165
  %v3881 = vpack.c.b16 %v3168, %v3167
  %v3882 = vpack.c.b16 %v3170, %v3169
  %v3883 = vpack.c.b16 %v3172, %v3171
  %v3884 = vpack.c.b16 %v3174, %v3173
  %v3885 = vpack.c.b16 %v3176, %v3175
  %v3886 = vpack.c.b16 %v3178, %v3177
  %v3887 = vpack.c.b16 %v3180, %v3179
  %v3888 = vpack.c.b16 %v3182, %v3181
  %v3889 = vpack.c.b16 %v3184, %v3183
  %v3890 = vpack.c.b16 %v3186, %v3185
  %v3891 = vpack.c.b16 %v3188, %v3187
  %v3892 = vpack.c.b16 %v3190, %v3189
  %v3893 = vpack.c.b16 %v3192, %v3191
  %v3894 = vpack.c.b16 %v3194, %v3193
  %v3895 = vpack.c.b16 %v3196, %v3195
  %v3896 = vpack.c.b16 %v3198, %v3197
  %v3897 = vpack.c.b16 %v3200, %v3199
  %v3898 = vpack.c.b16 %v3202, %v3201
  %v3899 = vpack.c.b16 %v3204, %v3203
  %v3900 = vpack.c.b16 %v3206, %v3205
  %v3901 = vpack.c.b16 %v3208, %v3207
  %v3902 = vpack.c.b16 %v3210, %v3209
  %v3903 = vpack.c.b16 %v3212, %v3211
  %v3904 = vpack.c.b16 %v3214, %v3213
  %v3905 = vpack.c.b16 %v3216, %v3215
  %v3906 = vpack.c.b16 %v3218, %v3217
  %v3907 = vpack.c.b16 %v3220, %v3219
  %v3908 = vpack.c.b16 %v3222, %v3221
  %v3909 = vpack.c.b16 %v3224, %v3223
  %v3910 = vpack.c.b16 %v3226, %v3225
  %v3911 = vpack.c.b16 %v3228, %v3227
  %v3912 = vpack.c.b16 %v3230, %v3229
  %v3913 = vpack.c.b16 %v3232, %v3231
  %v3914 = vpack.c.b16 %v3234, %v3233
  %v3915 = vpack.c.b16 %v3236, %v3235
  %v3916 = vpack.c.b16 %v3238, %v3237
  %v3917 = vpack.c.b16 %v3240, %v3239
  %v3918 = vpack.c.b16 %v3242, %v3241
  %v3919 = vpack.c.b16 %v3244, %v3243
  %v3920 = vpack.c.b16 %v3246, %v3245
  %v3921 = vpack.c.b16 %v3248, %v3247
  %v3922 = vpack.c.b16 %v3250, %v3249
  %v3923 = vpack.c.b16 %v3252, %v3251
  %v3924 = vpack.c.b16 %v3254, %v3253
  %v3925 = vpack.c.b16 %v3256, %v3255
  %v3926 = vpack.c.b16 %v3258, %v3257
  %v3927 = vpack.c.b16 %v3260, %v3259
  %v3928 = vpack.c.b16 %v3262, %v3261
  %v3929 = vpack.c.b16 %v3264, %v3263
  %v3930 = vpack.c.b16 %v3266, %v3265
  %v3931 = vpack.c.b16 %v3268, %v3267
  %v3932 = vpack.c.b16 %v3270, %v3269
  %v3933 = vpack.c.b16 %v3272, %v3271
  %v3934 = vpack.c.b16 %v3274, %v3273
  %v3935 = vpack.c.b16 %v3276, %v3275
  %v3936 = vpack.c.b16 %v3278, %v3277
  %v3937 = vpack.c.b16 %v3280, %v3279
  %v3938 = vpack.c.b16 %v3282, %v3281
  %v3939 = vpack.c.b16 %v3284, %v3283
  %v3940 = vpack.c.b16 %v3286, %v3285
  %v3941 = vpack.c.b16 %v3288, %v3287
  %v3942 = vpack.c.b16 %v3290, %v3289
  %v3943 = vpack.c.b16 %v3292, %v3291
  %v3944 = vpack.c.b16 %v3294, %v3293
  %v3945 = vpack.c.b16 %v3296, %v3295
  %v3946 = vpack.c.b16 %v3298, %v3297
  %v3947 = vpack.c.b16 %v3300, %v3299
  %v3948 = vpack.c.b16 %v3302, %v3301
  %v3949 = vpack.c.b16 %v3304, %v3303
  %v3950 = vpack.c.b16 %v3306, %v3305
  %v3951 = vpack.c.b16 %v3308, %v3307
  %v3952 = vpack.c.b16 %v3310, %v3309
  %v3953 = vpack.c.b16 %v3312, %v3311
  %v3954 = vpack.c.b16 %v3314, %v3313
  %v3955 = vpack.c.b16 %v3316, %v3315
  %v3956 = vpack.c.b16 %v3318, %v3317
  %v3957 = vpack.c.b16 %v3320, %v3319
  %v3958 = vpack.c.b16 %v3322, %v3321
  %v3959 = vpack.c.b16 %v3324, %v3323
  %v3960 = vpack.c.b16 %v3326, %v3325
  %v3961 = vpack.c.b16 %v3328, %v3327
  %v3962 = vpack.c.b16 %v3330, %v3329
  %v3963 = vpack.c.b16 %v3332, %v3331
  %v3964 = vpack.c.b16 %v3334, %v3333
  %v3965 = vpack.c.b16 %v3336, %v3335
  %v3966 = vpack.c.b16 %v3338, %v3337
  %v3967 = vpack.c.b16 %v3340, %v3339
  %v3968 = vpack.c.b16 %v3342, %v3341
  %v3969 = vpack.c.b16 %v3344, %v3343
  %v3970 = vpack.c.b16 %v3346, %v3345
  %v3971 = vpack.c.b16 %v3348, %v3347
  %v3972 = vpack.c.b16 %v3350, %v3349
  %v3973 = vpack.c.b16 %v3352, %v3351
  %v3974 = vpack.c.b16 %v3354, %v3353
  %v3975 = vpack.c.b16 %v3356, %v3355
  %v3976 = vpack.c.b16 %v3358, %v3357
  %v3977 = vpack.c.b16 %v3360, %v3359
  %v3978 = vpack.c.b16 %v3362, %v3361
  %v3979 = vpack.c.b16 %v3364, %v3363
  %v3980 = vpack.c.b16 %v3366, %v3365
  %v3981 = vpack.c.b16 %v3368, %v3367
  %v3982 = vpack.c.b16 %v3370, %v3369
  %v3983 = vpack.c.b16 %v3372, %v3371
  %v3984 = vpack.c.b16 %v3374, %v3373
  %v3985 = vpack.c.b16 %v3376, %v3375
  %v3986 = vpack.c.b16 %v3378, %v3377
  %v3987 = vpack.c.b16 %v3380, %v3379
  %v3988 = vpack.c.b16 %v3382, %v3381
  %v3989 = vpack.c.b16 %v3384, %v3383
  %v3990 = vpack.c.b16 %v3386, %v3385
  %v3991 = vpack.c.b16 %v3388, %v3387
  %v3992 = vpack.c.b16 %v3390, %v3389
  %v3993 = vpack.c.b16 %v3392, %v3391
  %v3994 = vpack.c.b16 %v3394, %v3393
  %v3995 = vpack.c.b16 %v3396, %v3395
  %v3996 = vpack.c.b16 %v3398, %v3397
  %v3997 = vpack.c.b16 %v3400, %v3399
  %v3998 = vpack.c.b16 %v3402, %v3401
  %v3999 = vpack.c.b16 %v3404, %v3403
  %v4000 = vpack.c.b16 %v3406, %v3405
  %v4001 = vpack.c.b16 %v3408, %v3407
  %v4002 = vpack.c.b16 %v3410, %v3409
  %v4003 = vpack.c.b16 %v3412, %v3411
  %v4004 = vpack.c.b16 %v3414, %v3413
  %v4005 = vpack.c.b16 %v3416, %v3415
  %v4006 = vpack.c.b16 %v3418, %v3417
  %v4007 = vpack.c.b16 %v3420, %v3419
  %v4008 = vpack.c.b16 %v3422, %v3421
  %v4009 = vpack.c.b16 %v3424, %v3423
  %v4010 = vpack.c.b16 %v3426, %v3425
  %v4011 = vpack.c.b16 %v3428, %v3427
  %v4012 = vpack.c.b16 %v3430, %v3429
  %v4013 = vpack.c.b16 %v3432, %v3431
  %v4014 = vpack.c.b16 %v3434, %v3433
  %v4015 = vpack.c.b16 %v3436, %v3435
  %v4016 = vpack.c.b16 %v3438, %v3437
  %v4017 = vpack.c.b16 %v3440, %v3439
  %v4018 = vpack.c.b16 %v3442, %v3441
  %v4019 = vpack.c.b16 %v3444, %v3443
  %v4020 = vpack.c.b16 %v3446, %v3445
  %v4021 = vpack.c.b16 %v3448, %v3447
  %v4022 = vpack.c.b16 %v3450, %v3449
  %v4023 = vpack.c.b16 %v3452, %v3451
  %v4024 = vpack.c.b16 %v3454, %v3453
  %v4025 = vpack.c.b16 %v3456, %v3455
  %v4026 = vpack.c.b16 %v3458, %v3457
  %v4027 = vpack.c.b16 %v3460, %v3459
  %v4028 = vpack.c.b16 %v3462, %v3461
  %v4029 = vpack.c.b16 %v3464, %v3463
  %v4030 = vpack.c.b16 %v3466, %v3465
  %v4031 = vpack.c.b16 %v3468, %v3467
  %v4032 = vpack.c.b16 %v3470, %v3469
  %v4033 = vpack.c.b16 %v3472, %v3471
  %v4034 = vpack.c.b16 %v3474, %v3473
  %v4035 = vpack.c.b16 %v3476, %v3475
  %v4036 = vpack.c.b16 %v3478, %v3477
  %v4037 = vpack.c.b16 %v3480, %v3479
  %v4038 = vpack.c.b16 %v3482, %v3481
  %v4039 = vpack.c.b16 %v3484, %v3483
  %v4040 = vpack.c.b16 %v3486, %v3485
  %v4041 = vpack.c.b16 %v3488, %v3487
  %v4042 = vpack.c.b16 %v3490, %v3489
  %v4043 = vpack.c.b16 %v3492, %v3491
  %v4044 = vpack.c.b16 %v3494, %v3493
  %v4045 = vpack.c.b16 %v3496, %v3495
  %v4046 = vpack.c.b16 %v3498, %v3497
  %v4047 = vpack.c.b16 %v3500, %v3499
  %v4048 = vpack.c.b16 %v3502, %v3501
  %v4049 = vpack.c.b16 %v3504, %v3503
  %v4050 = vpack.c.b16 %v3506, %v3505
  %v4051 = vpack.c.b16 %v3508, %v3507
  %v4052 = vpack.c.b16 %v3510, %v3509
  %v4053 = vpack.c.b16 %v3512, %v3511
  %v4054 = vpack.c.b16 %v3514, %v3513
  %v4055 = vpack.c.b16 %v3516, %v3515
  %v4056 = vpack.c.b16 %v3518, %v3517
  %v4057 = vpack.c.b16 %v3520, %v3519
  %v4058 = vpack.c.b16 %v3522, %v3521
  %v4059 = vpack.c.b16 %v3524, %v3523
  %v4060 = vpack.c.b16 %v3526, %v3525
  %v4061 = vpack.c.b16 %v3528, %v3527
  %v4062 = vpack.c.b16 %v3530, %v3529
  %v4063 = vpack.c.b16 %v3532, %v3531
  %v4064 = vpack.c.b16 %v3534, %v3533
  %v4065 = vpack.c.b16 %v3536, %v3535
  %v4066 = vpack.c.b16 %v3538, %v3537
  %v4067 = vpack.c.b16 %v3540, %v3539
  %v4068 = vpack.c.b16 %v3542, %v3541
  %v4069 = vpack.c.b16 %v3544, %v3543
  %v4070 = vpack.c.b16 %v3546, %v3545
  %v4071 = vpack.c.b16 %v3548, %v3547
  %v4072 = vpack.c.b16 %v3550, %v3549
  %v4073 = vpack.c.b16 %v3552, %v3551
  %v4074 = vpack.c.b16 %v3554, %v3553
  %v4075 = vpack.c.b16 %v3556, %v3555
  %v4076 = vpack.c.b16 %v3558, %v3557
  %v4077 = vpack.c.b16 %v3560, %v3559
  %v4078 = vpack.c.b16 %v3562, %v3561
  %v4079 = vpack.c.b16 %v3564, %v3563
  %v4080 = vpack.c.b16 %v3566, %v3565
  %v4081 = vpack.c.b16 %v3568, %v3567
  %v4082 = vpack.c.b16 %v3570, %v3569
  %4595 = vmatprep.subr.bf16.mxu0 0
  %4596 = vmatpush1.bf16.msra.mxu0 %v3571
  %4597 = vmatprep.subr.bf16.mxu0 0
  %4598 = vmatpush1.bf16.msra.mxu0 %v3572
  %4599 = vmatprep.subr.bf16.mxu0 0
  %4600 = vmatpush1.bf16.msra.mxu0 %v3573
  %4601 = vmatprep.subr.bf16.mxu0 0
  %4602 = vmatpush1.bf16.msra.mxu0 %v3574
  %4603 = vmatprep.subr.bf16.mxu0 0
  %4604 = vmatpush1.bf16.msra.mxu0 %v3575
  %4605 = vmatprep.subr.bf16.mxu0 0
  %4606 = vmatpush1.bf16.msra.mxu0 %v3576
  %4607 = vmatprep.subr.bf16.mxu0 0
  %4608 = vmatpush1.bf16.msra.mxu0 %v3577
  %4609 = vmatprep.subr.bf16.mxu0 0
  %4610 = vmatpush1.bf16.msra.mxu0 %v3578
  %4611 = vmatprep.subr.bf16.mxu0 0
  %4612 = vmatpush1.bf16.msra.mxu0 %v3579
  %4613 = vmatprep.subr.bf16.mxu0 0
  %4614 = vmatpush1.bf16.msra.mxu0 %v3580
  %4615 = vmatprep.subr.bf16.mxu0 0
  %4616 = vmatpush1.bf16.msra.mxu0 %v3581
  %4617 = vmatprep.subr.bf16.mxu0 0
  %4618 = vmatpush1.bf16.msra.mxu0 %v3582
  %4619 = vmatprep.subr.bf16.mxu0 0
  %4620 = vmatpush1.bf16.msra.mxu0 %v3583
  %4621 = vmatprep.subr.bf16.mxu0 0
  %4622 = vmatpush1.bf16.msra.mxu0 %v3584
  %4623 = vmatprep.subr.bf16.mxu0 0
  %4624 = vmatpush1.bf16.msra.mxu0 %v3585
  %4625 = vmatprep.subr.bf16.mxu0 0
  %4626 = vmatpush1.bf16.msra.mxu0 %v3586
  %4627 = vmatprep.mubr.bf16.mxu0 %v1104
  %4628 = vmatmul.mubr.bf16.gmra.mrb[0].mxu0 %v1090
  %v4629 = vpop.f32.mrb[0].mxu0
  %v4630 = vadd.f32 %v1058, %v4629
  %v4631 = vpop.f32.mrb[0].mxu0
  %v4632 = vpop.f32.mrb[0].mxu0
  %v4633 = vpop.f32.mrb[0].mxu0
  %4634 = vdwg.mxu0
  %4635 = vmatprep.subr.bf16.mxu0 0
  %4636 = vmatpush1.bf16.msra.mxu0 %v3587
  %4637 = vmatprep.subr.bf16.mxu0 0
  %4638 = vmatpush1.bf16.msra.mxu0 %v3588
  %4639 = vmatprep.subr.bf16.mxu0 0
  %4640 = vmatpush1.bf16.msra.mxu0 %v3589
  %4641 = vmatprep.subr.bf16.mxu0 0
  %4642 = vmatpush1.bf16.msra.mxu0 %v3590
  %4643 = vmatprep.subr.bf16.mxu0 0
  %4644 = vmatpush1.bf16.msra.mxu0 %v3591
  %4645 = vmatprep.subr.bf16.mxu0 0
  %4646 = vmatpush1.bf16.msra.mxu0 %v3592
  %4647 = vmatprep.subr.bf16.mxu0 0
  %4648 = vmatpush1.bf16.msra.mxu0 %v3593
  %4649 = vmatprep.subr.bf16.mxu0 0
  %4650 = vmatpush1.bf16.msra.mxu0 %v3594
  %4651 = vmatprep.subr.bf16.mxu0 0
  %4652 = vmatpush1.bf16.msra.mxu0 %v3595
  %4653 = vmatprep.subr.bf16.mxu0 0
  %4654 = vmatpush1.bf16.msra.mxu0 %v3596
  %4655 = vmatprep.subr.bf16.mxu0 0
  %4656 = vmatpush1.bf16.msra.mxu0 %v3597
  %4657 = vmatprep.subr.bf16.mxu0 0
  %4658 = vmatpush1.bf16.msra.mxu0 %v3598
  %4659 = vmatprep.subr.bf16.mxu0 0
  %4660 = vmatpush1.bf16.msra.mxu0 %v3599
  %4661 = vmatprep.subr.bf16.mxu0 0
  %4662 = vmatpush1.bf16.msra.mxu0 %v3600
  %4663 = vmatprep.subr.bf16.mxu0 0
  %4664 = vmatpush1.bf16.msra.mxu0 %v3601
  %4665 = vmatprep.subr.bf16.mxu0 0
  %4666 = vmatpush1.bf16.msra.mxu0 %v3602
  %4667 = vmatprep.mubr.bf16.mxu0 %v1114
  %4668 = vmatmul.mubr.bf16.gmra.mrb[0].mxu0 %v1112
  %v4669 = vpop.f32.mrb[0].mxu0
  %v4670 = vadd.f32 %v4630, %v4669
  %v4671 = vpop.f32.mrb[0].mxu0
  %v4672 = vpop.f32.mrb[0].mxu0
  %v4673 = vpop.f32.mrb[0].mxu0
  %4674 = vdwg.mxu0
  %4675 = vmatprep.subr.bf16.mxu0 0
  %4676 = vmatpush1.bf16.msra.mxu0 %v3603
  %4677 = vmatprep.subr.bf16.mxu0 0
  %4678 = vmatpush1.bf16.msra.mxu0 %v3604
  %4679 = vmatprep.subr.bf16.mxu0 0
  %4680 = vmatpush1.bf16.msra.mxu0 %v3605
  %4681 = vmatprep.subr.bf16.mxu0 0
  %4682 = vmatpush1.bf16.msra.mxu0 %v3606
  %4683 = vmatprep.subr.bf16.mxu0 0
  %4684 = vmatpush1.bf16.msra.mxu0 %v3607
  %4685 = vmatprep.subr.bf16.mxu0 0
  %4686 = vmatpush1.bf16.msra.mxu0 %v3608
  %4687 = vmatprep.subr.bf16.mxu0 0
  %4688 = vmatpush1.bf16.msra.mxu0 %v3609
  %4689 = vmatprep.subr.bf16.mxu0 0
  %4690 = vmatpush1.bf16.msra.mxu0 %v3610
  %4691 = vmatprep.subr.bf16.mxu0 0
  %4692 = vmatpush1.bf16.msra.mxu0 %v3611
  %4693 = vmatprep.subr.bf16.mxu0 0
  %4694 = vmatpush1.bf16.msra.mxu0 %v3612
  %4695 = vmatprep.subr.bf16.mxu0 0
  %4696 = vmatpush1.bf16.msra.mxu0 %v3613
  %4697 = vmatprep.subr.bf16.mxu0 0
  %4698 = vmatpush1.bf16.msra.mxu0 %v3614
  %4699 = vmatprep.subr.bf16.mxu0 0
  %4700 = vmatpush1.bf16.msra.mxu0 %v3615
  %4701 = vmatprep.subr.bf16.mxu0 0
  %4702 = vmatpush1.bf16.msra.mxu0 %v3616
  %4703 = vmatprep.subr.bf16.mxu0 0
  %4704 = vmatpush1.bf16.msra.mxu0 %v3617
  %4705 = vmatprep.subr.bf16.mxu0 0
  %4706 = vmatpush1.bf16.msra.mxu0 %v3618
  %4707 = vmatprep.mubr.bf16.mxu0 %v1111
  %4708 = vmatmul.mubr.bf16.gmra.mrb[0].mxu0 %v1097
  %v4709 = vpop.f32.mrb[0].mxu0
  %v4710 = vadd.f32 %v4670, %v4709
  %v4711 = vpop.f32.mrb[0].mxu0
  %v4712 = vpop.f32.mrb[0].mxu0
  %v4713 = vpop.f32.mrb[0].mxu0
  %4714 = vdwg.mxu0
  %4715 = vmatprep.subr.bf16.mxu0 0
  %4716 = vmatpush1.bf16.msra.mxu0 %v3619
  %4717 = vmatprep.subr.bf16.mxu0 0
  %4718 = vmatpush1.bf16.msra.mxu0 %v3620
  %4719 = vmatprep.subr.bf16.mxu0 0
  %4720 = vmatpush1.bf16.msra.mxu0 %v3621
  %4721 = vmatprep.subr.bf16.mxu0 0
  %4722 = vmatpush1.bf16.msra.mxu0 %v3622
  %4723 = vmatprep.subr.bf16.mxu0 0
  %4724 = vmatpush1.bf16.msra.mxu0 %v3623
  %4725 = vmatprep.subr.bf16.mxu0 0
  %4726 = vmatpush1.bf16.msra.mxu0 %v3624
  %4727 = vmatprep.subr.bf16.mxu0 0
  %4728 = vmatpush1.bf16.msra.mxu0 %v3625
  %4729 = vmatprep.subr.bf16.mxu0 0
  %4730 = vmatpush1.bf16.msra.mxu0 %v3626
  %4731 = vmatprep.subr.bf16.mxu0 0
  %4732 = vmatpush1.bf16.msra.mxu0 %v3627
  %4733 = vmatprep.subr.bf16.mxu0 0
  %4734 = vmatpush1.bf16.msra.mxu0 %v3628
  %4735 = vmatprep.subr.bf16.mxu0 0
  %4736 = vmatpush1.bf16.msra.mxu0 %v3629
  %4737 = vmatprep.subr.bf16.mxu0 0
  %4738 = vmatpush1.bf16.msra.mxu0 %v3630
  %4739 = vmatprep.subr.bf16.mxu0 0
  %4740 = vmatpush1.bf16.msra.mxu0 %v3631
  %4741 = vmatprep.subr.bf16.mxu0 0
  %4742 = vmatpush1.bf16.msra.mxu0 %v3632
  %4743 = vmatprep.subr.bf16.mxu0 0
  %4744 = vmatpush1.bf16.msra.mxu0 %v3633
  %4745 = vmatprep.subr.bf16.mxu0 0
  %4746 = vmatpush1.bf16.msra.mxu0 %v3634
  %4747 = vmatprep.mubr.bf16.mxu0 %v1115
  %4748 = vmatmul.mubr.bf16.gmra.mrb[0].mxu0 %v1113
  %v4749 = vpop.f32.mrb[0].mxu0
  %v4750 = vadd.f32 %v4710, %v4749
  %v4751 = vpop.f32.mrb[0].mxu0
  %v4752 = vpop.f32.mrb[0].mxu0
  %v4753 = vpop.f32.mrb[0].mxu0
  %4754 = vdwg.mxu0
  %4755 = vmatprep.subr.bf16.mxu0 0
  %4756 = vmatpush1.bf16.msra.mxu0 %v3635
  %4757 = vmatprep.subr.bf16.mxu0 0
  %4758 = vmatpush1.bf16.msra.mxu0 %v3636
  %4759 = vmatprep.subr.bf16.mxu0 0
  %4760 = vmatpush1.bf16.msra.mxu0 %v3637
  %4761 = vmatprep.subr.bf16.mxu0 0
  %4762 = vmatpush1.bf16.msra.mxu0 %v3638
  %4763 = vmatprep.subr.bf16.mxu0 0
  %4764 = vmatpush1.bf16.msra.mxu0 %v3639
  %4765 = vmatprep.subr.bf16.mxu0 0
  %4766 = vmatpush1.bf16.msra.mxu0 %v3640
  %4767 = vmatprep.subr.bf16.mxu0 0
  %4768 = vmatpush1.bf16.msra.mxu0 %v3641
  %4769 = vmatprep.subr.bf16.mxu0 0
  %4770 = vmatpush1.bf16.msra.mxu0 %v3642
  %4771 = vmatprep.subr.bf16.mxu0 0
  %4772 = vmatpush1.bf16.msra.mxu0 %v3643
  %4773 = vmatprep.subr.bf16.mxu0 0
  %4774 = vmatpush1.bf16.msra.mxu0 %v3644
  %4775 = vmatprep.subr.bf16.mxu0 0
  %4776 = vmatpush1.bf16.msra.mxu0 %v3645
  %4777 = vmatprep.subr.bf16.mxu0 0
  %4778 = vmatpush1.bf16.msra.mxu0 %v3646
  %4779 = vmatprep.subr.bf16.mxu0 0
  %4780 = vmatpush1.bf16.msra.mxu0 %v3647
  %4781 = vmatprep.subr.bf16.mxu0 0
  %4782 = vmatpush1.bf16.msra.mxu0 %v3648
  %4783 = vmatprep.subr.bf16.mxu0 0
  %4784 = vmatpush1.bf16.msra.mxu0 %v3649
  %4785 = vmatprep.subr.bf16.mxu0 0
  %4786 = vmatpush1.bf16.msra.mxu0 %v3650
  %4787 = vmatprep.mubr.bf16.mxu0 %v1153
  %4788 = vmatmul.mubr.bf16.gmra.mrb[0].mxu0 %v1139
  %v4789 = vpop.f32.mrb[0].mxu0
  %v4790 = vadd.f32 %v4750, %v4789
  %v4791 = vpop.f32.mrb[0].mxu0
  %v4792 = vpop.f32.mrb[0].mxu0
  %v4793 = vpop.f32.mrb[0].mxu0
  %4794 = vdwg.mxu0
  %4795 = vmatprep.subr.bf16.mxu0 0
  %4796 = vmatpush1.bf16.msra.mxu0 %v3651
  %4797 = vmatprep.subr.bf16.mxu0 0
  %4798 = vmatpush1.bf16.msra.mxu0 %v3652
  %4799 = vmatprep.subr.bf16.mxu0 0
  %4800 = vmatpush1.bf16.msra.mxu0 %v3653
  %4801 = vmatprep.subr.bf16.mxu0 0
  %4802 = vmatpush1.bf16.msra.mxu0 %v3654
  %4803 = vmatprep.subr.bf16.mxu0 0
  %4804 = vmatpush1.bf16.msra.mxu0 %v3655
  %4805 = vmatprep.subr.bf16.mxu0 0
  %4806 = vmatpush1.bf16.msra.mxu0 %v3656
  %4807 = vmatprep.subr.bf16.mxu0 0
  %4808 = vmatpush1.bf16.msra.mxu0 %v3657
  %4809 = vmatprep.subr.bf16.mxu0 0
  %4810 = vmatpush1.bf16.msra.mxu0 %v3658
  %4811 = vmatprep.subr.bf16.mxu0 0
  %4812 = vmatpush1.bf16.msra.mxu0 %v3659
  %4813 = vmatprep.subr.bf16.mxu0 0
  %4814 = vmatpush1.bf16.msra.mxu0 %v3660
  %4815 = vmatprep.subr.bf16.mxu0 0
  %4816 = vmatpush1.bf16.msra.mxu0 %v3661
  %4817 = vmatprep.subr.bf16.mxu0 0
  %4818 = vmatpush1.bf16.msra.mxu0 %v3662
  %4819 = vmatprep.subr.bf16.mxu0 0
  %4820 = vmatpush1.bf16.msra.mxu0 %v3663
  %4821 = vmatprep.subr.bf16.mxu0 0
  %4822 = vmatpush1.bf16.msra.mxu0 %v3664
  %4823 = vmatprep.subr.bf16.mxu0 0
  %4824 = vmatpush1.bf16.msra.mxu0 %v3665
  %4825 = vmatprep.subr.bf16.mxu0 0
  %4826 = vmatpush1.bf16.msra.mxu0 %v3666
  %4827 = vmatprep.mubr.bf16.mxu0 %v1163
  %4828 = vmatmul.mubr.bf16.gmra.mrb[0].mxu0 %v1161
  %v4829 = vpop.f32.mrb[0].mxu0
  %v4830 = vadd.f32 %v4790, %v4829
  %v4831 = vpop.f32.mrb[0].mxu0
  %v4832 = vpop.f32.mrb[0].mxu0
  %v4833 = vpop.f32.mrb[0].mxu0
  %4834 = vdwg.mxu0
  %4835 = vmatprep.subr.bf16.mxu0 0
  %4836 = vmatpush1.bf16.msra.mxu0 %v3667
  %4837 = vmatprep.subr.bf16.mxu0 0
  %4838 = vmatpush1.bf16.msra.mxu0 %v3668
  %4839 = vmatprep.subr.bf16.mxu0 0
  %4840 = vmatpush1.bf16.msra.mxu0 %v3669
  %4841 = vmatprep.subr.bf16.mxu0 0
  %4842 = vmatpush1.bf16.msra.mxu0 %v3670
  %4843 = vmatprep.subr.bf16.mxu0 0
  %4844 = vmatpush1.bf16.msra.mxu0 %v3671
  %4845 = vmatprep.subr.bf16.mxu0 0
  %4846 = vmatpush1.bf16.msra.mxu0 %v3672
  %4847 = vmatprep.subr.bf16.mxu0 0
  %4848 = vmatpush1.bf16.msra.mxu0 %v3673
  %4849 = vmatprep.subr.bf16.mxu0 0
  %4850 = vmatpush1.bf16.msra.mxu0 %v3674
  %4851 = vmatprep.subr.bf16.mxu0 0
  %4852 = vmatpush1.bf16.msra.mxu0 %v3675
  %4853 = vmatprep.subr.bf16.mxu0 0
  %4854 = vmatpush1.bf16.msra.mxu0 %v3676
  %4855 = vmatprep.subr.bf16.mxu0 0
  %4856 = vmatpush1.bf16.msra.mxu0 %v3677
  %4857 = vmatprep.subr.bf16.mxu0 0
  %4858 = vmatpush1.bf16.msra.mxu0 %v3678
  %4859 = vmatprep.subr.bf16.mxu0 0
  %4860 = vmatpush1.bf16.msra.mxu0 %v3679
  %4861 = vmatprep.subr.bf16.mxu0 0
  %4862 = vmatpush1.bf16.msra.mxu0 %v3680
  %4863 = vmatprep.subr.bf16.mxu0 0
  %4864 = vmatpush1.bf16.msra.mxu0 %v3681
  %4865 = vmatprep.subr.bf16.mxu0 0
  %4866 = vmatpush1.bf16.msra.mxu0 %v3682
  %4867 = vmatprep.mubr.bf16.mxu0 %v1160
  %4868 = vmatmul.mubr.bf16.gmra.mrb[0].mxu0 %v1146
  %v4869 = vpop.f32.mrb[0].mxu0
  %v4870 = vadd.f32 %v4830, %v4869
  %v4871 = vpop.f32.mrb[0].mxu0
  %v4872 = vpop.f32.mrb[0].mxu0
  %v4873 = vpop.f32.mrb[0].mxu0
  %4874 = vdwg.mxu0
  %4875 = vmatprep.subr.bf16.mxu0 0
  %4876 = vmatpush1.bf16.msra.mxu0 %v3683
  %4877 = vmatprep.subr.bf16.mxu0 0
  %4878 = vmatpush1.bf16.msra.mxu0 %v3684
  %4879 = vmatprep.subr.bf16.mxu0 0
  %4880 = vmatpush1.bf16.msra.mxu0 %v3685
  %4881 = vmatprep.subr.bf16.mxu0 0
  %4882 = vmatpush1.bf16.msra.mxu0 %v3686
  %4883 = vmatprep.subr.bf16.mxu0 0
  %4884 = vmatpush1.bf16.msra.mxu0 %v3687
  %4885 = vmatprep.subr.bf16.mxu0 0
  %4886 = vmatpush1.bf16.msra.mxu0 %v3688
  %4887 = vmatprep.subr.bf16.mxu0 0
  %4888 = vmatpush1.bf16.msra.mxu0 %v3689
  %4889 = vmatprep.subr.bf16.mxu0 0
  %4890 = vmatpush1.bf16.msra.mxu0 %v3690
  %4891 = vmatprep.subr.bf16.mxu0 0
  %4892 = vmatpush1.bf16.msra.mxu0 %v3691
  %4893 = vmatprep.subr.bf16.mxu0 0
  %4894 = vmatpush1.bf16.msra.mxu0 %v3692
  %4895 = vmatprep.subr.bf16.mxu0 0
  %4896 = vmatpush1.bf16.msra.mxu0 %v3693
  %4897 = vmatprep.subr.bf16.mxu0 0
  %4898 = vmatpush1.bf16.msra.mxu0 %v3694
  %4899 = vmatprep.subr.bf16.mxu0 0
  %4900 = vmatpush1.bf16.msra.mxu0 %v3695
  %4901 = vmatprep.subr.bf16.mxu0 0
  %4902 = vmatpush1.bf16.msra.mxu0 %v3696
  %4903 = vmatprep.subr.bf16.mxu0 0
  %4904 = vmatpush1.bf16.msra.mxu0 %v3697
  %4905 = vmatprep.subr.bf16.mxu0 0
  %4906 = vmatpush1.bf16.msra.mxu0 %v3698
  %4907 = vmatprep.mubr.bf16.mxu0 %v1164
  %4908 = vmatmul.mubr.bf16.gmra.mrb[0].mxu0 %v1162
  %v4909 = vpop.f32.mrb[0].mxu0
  %v4910 = vadd.f32 %v4870, %v4909
  %v4911 = vpop.f32.mrb[0].mxu0
  %v4912 = vpop.f32.mrb[0].mxu0
  %v4913 = vpop.f32.mrb[0].mxu0
  %4914 = vdwg.mxu0
  %4915 = vmatprep.subr.bf16.mxu0 0
  %4916 = vmatpush1.bf16.msra.mxu0 %v3699
  %4917 = vmatprep.subr.bf16.mxu0 0
  %4918 = vmatpush1.bf16.msra.mxu0 %v3700
  %4919 = vmatprep.subr.bf16.mxu0 0
  %4920 = vmatpush1.bf16.msra.mxu0 %v3701
  %4921 = vmatprep.subr.bf16.mxu0 0
  %4922 = vmatpush1.bf16.msra.mxu0 %v3702
  %4923 = vmatprep.subr.bf16.mxu0 0
  %4924 = vmatpush1.bf16.msra.mxu0 %v3703
  %4925 = vmatprep.subr.bf16.mxu0 0
  %4926 = vmatpush1.bf16.msra.mxu0 %v3704
  %4927 = vmatprep.subr.bf16.mxu0 0
  %4928 = vmatpush1.bf16.msra.mxu0 %v3705
  %4929 = vmatprep.subr.bf16.mxu0 0
  %4930 = vmatpush1.bf16.msra.mxu0 %v3706
  %4931 = vmatprep.subr.bf16.mxu0 0
  %4932 = vmatpush1.bf16.msra.mxu0 %v3707
  %4933 = vmatprep.subr.bf16.mxu0 0
  %4934 = vmatpush1.bf16.msra.mxu0 %v3708
  %4935 = vmatprep.subr.bf16.mxu0 0
  %4936 = vmatpush1.bf16.msra.mxu0 %v3709
  %4937 = vmatprep.subr.bf16.mxu0 0
  %4938 = vmatpush1.bf16.msra.mxu0 %v3710
  %4939 = vmatprep.subr.bf16.mxu0 0
  %4940 = vmatpush1.bf16.msra.mxu0 %v3711
  %4941 = vmatprep.subr.bf16.mxu0 0
  %4942 = vmatpush1.bf16.msra.mxu0 %v3712
  %4943 = vmatprep.subr.bf16.mxu0 0
  %4944 = vmatpush1.bf16.msra.mxu0 %v3713
  %4945 = vmatprep.subr.bf16.mxu0 0
  %4946 = vmatpush1.bf16.msra.mxu0 %v3714
  %4947 = vmatprep.mubr.bf16.mxu0 %v1202
  %4948 = vmatmul.mubr.bf16.gmra.mrb[0].mxu0 %v1188
  %v4949 = vpop.f32.mrb[0].mxu0
  %v4950 = vadd.f32 %v4910, %v4949
  %v4951 = vpop.f32.mrb[0].mxu0
  %v4952 = vpop.f32.mrb[0].mxu0
  %v4953 = vpop.f32.mrb[0].mxu0
  %4954 = vdwg.mxu0
  %4955 = vmatprep.subr.bf16.mxu0 0
  %4956 = vmatpush1.bf16.msra.mxu0 %v3715
  %4957 = vmatprep.subr.bf16.mxu0 0
  %4958 = vmatpush1.bf16.msra.mxu0 %v3716
  %4959 = vmatprep.subr.bf16.mxu0 0
  %4960 = vmatpush1.bf16.msra.mxu0 %v3717
  %4961 = vmatprep.subr.bf16.mxu0 0
  %4962 = vmatpush1.bf16.msra.mxu0 %v3718
  %4963 = vmatprep.subr.bf16.mxu0 0
  %4964 = vmatpush1.bf16.msra.mxu0 %v3719
  %4965 = vmatprep.subr.bf16.mxu0 0
  %4966 = vmatpush1.bf16.msra.mxu0 %v3720
  %4967 = vmatprep.subr.bf16.mxu0 0
  %4968 = vmatpush1.bf16.msra.mxu0 %v3721
  %4969 = vmatprep.subr.bf16.mxu0 0
  %4970 = vmatpush1.bf16.msra.mxu0 %v3722
  %4971 = vmatprep.subr.bf16.mxu0 0
  %4972 = vmatpush1.bf16.msra.mxu0 %v3723
  %4973 = vmatprep.subr.bf16.mxu0 0
  %4974 = vmatpush1.bf16.msra.mxu0 %v3724
  %4975 = vmatprep.subr.bf16.mxu0 0
  %4976 = vmatpush1.bf16.msra.mxu0 %v3725
  %4977 = vmatprep.subr.bf16.mxu0 0
  %4978 = vmatpush1.bf16.msra.mxu0 %v3726
  %4979 = vmatprep.subr.bf16.mxu0 0
  %4980 = vmatpush1.bf16.msra.mxu0 %v3727
  %4981 = vmatprep.subr.bf16.mxu0 0
  %4982 = vmatpush1.bf16.msra.mxu0 %v3728
  %4983 = vmatprep.subr.bf16.mxu0 0
  %4984 = vmatpush1.bf16.msra.mxu0 %v3729
  %4985 = vmatprep.subr.bf16.mxu0 0
  %4986 = vmatpush1.bf16.msra.mxu0 %v3730
  %4987 = vmatprep.mubr.bf16.mxu0 %v1212
  %4988 = vmatmul.mubr.bf16.gmra.mrb[0].mxu0 %v1210
  %v4989 = vpop.f32.mrb[0].mxu0
  %v4990 = vadd.f32 %v4950, %v4989
  %v4991 = vpop.f32.mrb[0].mxu0
  %v4992 = vpop.f32.mrb[0].mxu0
  %v4993 = vpop.f32.mrb[0].mxu0
  %4994 = vdwg.mxu0
  %4995 = vmatprep.subr.bf16.mxu0 0
  %4996 = vmatpush1.bf16.msra.mxu0 %v3731
  %4997 = vmatprep.subr.bf16.mxu0 0
  %4998 = vmatpush1.bf16.msra.mxu0 %v3732
  %4999 = vmatprep.subr.bf16.mxu0 0
  %5000 = vmatpush1.bf16.msra.mxu0 %v3733
  %5001 = vmatprep.subr.bf16.mxu0 0
  %5002 = vmatpush1.bf16.msra.mxu0 %v3734
  %5003 = vmatprep.subr.bf16.mxu0 0
  %5004 = vmatpush1.bf16.msra.mxu0 %v3735
  %5005 = vmatprep.subr.bf16.mxu0 0
  %5006 = vmatpush1.bf16.msra.mxu0 %v3736
  %5007 = vmatprep.subr.bf16.mxu0 0
  %5008 = vmatpush1.bf16.msra.mxu0 %v3737
  %5009 = vmatprep.subr.bf16.mxu0 0
  %5010 = vmatpush1.bf16.msra.mxu0 %v3738
  %5011 = vmatprep.subr.bf16.mxu0 0
  %5012 = vmatpush1.bf16.msra.mxu0 %v3739
  %5013 = vmatprep.subr.bf16.mxu0 0
  %5014 = vmatpush1.bf16.msra.mxu0 %v3740
  %5015 = vmatprep.subr.bf16.mxu0 0
  %5016 = vmatpush1.bf16.msra.mxu0 %v3741
  %5017 = vmatprep.subr.bf16.mxu0 0
  %5018 = vmatpush1.bf16.msra.mxu0 %v3742
  %5019 = vmatprep.subr.bf16.mxu0 0
  %5020 = vmatpush1.bf16.msra.mxu0 %v3743
  %5021 = vmatprep.subr.bf16.mxu0 0
  %5022 = vmatpush1.bf16.msra.mxu0 %v3744
  %5023 = vmatprep.subr.bf16.mxu0 0
  %5024 = vmatpush1.bf16.msra.mxu0 %v3745
  %5025 = vmatprep.subr.bf16.mxu0 0
  %5026 = vmatpush1.bf16.msra.mxu0 %v3746
  %5027 = vmatprep.mubr.bf16.mxu0 %v1209
  %5028 = vmatmul.mubr.bf16.gmra.mrb[0].mxu0 %v1195
  %v5029 = vpop.f32.mrb[0].mxu0
  %v5030 = vadd.f32 %v4990, %v5029
  %v5031 = vpop.f32.mrb[0].mxu0
  %v5032 = vpop.f32.mrb[0].mxu0
  %v5033 = vpop.f32.mrb[0].mxu0
  %5034 = vdwg.mxu0
  %5035 = vmatprep.subr.bf16.mxu0 0
  %5036 = vmatpush1.bf16.msra.mxu0 %v3747
  %5037 = vmatprep.subr.bf16.mxu0 0
  %5038 = vmatpush1.bf16.msra.mxu0 %v3748
  %5039 = vmatprep.subr.bf16.mxu0 0
  %5040 = vmatpush1.bf16.msra.mxu0 %v3749
  %5041 = vmatprep.subr.bf16.mxu0 0
  %5042 = vmatpush1.bf16.msra.mxu0 %v3750
  %5043 = vmatprep.subr.bf16.mxu0 0
  %5044 = vmatpush1.bf16.msra.mxu0 %v3751
  %5045 = vmatprep.subr.bf16.mxu0 0
  %5046 = vmatpush1.bf16.msra.mxu0 %v3752
  %5047 = vmatprep.subr.bf16.mxu0 0
  %5048 = vmatpush1.bf16.msra.mxu0 %v3753
  %5049 = vmatprep.subr.bf16.mxu0 0
  %5050 = vmatpush1.bf16.msra.mxu0 %v3754
  %5051 = vmatprep.subr.bf16.mxu0 0
  %5052 = vmatpush1.bf16.msra.mxu0 %v3755
  %5053 = vmatprep.subr.bf16.mxu0 0
  %5054 = vmatpush1.bf16.msra.mxu0 %v3756
  %5055 = vmatprep.subr.bf16.mxu0 0
  %5056 = vmatpush1.bf16.msra.mxu0 %v3757
  %5057 = vmatprep.subr.bf16.mxu0 0
  %5058 = vmatpush1.bf16.msra.mxu0 %v3758
  %5059 = vmatprep.subr.bf16.mxu0 0
  %5060 = vmatpush1.bf16.msra.mxu0 %v3759
  %5061 = vmatprep.subr.bf16.mxu0 0
  %5062 = vmatpush1.bf16.msra.mxu0 %v3760
  %5063 = vmatprep.subr.bf16.mxu0 0
  %5064 = vmatpush1.bf16.msra.mxu0 %v3761
  %5065 = vmatprep.subr.bf16.mxu0 0
  %5066 = vmatpush1.bf16.msra.mxu0 %v3762
  %5067 = vmatprep.mubr.bf16.mxu0 %v1213
  %5068 = vmatmul.mubr.bf16.gmra.mrb[0].mxu0 %v1211
  %v5069 = vpop.f32.mrb[0].mxu0
  %v5070 = vadd.f32 %v5030, %v5069
  %v5071 = vpop.f32.mrb[0].mxu0
  %v5072 = vpop.f32.mrb[0].mxu0
  %v5073 = vpop.f32.mrb[0].mxu0
  %5074 = vdwg.mxu0
  %5075 = vmatprep.subr.bf16.mxu0 0
  %5076 = vmatpush1.bf16.msra.mxu0 %v3763
  %5077 = vmatprep.subr.bf16.mxu0 0
  %5078 = vmatpush1.bf16.msra.mxu0 %v3764
  %5079 = vmatprep.subr.bf16.mxu0 0
  %5080 = vmatpush1.bf16.msra.mxu0 %v3765
  %5081 = vmatprep.subr.bf16.mxu0 0
  %5082 = vmatpush1.bf16.msra.mxu0 %v3766
  %5083 = vmatprep.subr.bf16.mxu0 0
  %5084 = vmatpush1.bf16.msra.mxu0 %v3767
  %5085 = vmatprep.subr.bf16.mxu0 0
  %5086 = vmatpush1.bf16.msra.mxu0 %v3768
  %5087 = vmatprep.subr.bf16.mxu0 0
  %5088 = vmatpush1.bf16.msra.mxu0 %v3769
  %5089 = vmatprep.subr.bf16.mxu0 0
  %5090 = vmatpush1.bf16.msra.mxu0 %v3770
  %5091 = vmatprep.subr.bf16.mxu0 0
  %5092 = vmatpush1.bf16.msra.mxu0 %v3771
  %5093 = vmatprep.subr.bf16.mxu0 0
  %5094 = vmatpush1.bf16.msra.mxu0 %v3772
  %5095 = vmatprep.subr.bf16.mxu0 0
  %5096 = vmatpush1.bf16.msra.mxu0 %v3773
  %5097 = vmatprep.subr.bf16.mxu0 0
  %5098 = vmatpush1.bf16.msra.mxu0 %v3774
  %5099 = vmatprep.subr.bf16.mxu0 0
  %5100 = vmatpush1.bf16.msra.mxu0 %v3775
  %5101 = vmatprep.subr.bf16.mxu0 0
  %5102 = vmatpush1.bf16.msra.mxu0 %v3776
  %5103 = vmatprep.subr.bf16.mxu0 0
  %5104 = vmatpush1.bf16.msra.mxu0 %v3777
  %5105 = vmatprep.subr.bf16.mxu0 0
  %5106 = vmatpush1.bf16.msra.mxu0 %v3778
  %5107 = vmatprep.mubr.bf16.mxu0 %v1251
  %5108 = vmatmul.mubr.bf16.gmra.mrb[0].mxu0 %v1237
  %v5109 = vpop.f32.mrb[0].mxu0
  %v5110 = vadd.f32 %v5070, %v5109
  %v5111 = vpop.f32.mrb[0].mxu0
  %v5112 = vpop.f32.mrb[0].mxu0
  %v5113 = vpop.f32.mrb[0].mxu0
  %5114 = vdwg.mxu0
  %5115 = vmatprep.subr.bf16.mxu0 0
  %5116 = vmatpush1.bf16.msra.mxu0 %v3779
  %5117 = vmatprep.subr.bf16.mxu0 0
  %5118 = vmatpush1.bf16.msra.mxu0 %v3780
  %5119 = vmatprep.subr.bf16.mxu0 0
  %5120 = vmatpush1.bf16.msra.mxu0 %v3781
  %5121 = vmatprep.subr.bf16.mxu0 0
  %5122 = vmatpush1.bf16.msra.mxu0 %v3782
  %5123 = vmatprep.subr.bf16.mxu0 0
  %5124 = vmatpush1.bf16.msra.mxu0 %v3783
  %5125 = vmatprep.subr.bf16.mxu0 0
  %5126 = vmatpush1.bf16.msra.mxu0 %v3784
  %5127 = vmatprep.subr.bf16.mxu0 0
  %5128 = vmatpush1.bf16.msra.mxu0 %v3785
  %5129 = vmatprep.subr.bf16.mxu0 0
  %5130 = vmatpush1.bf16.msra.mxu0 %v3786
  %5131 = vmatprep.subr.bf16.mxu0 0
  %5132 = vmatpush1.bf16.msra.mxu0 %v3787
  %5133 = vmatprep.subr.bf16.mxu0 0
  %5134 = vmatpush1.bf16.msra.mxu0 %v3788
  %5135 = vmatprep.subr.bf16.mxu0 0
  %5136 = vmatpush1.bf16.msra.mxu0 %v3789
  %5137 = vmatprep.subr.bf16.mxu0 0
  %5138 = vmatpush1.bf16.msra.mxu0 %v3790
  %5139 = vmatprep.subr.bf16.mxu0 0
  %5140 = vmatpush1.bf16.msra.mxu0 %v3791
  %5141 = vmatprep.subr.bf16.mxu0 0
  %5142 = vmatpush1.bf16.msra.mxu0 %v3792
  %5143 = vmatprep.subr.bf16.mxu0 0
  %5144 = vmatpush1.bf16.msra.mxu0 %v3793
  %5145 = vmatprep.subr.bf16.mxu0 0
  %5146 = vmatpush1.bf16.msra.mxu0 %v3794
  %5147 = vmatprep.mubr.bf16.mxu0 %v1261
  %5148 = vmatmul.mubr.bf16.gmra.mrb[0].mxu0 %v1259
  %v5149 = vpop.f32.mrb[0].mxu0
  %v5150 = vadd.f32 %v5110, %v5149
  %v5151 = vpop.f32.mrb[0].mxu0
  %v5152 = vpop.f32.mrb[0].mxu0
  %v5153 = vpop.f32.mrb[0].mxu0
  %5154 = vdwg.mxu0
  %5155 = vmatprep.subr.bf16.mxu0 0
  %5156 = vmatpush1.bf16.msra.mxu0 %v3795
  %5157 = vmatprep.subr.bf16.mxu0 0
  %5158 = vmatpush1.bf16.msra.mxu0 %v3796
  %5159 = vmatprep.subr.bf16.mxu0 0
  %5160 = vmatpush1.bf16.msra.mxu0 %v3797
  %5161 = vmatprep.subr.bf16.mxu0 0
  %5162 = vmatpush1.bf16.msra.mxu0 %v3798
  %5163 = vmatprep.subr.bf16.mxu0 0
  %5164 = vmatpush1.bf16.msra.mxu0 %v3799
  %5165 = vmatprep.subr.bf16.mxu0 0
  %5166 = vmatpush1.bf16.msra.mxu0 %v3800
  %5167 = vmatprep.subr.bf16.mxu0 0
  %5168 = vmatpush1.bf16.msra.mxu0 %v3801
  %5169 = vmatprep.subr.bf16.mxu0 0
  %5170 = vmatpush1.bf16.msra.mxu0 %v3802
  %5171 = vmatprep.subr.bf16.mxu0 0
  %5172 = vmatpush1.bf16.msra.mxu0 %v3803
  %5173 = vmatprep.subr.bf16.mxu0 0
  %5174 = vmatpush1.bf16.msra.mxu0 %v3804
  %5175 = vmatprep.subr.bf16.mxu0 0
  %5176 = vmatpush1.bf16.msra.mxu0 %v3805
  %5177 = vmatprep.subr.bf16.mxu0 0
  %5178 = vmatpush1.bf16.msra.mxu0 %v3806
  %5179 = vmatprep.subr.bf16.mxu0 0
  %5180 = vmatpush1.bf16.msra.mxu0 %v3807
  %5181 = vmatprep.subr.bf16.mxu0 0
  %5182 = vmatpush1.bf16.msra.mxu0 %v3808
  %5183 = vmatprep.subr.bf16.mxu0 0
  %5184 = vmatpush1.bf16.msra.mxu0 %v3809
  %5185 = vmatprep.subr.bf16.mxu0 0
  %5186 = vmatpush1.bf16.msra.mxu0 %v3810
  %5187 = vmatprep.mubr.bf16.mxu0 %v1258
  %5188 = vmatmul.mubr.bf16.gmra.mrb[0].mxu0 %v1244
  %v5189 = vpop.f32.mrb[0].mxu0
  %v5190 = vadd.f32 %v5150, %v5189
  %v5191 = vpop.f32.mrb[0].mxu0
  %v5192 = vpop.f32.mrb[0].mxu0
  %v5193 = vpop.f32.mrb[0].mxu0
  %5194 = vdwg.mxu0
  %5195 = vmatprep.subr.bf16.mxu0 0
  %5196 = vmatpush1.bf16.msra.mxu0 %v3811
  %5197 = vmatprep.subr.bf16.mxu0 0
  %5198 = vmatpush1.bf16.msra.mxu0 %v3812
  %5199 = vmatprep.subr.bf16.mxu0 0
  %5200 = vmatpush1.bf16.msra.mxu0 %v3813
  %5201 = vmatprep.subr.bf16.mxu0 0
  %5202 = vmatpush1.bf16.msra.mxu0 %v3814
  %5203 = vmatprep.subr.bf16.mxu0 0
  %5204 = vmatpush1.bf16.msra.mxu0 %v3815
  %5205 = vmatprep.subr.bf16.mxu0 0
  %5206 = vmatpush1.bf16.msra.mxu0 %v3816
  %5207 = vmatprep.subr.bf16.mxu0 0
  %5208 = vmatpush1.bf16.msra.mxu0 %v3817
  %5209 = vmatprep.subr.bf16.mxu0 0
  %5210 = vmatpush1.bf16.msra.mxu0 %v3818
  %5211 = vmatprep.subr.bf16.mxu0 0
  %5212 = vmatpush1.bf16.msra.mxu0 %v3819
  %5213 = vmatprep.subr.bf16.mxu0 0
  %5214 = vmatpush1.bf16.msra.mxu0 %v3820
  %5215 = vmatprep.subr.bf16.mxu0 0
  %5216 = vmatpush1.bf16.msra.mxu0 %v3821
  %5217 = vmatprep.subr.bf16.mxu0 0
  %5218 = vmatpush1.bf16.msra.mxu0 %v3822
  %5219 = vmatprep.subr.bf16.mxu0 0
  %5220 = vmatpush1.bf16.msra.mxu0 %v3823
  %5221 = vmatprep.subr.bf16.mxu0 0
  %5222 = vmatpush1.bf16.msra.mxu0 %v3824
  %5223 = vmatprep.subr.bf16.mxu0 0
  %5224 = vmatpush1.bf16.msra.mxu0 %v3825
  %5225 = vmatprep.subr.bf16.mxu0 0
  %5226 = vmatpush1.bf16.msra.mxu0 %v3826
  %5227 = vmatprep.mubr.bf16.mxu0 %v1262
  %5228 = vmatmul.mubr.bf16.gmra.mrb[0].mxu0 %v1260
  %v5229 = vpop.f32.mrb[0].mxu0
  %v5230 = vadd.f32 %v5190, %v5229
  %v5231 = vpop.f32.mrb[0].mxu0
  %v5232 = vpop.f32.mrb[0].mxu0
  %v5233 = vpop.f32.mrb[0].mxu0
  %5234 = vdwg.mxu0
  %5235 = vmatprep.subr.bf16.mxu0 0
  %5236 = vmatpush1.bf16.msra.mxu0 %v3827
  %5237 = vmatprep.subr.bf16.mxu0 0
  %5238 = vmatpush1.bf16.msra.mxu0 %v3828
  %5239 = vmatprep.subr.bf16.mxu0 0
  %5240 = vmatpush1.bf16.msra.mxu0 %v3829
  %5241 = vmatprep.subr.bf16.mxu0 0
  %5242 = vmatpush1.bf16.msra.mxu0 %v3830
  %5243 = vmatprep.subr.bf16.mxu0 0
  %5244 = vmatpush1.bf16.msra.mxu0 %v3831
  %5245 = vmatprep.subr.bf16.mxu0 0
  %5246 = vmatpush1.bf16.msra.mxu0 %v3832
  %5247 = vmatprep.subr.bf16.mxu0 0
  %5248 = vmatpush1.bf16.msra.mxu0 %v3833
  %5249 = vmatprep.subr.bf16.mxu0 0
  %5250 = vmatpush1.bf16.msra.mxu0 %v3834
  %5251 = vmatprep.subr.bf16.mxu0 0
  %5252 = vmatpush1.bf16.msra.mxu0 %v3835
  %5253 = vmatprep.subr.bf16.mxu0 0
  %5254 = vmatpush1.bf16.msra.mxu0 %v3836
  %5255 = vmatprep.subr.bf16.mxu0 0
  %5256 = vmatpush1.bf16.msra.mxu0 %v3837
  %5257 = vmatprep.subr.bf16.mxu0 0
  %5258 = vmatpush1.bf16.msra.mxu0 %v3838
  %5259 = vmatprep.subr.bf16.mxu0 0
  %5260 = vmatpush1.bf16.msra.mxu0 %v3839
  %5261 = vmatprep.subr.bf16.mxu0 0
  %5262 = vmatpush1.bf16.msra.mxu0 %v3840
  %5263 = vmatprep.subr.bf16.mxu0 0
  %5264 = vmatpush1.bf16.msra.mxu0 %v3841
  %5265 = vmatprep.subr.bf16.mxu0 0
  %5266 = vmatpush1.bf16.msra.mxu0 %v3842
  %5267 = vmatprep.mubr.bf16.mxu0 %v1300
  %5268 = vmatmul.mubr.bf16.gmra.mrb[0].mxu0 %v1286
  %v5269 = vpop.f32.mrb[0].mxu0
  %v5270 = vadd.f32 %v5230, %v5269
  %v5271 = vpop.f32.mrb[0].mxu0
  %v5272 = vpop.f32.mrb[0].mxu0
  %v5273 = vpop.f32.mrb[0].mxu0
  %5274 = vdwg.mxu0
  %5275 = vmatprep.subr.bf16.mxu0 0
  %5276 = vmatpush1.bf16.msra.mxu0 %v3843
  %5277 = vmatprep.subr.bf16.mxu0 0
  %5278 = vmatpush1.bf16.msra.mxu0 %v3844
  %5279 = vmatprep.subr.bf16.mxu0 0
  %5280 = vmatpush1.bf16.msra.mxu0 %v3845
  %5281 = vmatprep.subr.bf16.mxu0 0
  %5282 = vmatpush1.bf16.msra.mxu0 %v3846
  %5283 = vmatprep.subr.bf16.mxu0 0
  %5284 = vmatpush1.bf16.msra.mxu0 %v3847
  %5285 = vmatprep.subr.bf16.mxu0 0
  %5286 = vmatpush1.bf16.msra.mxu0 %v3848
  %5287 = vmatprep.subr.bf16.mxu0 0
  %5288 = vmatpush1.bf16.msra.mxu0 %v3849
  %5289 = vmatprep.subr.bf16.mxu0 0
  %5290 = vmatpush1.bf16.msra.mxu0 %v3850
  %5291 = vmatprep.subr.bf16.mxu0 0
  %5292 = vmatpush1.bf16.msra.mxu0 %v3851
  %5293 = vmatprep.subr.bf16.mxu0 0
  %5294 = vmatpush1.bf16.msra.mxu0 %v3852
  %5295 = vmatprep.subr.bf16.mxu0 0
  %5296 = vmatpush1.bf16.msra.mxu0 %v3853
  %5297 = vmatprep.subr.bf16.mxu0 0
  %5298 = vmatpush1.bf16.msra.mxu0 %v3854
  %5299 = vmatprep.subr.bf16.mxu0 0
  %5300 = vmatpush1.bf16.msra.mxu0 %v3855
  %5301 = vmatprep.subr.bf16.mxu0 0
  %5302 = vmatpush1.bf16.msra.mxu0 %v3856
  %5303 = vmatprep.subr.bf16.mxu0 0
  %5304 = vmatpush1.bf16.msra.mxu0 %v3857
  %5305 = vmatprep.subr.bf16.mxu0 0
  %5306 = vmatpush1.bf16.msra.mxu0 %v3858
  %5307 = vmatprep.mubr.bf16.mxu0 %v1310
  %5308 = vmatmul.mubr.bf16.gmra.mrb[0].mxu0 %v1308
  %v5309 = vpop.f32.mrb[0].mxu0
  %v5310 = vadd.f32 %v5270, %v5309
  %v5311 = vpop.f32.mrb[0].mxu0
  %v5312 = vpop.f32.mrb[0].mxu0
  %v5313 = vpop.f32.mrb[0].mxu0
  %5314 = vdwg.mxu0
  %5315 = vmatprep.subr.bf16.mxu0 0
  %5316 = vmatpush1.bf16.msra.mxu0 %v3859
  %5317 = vmatprep.subr.bf16.mxu0 0
  %5318 = vmatpush1.bf16.msra.mxu0 %v3860
  %5319 = vmatprep.subr.bf16.mxu0 0
  %5320 = vmatpush1.bf16.msra.mxu0 %v3861
  %5321 = vmatprep.subr.bf16.mxu0 0
  %5322 = vmatpush1.bf16.msra.mxu0 %v3862
  %5323 = vmatprep.subr.bf16.mxu0 0
  %5324 = vmatpush1.bf16.msra.mxu0 %v3863
  %5325 = vmatprep.subr.bf16.mxu0 0
  %5326 = vmatpush1.bf16.msra.mxu0 %v3864
  %5327 = vmatprep.subr.bf16.mxu0 0
  %5328 = vmatpush1.bf16.msra.mxu0 %v3865
  %5329 = vmatprep.subr.bf16.mxu0 0
  %5330 = vmatpush1.bf16.msra.mxu0 %v3866
  %5331 = vmatprep.subr.bf16.mxu0 0
  %5332 = vmatpush1.bf16.msra.mxu0 %v3867
  %5333 = vmatprep.subr.bf16.mxu0 0
  %5334 = vmatpush1.bf16.msra.mxu0 %v3868
  %5335 = vmatprep.subr.bf16.mxu0 0
  %5336 = vmatpush1.bf16.msra.mxu0 %v3869
  %5337 = vmatprep.subr.bf16.mxu0 0
  %5338 = vmatpush1.bf16.msra.mxu0 %v3870
  %5339 = vmatprep.subr.bf16.mxu0 0
  %5340 = vmatpush1.bf16.msra.mxu0 %v3871
  %5341 = vmatprep.subr.bf16.mxu0 0
  %5342 = vmatpush1.bf16.msra.mxu0 %v3872
  %5343 = vmatprep.subr.bf16.mxu0 0
  %5344 = vmatpush1.bf16.msra.mxu0 %v3873
  %5345 = vmatprep.subr.bf16.mxu0 0
  %5346 = vmatpush1.bf16.msra.mxu0 %v3874
  %5347 = vmatprep.mubr.bf16.mxu0 %v1307
  %5348 = vmatmul.mubr.bf16.gmra.mrb[0].mxu0 %v1293
  %v5349 = vpop.f32.mrb[0].mxu0
  %v5350 = vadd.f32 %v5310, %v5349
  %v5351 = vpop.f32.mrb[0].mxu0
  %v5352 = vpop.f32.mrb[0].mxu0
  %v5353 = vpop.f32.mrb[0].mxu0
  %5354 = vdwg.mxu0
  %5355 = vmatprep.subr.bf16.mxu0 0
  %5356 = vmatpush1.bf16.msra.mxu0 %v3875
  %5357 = vmatprep.subr.bf16.mxu0 0
  %5358 = vmatpush1.bf16.msra.mxu0 %v3876
  %5359 = vmatprep.subr.bf16.mxu0 0
  %5360 = vmatpush1.bf16.msra.mxu0 %v3877
  %5361 = vmatprep.subr.bf16.mxu0 0
  %5362 = vmatpush1.bf16.msra.mxu0 %v3878
  %5363 = vmatprep.subr.bf16.mxu0 0
  %5364 = vmatpush1.bf16.msra.mxu0 %v3879
  %5365 = vmatprep.subr.bf16.mxu0 0
  %5366 = vmatpush1.bf16.msra.mxu0 %v3880
  %5367 = vmatprep.subr.bf16.mxu0 0
  %5368 = vmatpush1.bf16.msra.mxu0 %v3881
  %5369 = vmatprep.subr.bf16.mxu0 0
  %5370 = vmatpush1.bf16.msra.mxu0 %v3882
  %5371 = vmatprep.subr.bf16.mxu0 0
  %5372 = vmatpush1.bf16.msra.mxu0 %v3883
  %5373 = vmatprep.subr.bf16.mxu0 0
  %5374 = vmatpush1.bf16.msra.mxu0 %v3884
  %5375 = vmatprep.subr.bf16.mxu0 0
  %5376 = vmatpush1.bf16.msra.mxu0 %v3885
  %5377 = vmatprep.subr.bf16.mxu0 0
  %5378 = vmatpush1.bf16.msra.mxu0 %v3886
  %5379 = vmatprep.subr.bf16.mxu0 0
  %5380 = vmatpush1.bf16.msra.mxu0 %v3887
  %5381 = vmatprep.subr.bf16.mxu0 0
  %5382 = vmatpush1.bf16.msra.mxu0 %v3888
  %5383 = vmatprep.subr.bf16.mxu0 0
  %5384 = vmatpush1.bf16.msra.mxu0 %v3889
  %5385 = vmatprep.subr.bf16.mxu0 0
  %5386 = vmatpush1.bf16.msra.mxu0 %v3890
  %5387 = vmatprep.mubr.bf16.mxu0 %v1311
  %5388 = vmatmul.mubr.bf16.gmra.mrb[0].mxu0 %v1309
  %v5389 = vpop.f32.mrb[0].mxu0
  %v5390 = vadd.f32 %v5350, %v5389
  %v5391 = vpop.f32.mrb[0].mxu0
  %v5392 = vpop.f32.mrb[0].mxu0
  %v5393 = vpop.f32.mrb[0].mxu0
  %5394 = vdwg.mxu0
  %5395 = vmatprep.subr.bf16.mxu0 0
  %5396 = vmatpush1.bf16.msra.mxu0 %v3891
  %5397 = vmatprep.subr.bf16.mxu0 0
  %5398 = vmatpush1.bf16.msra.mxu0 %v3892
  %5399 = vmatprep.subr.bf16.mxu0 0
  %5400 = vmatpush1.bf16.msra.mxu0 %v3893
  %5401 = vmatprep.subr.bf16.mxu0 0
  %5402 = vmatpush1.bf16.msra.mxu0 %v3894
  %5403 = vmatprep.subr.bf16.mxu0 0
  %5404 = vmatpush1.bf16.msra.mxu0 %v3895
  %5405 = vmatprep.subr.bf16.mxu0 0
  %5406 = vmatpush1.bf16.msra.mxu0 %v3896
  %5407 = vmatprep.subr.bf16.mxu0 0
  %5408 = vmatpush1.bf16.msra.mxu0 %v3897
  %5409 = vmatprep.subr.bf16.mxu0 0
  %5410 = vmatpush1.bf16.msra.mxu0 %v3898
  %5411 = vmatprep.subr.bf16.mxu0 0
  %5412 = vmatpush1.bf16.msra.mxu0 %v3899
  %5413 = vmatprep.subr.bf16.mxu0 0
  %5414 = vmatpush1.bf16.msra.mxu0 %v3900
  %5415 = vmatprep.subr.bf16.mxu0 0
  %5416 = vmatpush1.bf16.msra.mxu0 %v3901
  %5417 = vmatprep.subr.bf16.mxu0 0
  %5418 = vmatpush1.bf16.msra.mxu0 %v3902
  %5419 = vmatprep.subr.bf16.mxu0 0
  %5420 = vmatpush1.bf16.msra.mxu0 %v3903
  %5421 = vmatprep.subr.bf16.mxu0 0
  %5422 = vmatpush1.bf16.msra.mxu0 %v3904
  %5423 = vmatprep.subr.bf16.mxu0 0
  %5424 = vmatpush1.bf16.msra.mxu0 %v3905
  %5425 = vmatprep.subr.bf16.mxu0 0
  %5426 = vmatpush1.bf16.msra.mxu0 %v3906
  %5427 = vmatprep.mubr.bf16.mxu0 %v1349
  %5428 = vmatmul.mubr.bf16.gmra.mrb[0].mxu0 %v1335
  %v5429 = vpop.f32.mrb[0].mxu0
  %v5430 = vadd.f32 %v5390, %v5429
  %v5431 = vpop.f32.mrb[0].mxu0
  %v5432 = vpop.f32.mrb[0].mxu0
  %v5433 = vpop.f32.mrb[0].mxu0
  %5434 = vdwg.mxu0
  %5435 = vmatprep.subr.bf16.mxu0 0
  %5436 = vmatpush1.bf16.msra.mxu0 %v3907
  %5437 = vmatprep.subr.bf16.mxu0 0
  %5438 = vmatpush1.bf16.msra.mxu0 %v3908
  %5439 = vmatprep.subr.bf16.mxu0 0
  %5440 = vmatpush1.bf16.msra.mxu0 %v3909
  %5441 = vmatprep.subr.bf16.mxu0 0
  %5442 = vmatpush1.bf16.msra.mxu0 %v3910
  %5443 = vmatprep.subr.bf16.mxu0 0
  %5444 = vmatpush1.bf16.msra.mxu0 %v3911
  %5445 = vmatprep.subr.bf16.mxu0 0
  %5446 = vmatpush1.bf16.msra.mxu0 %v3912
  %5447 = vmatprep.subr.bf16.mxu0 0
  %5448 = vmatpush1.bf16.msra.mxu0 %v3913
  %5449 = vmatprep.subr.bf16.mxu0 0
  %5450 = vmatpush1.bf16.msra.mxu0 %v3914
  %5451 = vmatprep.subr.bf16.mxu0 0
  %5452 = vmatpush1.bf16.msra.mxu0 %v3915
  %5453 = vmatprep.subr.bf16.mxu0 0
  %5454 = vmatpush1.bf16.msra.mxu0 %v3916
  %5455 = vmatprep.subr.bf16.mxu0 0
  %5456 = vmatpush1.bf16.msra.mxu0 %v3917
  %5457 = vmatprep.subr.bf16.mxu0 0
  %5458 = vmatpush1.bf16.msra.mxu0 %v3918
  %5459 = vmatprep.subr.bf16.mxu0 0
  %5460 = vmatpush1.bf16.msra.mxu0 %v3919
  %5461 = vmatprep.subr.bf16.mxu0 0
  %5462 = vmatpush1.bf16.msra.mxu0 %v3920
  %5463 = vmatprep.subr.bf16.mxu0 0
  %5464 = vmatpush1.bf16.msra.mxu0 %v3921
  %5465 = vmatprep.subr.bf16.mxu0 0
  %5466 = vmatpush1.bf16.msra.mxu0 %v3922
  %5467 = vmatprep.mubr.bf16.mxu0 %v1359
  %5468 = vmatmul.mubr.bf16.gmra.mrb[0].mxu0 %v1357
  %v5469 = vpop.f32.mrb[0].mxu0
  %v5470 = vadd.f32 %v5430, %v5469
  %v5471 = vpop.f32.mrb[0].mxu0
  %v5472 = vpop.f32.mrb[0].mxu0
  %v5473 = vpop.f32.mrb[0].mxu0
  %5474 = vdwg.mxu0
  %5475 = vmatprep.subr.bf16.mxu0 0
  %5476 = vmatpush1.bf16.msra.mxu0 %v3923
  %5477 = vmatprep.subr.bf16.mxu0 0
  %5478 = vmatpush1.bf16.msra.mxu0 %v3924
  %5479 = vmatprep.subr.bf16.mxu0 0
  %5480 = vmatpush1.bf16.msra.mxu0 %v3925
  %5481 = vmatprep.subr.bf16.mxu0 0
  %5482 = vmatpush1.bf16.msra.mxu0 %v3926
  %5483 = vmatprep.subr.bf16.mxu0 0
  %5484 = vmatpush1.bf16.msra.mxu0 %v3927
  %5485 = vmatprep.subr.bf16.mxu0 0
  %5486 = vmatpush1.bf16.msra.mxu0 %v3928
  %5487 = vmatprep.subr.bf16.mxu0 0
  %5488 = vmatpush1.bf16.msra.mxu0 %v3929
  %5489 = vmatprep.subr.bf16.mxu0 0
  %5490 = vmatpush1.bf16.msra.mxu0 %v3930
  %5491 = vmatprep.subr.bf16.mxu0 0
  %5492 = vmatpush1.bf16.msra.mxu0 %v3931
  %5493 = vmatprep.subr.bf16.mxu0 0
  %5494 = vmatpush1.bf16.msra.mxu0 %v3932
  %5495 = vmatprep.subr.bf16.mxu0 0
  %5496 = vmatpush1.bf16.msra.mxu0 %v3933
  %5497 = vmatprep.subr.bf16.mxu0 0
  %5498 = vmatpush1.bf16.msra.mxu0 %v3934
  %5499 = vmatprep.subr.bf16.mxu0 0
  %5500 = vmatpush1.bf16.msra.mxu0 %v3935
  %5501 = vmatprep.subr.bf16.mxu0 0
  %5502 = vmatpush1.bf16.msra.mxu0 %v3936
  %5503 = vmatprep.subr.bf16.mxu0 0
  %5504 = vmatpush1.bf16.msra.mxu0 %v3937
  %5505 = vmatprep.subr.bf16.mxu0 0
  %5506 = vmatpush1.bf16.msra.mxu0 %v3938
  %5507 = vmatprep.mubr.bf16.mxu0 %v1356
  %5508 = vmatmul.mubr.bf16.gmra.mrb[0].mxu0 %v1342
  %v5509 = vpop.f32.mrb[0].mxu0
  %v5510 = vadd.f32 %v5470, %v5509
  %v5511 = vpop.f32.mrb[0].mxu0
  %v5512 = vpop.f32.mrb[0].mxu0
  %v5513 = vpop.f32.mrb[0].mxu0
  %5514 = vdwg.mxu0
  %5515 = vmatprep.subr.bf16.mxu0 0
  %5516 = vmatpush1.bf16.msra.mxu0 %v3939
  %5517 = vmatprep.subr.bf16.mxu0 0
  %5518 = vmatpush1.bf16.msra.mxu0 %v3940
  %5519 = vmatprep.subr.bf16.mxu0 0
  %5520 = vmatpush1.bf16.msra.mxu0 %v3941
  %5521 = vmatprep.subr.bf16.mxu0 0
  %5522 = vmatpush1.bf16.msra.mxu0 %v3942
  %5523 = vmatprep.subr.bf16.mxu0 0
  %5524 = vmatpush1.bf16.msra.mxu0 %v3943
  %5525 = vmatprep.subr.bf16.mxu0 0
  %5526 = vmatpush1.bf16.msra.mxu0 %v3944
  %5527 = vmatprep.subr.bf16.mxu0 0
  %5528 = vmatpush1.bf16.msra.mxu0 %v3945
  %5529 = vmatprep.subr.bf16.mxu0 0
  %5530 = vmatpush1.bf16.msra.mxu0 %v3946
  %5531 = vmatprep.subr.bf16.mxu0 0
  %5532 = vmatpush1.bf16.msra.mxu0 %v3947
  %5533 = vmatprep.subr.bf16.mxu0 0
  %5534 = vmatpush1.bf16.msra.mxu0 %v3948
  %5535 = vmatprep.subr.bf16.mxu0 0
  %5536 = vmatpush1.bf16.msra.mxu0 %v3949
  %5537 = vmatprep.subr.bf16.mxu0 0
  %5538 = vmatpush1.bf16.msra.mxu0 %v3950
  %5539 = vmatprep.subr.bf16.mxu0 0
  %5540 = vmatpush1.bf16.msra.mxu0 %v3951
  %5541 = vmatprep.subr.bf16.mxu0 0
  %5542 = vmatpush1.bf16.msra.mxu0 %v3952
  %5543 = vmatprep.subr.bf16.mxu0 0
  %5544 = vmatpush1.bf16.msra.mxu0 %v3953
  %5545 = vmatprep.subr.bf16.mxu0 0
  %5546 = vmatpush1.bf16.msra.mxu0 %v3954
  %5547 = vmatprep.mubr.bf16.mxu0 %v1360
  %5548 = vmatmul.mubr.bf16.gmra.mrb[0].mxu0 %v1358
  %v5549 = vpop.f32.mrb[0].mxu0
  %v5550 = vadd.f32 %v5510, %v5549
  %v5551 = vpop.f32.mrb[0].mxu0
  %v5552 = vpop.f32.mrb[0].mxu0
  %v5553 = vpop.f32.mrb[0].mxu0
  %5554 = vdwg.mxu0
  %5555 = vmatprep.subr.bf16.mxu0 0
  %5556 = vmatpush1.bf16.msra.mxu0 %v3955
  %5557 = vmatprep.subr.bf16.mxu0 0
  %5558 = vmatpush1.bf16.msra.mxu0 %v3956
  %5559 = vmatprep.subr.bf16.mxu0 0
  %5560 = vmatpush1.bf16.msra.mxu0 %v3957
  %5561 = vmatprep.subr.bf16.mxu0 0
  %5562 = vmatpush1.bf16.msra.mxu0 %v3958
  %5563 = vmatprep.subr.bf16.mxu0 0
  %5564 = vmatpush1.bf16.msra.mxu0 %v3959
  %5565 = vmatprep.subr.bf16.mxu0 0
  %5566 = vmatpush1.bf16.msra.mxu0 %v3960
  %5567 = vmatprep.subr.bf16.mxu0 0
  %5568 = vmatpush1.bf16.msra.mxu0 %v3961
  %5569 = vmatprep.subr.bf16.mxu0 0
  %5570 = vmatpush1.bf16.msra.mxu0 %v3962
  %5571 = vmatprep.subr.bf16.mxu0 0
  %5572 = vmatpush1.bf16.msra.mxu0 %v3963
  %5573 = vmatprep.subr.bf16.mxu0 0
  %5574 = vmatpush1.bf16.msra.mxu0 %v3964
  %5575 = vmatprep.subr.bf16.mxu0 0
  %5576 = vmatpush1.bf16.msra.mxu0 %v3965
  %5577 = vmatprep.subr.bf16.mxu0 0
  %5578 = vmatpush1.bf16.msra.mxu0 %v3966
  %5579 = vmatprep.subr.bf16.mxu0 0
  %5580 = vmatpush1.bf16.msra.mxu0 %v3967
  %5581 = vmatprep.subr.bf16.mxu0 0
  %5582 = vmatpush1.bf16.msra.mxu0 %v3968
  %5583 = vmatprep.subr.bf16.mxu0 0
  %5584 = vmatpush1.bf16.msra.mxu0 %v3969
  %5585 = vmatprep.subr.bf16.mxu0 0
  %5586 = vmatpush1.bf16.msra.mxu0 %v3970
  %5587 = vmatprep.mubr.bf16.mxu0 %v1398
  %5588 = vmatmul.mubr.bf16.gmra.mrb[0].mxu0 %v1384
  %v5589 = vpop.f32.mrb[0].mxu0
  %v5590 = vadd.f32 %v5550, %v5589
  %v5591 = vpop.f32.mrb[0].mxu0
  %v5592 = vpop.f32.mrb[0].mxu0
  %v5593 = vpop.f32.mrb[0].mxu0
  %5594 = vdwg.mxu0
  %5595 = vmatprep.subr.bf16.mxu0 0
  %5596 = vmatpush1.bf16.msra.mxu0 %v3971
  %5597 = vmatprep.subr.bf16.mxu0 0
  %5598 = vmatpush1.bf16.msra.mxu0 %v3972
  %5599 = vmatprep.subr.bf16.mxu0 0
  %5600 = vmatpush1.bf16.msra.mxu0 %v3973
  %5601 = vmatprep.subr.bf16.mxu0 0
  %5602 = vmatpush1.bf16.msra.mxu0 %v3974
  %5603 = vmatprep.subr.bf16.mxu0 0
  %5604 = vmatpush1.bf16.msra.mxu0 %v3975
  %5605 = vmatprep.subr.bf16.mxu0 0
  %5606 = vmatpush1.bf16.msra.mxu0 %v3976
  %5607 = vmatprep.subr.bf16.mxu0 0
  %5608 = vmatpush1.bf16.msra.mxu0 %v3977
  %5609 = vmatprep.subr.bf16.mxu0 0
  %5610 = vmatpush1.bf16.msra.mxu0 %v3978
  %5611 = vmatprep.subr.bf16.mxu0 0
  %5612 = vmatpush1.bf16.msra.mxu0 %v3979
  %5613 = vmatprep.subr.bf16.mxu0 0
  %5614 = vmatpush1.bf16.msra.mxu0 %v3980
  %5615 = vmatprep.subr.bf16.mxu0 0
  %5616 = vmatpush1.bf16.msra.mxu0 %v3981
  %5617 = vmatprep.subr.bf16.mxu0 0
  %5618 = vmatpush1.bf16.msra.mxu0 %v3982
  %5619 = vmatprep.subr.bf16.mxu0 0
  %5620 = vmatpush1.bf16.msra.mxu0 %v3983
  %5621 = vmatprep.subr.bf16.mxu0 0
  %5622 = vmatpush1.bf16.msra.mxu0 %v3984
  %5623 = vmatprep.subr.bf16.mxu0 0
  %5624 = vmatpush1.bf16.msra.mxu0 %v3985
  %5625 = vmatprep.subr.bf16.mxu0 0
  %5626 = vmatpush1.bf16.msra.mxu0 %v3986
  %5627 = vmatprep.mubr.bf16.mxu0 %v1408
  %5628 = vmatmul.mubr.bf16.gmra.mrb[0].mxu0 %v1406
  %v5629 = vpop.f32.mrb[0].mxu0
  %v5630 = vadd.f32 %v5590, %v5629
  %v5631 = vpop.f32.mrb[0].mxu0
  %v5632 = vpop.f32.mrb[0].mxu0
  %v5633 = vpop.f32.mrb[0].mxu0
  %5634 = vdwg.mxu0
  %5635 = vmatprep.subr.bf16.mxu0 0
  %5636 = vmatpush1.bf16.msra.mxu0 %v3987
  %5637 = vmatprep.subr.bf16.mxu0 0
  %5638 = vmatpush1.bf16.msra.mxu0 %v3988
  %5639 = vmatprep.subr.bf16.mxu0 0
  %5640 = vmatpush1.bf16.msra.mxu0 %v3989
  %5641 = vmatprep.subr.bf16.mxu0 0
  %5642 = vmatpush1.bf16.msra.mxu0 %v3990
  %5643 = vmatprep.subr.bf16.mxu0 0
  %5644 = vmatpush1.bf16.msra.mxu0 %v3991
  %5645 = vmatprep.subr.bf16.mxu0 0
  %5646 = vmatpush1.bf16.msra.mxu0 %v3992
  %5647 = vmatprep.subr.bf16.mxu0 0
  %5648 = vmatpush1.bf16.msra.mxu0 %v3993
  %5649 = vmatprep.subr.bf16.mxu0 0
  %5650 = vmatpush1.bf16.msra.mxu0 %v3994
  %5651 = vmatprep.subr.bf16.mxu0 0
  %5652 = vmatpush1.bf16.msra.mxu0 %v3995
  %5653 = vmatprep.subr.bf16.mxu0 0
  %5654 = vmatpush1.bf16.msra.mxu0 %v3996
  %5655 = vmatprep.subr.bf16.mxu0 0
  %5656 = vmatpush1.bf16.msra.mxu0 %v3997
  %5657 = vmatprep.subr.bf16.mxu0 0
  %5658 = vmatpush1.bf16.msra.mxu0 %v3998
  %5659 = vmatprep.subr.bf16.mxu0 0
  %5660 = vmatpush1.bf16.msra.mxu0 %v3999
  %5661 = vmatprep.subr.bf16.mxu0 0
  %5662 = vmatpush1.bf16.msra.mxu0 %v4000
  %5663 = vmatprep.subr.bf16.mxu0 0
  %5664 = vmatpush1.bf16.msra.mxu0 %v4001
  %5665 = vmatprep.subr.bf16.mxu0 0
  %5666 = vmatpush1.bf16.msra.mxu0 %v4002
  %5667 = vmatprep.mubr.bf16.mxu0 %v1405
  %5668 = vmatmul.mubr.bf16.gmra.mrb[0].mxu0 %v1391
  %v5669 = vpop.f32.mrb[0].mxu0
  %v5670 = vadd.f32 %v5630, %v5669
  %v5671 = vpop.f32.mrb[0].mxu0
  %v5672 = vpop.f32.mrb[0].mxu0
  %v5673 = vpop.f32.mrb[0].mxu0
  %5674 = vdwg.mxu0
  %5675 = vmatprep.subr.bf16.mxu0 0
  %5676 = vmatpush1.bf16.msra.mxu0 %v4003
  %5677 = vmatprep.subr.bf16.mxu0 0
  %5678 = vmatpush1.bf16.msra.mxu0 %v4004
  %5679 = vmatprep.subr.bf16.mxu0 0
  %5680 = vmatpush1.bf16.msra.mxu0 %v4005
  %5681 = vmatprep.subr.bf16.mxu0 0
  %5682 = vmatpush1.bf16.msra.mxu0 %v4006
  %5683 = vmatprep.subr.bf16.mxu0 0
  %5684 = vmatpush1.bf16.msra.mxu0 %v4007
  %5685 = vmatprep.subr.bf16.mxu0 0
  %5686 = vmatpush1.bf16.msra.mxu0 %v4008
  %5687 = vmatprep.subr.bf16.mxu0 0
  %5688 = vmatpush1.bf16.msra.mxu0 %v4009
  %5689 = vmatprep.subr.bf16.mxu0 0
  %5690 = vmatpush1.bf16.msra.mxu0 %v4010
  %5691 = vmatprep.subr.bf16.mxu0 0
  %5692 = vmatpush1.bf16.msra.mxu0 %v4011
  %5693 = vmatprep.subr.bf16.mxu0 0
  %5694 = vmatpush1.bf16.msra.mxu0 %v4012
  %5695 = vmatprep.subr.bf16.mxu0 0
  %5696 = vmatpush1.bf16.msra.mxu0 %v4013
  %5697 = vmatprep.subr.bf16.mxu0 0
  %5698 = vmatpush1.bf16.msra.mxu0 %v4014
  %5699 = vmatprep.subr.bf16.mxu0 0
  %5700 = vmatpush1.bf16.msra.mxu0 %v4015
  %5701 = vmatprep.subr.bf16.mxu0 0
  %5702 = vmatpush1.bf16.msra.mxu0 %v4016
  %5703 = vmatprep.subr.bf16.mxu0 0
  %5704 = vmatpush1.bf16.msra.mxu0 %v4017
  %5705 = vmatprep.subr.bf16.mxu0 0
  %5706 = vmatpush1.bf16.msra.mxu0 %v4018
  %5707 = vmatprep.mubr.bf16.mxu0 %v1409
  %5708 = vmatmul.mubr.bf16.gmra.mrb[0].mxu0 %v1407
  %v5709 = vpop.f32.mrb[0].mxu0
  %v5710 = vadd.f32 %v5670, %v5709
  %v5711 = vpop.f32.mrb[0].mxu0
  %v5712 = vpop.f32.mrb[0].mxu0
  %v5713 = vpop.f32.mrb[0].mxu0
  %5714 = vdwg.mxu0
  %5715 = vmatprep.subr.bf16.mxu0 0
  %5716 = vmatpush1.bf16.msra.mxu0 %v4019
  %5717 = vmatprep.subr.bf16.mxu0 0
  %5718 = vmatpush1.bf16.msra.mxu0 %v4020
  %5719 = vmatprep.subr.bf16.mxu0 0
  %5720 = vmatpush1.bf16.msra.mxu0 %v4021
  %5721 = vmatprep.subr.bf16.mxu0 0
  %5722 = vmatpush1.bf16.msra.mxu0 %v4022
  %5723 = vmatprep.subr.bf16.mxu0 0
  %5724 = vmatpush1.bf16.msra.mxu0 %v4023
  %5725 = vmatprep.subr.bf16.mxu0 0
  %5726 = vmatpush1.bf16.msra.mxu0 %v4024
  %5727 = vmatprep.subr.bf16.mxu0 0
  %5728 = vmatpush1.bf16.msra.mxu0 %v4025
  %5729 = vmatprep.subr.bf16.mxu0 0
  %5730 = vmatpush1.bf16.msra.mxu0 %v4026
  %5731 = vmatprep.subr.bf16.mxu0 0
  %5732 = vmatpush1.bf16.msra.mxu0 %v4027
  %5733 = vmatprep.subr.bf16.mxu0 0
  %5734 = vmatpush1.bf16.msra.mxu0 %v4028
  %5735 = vmatprep.subr.bf16.mxu0 0
  %5736 = vmatpush1.bf16.msra.mxu0 %v4029
  %5737 = vmatprep.subr.bf16.mxu0 0
  %5738 = vmatpush1.bf16.msra.mxu0 %v4030
  %5739 = vmatprep.subr.bf16.mxu0 0
  %5740 = vmatpush1.bf16.msra.mxu0 %v4031
  %5741 = vmatprep.subr.bf16.mxu0 0
  %5742 = vmatpush1.bf16.msra.mxu0 %v4032
  %5743 = vmatprep.subr.bf16.mxu0 0
  %5744 = vmatpush1.bf16.msra.mxu0 %v4033
  %5745 = vmatprep.subr.bf16.mxu0 0
  %5746 = vmatpush1.bf16.msra.mxu0 %v4034
  %5747 = vmatprep.mubr.bf16.mxu0 %v1447
  %5748 = vmatmul.mubr.bf16.gmra.mrb[0].mxu0 %v1433
  %v5749 = vpop.f32.mrb[0].mxu0
  %v5750 = vadd.f32 %v5710, %v5749
  %v5751 = vpop.f32.mrb[0].mxu0
  %v5752 = vpop.f32.mrb[0].mxu0
  %v5753 = vpop.f32.mrb[0].mxu0
  %5754 = vdwg.mxu0
  %5755 = vmatprep.subr.bf16.mxu0 0
  %5756 = vmatpush1.bf16.msra.mxu0 %v4035
  %5757 = vmatprep.subr.bf16.mxu0 0
  %5758 = vmatpush1.bf16.msra.mxu0 %v4036
  %5759 = vmatprep.subr.bf16.mxu0 0
  %5760 = vmatpush1.bf16.msra.mxu0 %v4037
  %5761 = vmatprep.subr.bf16.mxu0 0
  %5762 = vmatpush1.bf16.msra.mxu0 %v4038
  %5763 = vmatprep.subr.bf16.mxu0 0
  %5764 = vmatpush1.bf16.msra.mxu0 %v4039
  %5765 = vmatprep.subr.bf16.mxu0 0
  %5766 = vmatpush1.bf16.msra.mxu0 %v4040
  %5767 = vmatprep.subr.bf16.mxu0 0
  %5768 = vmatpush1.bf16.msra.mxu0 %v4041
  %5769 = vmatprep.subr.bf16.mxu0 0
  %5770 = vmatpush1.bf16.msra.mxu0 %v4042
  %5771 = vmatprep.subr.bf16.mxu0 0
  %5772 = vmatpush1.bf16.msra.mxu0 %v4043
  %5773 = vmatprep.subr.bf16.mxu0 0
  %5774 = vmatpush1.bf16.msra.mxu0 %v4044
  %5775 = vmatprep.subr.bf16.mxu0 0
  %5776 = vmatpush1.bf16.msra.mxu0 %v4045
  %5777 = vmatprep.subr.bf16.mxu0 0
  %5778 = vmatpush1.bf16.msra.mxu0 %v4046
  %5779 = vmatprep.subr.bf16.mxu0 0
  %5780 = vmatpush1.bf16.msra.mxu0 %v4047
  %5781 = vmatprep.subr.bf16.mxu0 0
  %5782 = vmatpush1.bf16.msra.mxu0 %v4048
  %5783 = vmatprep.subr.bf16.mxu0 0
  %5784 = vmatpush1.bf16.msra.mxu0 %v4049
  %5785 = vmatprep.subr.bf16.mxu0 0
  %5786 = vmatpush1.bf16.msra.mxu0 %v4050
  %5787 = vmatprep.mubr.bf16.mxu0 %v1457
  %5788 = vmatmul.mubr.bf16.gmra.mrb[0].mxu0 %v1455
  %v5789 = vpop.f32.mrb[0].mxu0
  %v5790 = vadd.f32 %v5750, %v5789
  %v5791 = vpop.f32.mrb[0].mxu0
  %v5792 = vpop.f32.mrb[0].mxu0
  %v5793 = vpop.f32.mrb[0].mxu0
  %5794 = vdwg.mxu0
  %5795 = vmatprep.subr.bf16.mxu0 0
  %5796 = vmatpush1.bf16.msra.mxu0 %v4051
  %5797 = vmatprep.subr.bf16.mxu0 0
  %5798 = vmatpush1.bf16.msra.mxu0 %v4052
  %5799 = vmatprep.subr.bf16.mxu0 0
  %5800 = vmatpush1.bf16.msra.mxu0 %v4053
  %5801 = vmatprep.subr.bf16.mxu0 0
  %5802 = vmatpush1.bf16.msra.mxu0 %v4054
  %5803 = vmatprep.subr.bf16.mxu0 0
  %5804 = vmatpush1.bf16.msra.mxu0 %v4055
  %5805 = vmatprep.subr.bf16.mxu0 0
  %5806 = vmatpush1.bf16.msra.mxu0 %v4056
  %5807 = vmatprep.subr.bf16.mxu0 0
  %5808 = vmatpush1.bf16.msra.mxu0 %v4057
  %5809 = vmatprep.subr.bf16.mxu0 0
  %5810 = vmatpush1.bf16.msra.mxu0 %v4058
  %5811 = vmatprep.subr.bf16.mxu0 0
  %5812 = vmatpush1.bf16.msra.mxu0 %v4059
  %5813 = vmatprep.subr.bf16.mxu0 0
  %5814 = vmatpush1.bf16.msra.mxu0 %v4060
  %5815 = vmatprep.subr.bf16.mxu0 0
  %5816 = vmatpush1.bf16.msra.mxu0 %v4061
  %5817 = vmatprep.subr.bf16.mxu0 0
  %5818 = vmatpush1.bf16.msra.mxu0 %v4062
  %5819 = vmatprep.subr.bf16.mxu0 0
  %5820 = vmatpush1.bf16.msra.mxu0 %v4063
  %5821 = vmatprep.subr.bf16.mxu0 0
  %5822 = vmatpush1.bf16.msra.mxu0 %v4064
  %5823 = vmatprep.subr.bf16.mxu0 0
  %5824 = vmatpush1.bf16.msra.mxu0 %v4065
  %5825 = vmatprep.subr.bf16.mxu0 0
  %5826 = vmatpush1.bf16.msra.mxu0 %v4066
  %5827 = vmatprep.mubr.bf16.mxu0 %v1454
  %5828 = vmatmul.mubr.bf16.gmra.mrb[0].mxu0 %v1440
  %v5829 = vpop.f32.mrb[0].mxu0
  %v5830 = vadd.f32 %v5790, %v5829
  %v5831 = vpop.f32.mrb[0].mxu0
  %v5832 = vpop.f32.mrb[0].mxu0
  %v5833 = vpop.f32.mrb[0].mxu0
  %5834 = vdwg.mxu0
  %5835 = vmatprep.subr.bf16.mxu0 0
  %5836 = vmatpush1.bf16.msra.mxu0 %v4067
  %5837 = vmatprep.subr.bf16.mxu0 0
  %5838 = vmatpush1.bf16.msra.mxu0 %v4068
  %5839 = vmatprep.subr.bf16.mxu0 0
  %5840 = vmatpush1.bf16.msra.mxu0 %v4069
  %5841 = vmatprep.subr.bf16.mxu0 0
  %5842 = vmatpush1.bf16.msra.mxu0 %v4070
  %5843 = vmatprep.subr.bf16.mxu0 0
  %5844 = vmatpush1.bf16.msra.mxu0 %v4071
  %5845 = vmatprep.subr.bf16.mxu0 0
  %5846 = vmatpush1.bf16.msra.mxu0 %v4072
  %5847 = vmatprep.subr.bf16.mxu0 0
  %5848 = vmatpush1.bf16.msra.mxu0 %v4073
  %5849 = vmatprep.subr.bf16.mxu0 0
  %5850 = vmatpush1.bf16.msra.mxu0 %v4074
  %5851 = vmatprep.subr.bf16.mxu0 0
  %5852 = vmatpush1.bf16.msra.mxu0 %v4075
  %5853 = vmatprep.subr.bf16.mxu0 0
  %5854 = vmatpush1.bf16.msra.mxu0 %v4076
  %5855 = vmatprep.subr.bf16.mxu0 0
  %5856 = vmatpush1.bf16.msra.mxu0 %v4077
  %5857 = vmatprep.subr.bf16.mxu0 0
  %5858 = vmatpush1.bf16.msra.mxu0 %v4078
  %5859 = vmatprep.subr.bf16.mxu0 0
  %5860 = vmatpush1.bf16.msra.mxu0 %v4079
  %5861 = vmatprep.subr.bf16.mxu0 0
  %5862 = vmatpush1.bf16.msra.mxu0 %v4080
  %5863 = vmatprep.subr.bf16.mxu0 0
  %5864 = vmatpush1.bf16.msra.mxu0 %v4081
  %5865 = vmatprep.subr.bf16.mxu0 0
  %5866 = vmatpush1.bf16.msra.mxu0 %v4082
  %5867 = vmatprep.mubr.bf16.mxu0 %v1458
  %5868 = vmatmul.mubr.bf16.gmra.mrb[0].mxu0 %v1456
  %v5869 = vpop.f32.mrb[0].mxu0
  %v5870 = vadd.f32 %v5830, %v5869
  %v5871 = vpop.f32.mrb[0].mxu0
  %v5872 = vpop.f32.mrb[0].mxu0
  %v5873 = vpop.f32.mrb[0].mxu0
  %5874 = vdwg.mxu0
  %v5875 = vsub.f32 0.0, %v5870
  %v5876 = vmul.f32 %v5875, 1.442695
  %v5877 = vpow.pop %v5876
  %v5878 = vadd.f32 %v5877, 1.0
  %v5879 = vrcp.pop %v5878
  %v5880 = vmul.f32 1.0, %v5879
  %5881 = vst [vmem:[%s3] sm:$0x1] %v5880
  // Predicated region
  $region14: #{adversary_forward.7} parent=0 // pred_check
    _
  $region15: #{adversary_forward.7} parent=0 // pred_check_branch
    %5883 = sbr.rel (0) target = $region17
  $region16: #{adversary_forward.7} parent=0 // pred_region
    _
  $region17: #{adversary_forward.7} parent=0 // pred_fallthru
    _
  // Predicated region
  $region18: #{adversary_forward.7} parent=0 // pred_check
    _
  $region19: #{adversary_forward.7} parent=0 // pred_check_branch
    %5885 = sbr.rel (0) target = $region21
  $region20: #{adversary_forward.7} parent=0 // pred_region
    _
  $region21: #{adversary_forward.7} parent=0 // pred_fallthru
    _

</llo_original>
